<compile_context>
chip_gen: v7x
topology: tpu7x:2x2x1
jax: 0.10.0
libtpu: 0.0.40
codegen_flags: <defaults>
</compile_context>

<pallas_src>
import jax
import jax.numpy as jnp
import numpy as np
from jax.experimental import pallas as pl
from jax.experimental.pallas import tpu as pltpu


# --------------------------- Fused GRU + FC kernel ----------------------------

def make_fused_gru_kernel(num_layers, T, B_pad, H_pad):
    """Kernel signature:
        kernel(x_flat, (w_ih, w_hh, b_gi, b_hn) * num_layers, fc_w, fc_b,
               out_ref, gi_scr, hseq_scr)

    x_flat : (T*B_pad, D_pad)  bf16, time-major, lane/sublane padded
    w_ih   : (3, in_pad, H_pad) bf16   per-gate (r|z|n) input weights, transposed
    w_hh   : (3, H_pad, H_pad)  bf16   per-gate hidden weights, transposed
    b_gi   : (3, 1, H_pad) f32   [b_ih_r+b_hh_r | b_ih_z+b_hh_z | b_ih_n]
    b_hn   : (1, H_pad)    f32   b_hh_n (kept separate: multiplied by r)
    fc_w   : (H_pad, O_pad) bf16, fc_b : (1, O_pad) f32
    out_ref: (B_pad, O_pad) f32
    gi_scr : (3, T*B_pad, H_pad) f32  VMEM scratch (hoisted per-gate input proj)
    hseq_scr:(T*B_pad, H_pad)    f32  VMEM scratch (previous layer's hidden seq)
    """

    def kernel(*refs):
        n_in = 1 + 4 * num_layers + 2
        x_ref = refs[0]
        fcw_ref = refs[1 + 4 * num_layers]
        fcb_ref = refs[2 + 4 * num_layers]
        out_ref = refs[n_in]
        gi_scr = refs[n_in + 1]
        hseq_scr = refs[n_in + 2]

        # Zero-cost per-gate ref views (leading-axis indexing, no lane slicing).
        gi_r, gi_z, gi_n = gi_scr.at[0], gi_scr.at[1], gi_scr.at[2]

        h_last = None
        for layer in range(num_layers):
            wih_ref, whh_ref, bgi_ref, bhn_ref = refs[1 + 4 * layer: 5 + 4 * layer]
            is_last = layer == num_layers - 1

            # ---- Hoisted per-gate input projection over all T*B_pad rows ----
            # bf16 MXU operands, f32 accumulation; r/z (and n-input) biases folded
            # here once per layer instead of once per timestep.
            if layer == 0:
                src = x_ref[...]                                   # already bf16
            else:
                src = hseq_scr[...].astype(jnp.bfloat16)           # one cast/layer
            for g, gi_view in enumerate((gi_r, gi_z, gi_n)):
                gi_view[...] = (
                    jnp.dot(src, wih_ref[g], preferred_element_type=jnp.float32)
                    + bgi_ref[g]
                )

            # n-gate hidden bias: load + broadcast ONCE per layer (hoisted).
            bhn_b = jnp.broadcast_to(bhn_ref[...], (B_pad, H_pad))

            # ---- Serial recurrence: only h @ W_hh per step stays on this path ----
            def step(t, h_prev, whh_ref=whh_ref, bhn_b=bhn_b, is_last=is_last):
                row = pl.multiple_of(t * B_pad, 8)
                h_bf = h_prev.astype(jnp.bfloat16)
                gh_r = jnp.dot(h_bf, whh_ref[0], preferred_element_type=jnp.float32)
                gh_z = jnp.dot(h_bf, whh_ref[1], preferred_element_type=jnp.float32)
                gh_n = jnp.dot(h_bf, whh_ref[2], preferred_element_type=jnp.float32)
                r = jax.nn.sigmoid(gi_r[pl.ds(row, B_pad), :] + gh_r)
                z = jax.nn.sigmoid(gi_z[pl.ds(row, B_pad), :] + gh_z)
                n = jnp.tanh(gi_n[pl.ds(row, B_pad), :] + r * (gh_n + bhn_b))
                h_new = (1.0 - z) * n + z * h_prev
                if not is_last:
                    # Middle layers: lane-dense, unmasked (B_pad, 128k) store.
                    hseq_scr[pl.ds(row, B_pad), :] = h_new
                return h_new

            h_last = jax.lax.fori_loop(
                0, T, step, jnp.zeros((B_pad, H_pad), jnp.float32),
                unroll=min(T, 8))

        # ---- Fused FC head on h[T-1] of the last layer (lane-dense output) ----
        out_ref[...] = (
            jnp.dot(h_last.astype(jnp.bfloat16), fcw_ref[...],
                    preferred_element_type=jnp.float32)
            + fcb_ref[...]
        ).astype(out_ref.dtype)

    return kernel


# ------------------------------ Model wrapper ---------------------------------

def _round_up(v, m):
    return ((v + m - 1) // m) * m


def init_params(key, input_dim, hidden_dim, num_layers, output_dim, pred_len):
    """Deterministic init matching the PyTorch module's parameter shapes."""
    k = 1.0 / np.sqrt(hidden_dim)
    params = {"hidden_dim": hidden_dim, "layers": []}
    for layer in range(num_layers):
        in_dim = input_dim if layer == 0 else hidden_dim
        key, k0, k1, k2, k3 = jax.random.split(key, 5)
        params["layers"].append({
            "w_ih": jax.random.uniform(k0, (3 * hidden_dim, in_dim), jnp.float32, -k, k),
            "w_hh": jax.random.uniform(k1, (3 * hidden_dim, hidden_dim), jnp.float32, -k, k),
            "b_ih": jax.random.uniform(k2, (3 * hidden_dim,), jnp.float32, -k, k),
            "b_hh": jax.random.uniform(k3, (3 * hidden_dim,), jnp.float32, -k, k),
        })
    out_features = output_dim * pred_len
    key, k4, k5 = jax.random.split(key, 3)
    params["fc_w"] = jax.random.uniform(k4, (out_features, hidden_dim), jnp.float32, -k, k)
    params["fc_b"] = jax.random.uniform(k5, (out_features,), jnp.float32, -k, k)
    return params


def gru_forecast(x, params, pred_len):
    """Equivalent of GRU.forecasting(x): x (B, T, D) -> (B*output_dim, pred_len, 1)."""
    # TODO(synk): nn.GRU inter-layer dropout is a train-time-only op; the inference
    # forward path has none, so it is intentionally omitted here.
    B, T, D = x.shape
    H = params["hidden_dim"]
    num_layers = len(params["layers"])
    O = params["fc_w"].shape[0]

    B_pad = _round_up(B, 8)        # sublane-aligned batch
    H_pad = _round_up(H, 128)      # lane-dense hidden
    D_pad = _round_up(D, 128)      # lane-dense input
    O_pad = _round_up(O, 128)      # lane-dense output

    # Wrapper-side layout plumbing: time-major, pad batch/lanes, flatten, bf16.
    x_tm = jnp.transpose(x, (1, 0, 2)).astype(jnp.float32)          # (T, B, D)
    x_tm = jnp.pad(x_tm, ((0, 0), (0, B_pad - B), (0, D_pad - D)))  # (T, B_pad, D_pad)
    x_flat = x_tm.reshape(T * B_pad, D_pad).astype(jnp.bfloat16)

    def pad2(a, r, c):
        return jnp.pad(a, ((0, r - a.shape[0]), (0, c - a.shape[1])))

    kernel_inputs = [x_flat]
    for layer, lp in enumerate(params["layers"]):
        in_pad = D_pad if layer == 0 else H_pad
        w_ih, w_hh = lp["w_ih"], lp["w_hh"]
        b_ih, b_hh = lp["b_ih"], lp["b_hh"]
        wih_g, whh_g, bgi_g = [], [], []
        for g in range(3):  # PyTorch gate order r | z | n
            wih_g.append(pad2(w_ih[g * H:(g + 1) * H, :].T, in_pad, H_pad))
            whh_g.append(pad2(w_hh[g * H:(g + 1) * H, :].T, H_pad, H_pad))
            bg = b_ih[g * H:(g + 1) * H]
            if g < 2:
                bg = bg + b_hh[g * H:(g + 1) * H]   # fold b_hh for r/z only
            bgi_g.append(jnp.pad(bg, (0, H_pad - H)).reshape(1, H_pad))
        kernel_inputs += [
            jnp.stack(wih_g).astype(jnp.bfloat16),                      # (3, in_pad, H_pad)
            jnp.stack(whh_g).astype(jnp.bfloat16),                      # (3, H_pad, H_pad)
            jnp.stack(bgi_g),                                           # (3, 1, H_pad) f32
            jnp.pad(b_hh[2 * H:], (0, H_pad - H)).reshape(1, H_pad),    # (1, H_pad) f32
        ]
    kernel_inputs += [
        pad2(params["fc_w"].T, H_pad, O_pad).astype(jnp.bfloat16),      # (H_pad, O_pad)
        jnp.pad(params["fc_b"], (0, O_pad - O)).reshape(1, O_pad),      # (1, O_pad) f32
    ]

    scratch_shapes = [
        pltpu.VMEM((3, T * B_pad, H_pad), jnp.float32),   # per-gate hoisted input proj
        pltpu.VMEM((T * B_pad, H_pad), jnp.float32),      # inter-layer hidden sequence
    ]

    # Explicit VMEM budget: no grid, so everything is resident once; size the limit.
    in_bytes = sum(int(np.prod(a.shape)) * jnp.dtype(a.dtype).itemsize
                   for a in kernel_inputs)
    scr_bytes = (3 + 1) * T * B_pad * H_pad * 4
    out_bytes = B_pad * O_pad * 4
    vmem_limit = int(min(64 << 20,
                         max(16 << 20,
                             2 * (in_bytes + scr_bytes + out_bytes) + (2 << 20))))

    kernel = make_fused_gru_kernel(num_layers, T, B_pad, H_pad)
    out_pad = pl.pallas_call(
        kernel,
        out_shape=jax.ShapeDtypeStruct((B_pad, O_pad), jnp.float32),
        in_specs=[pl.BlockSpec(memory_space=pltpu.MemorySpace.VMEM)
                  for _ in kernel_inputs],
        out_specs=pl.BlockSpec(memory_space=pltpu.MemorySpace.VMEM),
        scratch_shapes=scratch_shapes,
        compiler_params=pltpu.CompilerParams(vmem_limit_bytes=vmem_limit),
    )(*kernel_inputs)

    return out_pad[:B, :O].reshape(-1, pred_len, 1)


# ---------------------------- Pure-JAX reference ------------------------------

def gru_forecast_ref(x, params, pred_len):
    B, T, D = x.shape
    H = params["hidden_dim"]
    h_seq = jnp.transpose(x, (1, 0, 2)).astype(jnp.float32)        # (T, B, D)
    for lp in params["layers"]:
        w_ih_T, w_hh_T = lp["w_ih"].T, lp["w_hh"].T
        b_ih, b_hh = lp["b_ih"], lp["b_hh"]

        def step(h_prev, x_t, w_ih_T=w_ih_T, w_hh_T=w_hh_T, b_ih=b_ih, b_hh=b_hh):
            gi = x_t @ w_ih_T + b_ih
            gh = h_prev @ w_hh_T + b_hh
            r = jax.nn.sigmoid(gi[:, :H] + gh[:, :H])
            z = jax.nn.sigmoid(gi[:, H:2 * H] + gh[:, H:2 * H])
            n = jnp.tanh(gi[:, 2 * H:] + r * gh[:, 2 * H:])
            h_new = (1.0 - z) * n + z * h_prev
            return h_new, h_new

        _, h_seq = jax.lax.scan(step, jnp.zeros((B, H), jnp.float32), h_seq)
    out = h_seq[-1] @ params["fc_w"].T + params["fc_b"]
    return out.reshape(-1, pred_len, 1)


# ----------------------------------- Main --------------------------------------

if __name__ == "__main__":
    B, T = 2, 8
    input_dim, hidden_dim, num_layers = 4, 32, 2
    output_dim, pred_len = 1, 4

    key = jax.random.PRNGKey(0)
    key, kx, kp = jax.random.split(key, 3)
    x = jax.random.normal(kx, (B, T, input_dim), jnp.float32)   # (batch, seq, input_dim)
    params = init_params(kp, input_dim, hidden_dim, num_layers, output_dim, pred_len)

    out = jax.block_until_ready(gru_forecast(x, params, pred_len))
    assert out.shape == (B * output_dim, pred_len, 1), out.shape

    ref = jax.block_until_ready(gru_forecast_ref(x, params, pred_len))
    # bf16 MXU operands in the kernel vs f32 reference -> loosened tolerance.
    np.testing.assert_allclose(np.asarray(out), np.asarray(ref), rtol=5e-2, atol=5e-2)

    print("KERNEL_OK")
</pallas_src>

<mosaic_0001>
module attributes {stable_mosaic.version = 11 : i64} {
  func.func @kernel(%arg0: memref<64x128xbf16, #tpu.memory_space<vmem>>, %arg1: memref<3x128x128xbf16, #tpu.memory_space<vmem>>, %arg2: memref<3x128x128xbf16, #tpu.memory_space<vmem>>, %arg3: memref<3x1x128xf32, #tpu.memory_space<vmem>>, %arg4: memref<1x128xf32, #tpu.memory_space<vmem>>, %arg5: memref<3x128x128xbf16, #tpu.memory_space<vmem>>, %arg6: memref<3x128x128xbf16, #tpu.memory_space<vmem>>, %arg7: memref<3x1x128xf32, #tpu.memory_space<vmem>>, %arg8: memref<1x128xf32, #tpu.memory_space<vmem>>, %arg9: memref<128x128xbf16, #tpu.memory_space<vmem>>, %arg10: memref<1x128xf32, #tpu.memory_space<vmem>>, %arg11: memref<8x128xf32, #tpu.memory_space<vmem>>, %arg12: memref<3x64x128xf32, #tpu.memory_space<vmem>>, %arg13: memref<64x128xf32, #tpu.memory_space<vmem>>) attributes {dimension_semantics = [], scalar_prefetch = 0 : i64, scratch_operands = 2 : i64, tpu.core_type = #tpu.core_type<tc>} {
    %c0 = arith.constant 0 : index
    %c0_0 = arith.constant 0 : index
    %0 = vector.load %arg0[%c0, %c0_0] : memref<64x128xbf16, #tpu.memory_space<vmem>>, vector<64x128xbf16>
    %c0_1 = arith.constant 0 : index
    %c0_2 = arith.constant 0 : index
    %c0_3 = arith.constant 0 : index
    %1 = vector.load %arg1[%c0_1, %c0_2, %c0_3] : memref<3x128x128xbf16, #tpu.memory_space<vmem>>, vector<1x128x128xbf16>
    %2 = vector.shape_cast %1 : vector<1x128x128xbf16> to vector<128x128xbf16>
    %cst = arith.constant dense<0.000000e+00> : vector<64x128xf32>
    %3 = tpu.matmul %0, %2, %cst {dimension_numbers = #tpu.dot_dimension_numbers<[1], [0], [0], [1], [0, 0, 1, 1], [], []>} : vector<64x128xbf16>, vector<128x128xbf16>, vector<64x128xf32> -> vector<64x128xf32>
    %c0_4 = arith.constant 0 : index
    %c0_5 = arith.constant 0 : index
    %c0_6 = arith.constant 0 : index
    %4 = vector.load %arg3[%c0_4, %c0_5, %c0_6] : memref<3x1x128xf32, #tpu.memory_space<vmem>>, vector<1x1x128xf32>
    %5 = vector.shape_cast %4 : vector<1x1x128xf32> to vector<1x128xf32>
    %6 = vector.broadcast %5 : vector<1x128xf32> to vector<64x128xf32>
    %7 = arith.addf %3, %6 : vector<64x128xf32>
    %c0_7 = arith.constant 0 : index
    %c0_8 = arith.constant 0 : index
    %c0_9 = arith.constant 0 : index
    %8 = vector.load %arg12[%c0_7, %c0_8, %c0_9] : memref<3x64x128xf32, #tpu.memory_space<vmem>>, vector<1x64x128xf32>
    %9 = vector.shape_cast %8 : vector<1x64x128xf32> to vector<64x128xf32>
    %10 = vector.shape_cast %7 : vector<64x128xf32> to vector<1x64x128xf32>
    tpu.vector_store %arg12[%c0_7, %c0_8, %c0_9], %10 {strides = array<i32>} : memref<3x64x128xf32, #tpu.memory_space<vmem>>, vector<1x64x128xf32>,
    %c1 = arith.constant 1 : index
    %c0_10 = arith.constant 0 : index
    %c0_11 = arith.constant 0 : index
    %11 = vector.load %arg1[%c1, %c0_10, %c0_11] : memref<3x128x128xbf16, #tpu.memory_space<vmem>>, vector<1x128x128xbf16>
    %12 = vector.shape_cast %11 : vector<1x128x128xbf16> to vector<128x128xbf16>
    %cst_12 = arith.constant dense<0.000000e+00> : vector<64x128xf32>
    %13 = tpu.matmul %0, %12, %cst_12 {dimension_numbers = #tpu.dot_dimension_numbers<[1], [0], [0], [1], [0, 0, 1, 1], [], []>} : vector<64x128xbf16>, vector<128x128xbf16>, vector<64x128xf32> -> vector<64x128xf32>
    %c1_13 = arith.constant 1 : index
    %c0_14 = arith.constant 0 : index
    %c0_15 = arith.constant 0 : index
    %14 = vector.load %arg3[%c1_13, %c0_14, %c0_15] : memref<3x1x128xf32, #tpu.memory_space<vmem>>, vector<1x1x128xf32>
    %15 = vector.shape_cast %14 : vector<1x1x128xf32> to vector<1x128xf32>
    %16 = vector.broadcast %15 : vector<1x128xf32> to vector<64x128xf32>
    %17 = arith.addf %13, %16 : vector<64x128xf32>
    %c1_16 = arith.constant 1 : index
    %c0_17 = arith.constant 0 : index
    %c0_18 = arith.constant 0 : index
    %18 = vector.load %arg12[%c1_16, %c0_17, %c0_18] : memref<3x64x128xf32, #tpu.memory_space<vmem>>, vector<1x64x128xf32>
    %19 = vector.shape_cast %18 : vector<1x64x128xf32> to vector<64x128xf32>
    %20 = vector.shape_cast %17 : vector<64x128xf32> to vector<1x64x128xf32>
    tpu.vector_store %arg12[%c1_16, %c0_17, %c0_18], %20 {strides = array<i32>} : memref<3x64x128xf32, #tpu.memory_space<vmem>>, vector<1x64x128xf32>,
    %c2 = arith.constant 2 : index
    %c0_19 = arith.constant 0 : index
    %c0_20 = arith.constant 0 : index
    %21 = vector.load %arg1[%c2, %c0_19, %c0_20] : memref<3x128x128xbf16, #tpu.memory_space<vmem>>, vector<1x128x128xbf16>
    %22 = vector.shape_cast %21 : vector<1x128x128xbf16> to vector<128x128xbf16>
    %cst_21 = arith.constant dense<0.000000e+00> : vector<64x128xf32>
    %23 = tpu.matmul %0, %22, %cst_21 {dimension_numbers = #tpu.dot_dimension_numbers<[1], [0], [0], [1], [0, 0, 1, 1], [], []>} : vector<64x128xbf16>, vector<128x128xbf16>, vector<64x128xf32> -> vector<64x128xf32>
    %c2_22 = arith.constant 2 : index
    %c0_23 = arith.constant 0 : index
    %c0_24 = arith.constant 0 : index
    %24 = vector.load %arg3[%c2_22, %c0_23, %c0_24] : memref<3x1x128xf32, #tpu.memory_space<vmem>>, vector<1x1x128xf32>
    %25 = vector.shape_cast %24 : vector<1x1x128xf32> to vector<1x128xf32>
    %26 = vector.broadcast %25 : vector<1x128xf32> to vector<64x128xf32>
    %27 = arith.addf %23, %26 : vector<64x128xf32>
    %c2_25 = arith.constant 2 : index
    %c0_26 = arith.constant 0 : index
    %c0_27 = arith.constant 0 : index
    %28 = vector.load %arg12[%c2_25, %c0_26, %c0_27] : memref<3x64x128xf32, #tpu.memory_space<vmem>>, vector<1x64x128xf32>
    %29 = vector.shape_cast %28 : vector<1x64x128xf32> to vector<64x128xf32>
    %30 = vector.shape_cast %27 : vector<64x128xf32> to vector<1x64x128xf32>
    tpu.vector_store %arg12[%c2_25, %c0_26, %c0_27], %30 {strides = array<i32>} : memref<3x64x128xf32, #tpu.memory_space<vmem>>, vector<1x64x128xf32>,
    %c0_28 = arith.constant 0 : index
    %c0_29 = arith.constant 0 : index
    %31 = vector.load %arg4[%c0_28, %c0_29] : memref<1x128xf32, #tpu.memory_space<vmem>>, vector<1x128xf32>
    %32 = vector.shape_cast %31 : vector<1x128xf32> to vector<1x128xf32>
    %33 = vector.broadcast %32 : vector<1x128xf32> to vector<8x128xf32>
    %cst_30 = arith.constant 0.000000e+00 : f32
    %34 = vector.broadcast %cst_30 : f32 to vector<8x128xf32>
    %c0_i32 = arith.constant 0 : i32
    %c1_i32 = arith.constant 1 : i32
    %c2_i32 = arith.constant 2 : i32
    %c0_i32_31 = arith.constant 0 : i32
    %c8_i32 = arith.constant 8 : i32
    %35 = arith.muli %c0_i32_31, %c8_i32 : i32
    %36 = tpu.assume_multiple %35, 8 : i32
    %37 = arith.truncf %34 : vector<8x128xf32> to vector<8x128xbf16>
    %c0_32 = arith.constant 0 : index
    %c0_33 = arith.constant 0 : index
    %c0_34 = arith.constant 0 : index
    %38 = vector.load %arg2[%c0_32, %c0_33, %c0_34] : memref<3x128x128xbf16, #tpu.memory_space<vmem>>, vector<1x128x128xbf16>
    %39 = vector.shape_cast %38 : vector<1x128x128xbf16> to vector<128x128xbf16>
    %cst_35 = arith.constant dense<0.000000e+00> : vector<8x128xf32>
    %40 = tpu.matmul %37, %39, %cst_35 {dimension_numbers = #tpu.dot_dimension_numbers<[1], [0], [0], [1], [0, 0, 1, 1], [], []>} : vector<8x128xbf16>, vector<128x128xbf16>, vector<8x128xf32> -> vector<8x128xf32>
    %c1_36 = arith.constant 1 : index
    %c0_37 = arith.constant 0 : index
    %c0_38 = arith.constant 0 : index
    %41 = vector.load %arg2[%c1_36, %c0_37, %c0_38] : memref<3x128x128xbf16, #tpu.memory_space<vmem>>, vector<1x128x128xbf16>
    %42 = vector.shape_cast %41 : vector<1x128x128xbf16> to vector<128x128xbf16>
    %cst_39 = arith.constant dense<0.000000e+00> : vector<8x128xf32>
    %43 = tpu.matmul %37, %42, %cst_39 {dimension_numbers = #tpu.dot_dimension_numbers<[1], [0], [0], [1], [0, 0, 1, 1], [], []>} : vector<8x128xbf16>, vector<128x128xbf16>, vector<8x128xf32> -> vector<8x128xf32>
    %c2_40 = arith.constant 2 : index
    %c0_41 = arith.constant 0 : index
    %c0_42 = arith.constant 0 : index
    %44 = vector.load %arg2[%c2_40, %c0_41, %c0_42] : memref<3x128x128xbf16, #tpu.memory_space<vmem>>, vector<1x128x128xbf16>
    %45 = vector.shape_cast %44 : vector<1x128x128xbf16> to vector<128x128xbf16>
    %cst_43 = arith.constant dense<0.000000e+00> : vector<8x128xf32>
    %46 = tpu.matmul %37, %45, %cst_43 {dimension_numbers = #tpu.dot_dimension_numbers<[1], [0], [0], [1], [0, 0, 1, 1], [], []>} : vector<8x128xbf16>, vector<128x128xbf16>, vector<8x128xf32> -> vector<8x128xf32>
    %c0_i32_44 = arith.constant 0 : i32
    %c0_i32_45 = arith.constant 0 : i32
    %47 = tpu.memref_slice %arg12[%c0_i32, %c0_i32_44, %c0_i32_45] : memref<3x64x128xf32, #tpu.memory_space<vmem>> -> memref<1x64x128xf32, #tpu.memory_space<vmem>>
    %48 = tpu.memref_squeeze %47 : memref<1x64x128xf32, #tpu.memory_space<vmem>> -> memref<64x128xf32, #tpu.memory_space<vmem>>
    %49 = arith.index_cast %36 : i32 to index
    %c0_46 = arith.constant 0 : index
    %50 = vector.load %48[%49, %c0_46] : memref<64x128xf32, #tpu.memory_space<vmem>>, vector<8x128xf32>
    %51 = arith.addf %50, %40 : vector<8x128xf32>
    %52 = arith.negf %51 : vector<8x128xf32>
    %53 = math.exp %52 : vector<8x128xf32>
    %cst_47 = arith.constant 1.000000e+00 : f32
    %54 = vector.broadcast %cst_47 : f32 to vector<8x128xf32>
    %55 = arith.addf %54, %53 : vector<8x128xf32>
    %56 = arith.divf %54, %55 : vector<8x128xf32>
    %c0_i32_48 = arith.constant 0 : i32
    %c0_i32_49 = arith.constant 0 : i32
    %57 = tpu.memref_slice %arg12[%c1_i32, %c0_i32_48, %c0_i32_49] : memref<3x64x128xf32, #tpu.memory_space<vmem>> -> memref<1x64x128xf32, #tpu.memory_space<vmem>>
    %58 = tpu.memref_squeeze %57 : memref<1x64x128xf32, #tpu.memory_space<vmem>> -> memref<64x128xf32, #tpu.memory_space<vmem>>
    %59 = arith.index_cast %36 : i32 to index
    %c0_50 = arith.constant 0 : index
    %60 = vector.load %58[%59, %c0_50] : memref<64x128xf32, #tpu.memory_space<vmem>>, vector<8x128xf32>
    %61 = arith.addf %60, %43 : vector<8x128xf32>
    %62 = arith.negf %61 : vector<8x128xf32>
    %63 = math.exp %62 : vector<8x128xf32>
    %cst_51 = arith.constant 1.000000e+00 : f32
    %64 = vector.broadcast %cst_51 : f32 to vector<8x128xf32>
    %65 = arith.addf %64, %63 : vector<8x128xf32>
    %66 = arith.divf %64, %65 : vector<8x128xf32>
    %c0_i32_52 = arith.constant 0 : i32
    %c0_i32_53 = arith.constant 0 : i32
    %67 = tpu.memref_slice %arg12[%c2_i32, %c0_i32_52, %c0_i32_53] : memref<3x64x128xf32, #tpu.memory_space<vmem>> -> memref<1x64x128xf32, #tpu.memory_space<vmem>>
    %68 = tpu.memref_squeeze %67 : memref<1x64x128xf32, #tpu.memory_space<vmem>> -> memref<64x128xf32, #tpu.memory_space<vmem>>
    %69 = arith.index_cast %36 : i32 to index
    %c0_54 = arith.constant 0 : index
    %70 = vector.load %68[%69, %c0_54] : memref<64x128xf32, #tpu.memory_space<vmem>>, vector<8x128xf32>
    %71 = arith.addf %46, %33 : vector<8x128xf32>
    %72 = arith.mulf %56, %71 : vector<8x128xf32>
    %73 = arith.addf %70, %72 : vector<8x128xf32>
    %74 = math.tanh %73 : vector<8x128xf32>
    %cst_55 = arith.constant 1.000000e+00 : f32
    %75 = vector.broadcast %cst_55 : f32 to vector<8x128xf32>
    %76 = arith.subf %75, %66 : vector<8x128xf32>
    %77 = arith.mulf %76, %74 : vector<8x128xf32>
    %78 = arith.mulf %66, %34 : vector<8x128xf32>
    %79 = arith.addf %77, %78 : vector<8x128xf32>
    %80 = arith.index_cast %36 : i32 to index
    %c0_56 = arith.constant 0 : index
    %81 = vector.load %arg13[%80, %c0_56] : memref<64x128xf32, #tpu.memory_space<vmem>>, vector<8x128xf32>
    tpu.vector_store %arg13[%80, %c0_56], %79 {strides = array<i32>} : memref<64x128xf32, #tpu.memory_space<vmem>>, vector<8x128xf32>,
    %c1_i32_57 = arith.constant 1 : i32
    %c8_i32_58 = arith.constant 8 : i32
    %82 = arith.muli %c1_i32_57, %c8_i32_58 : i32
    %83 = tpu.assume_multiple %82, 8 : i32
    %84 = arith.truncf %79 : vector<8x128xf32> to vector<8x128xbf16>
    %c0_59 = arith.constant 0 : index
    %c0_60 = arith.constant 0 : index
    %c0_61 = arith.constant 0 : index
    %85 = vector.load %arg2[%c0_59, %c0_60, %c0_61] : memref<3x128x128xbf16, #tpu.memory_space<vmem>>, vector<1x128x128xbf16>
    %86 = vector.shape_cast %85 : vector<1x128x128xbf16> to vector<128x128xbf16>
    %cst_62 = arith.constant dense<0.000000e+00> : vector<8x128xf32>
    %87 = tpu.matmul %84, %86, %cst_62 {dimension_numbers = #tpu.dot_dimension_numbers<[1], [0], [0], [1], [0, 0, 1, 1], [], []>} : vector<8x128xbf16>, vector<128x128xbf16>, vector<8x128xf32> -> vector<8x128xf32>
    %c1_63 = arith.constant 1 : index
    %c0_64 = arith.constant 0 : index
    %c0_65 = arith.constant 0 : index
    %88 = vector.load %arg2[%c1_63, %c0_64, %c0_65] : memref<3x128x128xbf16, #tpu.memory_space<vmem>>, vector<1x128x128xbf16>
    %89 = vector.shape_cast %88 : vector<1x128x128xbf16> to vector<128x128xbf16>
    %cst_66 = arith.constant dense<0.000000e+00> : vector<8x128xf32>
    %90 = tpu.matmul %84, %89, %cst_66 {dimension_numbers = #tpu.dot_dimension_numbers<[1], [0], [0], [1], [0, 0, 1, 1], [], []>} : vector<8x128xbf16>, vector<128x128xbf16>, vector<8x128xf32> -> vector<8x128xf32>
    %c2_67 = arith.constant 2 : index
    %c0_68 = arith.constant 0 : index
    %c0_69 = arith.constant 0 : index
    %91 = vector.load %arg2[%c2_67, %c0_68, %c0_69] : memref<3x128x128xbf16, #tpu.memory_space<vmem>>, vector<1x128x128xbf16>
    %92 = vector.shape_cast %91 : vector<1x128x128xbf16> to vector<128x128xbf16>
    %cst_70 = arith.constant dense<0.000000e+00> : vector<8x128xf32>
    %93 = tpu.matmul %84, %92, %cst_70 {dimension_numbers = #tpu.dot_dimension_numbers<[1], [0], [0], [1], [0, 0, 1, 1], [], []>} : vector<8x128xbf16>, vector<128x128xbf16>, vector<8x128xf32> -> vector<8x128xf32>
    %c0_i32_71 = arith.constant 0 : i32
    %c0_i32_72 = arith.constant 0 : i32
    %94 = tpu.memref_slice %arg12[%c0_i32, %c0_i32_71, %c0_i32_72] : memref<3x64x128xf32, #tpu.memory_space<vmem>> -> memref<1x64x128xf32, #tpu.memory_space<vmem>>
    %95 = tpu.memref_squeeze %94 : memref<1x64x128xf32, #tpu.memory_space<vmem>> -> memref<64x128xf32, #tpu.memory_space<vmem>>
    %96 = arith.index_cast %83 : i32 to index
    %c0_73 = arith.constant 0 : index
    %97 = vector.load %95[%96, %c0_73] : memref<64x128xf32, #tpu.memory_space<vmem>>, vector<8x128xf32>
    %98 = arith.addf %97, %87 : vector<8x128xf32>
    %99 = arith.negf %98 : vector<8x128xf32>
    %100 = math.exp %99 : vector<8x128xf32>
    %cst_74 = arith.constant 1.000000e+00 : f32
    %101 = vector.broadcast %cst_74 : f32 to vector<8x128xf32>
    %102 = arith.addf %101, %100 : vector<8x128xf32>
    %103 = arith.divf %101, %102 : vector<8x128xf32>
    %c0_i32_75 = arith.constant 0 : i32
    %c0_i32_76 = arith.constant 0 : i32
    %104 = tpu.memref_slice %arg12[%c1_i32, %c0_i32_75, %c0_i32_76] : memref<3x64x128xf32, #tpu.memory_space<vmem>> -> memref<1x64x128xf32, #tpu.memory_space<vmem>>
    %105 = tpu.memref_squeeze %104 : memref<1x64x128xf32, #tpu.memory_space<vmem>> -> memref<64x128xf32, #tpu.memory_space<vmem>>
    %106 = arith.index_cast %83 : i32 to index
    %c0_77 = arith.constant 0 : index
    %107 = vector.load %105[%106, %c0_77] : memref<64x128xf32, #tpu.memory_space<vmem>>, vector<8x128xf32>
    %108 = arith.addf %107, %90 : vector<8x128xf32>
    %109 = arith.negf %108 : vector<8x128xf32>
    %110 = math.exp %109 : vector<8x128xf32>
    %cst_78 = arith.constant 1.000000e+00 : f32
    %111 = vector.broadcast %cst_78 : f32 to vector<8x128xf32>
    %112 = arith.addf %111, %110 : vector<8x128xf32>
    %113 = arith.divf %111, %112 : vector<8x128xf32>
    %c0_i32_79 = arith.constant 0 : i32
    %c0_i32_80 = arith.constant 0 : i32
    %114 = tpu.memref_slice %arg12[%c2_i32, %c0_i32_79, %c0_i32_80] : memref<3x64x128xf32, #tpu.memory_space<vmem>> -> memref<1x64x128xf32, #tpu.memory_space<vmem>>
    %115 = tpu.memref_squeeze %114 : memref<1x64x128xf32, #tpu.memory_space<vmem>> -> memref<64x128xf32, #tpu.memory_space<vmem>>
    %116 = arith.index_cast %83 : i32 to index
    %c0_81 = arith.constant 0 : index
    %117 = vector.load %115[%116, %c0_81] : memref<64x128xf32, #tpu.memory_space<vmem>>, vector<8x128xf32>
    %118 = arith.addf %93, %33 : vector<8x128xf32>
    %119 = arith.mulf %103, %118 : vector<8x128xf32>
    %120 = arith.addf %117, %119 : vector<8x128xf32>
    %121 = math.tanh %120 : vector<8x128xf32>
    %cst_82 = arith.constant 1.000000e+00 : f32
    %122 = vector.broadcast %cst_82 : f32 to vector<8x128xf32>
    %123 = arith.subf %122, %113 : vector<8x128xf32>
    %124 = arith.mulf %123, %121 : vector<8x128xf32>
    %125 = arith.mulf %113, %79 : vector<8x128xf32>
    %126 = arith.addf %124, %125 : vector<8x128xf32>
    %127 = arith.index_cast %83 : i32 to index
    %c0_83 = arith.constant 0 : index
    %128 = vector.load %arg13[%127, %c0_83] : memref<64x128xf32, #tpu.memory_space<vmem>>, vector<8x128xf32>
    tpu.vector_store %arg13[%127, %c0_83], %126 {strides = array<i32>} : memref<64x128xf32, #tpu.memory_space<vmem>>, vector<8x128xf32>,
    %c2_i32_84 = arith.constant 2 : i32
    %c8_i32_85 = arith.constant 8 : i32
    %129 = arith.muli %c2_i32_84, %c8_i32_85 : i32
    %130 = tpu.assume_multiple %129, 8 : i32
    %131 = arith.truncf %126 : vector<8x128xf32> to vector<8x128xbf16>
    %c0_86 = arith.constant 0 : index
    %c0_87 = arith.constant 0 : index
    %c0_88 = arith.constant 0 : index
    %132 = vector.load %arg2[%c0_86, %c0_87, %c0_88] : memref<3x128x128xbf16, #tpu.memory_space<vmem>>, vector<1x128x128xbf16>
    %133 = vector.shape_cast %132 : vector<1x128x128xbf16> to vector<128x128xbf16>
    %cst_89 = arith.constant dense<0.000000e+00> : vector<8x128xf32>
    %134 = tpu.matmul %131, %133, %cst_89 {dimension_numbers = #tpu.dot_dimension_numbers<[1], [0], [0], [1], [0, 0, 1, 1], [], []>} : vector<8x128xbf16>, vector<128x128xbf16>, vector<8x128xf32> -> vector<8x128xf32>
    %c1_90 = arith.constant 1 : index
    %c0_91 = arith.constant 0 : index
    %c0_92 = arith.constant 0 : index
    %135 = vector.load %arg2[%c1_90, %c0_91, %c0_92] : memref<3x128x128xbf16, #tpu.memory_space<vmem>>, vector<1x128x128xbf16>
    %136 = vector.shape_cast %135 : vector<1x128x128xbf16> to vector<128x128xbf16>
    %cst_93 = arith.constant dense<0.000000e+00> : vector<8x128xf32>
    %137 = tpu.matmul %131, %136, %cst_93 {dimension_numbers = #tpu.dot_dimension_numbers<[1], [0], [0], [1], [0, 0, 1, 1], [], []>} : vector<8x128xbf16>, vector<128x128xbf16>, vector<8x128xf32> -> vector<8x128xf32>
    %c2_94 = arith.constant 2 : index
    %c0_95 = arith.constant 0 : index
    %c0_96 = arith.constant 0 : index
    %138 = vector.load %arg2[%c2_94, %c0_95, %c0_96] : memref<3x128x128xbf16, #tpu.memory_space<vmem>>, vector<1x128x128xbf16>
    %139 = vector.shape_cast %138 : vector<1x128x128xbf16> to vector<128x128xbf16>
    %cst_97 = arith.constant dense<0.000000e+00> : vector<8x128xf32>
    %140 = tpu.matmul %131, %139, %cst_97 {dimension_numbers = #tpu.dot_dimension_numbers<[1], [0], [0], [1], [0, 0, 1, 1], [], []>} : vector<8x128xbf16>, vector<128x128xbf16>, vector<8x128xf32> -> vector<8x128xf32>
    %c0_i32_98 = arith.constant 0 : i32
    %c0_i32_99 = arith.constant 0 : i32
    %141 = tpu.memref_slice %arg12[%c0_i32, %c0_i32_98, %c0_i32_99] : memref<3x64x128xf32, #tpu.memory_space<vmem>> -> memref<1x64x128xf32, #tpu.memory_space<vmem>>
    %142 = tpu.memref_squeeze %141 : memref<1x64x128xf32, #tpu.memory_space<vmem>> -> memref<64x128xf32, #tpu.memory_space<vmem>>
    %143 = arith.index_cast %130 : i32 to index
    %c0_100 = arith.constant 0 : index
    %144 = vector.load %142[%143, %c0_100] : memref<64x128xf32, #tpu.memory_space<vmem>>, vector<8x128xf32>
    %145 = arith.addf %144, %134 : vector<8x128xf32>
    %146 = arith.negf %145 : vector<8x128xf32>
    %147 = math.exp %146 : vector<8x128xf32>
    %cst_101 = arith.constant 1.000000e+00 : f32
    %148 = vector.broadcast %cst_101 : f32 to vector<8x128xf32>
    %149 = arith.addf %148, %147 : vector<8x128xf32>
    %150 = arith.divf %148, %149 : vector<8x128xf32>
    %c0_i32_102 = arith.constant 0 : i32
    %c0_i32_103 = arith.constant 0 : i32
    %151 = tpu.memref_slice %arg12[%c1_i32, %c0_i32_102, %c0_i32_103] : memref<3x64x128xf32, #tpu.memory_space<vmem>> -> memref<1x64x128xf32, #tpu.memory_space<vmem>>
    %152 = tpu.memref_squeeze %151 : memref<1x64x128xf32, #tpu.memory_space<vmem>> -> memref<64x128xf32, #tpu.memory_space<vmem>>
    %153 = arith.index_cast %130 : i32 to index
    %c0_104 = arith.constant 0 : index
    %154 = vector.load %152[%153, %c0_104] : memref<64x128xf32, #tpu.memory_space<vmem>>, vector<8x128xf32>
    %155 = arith.addf %154, %137 : vector<8x128xf32>
    %156 = arith.negf %155 : vector<8x128xf32>
    %157 = math.exp %156 : vector<8x128xf32>
    %cst_105 = arith.constant 1.000000e+00 : f32
    %158 = vector.broadcast %cst_105 : f32 to vector<8x128xf32>
    %159 = arith.addf %158, %157 : vector<8x128xf32>
    %160 = arith.divf %158, %159 : vector<8x128xf32>
    %c0_i32_106 = arith.constant 0 : i32
    %c0_i32_107 = arith.constant 0 : i32
    %161 = tpu.memref_slice %arg12[%c2_i32, %c0_i32_106, %c0_i32_107] : memref<3x64x128xf32, #tpu.memory_space<vmem>> -> memref<1x64x128xf32, #tpu.memory_space<vmem>>
    %162 = tpu.memref_squeeze %161 : memref<1x64x128xf32, #tpu.memory_space<vmem>> -> memref<64x128xf32, #tpu.memory_space<vmem>>
    %163 = arith.index_cast %130 : i32 to index
    %c0_108 = arith.constant 0 : index
    %164 = vector.load %162[%163, %c0_108] : memref<64x128xf32, #tpu.memory_space<vmem>>, vector<8x128xf32>
    %165 = arith.addf %140, %33 : vector<8x128xf32>
    %166 = arith.mulf %150, %165 : vector<8x128xf32>
    %167 = arith.addf %164, %166 : vector<8x128xf32>
    %168 = math.tanh %167 : vector<8x128xf32>
    %cst_109 = arith.constant 1.000000e+00 : f32
    %169 = vector.broadcast %cst_109 : f32 to vector<8x128xf32>
    %170 = arith.subf %169, %160 : vector<8x128xf32>
    %171 = arith.mulf %170, %168 : vector<8x128xf32>
    %172 = arith.mulf %160, %126 : vector<8x128xf32>
    %173 = arith.addf %171, %172 : vector<8x128xf32>
    %174 = arith.index_cast %130 : i32 to index
    %c0_110 = arith.constant 0 : index
    %175 = vector.load %arg13[%174, %c0_110] : memref<64x128xf32, #tpu.memory_space<vmem>>, vector<8x128xf32>
    tpu.vector_store %arg13[%174, %c0_110], %173 {strides = array<i32>} : memref<64x128xf32, #tpu.memory_space<vmem>>, vector<8x128xf32>,
    %c3_i32 = arith.constant 3 : i32
    %c8_i32_111 = arith.constant 8 : i32
    %176 = arith.muli %c3_i32, %c8_i32_111 : i32
    %177 = tpu.assume_multiple %176, 8 : i32
    %178 = arith.truncf %173 : vector<8x128xf32> to vector<8x128xbf16>
    %c0_112 = arith.constant 0 : index
    %c0_113 = arith.constant 0 : index
    %c0_114 = arith.constant 0 : index
    %179 = vector.load %arg2[%c0_112, %c0_113, %c0_114] : memref<3x128x128xbf16, #tpu.memory_space<vmem>>, vector<1x128x128xbf16>
    %180 = vector.shape_cast %179 : vector<1x128x128xbf16> to vector<128x128xbf16>
    %cst_115 = arith.constant dense<0.000000e+00> : vector<8x128xf32>
    %181 = tpu.matmul %178, %180, %cst_115 {dimension_numbers = #tpu.dot_dimension_numbers<[1], [0], [0], [1], [0, 0, 1, 1], [], []>} : vector<8x128xbf16>, vector<128x128xbf16>, vector<8x128xf32> -> vector<8x128xf32>
    %c1_116 = arith.constant 1 : index
    %c0_117 = arith.constant 0 : index
    %c0_118 = arith.constant 0 : index
    %182 = vector.load %arg2[%c1_116, %c0_117, %c0_118] : memref<3x128x128xbf16, #tpu.memory_space<vmem>>, vector<1x128x128xbf16>
    %183 = vector.shape_cast %182 : vector<1x128x128xbf16> to vector<128x128xbf16>
    %cst_119 = arith.constant dense<0.000000e+00> : vector<8x128xf32>
    %184 = tpu.matmul %178, %183, %cst_119 {dimension_numbers = #tpu.dot_dimension_numbers<[1], [0], [0], [1], [0, 0, 1, 1], [], []>} : vector<8x128xbf16>, vector<128x128xbf16>, vector<8x128xf32> -> vector<8x128xf32>
    %c2_120 = arith.constant 2 : index
    %c0_121 = arith.constant 0 : index
    %c0_122 = arith.constant 0 : index
    %185 = vector.load %arg2[%c2_120, %c0_121, %c0_122] : memref<3x128x128xbf16, #tpu.memory_space<vmem>>, vector<1x128x128xbf16>
    %186 = vector.shape_cast %185 : vector<1x128x128xbf16> to vector<128x128xbf16>
    %cst_123 = arith.constant dense<0.000000e+00> : vector<8x128xf32>
    %187 = tpu.matmul %178, %186, %cst_123 {dimension_numbers = #tpu.dot_dimension_numbers<[1], [0], [0], [1], [0, 0, 1, 1], [], []>} : vector<8x128xbf16>, vector<128x128xbf16>, vector<8x128xf32> -> vector<8x128xf32>
    %c0_i32_124 = arith.constant 0 : i32
    %c0_i32_125 = arith.constant 0 : i32
    %188 = tpu.memref_slice %arg12[%c0_i32, %c0_i32_124, %c0_i32_125] : memref<3x64x128xf32, #tpu.memory_space<vmem>> -> memref<1x64x128xf32, #tpu.memory_space<vmem>>
    %189 = tpu.memref_squeeze %188 : memref<1x64x128xf32, #tpu.memory_space<vmem>> -> memref<64x128xf32, #tpu.memory_space<vmem>>
    %190 = arith.index_cast %177 : i32 to index
    %c0_126 = arith.constant 0 : index
    %191 = vector.load %189[%190, %c0_126] : memref<64x128xf32, #tpu.memory_space<vmem>>, vector<8x128xf32>
    %192 = arith.addf %191, %181 : vector<8x128xf32>
    %193 = arith.negf %192 : vector<8x128xf32>
    %194 = math.exp %193 : vector<8x128xf32>
    %cst_127 = arith.constant 1.000000e+00 : f32
    %195 = vector.broadcast %cst_127 : f32 to vector<8x128xf32>
    %196 = arith.addf %195, %194 : vector<8x128xf32>
    %197 = arith.divf %195, %196 : vector<8x128xf32>
    %c0_i32_128 = arith.constant 0 : i32
    %c0_i32_129 = arith.constant 0 : i32
    %198 = tpu.memref_slice %arg12[%c1_i32, %c0_i32_128, %c0_i32_129] : memref<3x64x128xf32, #tpu.memory_space<vmem>> -> memref<1x64x128xf32, #tpu.memory_space<vmem>>
    %199 = tpu.memref_squeeze %198 : memref<1x64x128xf32, #tpu.memory_space<vmem>> -> memref<64x128xf32, #tpu.memory_space<vmem>>
    %200 = arith.index_cast %177 : i32 to index
    %c0_130 = arith.constant 0 : index
    %201 = vector.load %199[%200, %c0_130] : memref<64x128xf32, #tpu.memory_space<vmem>>, vector<8x128xf32>
    %202 = arith.addf %201, %184 : vector<8x128xf32>
    %203 = arith.negf %202 : vector<8x128xf32>
    %204 = math.exp %203 : vector<8x128xf32>
    %cst_131 = arith.constant 1.000000e+00 : f32
    %205 = vector.broadcast %cst_131 : f32 to vector<8x128xf32>
    %206 = arith.addf %205, %204 : vector<8x128xf32>
    %207 = arith.divf %205, %206 : vector<8x128xf32>
    %c0_i32_132 = arith.constant 0 : i32
    %c0_i32_133 = arith.constant 0 : i32
    %208 = tpu.memref_slice %arg12[%c2_i32, %c0_i32_132, %c0_i32_133] : memref<3x64x128xf32, #tpu.memory_space<vmem>> -> memref<1x64x128xf32, #tpu.memory_space<vmem>>
    %209 = tpu.memref_squeeze %208 : memref<1x64x128xf32, #tpu.memory_space<vmem>> -> memref<64x128xf32, #tpu.memory_space<vmem>>
    %210 = arith.index_cast %177 : i32 to index
    %c0_134 = arith.constant 0 : index
    %211 = vector.load %209[%210, %c0_134] : memref<64x128xf32, #tpu.memory_space<vmem>>, vector<8x128xf32>
    %212 = arith.addf %187, %33 : vector<8x128xf32>
    %213 = arith.mulf %197, %212 : vector<8x128xf32>
    %214 = arith.addf %211, %213 : vector<8x128xf32>
    %215 = math.tanh %214 : vector<8x128xf32>
    %cst_135 = arith.constant 1.000000e+00 : f32
    %216 = vector.broadcast %cst_135 : f32 to vector<8x128xf32>
    %217 = arith.subf %216, %207 : vector<8x128xf32>
    %218 = arith.mulf %217, %215 : vector<8x128xf32>
    %219 = arith.mulf %207, %173 : vector<8x128xf32>
    %220 = arith.addf %218, %219 : vector<8x128xf32>
    %221 = arith.index_cast %177 : i32 to index
    %c0_136 = arith.constant 0 : index
    %222 = vector.load %arg13[%221, %c0_136] : memref<64x128xf32, #tpu.memory_space<vmem>>, vector<8x128xf32>
    tpu.vector_store %arg13[%221, %c0_136], %220 {strides = array<i32>} : memref<64x128xf32, #tpu.memory_space<vmem>>, vector<8x128xf32>,
    %c4_i32 = arith.constant 4 : i32
    %c8_i32_137 = arith.constant 8 : i32
    %223 = arith.muli %c4_i32, %c8_i32_137 : i32
    %224 = tpu.assume_multiple %223, 8 : i32
    %225 = arith.truncf %220 : vector<8x128xf32> to vector<8x128xbf16>
    %c0_138 = arith.constant 0 : index
    %c0_139 = arith.constant 0 : index
    %c0_140 = arith.constant 0 : index
    %226 = vector.load %arg2[%c0_138, %c0_139, %c0_140] : memref<3x128x128xbf16, #tpu.memory_space<vmem>>, vector<1x128x128xbf16>
    %227 = vector.shape_cast %226 : vector<1x128x128xbf16> to vector<128x128xbf16>
    %cst_141 = arith.constant dense<0.000000e+00> : vector<8x128xf32>
    %228 = tpu.matmul %225, %227, %cst_141 {dimension_numbers = #tpu.dot_dimension_numbers<[1], [0], [0], [1], [0, 0, 1, 1], [], []>} : vector<8x128xbf16>, vector<128x128xbf16>, vector<8x128xf32> -> vector<8x128xf32>
    %c1_142 = arith.constant 1 : index
    %c0_143 = arith.constant 0 : index
    %c0_144 = arith.constant 0 : index
    %229 = vector.load %arg2[%c1_142, %c0_143, %c0_144] : memref<3x128x128xbf16, #tpu.memory_space<vmem>>, vector<1x128x128xbf16>
    %230 = vector.shape_cast %229 : vector<1x128x128xbf16> to vector<128x128xbf16>
    %cst_145 = arith.constant dense<0.000000e+00> : vector<8x128xf32>
    %231 = tpu.matmul %225, %230, %cst_145 {dimension_numbers = #tpu.dot_dimension_numbers<[1], [0], [0], [1], [0, 0, 1, 1], [], []>} : vector<8x128xbf16>, vector<128x128xbf16>, vector<8x128xf32> -> vector<8x128xf32>
    %c2_146 = arith.constant 2 : index
    %c0_147 = arith.constant 0 : index
    %c0_148 = arith.constant 0 : index
    %232 = vector.load %arg2[%c2_146, %c0_147, %c0_148] : memref<3x128x128xbf16, #tpu.memory_space<vmem>>, vector<1x128x128xbf16>
    %233 = vector.shape_cast %232 : vector<1x128x128xbf16> to vector<128x128xbf16>
    %cst_149 = arith.constant dense<0.000000e+00> : vector<8x128xf32>
    %234 = tpu.matmul %225, %233, %cst_149 {dimension_numbers = #tpu.dot_dimension_numbers<[1], [0], [0], [1], [0, 0, 1, 1], [], []>} : vector<8x128xbf16>, vector<128x128xbf16>, vector<8x128xf32> -> vector<8x128xf32>
    %c0_i32_150 = arith.constant 0 : i32
    %c0_i32_151 = arith.constant 0 : i32
    %235 = tpu.memref_slice %arg12[%c0_i32, %c0_i32_150, %c0_i32_151] : memref<3x64x128xf32, #tpu.memory_space<vmem>> -> memref<1x64x128xf32, #tpu.memory_space<vmem>>
    %236 = tpu.memref_squeeze %235 : memref<1x64x128xf32, #tpu.memory_space<vmem>> -> memref<64x128xf32, #tpu.memory_space<vmem>>
    %237 = arith.index_cast %224 : i32 to index
    %c0_152 = arith.constant 0 : index
    %238 = vector.load %236[%237, %c0_152] : memref<64x128xf32, #tpu.memory_space<vmem>>, vector<8x128xf32>
    %239 = arith.addf %238, %228 : vector<8x128xf32>
    %240 = arith.negf %239 : vector<8x128xf32>
    %241 = math.exp %240 : vector<8x128xf32>
    %cst_153 = arith.constant 1.000000e+00 : f32
    %242 = vector.broadcast %cst_153 : f32 to vector<8x128xf32>
    %243 = arith.addf %242, %241 : vector<8x128xf32>
    %244 = arith.divf %242, %243 : vector<8x128xf32>
    %c0_i32_154 = arith.constant 0 : i32
    %c0_i32_155 = arith.constant 0 : i32
    %245 = tpu.memref_slice %arg12[%c1_i32, %c0_i32_154, %c0_i32_155] : memref<3x64x128xf32, #tpu.memory_space<vmem>> -> memref<1x64x128xf32, #tpu.memory_space<vmem>>
    %246 = tpu.memref_squeeze %245 : memref<1x64x128xf32, #tpu.memory_space<vmem>> -> memref<64x128xf32, #tpu.memory_space<vmem>>
    %247 = arith.index_cast %224 : i32 to index
    %c0_156 = arith.constant 0 : index
    %248 = vector.load %246[%247, %c0_156] : memref<64x128xf32, #tpu.memory_space<vmem>>, vector<8x128xf32>
    %249 = arith.addf %248, %231 : vector<8x128xf32>
    %250 = arith.negf %249 : vector<8x128xf32>
    %251 = math.exp %250 : vector<8x128xf32>
    %cst_157 = arith.constant 1.000000e+00 : f32
    %252 = vector.broadcast %cst_157 : f32 to vector<8x128xf32>
    %253 = arith.addf %252, %251 : vector<8x128xf32>
    %254 = arith.divf %252, %253 : vector<8x128xf32>
    %c0_i32_158 = arith.constant 0 : i32
    %c0_i32_159 = arith.constant 0 : i32
    %255 = tpu.memref_slice %arg12[%c2_i32, %c0_i32_158, %c0_i32_159] : memref<3x64x128xf32, #tpu.memory_space<vmem>> -> memref<1x64x128xf32, #tpu.memory_space<vmem>>
    %256 = tpu.memref_squeeze %255 : memref<1x64x128xf32, #tpu.memory_space<vmem>> -> memref<64x128xf32, #tpu.memory_space<vmem>>
    %257 = arith.index_cast %224 : i32 to index
    %c0_160 = arith.constant 0 : index
    %258 = vector.load %256[%257, %c0_160] : memref<64x128xf32, #tpu.memory_space<vmem>>, vector<8x128xf32>
    %259 = arith.addf %234, %33 : vector<8x128xf32>
    %260 = arith.mulf %244, %259 : vector<8x128xf32>
    %261 = arith.addf %258, %260 : vector<8x128xf32>
    %262 = math.tanh %261 : vector<8x128xf32>
    %cst_161 = arith.constant 1.000000e+00 : f32
    %263 = vector.broadcast %cst_161 : f32 to vector<8x128xf32>
    %264 = arith.subf %263, %254 : vector<8x128xf32>
    %265 = arith.mulf %264, %262 : vector<8x128xf32>
    %266 = arith.mulf %254, %220 : vector<8x128xf32>
    %267 = arith.addf %265, %266 : vector<8x128xf32>
    %268 = arith.index_cast %224 : i32 to index
    %c0_162 = arith.constant 0 : index
    %269 = vector.load %arg13[%268, %c0_162] : memref<64x128xf32, #tpu.memory_space<vmem>>, vector<8x128xf32>
    tpu.vector_store %arg13[%268, %c0_162], %267 {strides = array<i32>} : memref<64x128xf32, #tpu.memory_space<vmem>>, vector<8x128xf32>,
    %c5_i32 = arith.constant 5 : i32
    %c8_i32_163 = arith.constant 8 : i32
    %270 = arith.muli %c5_i32, %c8_i32_163 : i32
    %271 = tpu.assume_multiple %270, 8 : i32
    %272 = arith.truncf %267 : vector<8x128xf32> to vector<8x128xbf16>
    %c0_164 = arith.constant 0 : index
    %c0_165 = arith.constant 0 : index
    %c0_166 = arith.constant 0 : index
    %273 = vector.load %arg2[%c0_164, %c0_165, %c0_166] : memref<3x128x128xbf16, #tpu.memory_space<vmem>>, vector<1x128x128xbf16>
    %274 = vector.shape_cast %273 : vector<1x128x128xbf16> to vector<128x128xbf16>
    %cst_167 = arith.constant dense<0.000000e+00> : vector<8x128xf32>
    %275 = tpu.matmul %272, %274, %cst_167 {dimension_numbers = #tpu.dot_dimension_numbers<[1], [0], [0], [1], [0, 0, 1, 1], [], []>} : vector<8x128xbf16>, vector<128x128xbf16>, vector<8x128xf32> -> vector<8x128xf32>
    %c1_168 = arith.constant 1 : index
    %c0_169 = arith.constant 0 : index
    %c0_170 = arith.constant 0 : index
    %276 = vector.load %arg2[%c1_168, %c0_169, %c0_170] : memref<3x128x128xbf16, #tpu.memory_space<vmem>>, vector<1x128x128xbf16>
    %277 = vector.shape_cast %276 : vector<1x128x128xbf16> to vector<128x128xbf16>
    %cst_171 = arith.constant dense<0.000000e+00> : vector<8x128xf32>
    %278 = tpu.matmul %272, %277, %cst_171 {dimension_numbers = #tpu.dot_dimension_numbers<[1], [0], [0], [1], [0, 0, 1, 1], [], []>} : vector<8x128xbf16>, vector<128x128xbf16>, vector<8x128xf32> -> vector<8x128xf32>
    %c2_172 = arith.constant 2 : index
    %c0_173 = arith.constant 0 : index
    %c0_174 = arith.constant 0 : index
    %279 = vector.load %arg2[%c2_172, %c0_173, %c0_174] : memref<3x128x128xbf16, #tpu.memory_space<vmem>>, vector<1x128x128xbf16>
    %280 = vector.shape_cast %279 : vector<1x128x128xbf16> to vector<128x128xbf16>
    %cst_175 = arith.constant dense<0.000000e+00> : vector<8x128xf32>
    %281 = tpu.matmul %272, %280, %cst_175 {dimension_numbers = #tpu.dot_dimension_numbers<[1], [0], [0], [1], [0, 0, 1, 1], [], []>} : vector<8x128xbf16>, vector<128x128xbf16>, vector<8x128xf32> -> vector<8x128xf32>
    %c0_i32_176 = arith.constant 0 : i32
    %c0_i32_177 = arith.constant 0 : i32
    %282 = tpu.memref_slice %arg12[%c0_i32, %c0_i32_176, %c0_i32_177] : memref<3x64x128xf32, #tpu.memory_space<vmem>> -> memref<1x64x128xf32, #tpu.memory_space<vmem>>
    %283 = tpu.memref_squeeze %282 : memref<1x64x128xf32, #tpu.memory_space<vmem>> -> memref<64x128xf32, #tpu.memory_space<vmem>>
    %284 = arith.index_cast %271 : i32 to index
    %c0_178 = arith.constant 0 : index
    %285 = vector.load %283[%284, %c0_178] : memref<64x128xf32, #tpu.memory_space<vmem>>, vector<8x128xf32>
    %286 = arith.addf %285, %275 : vector<8x128xf32>
    %287 = arith.negf %286 : vector<8x128xf32>
    %288 = math.exp %287 : vector<8x128xf32>
    %cst_179 = arith.constant 1.000000e+00 : f32
    %289 = vector.broadcast %cst_179 : f32 to vector<8x128xf32>
    %290 = arith.addf %289, %288 : vector<8x128xf32>
    %291 = arith.divf %289, %290 : vector<8x128xf32>
    %c0_i32_180 = arith.constant 0 : i32
    %c0_i32_181 = arith.constant 0 : i32
    %292 = tpu.memref_slice %arg12[%c1_i32, %c0_i32_180, %c0_i32_181] : memref<3x64x128xf32, #tpu.memory_space<vmem>> -> memref<1x64x128xf32, #tpu.memory_space<vmem>>
    %293 = tpu.memref_squeeze %292 : memref<1x64x128xf32, #tpu.memory_space<vmem>> -> memref<64x128xf32, #tpu.memory_space<vmem>>
    %294 = arith.index_cast %271 : i32 to index
    %c0_182 = arith.constant 0 : index
    %295 = vector.load %293[%294, %c0_182] : memref<64x128xf32, #tpu.memory_space<vmem>>, vector<8x128xf32>
    %296 = arith.addf %295, %278 : vector<8x128xf32>
    %297 = arith.negf %296 : vector<8x128xf32>
    %298 = math.exp %297 : vector<8x128xf32>
    %cst_183 = arith.constant 1.000000e+00 : f32
    %299 = vector.broadcast %cst_183 : f32 to vector<8x128xf32>
    %300 = arith.addf %299, %298 : vector<8x128xf32>
    %301 = arith.divf %299, %300 : vector<8x128xf32>
    %c0_i32_184 = arith.constant 0 : i32
    %c0_i32_185 = arith.constant 0 : i32
    %302 = tpu.memref_slice %arg12[%c2_i32, %c0_i32_184, %c0_i32_185] : memref<3x64x128xf32, #tpu.memory_space<vmem>> -> memref<1x64x128xf32, #tpu.memory_space<vmem>>
    %303 = tpu.memref_squeeze %302 : memref<1x64x128xf32, #tpu.memory_space<vmem>> -> memref<64x128xf32, #tpu.memory_space<vmem>>
    %304 = arith.index_cast %271 : i32 to index
    %c0_186 = arith.constant 0 : index
    %305 = vector.load %303[%304, %c0_186] : memref<64x128xf32, #tpu.memory_space<vmem>>, vector<8x128xf32>
    %306 = arith.addf %281, %33 : vector<8x128xf32>
    %307 = arith.mulf %291, %306 : vector<8x128xf32>
    %308 = arith.addf %305, %307 : vector<8x128xf32>
    %309 = math.tanh %308 : vector<8x128xf32>
    %cst_187 = arith.constant 1.000000e+00 : f32
    %310 = vector.broadcast %cst_187 : f32 to vector<8x128xf32>
    %311 = arith.subf %310, %301 : vector<8x128xf32>
    %312 = arith.mulf %311, %309 : vector<8x128xf32>
    %313 = arith.mulf %301, %267 : vector<8x128xf32>
    %314 = arith.addf %312, %313 : vector<8x128xf32>
    %315 = arith.index_cast %271 : i32 to index
    %c0_188 = arith.constant 0 : index
    %316 = vector.load %arg13[%315, %c0_188] : memref<64x128xf32, #tpu.memory_space<vmem>>, vector<8x128xf32>
    tpu.vector_store %arg13[%315, %c0_188], %314 {strides = array<i32>} : memref<64x128xf32, #tpu.memory_space<vmem>>, vector<8x128xf32>,
    %c6_i32 = arith.constant 6 : i32
    %c8_i32_189 = arith.constant 8 : i32
    %317 = arith.muli %c6_i32, %c8_i32_189 : i32
    %318 = tpu.assume_multiple %317, 8 : i32
    %319 = arith.truncf %314 : vector<8x128xf32> to vector<8x128xbf16>
    %c0_190 = arith.constant 0 : index
    %c0_191 = arith.constant 0 : index
    %c0_192 = arith.constant 0 : index
    %320 = vector.load %arg2[%c0_190, %c0_191, %c0_192] : memref<3x128x128xbf16, #tpu.memory_space<vmem>>, vector<1x128x128xbf16>
    %321 = vector.shape_cast %320 : vector<1x128x128xbf16> to vector<128x128xbf16>
    %cst_193 = arith.constant dense<0.000000e+00> : vector<8x128xf32>
    %322 = tpu.matmul %319, %321, %cst_193 {dimension_numbers = #tpu.dot_dimension_numbers<[1], [0], [0], [1], [0, 0, 1, 1], [], []>} : vector<8x128xbf16>, vector<128x128xbf16>, vector<8x128xf32> -> vector<8x128xf32>
    %c1_194 = arith.constant 1 : index
    %c0_195 = arith.constant 0 : index
    %c0_196 = arith.constant 0 : index
    %323 = vector.load %arg2[%c1_194, %c0_195, %c0_196] : memref<3x128x128xbf16, #tpu.memory_space<vmem>>, vector<1x128x128xbf16>
    %324 = vector.shape_cast %323 : vector<1x128x128xbf16> to vector<128x128xbf16>
    %cst_197 = arith.constant dense<0.000000e+00> : vector<8x128xf32>
    %325 = tpu.matmul %319, %324, %cst_197 {dimension_numbers = #tpu.dot_dimension_numbers<[1], [0], [0], [1], [0, 0, 1, 1], [], []>} : vector<8x128xbf16>, vector<128x128xbf16>, vector<8x128xf32> -> vector<8x128xf32>
    %c2_198 = arith.constant 2 : index
    %c0_199 = arith.constant 0 : index
    %c0_200 = arith.constant 0 : index
    %326 = vector.load %arg2[%c2_198, %c0_199, %c0_200] : memref<3x128x128xbf16, #tpu.memory_space<vmem>>, vector<1x128x128xbf16>
    %327 = vector.shape_cast %326 : vector<1x128x128xbf16> to vector<128x128xbf16>
    %cst_201 = arith.constant dense<0.000000e+00> : vector<8x128xf32>
    %328 = tpu.matmul %319, %327, %cst_201 {dimension_numbers = #tpu.dot_dimension_numbers<[1], [0], [0], [1], [0, 0, 1, 1], [], []>} : vector<8x128xbf16>, vector<128x128xbf16>, vector<8x128xf32> -> vector<8x128xf32>
    %c0_i32_202 = arith.constant 0 : i32
    %c0_i32_203 = arith.constant 0 : i32
    %329 = tpu.memref_slice %arg12[%c0_i32, %c0_i32_202, %c0_i32_203] : memref<3x64x128xf32, #tpu.memory_space<vmem>> -> memref<1x64x128xf32, #tpu.memory_space<vmem>>
    %330 = tpu.memref_squeeze %329 : memref<1x64x128xf32, #tpu.memory_space<vmem>> -> memref<64x128xf32, #tpu.memory_space<vmem>>
    %331 = arith.index_cast %318 : i32 to index
    %c0_204 = arith.constant 0 : index
    %332 = vector.load %330[%331, %c0_204] : memref<64x128xf32, #tpu.memory_space<vmem>>, vector<8x128xf32>
    %333 = arith.addf %332, %322 : vector<8x128xf32>
    %334 = arith.negf %333 : vector<8x128xf32>
    %335 = math.exp %334 : vector<8x128xf32>
    %cst_205 = arith.constant 1.000000e+00 : f32
    %336 = vector.broadcast %cst_205 : f32 to vector<8x128xf32>
    %337 = arith.addf %336, %335 : vector<8x128xf32>
    %338 = arith.divf %336, %337 : vector<8x128xf32>
    %c0_i32_206 = arith.constant 0 : i32
    %c0_i32_207 = arith.constant 0 : i32
    %339 = tpu.memref_slice %arg12[%c1_i32, %c0_i32_206, %c0_i32_207] : memref<3x64x128xf32, #tpu.memory_space<vmem>> -> memref<1x64x128xf32, #tpu.memory_space<vmem>>
    %340 = tpu.memref_squeeze %339 : memref<1x64x128xf32, #tpu.memory_space<vmem>> -> memref<64x128xf32, #tpu.memory_space<vmem>>
    %341 = arith.index_cast %318 : i32 to index
    %c0_208 = arith.constant 0 : index
    %342 = vector.load %340[%341, %c0_208] : memref<64x128xf32, #tpu.memory_space<vmem>>, vector<8x128xf32>
    %343 = arith.addf %342, %325 : vector<8x128xf32>
    %344 = arith.negf %343 : vector<8x128xf32>
    %345 = math.exp %344 : vector<8x128xf32>
    %cst_209 = arith.constant 1.000000e+00 : f32
    %346 = vector.broadcast %cst_209 : f32 to vector<8x128xf32>
    %347 = arith.addf %346, %345 : vector<8x128xf32>
    %348 = arith.divf %346, %347 : vector<8x128xf32>
    %c0_i32_210 = arith.constant 0 : i32
    %c0_i32_211 = arith.constant 0 : i32
    %349 = tpu.memref_slice %arg12[%c2_i32, %c0_i32_210, %c0_i32_211] : memref<3x64x128xf32, #tpu.memory_space<vmem>> -> memref<1x64x128xf32, #tpu.memory_space<vmem>>
    %350 = tpu.memref_squeeze %349 : memref<1x64x128xf32, #tpu.memory_space<vmem>> -> memref<64x128xf32, #tpu.memory_space<vmem>>
    %351 = arith.index_cast %318 : i32 to index
    %c0_212 = arith.constant 0 : index
    %352 = vector.load %350[%351, %c0_212] : memref<64x128xf32, #tpu.memory_space<vmem>>, vector<8x128xf32>
    %353 = arith.addf %328, %33 : vector<8x128xf32>
    %354 = arith.mulf %338, %353 : vector<8x128xf32>
    %355 = arith.addf %352, %354 : vector<8x128xf32>
    %356 = math.tanh %355 : vector<8x128xf32>
    %cst_213 = arith.constant 1.000000e+00 : f32
    %357 = vector.broadcast %cst_213 : f32 to vector<8x128xf32>
    %358 = arith.subf %357, %348 : vector<8x128xf32>
    %359 = arith.mulf %358, %356 : vector<8x128xf32>
    %360 = arith.mulf %348, %314 : vector<8x128xf32>
    %361 = arith.addf %359, %360 : vector<8x128xf32>
    %362 = arith.index_cast %318 : i32 to index
    %c0_214 = arith.constant 0 : index
    %363 = vector.load %arg13[%362, %c0_214] : memref<64x128xf32, #tpu.memory_space<vmem>>, vector<8x128xf32>
    tpu.vector_store %arg13[%362, %c0_214], %361 {strides = array<i32>} : memref<64x128xf32, #tpu.memory_space<vmem>>, vector<8x128xf32>,
    %c7_i32 = arith.constant 7 : i32
    %c8_i32_215 = arith.constant 8 : i32
    %364 = arith.muli %c7_i32, %c8_i32_215 : i32
    %365 = tpu.assume_multiple %364, 8 : i32
    %366 = arith.truncf %361 : vector<8x128xf32> to vector<8x128xbf16>
    %c0_216 = arith.constant 0 : index
    %c0_217 = arith.constant 0 : index
    %c0_218 = arith.constant 0 : index
    %367 = vector.load %arg2[%c0_216, %c0_217, %c0_218] : memref<3x128x128xbf16, #tpu.memory_space<vmem>>, vector<1x128x128xbf16>
    %368 = vector.shape_cast %367 : vector<1x128x128xbf16> to vector<128x128xbf16>
    %cst_219 = arith.constant dense<0.000000e+00> : vector<8x128xf32>
    %369 = tpu.matmul %366, %368, %cst_219 {dimension_numbers = #tpu.dot_dimension_numbers<[1], [0], [0], [1], [0, 0, 1, 1], [], []>} : vector<8x128xbf16>, vector<128x128xbf16>, vector<8x128xf32> -> vector<8x128xf32>
    %c1_220 = arith.constant 1 : index
    %c0_221 = arith.constant 0 : index
    %c0_222 = arith.constant 0 : index
    %370 = vector.load %arg2[%c1_220, %c0_221, %c0_222] : memref<3x128x128xbf16, #tpu.memory_space<vmem>>, vector<1x128x128xbf16>
    %371 = vector.shape_cast %370 : vector<1x128x128xbf16> to vector<128x128xbf16>
    %cst_223 = arith.constant dense<0.000000e+00> : vector<8x128xf32>
    %372 = tpu.matmul %366, %371, %cst_223 {dimension_numbers = #tpu.dot_dimension_numbers<[1], [0], [0], [1], [0, 0, 1, 1], [], []>} : vector<8x128xbf16>, vector<128x128xbf16>, vector<8x128xf32> -> vector<8x128xf32>
    %c2_224 = arith.constant 2 : index
    %c0_225 = arith.constant 0 : index
    %c0_226 = arith.constant 0 : index
    %373 = vector.load %arg2[%c2_224, %c0_225, %c0_226] : memref<3x128x128xbf16, #tpu.memory_space<vmem>>, vector<1x128x128xbf16>
    %374 = vector.shape_cast %373 : vector<1x128x128xbf16> to vector<128x128xbf16>
    %cst_227 = arith.constant dense<0.000000e+00> : vector<8x128xf32>
    %375 = tpu.matmul %366, %374, %cst_227 {dimension_numbers = #tpu.dot_dimension_numbers<[1], [0], [0], [1], [0, 0, 1, 1], [], []>} : vector<8x128xbf16>, vector<128x128xbf16>, vector<8x128xf32> -> vector<8x128xf32>
    %c0_i32_228 = arith.constant 0 : i32
    %c0_i32_229 = arith.constant 0 : i32
    %376 = tpu.memref_slice %arg12[%c0_i32, %c0_i32_228, %c0_i32_229] : memref<3x64x128xf32, #tpu.memory_space<vmem>> -> memref<1x64x128xf32, #tpu.memory_space<vmem>>
    %377 = tpu.memref_squeeze %376 : memref<1x64x128xf32, #tpu.memory_space<vmem>> -> memref<64x128xf32, #tpu.memory_space<vmem>>
    %378 = arith.index_cast %365 : i32 to index
    %c0_230 = arith.constant 0 : index
    %379 = vector.load %377[%378, %c0_230] : memref<64x128xf32, #tpu.memory_space<vmem>>, vector<8x128xf32>
    %380 = arith.addf %379, %369 : vector<8x128xf32>
    %381 = arith.negf %380 : vector<8x128xf32>
    %382 = math.exp %381 : vector<8x128xf32>
    %cst_231 = arith.constant 1.000000e+00 : f32
    %383 = vector.broadcast %cst_231 : f32 to vector<8x128xf32>
    %384 = arith.addf %383, %382 : vector<8x128xf32>
    %385 = arith.divf %383, %384 : vector<8x128xf32>
    %c0_i32_232 = arith.constant 0 : i32
    %c0_i32_233 = arith.constant 0 : i32
    %386 = tpu.memref_slice %arg12[%c1_i32, %c0_i32_232, %c0_i32_233] : memref<3x64x128xf32, #tpu.memory_space<vmem>> -> memref<1x64x128xf32, #tpu.memory_space<vmem>>
    %387 = tpu.memref_squeeze %386 : memref<1x64x128xf32, #tpu.memory_space<vmem>> -> memref<64x128xf32, #tpu.memory_space<vmem>>
    %388 = arith.index_cast %365 : i32 to index
    %c0_234 = arith.constant 0 : index
    %389 = vector.load %387[%388, %c0_234] : memref<64x128xf32, #tpu.memory_space<vmem>>, vector<8x128xf32>
    %390 = arith.addf %389, %372 : vector<8x128xf32>
    %391 = arith.negf %390 : vector<8x128xf32>
    %392 = math.exp %391 : vector<8x128xf32>
    %cst_235 = arith.constant 1.000000e+00 : f32
    %393 = vector.broadcast %cst_235 : f32 to vector<8x128xf32>
    %394 = arith.addf %393, %392 : vector<8x128xf32>
    %395 = arith.divf %393, %394 : vector<8x128xf32>
    %c0_i32_236 = arith.constant 0 : i32
    %c0_i32_237 = arith.constant 0 : i32
    %396 = tpu.memref_slice %arg12[%c2_i32, %c0_i32_236, %c0_i32_237] : memref<3x64x128xf32, #tpu.memory_space<vmem>> -> memref<1x64x128xf32, #tpu.memory_space<vmem>>
    %397 = tpu.memref_squeeze %396 : memref<1x64x128xf32, #tpu.memory_space<vmem>> -> memref<64x128xf32, #tpu.memory_space<vmem>>
    %398 = arith.index_cast %365 : i32 to index
    %c0_238 = arith.constant 0 : index
    %399 = vector.load %397[%398, %c0_238] : memref<64x128xf32, #tpu.memory_space<vmem>>, vector<8x128xf32>
    %400 = arith.addf %375, %33 : vector<8x128xf32>
    %401 = arith.mulf %385, %400 : vector<8x128xf32>
    %402 = arith.addf %399, %401 : vector<8x128xf32>
    %403 = math.tanh %402 : vector<8x128xf32>
    %cst_239 = arith.constant 1.000000e+00 : f32
    %404 = vector.broadcast %cst_239 : f32 to vector<8x128xf32>
    %405 = arith.subf %404, %395 : vector<8x128xf32>
    %406 = arith.mulf %405, %403 : vector<8x128xf32>
    %407 = arith.mulf %395, %361 : vector<8x128xf32>
    %408 = arith.addf %406, %407 : vector<8x128xf32>
    %409 = arith.index_cast %365 : i32 to index
    %c0_240 = arith.constant 0 : index
    %410 = vector.load %arg13[%409, %c0_240] : memref<64x128xf32, #tpu.memory_space<vmem>>, vector<8x128xf32>
    tpu.vector_store %arg13[%409, %c0_240], %408 {strides = array<i32>} : memref<64x128xf32, #tpu.memory_space<vmem>>, vector<8x128xf32>,
    %c8_i32_241 = arith.constant 8 : i32
    %c0_242 = arith.constant 0 : index
    %c0_243 = arith.constant 0 : index
    %411 = vector.load %arg13[%c0_242, %c0_243] : memref<64x128xf32, #tpu.memory_space<vmem>>, vector<64x128xf32>
    %412 = arith.truncf %411 : vector<64x128xf32> to vector<64x128xbf16>
    %c0_244 = arith.constant 0 : index
    %c0_245 = arith.constant 0 : index
    %c0_246 = arith.constant 0 : index
    %413 = vector.load %arg5[%c0_244, %c0_245, %c0_246] : memref<3x128x128xbf16, #tpu.memory_space<vmem>>, vector<1x128x128xbf16>
    %414 = vector.shape_cast %413 : vector<1x128x128xbf16> to vector<128x128xbf16>
    %cst_247 = arith.constant dense<0.000000e+00> : vector<64x128xf32>
    %415 = tpu.matmul %412, %414, %cst_247 {dimension_numbers = #tpu.dot_dimension_numbers<[1], [0], [0], [1], [0, 0, 1, 1], [], []>} : vector<64x128xbf16>, vector<128x128xbf16>, vector<64x128xf32> -> vector<64x128xf32>
    %c0_248 = arith.constant 0 : index
    %c0_249 = arith.constant 0 : index
    %c0_250 = arith.constant 0 : index
    %416 = vector.load %arg7[%c0_248, %c0_249, %c0_250] : memref<3x1x128xf32, #tpu.memory_space<vmem>>, vector<1x1x128xf32>
    %417 = vector.shape_cast %416 : vector<1x1x128xf32> to vector<1x128xf32>
    %418 = vector.broadcast %417 : vector<1x128xf32> to vector<64x128xf32>
    %419 = arith.addf %415, %418 : vector<64x128xf32>
    %c0_251 = arith.constant 0 : index
    %c0_252 = arith.constant 0 : index
    %c0_253 = arith.constant 0 : index
    %420 = vector.load %arg12[%c0_251, %c0_252, %c0_253] : memref<3x64x128xf32, #tpu.memory_space<vmem>>, vector<1x64x128xf32>
    %421 = vector.shape_cast %420 : vector<1x64x128xf32> to vector<64x128xf32>
    %422 = vector.shape_cast %419 : vector<64x128xf32> to vector<1x64x128xf32>
    tpu.vector_store %arg12[%c0_251, %c0_252, %c0_253], %422 {strides = array<i32>} : memref<3x64x128xf32, #tpu.memory_space<vmem>>, vector<1x64x128xf32>,
    %c1_254 = arith.constant 1 : index
    %c0_255 = arith.constant 0 : index
    %c0_256 = arith.constant 0 : index
    %423 = vector.load %arg5[%c1_254, %c0_255, %c0_256] : memref<3x128x128xbf16, #tpu.memory_space<vmem>>, vector<1x128x128xbf16>
    %424 = vector.shape_cast %423 : vector<1x128x128xbf16> to vector<128x128xbf16>
    %cst_257 = arith.constant dense<0.000000e+00> : vector<64x128xf32>
    %425 = tpu.matmul %412, %424, %cst_257 {dimension_numbers = #tpu.dot_dimension_numbers<[1], [0], [0], [1], [0, 0, 1, 1], [], []>} : vector<64x128xbf16>, vector<128x128xbf16>, vector<64x128xf32> -> vector<64x128xf32>
    %c1_258 = arith.constant 1 : index
    %c0_259 = arith.constant 0 : index
    %c0_260 = arith.constant 0 : index
    %426 = vector.load %arg7[%c1_258, %c0_259, %c0_260] : memref<3x1x128xf32, #tpu.memory_space<vmem>>, vector<1x1x128xf32>
    %427 = vector.shape_cast %426 : vector<1x1x128xf32> to vector<1x128xf32>
    %428 = vector.broadcast %427 : vector<1x128xf32> to vector<64x128xf32>
    %429 = arith.addf %425, %428 : vector<64x128xf32>
    %c1_261 = arith.constant 1 : index
    %c0_262 = arith.constant 0 : index
    %c0_263 = arith.constant 0 : index
    %430 = vector.load %arg12[%c1_261, %c0_262, %c0_263] : memref<3x64x128xf32, #tpu.memory_space<vmem>>, vector<1x64x128xf32>
    %431 = vector.shape_cast %430 : vector<1x64x128xf32> to vector<64x128xf32>
    %432 = vector.shape_cast %429 : vector<64x128xf32> to vector<1x64x128xf32>
    tpu.vector_store %arg12[%c1_261, %c0_262, %c0_263], %432 {strides = array<i32>} : memref<3x64x128xf32, #tpu.memory_space<vmem>>, vector<1x64x128xf32>,
    %c2_264 = arith.constant 2 : index
    %c0_265 = arith.constant 0 : index
    %c0_266 = arith.constant 0 : index
    %433 = vector.load %arg5[%c2_264, %c0_265, %c0_266] : memref<3x128x128xbf16, #tpu.memory_space<vmem>>, vector<1x128x128xbf16>
    %434 = vector.shape_cast %433 : vector<1x128x128xbf16> to vector<128x128xbf16>
    %cst_267 = arith.constant dense<0.000000e+00> : vector<64x128xf32>
    %435 = tpu.matmul %412, %434, %cst_267 {dimension_numbers = #tpu.dot_dimension_numbers<[1], [0], [0], [1], [0, 0, 1, 1], [], []>} : vector<64x128xbf16>, vector<128x128xbf16>, vector<64x128xf32> -> vector<64x128xf32>
    %c2_268 = arith.constant 2 : index
    %c0_269 = arith.constant 0 : index
    %c0_270 = arith.constant 0 : index
    %436 = vector.load %arg7[%c2_268, %c0_269, %c0_270] : memref<3x1x128xf32, #tpu.memory_space<vmem>>, vector<1x1x128xf32>
    %437 = vector.shape_cast %436 : vector<1x1x128xf32> to vector<1x128xf32>
    %438 = vector.broadcast %437 : vector<1x128xf32> to vector<64x128xf32>
    %439 = arith.addf %435, %438 : vector<64x128xf32>
    %c2_271 = arith.constant 2 : index
    %c0_272 = arith.constant 0 : index
    %c0_273 = arith.constant 0 : index
    %440 = vector.load %arg12[%c2_271, %c0_272, %c0_273] : memref<3x64x128xf32, #tpu.memory_space<vmem>>, vector<1x64x128xf32>
    %441 = vector.shape_cast %440 : vector<1x64x128xf32> to vector<64x128xf32>
    %442 = vector.shape_cast %439 : vector<64x128xf32> to vector<1x64x128xf32>
    tpu.vector_store %arg12[%c2_271, %c0_272, %c0_273], %442 {strides = array<i32>} : memref<3x64x128xf32, #tpu.memory_space<vmem>>, vector<1x64x128xf32>,
    %c0_274 = arith.constant 0 : index
    %c0_275 = arith.constant 0 : index
    %443 = vector.load %arg8[%c0_274, %c0_275] : memref<1x128xf32, #tpu.memory_space<vmem>>, vector<1x128xf32>
    %444 = vector.shape_cast %443 : vector<1x128xf32> to vector<1x128xf32>
    %445 = vector.broadcast %444 : vector<1x128xf32> to vector<8x128xf32>
    %cst_276 = arith.constant 0.000000e+00 : f32
    %446 = vector.broadcast %cst_276 : f32 to vector<8x128xf32>
    %c0_i32_277 = arith.constant 0 : i32
    %c1_i32_278 = arith.constant 1 : i32
    %c2_i32_279 = arith.constant 2 : i32
    %c0_i32_280 = arith.constant 0 : i32
    %c8_i32_281 = arith.constant 8 : i32
    %447 = arith.muli %c0_i32_280, %c8_i32_281 : i32
    %448 = tpu.assume_multiple %447, 8 : i32
    %449 = arith.truncf %446 : vector<8x128xf32> to vector<8x128xbf16>
    %c0_282 = arith.constant 0 : index
    %c0_283 = arith.constant 0 : index
    %c0_284 = arith.constant 0 : index
    %450 = vector.load %arg6[%c0_282, %c0_283, %c0_284] : memref<3x128x128xbf16, #tpu.memory_space<vmem>>, vector<1x128x128xbf16>
    %451 = vector.shape_cast %450 : vector<1x128x128xbf16> to vector<128x128xbf16>
    %cst_285 = arith.constant dense<0.000000e+00> : vector<8x128xf32>
    %452 = tpu.matmul %449, %451, %cst_285 {dimension_numbers = #tpu.dot_dimension_numbers<[1], [0], [0], [1], [0, 0, 1, 1], [], []>} : vector<8x128xbf16>, vector<128x128xbf16>, vector<8x128xf32> -> vector<8x128xf32>
    %c1_286 = arith.constant 1 : index
    %c0_287 = arith.constant 0 : index
    %c0_288 = arith.constant 0 : index
    %453 = vector.load %arg6[%c1_286, %c0_287, %c0_288] : memref<3x128x128xbf16, #tpu.memory_space<vmem>>, vector<1x128x128xbf16>
    %454 = vector.shape_cast %453 : vector<1x128x128xbf16> to vector<128x128xbf16>
    %cst_289 = arith.constant dense<0.000000e+00> : vector<8x128xf32>
    %455 = tpu.matmul %449, %454, %cst_289 {dimension_numbers = #tpu.dot_dimension_numbers<[1], [0], [0], [1], [0, 0, 1, 1], [], []>} : vector<8x128xbf16>, vector<128x128xbf16>, vector<8x128xf32> -> vector<8x128xf32>
    %c2_290 = arith.constant 2 : index
    %c0_291 = arith.constant 0 : index
    %c0_292 = arith.constant 0 : index
    %456 = vector.load %arg6[%c2_290, %c0_291, %c0_292] : memref<3x128x128xbf16, #tpu.memory_space<vmem>>, vector<1x128x128xbf16>
    %457 = vector.shape_cast %456 : vector<1x128x128xbf16> to vector<128x128xbf16>
    %cst_293 = arith.constant dense<0.000000e+00> : vector<8x128xf32>
    %458 = tpu.matmul %449, %457, %cst_293 {dimension_numbers = #tpu.dot_dimension_numbers<[1], [0], [0], [1], [0, 0, 1, 1], [], []>} : vector<8x128xbf16>, vector<128x128xbf16>, vector<8x128xf32> -> vector<8x128xf32>
    %c0_i32_294 = arith.constant 0 : i32
    %c0_i32_295 = arith.constant 0 : i32
    %459 = tpu.memref_slice %arg12[%c0_i32_277, %c0_i32_294, %c0_i32_295] : memref<3x64x128xf32, #tpu.memory_space<vmem>> -> memref<1x64x128xf32, #tpu.memory_space<vmem>>
    %460 = tpu.memref_squeeze %459 : memref<1x64x128xf32, #tpu.memory_space<vmem>> -> memref<64x128xf32, #tpu.memory_space<vmem>>
    %461 = arith.index_cast %448 : i32 to index
    %c0_296 = arith.constant 0 : index
    %462 = vector.load %460[%461, %c0_296] : memref<64x128xf32, #tpu.memory_space<vmem>>, vector<8x128xf32>
    %463 = arith.addf %462, %452 : vector<8x128xf32>
    %464 = arith.negf %463 : vector<8x128xf32>
    %465 = math.exp %464 : vector<8x128xf32>
    %cst_297 = arith.constant 1.000000e+00 : f32
    %466 = vector.broadcast %cst_297 : f32 to vector<8x128xf32>
    %467 = arith.addf %466, %465 : vector<8x128xf32>
    %468 = arith.divf %466, %467 : vector<8x128xf32>
    %c0_i32_298 = arith.constant 0 : i32
    %c0_i32_299 = arith.constant 0 : i32
    %469 = tpu.memref_slice %arg12[%c1_i32_278, %c0_i32_298, %c0_i32_299] : memref<3x64x128xf32, #tpu.memory_space<vmem>> -> memref<1x64x128xf32, #tpu.memory_space<vmem>>
    %470 = tpu.memref_squeeze %469 : memref<1x64x128xf32, #tpu.memory_space<vmem>> -> memref<64x128xf32, #tpu.memory_space<vmem>>
    %471 = arith.index_cast %448 : i32 to index
    %c0_300 = arith.constant 0 : index
    %472 = vector.load %470[%471, %c0_300] : memref<64x128xf32, #tpu.memory_space<vmem>>, vector<8x128xf32>
    %473 = arith.addf %472, %455 : vector<8x128xf32>
    %474 = arith.negf %473 : vector<8x128xf32>
    %475 = math.exp %474 : vector<8x128xf32>
    %cst_301 = arith.constant 1.000000e+00 : f32
    %476 = vector.broadcast %cst_301 : f32 to vector<8x128xf32>
    %477 = arith.addf %476, %475 : vector<8x128xf32>
    %478 = arith.divf %476, %477 : vector<8x128xf32>
    %c0_i32_302 = arith.constant 0 : i32
    %c0_i32_303 = arith.constant 0 : i32
    %479 = tpu.memref_slice %arg12[%c2_i32_279, %c0_i32_302, %c0_i32_303] : memref<3x64x128xf32, #tpu.memory_space<vmem>> -> memref<1x64x128xf32, #tpu.memory_space<vmem>>
    %480 = tpu.memref_squeeze %479 : memref<1x64x128xf32, #tpu.memory_space<vmem>> -> memref<64x128xf32, #tpu.memory_space<vmem>>
    %481 = arith.index_cast %448 : i32 to index
    %c0_304 = arith.constant 0 : index
    %482 = vector.load %480[%481, %c0_304] : memref<64x128xf32, #tpu.memory_space<vmem>>, vector<8x128xf32>
    %483 = arith.addf %458, %445 : vector<8x128xf32>
    %484 = arith.mulf %468, %483 : vector<8x128xf32>
    %485 = arith.addf %482, %484 : vector<8x128xf32>
    %486 = math.tanh %485 : vector<8x128xf32>
    %cst_305 = arith.constant 1.000000e+00 : f32
    %487 = vector.broadcast %cst_305 : f32 to vector<8x128xf32>
    %488 = arith.subf %487, %478 : vector<8x128xf32>
    %489 = arith.mulf %488, %486 : vector<8x128xf32>
    %490 = arith.mulf %478, %446 : vector<8x128xf32>
    %491 = arith.addf %489, %490 : vector<8x128xf32>
    %c1_i32_306 = arith.constant 1 : i32
    %c8_i32_307 = arith.constant 8 : i32
    %492 = arith.muli %c1_i32_306, %c8_i32_307 : i32
    %493 = tpu.assume_multiple %492, 8 : i32
    %494 = arith.truncf %491 : vector<8x128xf32> to vector<8x128xbf16>
    %c0_308 = arith.constant 0 : index
    %c0_309 = arith.constant 0 : index
    %c0_310 = arith.constant 0 : index
    %495 = vector.load %arg6[%c0_308, %c0_309, %c0_310] : memref<3x128x128xbf16, #tpu.memory_space<vmem>>, vector<1x128x128xbf16>
    %496 = vector.shape_cast %495 : vector<1x128x128xbf16> to vector<128x128xbf16>
    %cst_311 = arith.constant dense<0.000000e+00> : vector<8x128xf32>
    %497 = tpu.matmul %494, %496, %cst_311 {dimension_numbers = #tpu.dot_dimension_numbers<[1], [0], [0], [1], [0, 0, 1, 1], [], []>} : vector<8x128xbf16>, vector<128x128xbf16>, vector<8x128xf32> -> vector<8x128xf32>
    %c1_312 = arith.constant 1 : index
    %c0_313 = arith.constant 0 : index
    %c0_314 = arith.constant 0 : index
    %498 = vector.load %arg6[%c1_312, %c0_313, %c0_314] : memref<3x128x128xbf16, #tpu.memory_space<vmem>>, vector<1x128x128xbf16>
    %499 = vector.shape_cast %498 : vector<1x128x128xbf16> to vector<128x128xbf16>
    %cst_315 = arith.constant dense<0.000000e+00> : vector<8x128xf32>
    %500 = tpu.matmul %494, %499, %cst_315 {dimension_numbers = #tpu.dot_dimension_numbers<[1], [0], [0], [1], [0, 0, 1, 1], [], []>} : vector<8x128xbf16>, vector<128x128xbf16>, vector<8x128xf32> -> vector<8x128xf32>
    %c2_316 = arith.constant 2 : index
    %c0_317 = arith.constant 0 : index
    %c0_318 = arith.constant 0 : index
    %501 = vector.load %arg6[%c2_316, %c0_317, %c0_318] : memref<3x128x128xbf16, #tpu.memory_space<vmem>>, vector<1x128x128xbf16>
    %502 = vector.shape_cast %501 : vector<1x128x128xbf16> to vector<128x128xbf16>
    %cst_319 = arith.constant dense<0.000000e+00> : vector<8x128xf32>
    %503 = tpu.matmul %494, %502, %cst_319 {dimension_numbers = #tpu.dot_dimension_numbers<[1], [0], [0], [1], [0, 0, 1, 1], [], []>} : vector<8x128xbf16>, vector<128x128xbf16>, vector<8x128xf32> -> vector<8x128xf32>
    %c0_i32_320 = arith.constant 0 : i32
    %c0_i32_321 = arith.constant 0 : i32
    %504 = tpu.memref_slice %arg12[%c0_i32_277, %c0_i32_320, %c0_i32_321] : memref<3x64x128xf32, #tpu.memory_space<vmem>> -> memref<1x64x128xf32, #tpu.memory_space<vmem>>
    %505 = tpu.memref_squeeze %504 : memref<1x64x128xf32, #tpu.memory_space<vmem>> -> memref<64x128xf32, #tpu.memory_space<vmem>>
    %506 = arith.index_cast %493 : i32 to index
    %c0_322 = arith.constant 0 : index
    %507 = vector.load %505[%506, %c0_322] : memref<64x128xf32, #tpu.memory_space<vmem>>, vector<8x128xf32>
    %508 = arith.addf %507, %497 : vector<8x128xf32>
    %509 = arith.negf %508 : vector<8x128xf32>
    %510 = math.exp %509 : vector<8x128xf32>
    %cst_323 = arith.constant 1.000000e+00 : f32
    %511 = vector.broadcast %cst_323 : f32 to vector<8x128xf32>
    %512 = arith.addf %511, %510 : vector<8x128xf32>
    %513 = arith.divf %511, %512 : vector<8x128xf32>
    %c0_i32_324 = arith.constant 0 : i32
    %c0_i32_325 = arith.constant 0 : i32
    %514 = tpu.memref_slice %arg12[%c1_i32_278, %c0_i32_324, %c0_i32_325] : memref<3x64x128xf32, #tpu.memory_space<vmem>> -> memref<1x64x128xf32, #tpu.memory_space<vmem>>
    %515 = tpu.memref_squeeze %514 : memref<1x64x128xf32, #tpu.memory_space<vmem>> -> memref<64x128xf32, #tpu.memory_space<vmem>>
    %516 = arith.index_cast %493 : i32 to index
    %c0_326 = arith.constant 0 : index
    %517 = vector.load %515[%516, %c0_326] : memref<64x128xf32, #tpu.memory_space<vmem>>, vector<8x128xf32>
    %518 = arith.addf %517, %500 : vector<8x128xf32>
    %519 = arith.negf %518 : vector<8x128xf32>
    %520 = math.exp %519 : vector<8x128xf32>
    %cst_327 = arith.constant 1.000000e+00 : f32
    %521 = vector.broadcast %cst_327 : f32 to vector<8x128xf32>
    %522 = arith.addf %521, %520 : vector<8x128xf32>
    %523 = arith.divf %521, %522 : vector<8x128xf32>
    %c0_i32_328 = arith.constant 0 : i32
    %c0_i32_329 = arith.constant 0 : i32
    %524 = tpu.memref_slice %arg12[%c2_i32_279, %c0_i32_328, %c0_i32_329] : memref<3x64x128xf32, #tpu.memory_space<vmem>> -> memref<1x64x128xf32, #tpu.memory_space<vmem>>
    %525 = tpu.memref_squeeze %524 : memref<1x64x128xf32, #tpu.memory_space<vmem>> -> memref<64x128xf32, #tpu.memory_space<vmem>>
    %526 = arith.index_cast %493 : i32 to index
    %c0_330 = arith.constant 0 : index
    %527 = vector.load %525[%526, %c0_330] : memref<64x128xf32, #tpu.memory_space<vmem>>, vector<8x128xf32>
    %528 = arith.addf %503, %445 : vector<8x128xf32>
    %529 = arith.mulf %513, %528 : vector<8x128xf32>
    %530 = arith.addf %527, %529 : vector<8x128xf32>
    %531 = math.tanh %530 : vector<8x128xf32>
    %cst_331 = arith.constant 1.000000e+00 : f32
    %532 = vector.broadcast %cst_331 : f32 to vector<8x128xf32>
    %533 = arith.subf %532, %523 : vector<8x128xf32>
    %534 = arith.mulf %533, %531 : vector<8x128xf32>
    %535 = arith.mulf %523, %491 : vector<8x128xf32>
    %536 = arith.addf %534, %535 : vector<8x128xf32>
    %c2_i32_332 = arith.constant 2 : i32
    %c8_i32_333 = arith.constant 8 : i32
    %537 = arith.muli %c2_i32_332, %c8_i32_333 : i32
    %538 = tpu.assume_multiple %537, 8 : i32
    %539 = arith.truncf %536 : vector<8x128xf32> to vector<8x128xbf16>
    %c0_334 = arith.constant 0 : index
    %c0_335 = arith.constant 0 : index
    %c0_336 = arith.constant 0 : index
    %540 = vector.load %arg6[%c0_334, %c0_335, %c0_336] : memref<3x128x128xbf16, #tpu.memory_space<vmem>>, vector<1x128x128xbf16>
    %541 = vector.shape_cast %540 : vector<1x128x128xbf16> to vector<128x128xbf16>
    %cst_337 = arith.constant dense<0.000000e+00> : vector<8x128xf32>
    %542 = tpu.matmul %539, %541, %cst_337 {dimension_numbers = #tpu.dot_dimension_numbers<[1], [0], [0], [1], [0, 0, 1, 1], [], []>} : vector<8x128xbf16>, vector<128x128xbf16>, vector<8x128xf32> -> vector<8x128xf32>
    %c1_338 = arith.constant 1 : index
    %c0_339 = arith.constant 0 : index
    %c0_340 = arith.constant 0 : index
    %543 = vector.load %arg6[%c1_338, %c0_339, %c0_340] : memref<3x128x128xbf16, #tpu.memory_space<vmem>>, vector<1x128x128xbf16>
    %544 = vector.shape_cast %543 : vector<1x128x128xbf16> to vector<128x128xbf16>
    %cst_341 = arith.constant dense<0.000000e+00> : vector<8x128xf32>
    %545 = tpu.matmul %539, %544, %cst_341 {dimension_numbers = #tpu.dot_dimension_numbers<[1], [0], [0], [1], [0, 0, 1, 1], [], []>} : vector<8x128xbf16>, vector<128x128xbf16>, vector<8x128xf32> -> vector<8x128xf32>
    %c2_342 = arith.constant 2 : index
    %c0_343 = arith.constant 0 : index
    %c0_344 = arith.constant 0 : index
    %546 = vector.load %arg6[%c2_342, %c0_343, %c0_344] : memref<3x128x128xbf16, #tpu.memory_space<vmem>>, vector<1x128x128xbf16>
    %547 = vector.shape_cast %546 : vector<1x128x128xbf16> to vector<128x128xbf16>
    %cst_345 = arith.constant dense<0.000000e+00> : vector<8x128xf32>
    %548 = tpu.matmul %539, %547, %cst_345 {dimension_numbers = #tpu.dot_dimension_numbers<[1], [0], [0], [1], [0, 0, 1, 1], [], []>} : vector<8x128xbf16>, vector<128x128xbf16>, vector<8x128xf32> -> vector<8x128xf32>
    %c0_i32_346 = arith.constant 0 : i32
    %c0_i32_347 = arith.constant 0 : i32
    %549 = tpu.memref_slice %arg12[%c0_i32_277, %c0_i32_346, %c0_i32_347] : memref<3x64x128xf32, #tpu.memory_space<vmem>> -> memref<1x64x128xf32, #tpu.memory_space<vmem>>
    %550 = tpu.memref_squeeze %549 : memref<1x64x128xf32, #tpu.memory_space<vmem>> -> memref<64x128xf32, #tpu.memory_space<vmem>>
    %551 = arith.index_cast %538 : i32 to index
    %c0_348 = arith.constant 0 : index
    %552 = vector.load %550[%551, %c0_348] : memref<64x128xf32, #tpu.memory_space<vmem>>, vector<8x128xf32>
    %553 = arith.addf %552, %542 : vector<8x128xf32>
    %554 = arith.negf %553 : vector<8x128xf32>
    %555 = math.exp %554 : vector<8x128xf32>
    %cst_349 = arith.constant 1.000000e+00 : f32
    %556 = vector.broadcast %cst_349 : f32 to vector<8x128xf32>
    %557 = arith.addf %556, %555 : vector<8x128xf32>
    %558 = arith.divf %556, %557 : vector<8x128xf32>
    %c0_i32_350 = arith.constant 0 : i32
    %c0_i32_351 = arith.constant 0 : i32
    %559 = tpu.memref_slice %arg12[%c1_i32_278, %c0_i32_350, %c0_i32_351] : memref<3x64x128xf32, #tpu.memory_space<vmem>> -> memref<1x64x128xf32, #tpu.memory_space<vmem>>
    %560 = tpu.memref_squeeze %559 : memref<1x64x128xf32, #tpu.memory_space<vmem>> -> memref<64x128xf32, #tpu.memory_space<vmem>>
    %561 = arith.index_cast %538 : i32 to index
    %c0_352 = arith.constant 0 : index
    %562 = vector.load %560[%561, %c0_352] : memref<64x128xf32, #tpu.memory_space<vmem>>, vector<8x128xf32>
    %563 = arith.addf %562, %545 : vector<8x128xf32>
    %564 = arith.negf %563 : vector<8x128xf32>
    %565 = math.exp %564 : vector<8x128xf32>
    %cst_353 = arith.constant 1.000000e+00 : f32
    %566 = vector.broadcast %cst_353 : f32 to vector<8x128xf32>
    %567 = arith.addf %566, %565 : vector<8x128xf32>
    %568 = arith.divf %566, %567 : vector<8x128xf32>
    %c0_i32_354 = arith.constant 0 : i32
    %c0_i32_355 = arith.constant 0 : i32
    %569 = tpu.memref_slice %arg12[%c2_i32_279, %c0_i32_354, %c0_i32_355] : memref<3x64x128xf32, #tpu.memory_space<vmem>> -> memref<1x64x128xf32, #tpu.memory_space<vmem>>
    %570 = tpu.memref_squeeze %569 : memref<1x64x128xf32, #tpu.memory_space<vmem>> -> memref<64x128xf32, #tpu.memory_space<vmem>>
    %571 = arith.index_cast %538 : i32 to index
    %c0_356 = arith.constant 0 : index
    %572 = vector.load %570[%571, %c0_356] : memref<64x128xf32, #tpu.memory_space<vmem>>, vector<8x128xf32>
    %573 = arith.addf %548, %445 : vector<8x128xf32>
    %574 = arith.mulf %558, %573 : vector<8x128xf32>
    %575 = arith.addf %572, %574 : vector<8x128xf32>
    %576 = math.tanh %575 : vector<8x128xf32>
    %cst_357 = arith.constant 1.000000e+00 : f32
    %577 = vector.broadcast %cst_357 : f32 to vector<8x128xf32>
    %578 = arith.subf %577, %568 : vector<8x128xf32>
    %579 = arith.mulf %578, %576 : vector<8x128xf32>
    %580 = arith.mulf %568, %536 : vector<8x128xf32>
    %581 = arith.addf %579, %580 : vector<8x128xf32>
    %c3_i32_358 = arith.constant 3 : i32
    %c8_i32_359 = arith.constant 8 : i32
    %582 = arith.muli %c3_i32_358, %c8_i32_359 : i32
    %583 = tpu.assume_multiple %582, 8 : i32
    %584 = arith.truncf %581 : vector<8x128xf32> to vector<8x128xbf16>
    %c0_360 = arith.constant 0 : index
    %c0_361 = arith.constant 0 : index
    %c0_362 = arith.constant 0 : index
    %585 = vector.load %arg6[%c0_360, %c0_361, %c0_362] : memref<3x128x128xbf16, #tpu.memory_space<vmem>>, vector<1x128x128xbf16>
    %586 = vector.shape_cast %585 : vector<1x128x128xbf16> to vector<128x128xbf16>
    %cst_363 = arith.constant dense<0.000000e+00> : vector<8x128xf32>
    %587 = tpu.matmul %584, %586, %cst_363 {dimension_numbers = #tpu.dot_dimension_numbers<[1], [0], [0], [1], [0, 0, 1, 1], [], []>} : vector<8x128xbf16>, vector<128x128xbf16>, vector<8x128xf32> -> vector<8x128xf32>
    %c1_364 = arith.constant 1 : index
    %c0_365 = arith.constant 0 : index
    %c0_366 = arith.constant 0 : index
    %588 = vector.load %arg6[%c1_364, %c0_365, %c0_366] : memref<3x128x128xbf16, #tpu.memory_space<vmem>>, vector<1x128x128xbf16>
    %589 = vector.shape_cast %588 : vector<1x128x128xbf16> to vector<128x128xbf16>
    %cst_367 = arith.constant dense<0.000000e+00> : vector<8x128xf32>
    %590 = tpu.matmul %584, %589, %cst_367 {dimension_numbers = #tpu.dot_dimension_numbers<[1], [0], [0], [1], [0, 0, 1, 1], [], []>} : vector<8x128xbf16>, vector<128x128xbf16>, vector<8x128xf32> -> vector<8x128xf32>
    %c2_368 = arith.constant 2 : index
    %c0_369 = arith.constant 0 : index
    %c0_370 = arith.constant 0 : index
    %591 = vector.load %arg6[%c2_368, %c0_369, %c0_370] : memref<3x128x128xbf16, #tpu.memory_space<vmem>>, vector<1x128x128xbf16>
    %592 = vector.shape_cast %591 : vector<1x128x128xbf16> to vector<128x128xbf16>
    %cst_371 = arith.constant dense<0.000000e+00> : vector<8x128xf32>
    %593 = tpu.matmul %584, %592, %cst_371 {dimension_numbers = #tpu.dot_dimension_numbers<[1], [0], [0], [1], [0, 0, 1, 1], [], []>} : vector<8x128xbf16>, vector<128x128xbf16>, vector<8x128xf32> -> vector<8x128xf32>
    %c0_i32_372 = arith.constant 0 : i32
    %c0_i32_373 = arith.constant 0 : i32
    %594 = tpu.memref_slice %arg12[%c0_i32_277, %c0_i32_372, %c0_i32_373] : memref<3x64x128xf32, #tpu.memory_space<vmem>> -> memref<1x64x128xf32, #tpu.memory_space<vmem>>
    %595 = tpu.memref_squeeze %594 : memref<1x64x128xf32, #tpu.memory_space<vmem>> -> memref<64x128xf32, #tpu.memory_space<vmem>>
    %596 = arith.index_cast %583 : i32 to index
    %c0_374 = arith.constant 0 : index
    %597 = vector.load %595[%596, %c0_374] : memref<64x128xf32, #tpu.memory_space<vmem>>, vector<8x128xf32>
    %598 = arith.addf %597, %587 : vector<8x128xf32>
    %599 = arith.negf %598 : vector<8x128xf32>
    %600 = math.exp %599 : vector<8x128xf32>
    %cst_375 = arith.constant 1.000000e+00 : f32
    %601 = vector.broadcast %cst_375 : f32 to vector<8x128xf32>
    %602 = arith.addf %601, %600 : vector<8x128xf32>
    %603 = arith.divf %601, %602 : vector<8x128xf32>
    %c0_i32_376 = arith.constant 0 : i32
    %c0_i32_377 = arith.constant 0 : i32
    %604 = tpu.memref_slice %arg12[%c1_i32_278, %c0_i32_376, %c0_i32_377] : memref<3x64x128xf32, #tpu.memory_space<vmem>> -> memref<1x64x128xf32, #tpu.memory_space<vmem>>
    %605 = tpu.memref_squeeze %604 : memref<1x64x128xf32, #tpu.memory_space<vmem>> -> memref<64x128xf32, #tpu.memory_space<vmem>>
    %606 = arith.index_cast %583 : i32 to index
    %c0_378 = arith.constant 0 : index
    %607 = vector.load %605[%606, %c0_378] : memref<64x128xf32, #tpu.memory_space<vmem>>, vector<8x128xf32>
    %608 = arith.addf %607, %590 : vector<8x128xf32>
    %609 = arith.negf %608 : vector<8x128xf32>
    %610 = math.exp %609 : vector<8x128xf32>
    %cst_379 = arith.constant 1.000000e+00 : f32
    %611 = vector.broadcast %cst_379 : f32 to vector<8x128xf32>
    %612 = arith.addf %611, %610 : vector<8x128xf32>
    %613 = arith.divf %611, %612 : vector<8x128xf32>
    %c0_i32_380 = arith.constant 0 : i32
    %c0_i32_381 = arith.constant 0 : i32
    %614 = tpu.memref_slice %arg12[%c2_i32_279, %c0_i32_380, %c0_i32_381] : memref<3x64x128xf32, #tpu.memory_space<vmem>> -> memref<1x64x128xf32, #tpu.memory_space<vmem>>
    %615 = tpu.memref_squeeze %614 : memref<1x64x128xf32, #tpu.memory_space<vmem>> -> memref<64x128xf32, #tpu.memory_space<vmem>>
    %616 = arith.index_cast %583 : i32 to index
    %c0_382 = arith.constant 0 : index
    %617 = vector.load %615[%616, %c0_382] : memref<64x128xf32, #tpu.memory_space<vmem>>, vector<8x128xf32>
    %618 = arith.addf %593, %445 : vector<8x128xf32>
    %619 = arith.mulf %603, %618 : vector<8x128xf32>
    %620 = arith.addf %617, %619 : vector<8x128xf32>
    %621 = math.tanh %620 : vector<8x128xf32>
    %cst_383 = arith.constant 1.000000e+00 : f32
    %622 = vector.broadcast %cst_383 : f32 to vector<8x128xf32>
    %623 = arith.subf %622, %613 : vector<8x128xf32>
    %624 = arith.mulf %623, %621 : vector<8x128xf32>
    %625 = arith.mulf %613, %581 : vector<8x128xf32>
    %626 = arith.addf %624, %625 : vector<8x128xf32>
    %c4_i32_384 = arith.constant 4 : i32
    %c8_i32_385 = arith.constant 8 : i32
    %627 = arith.muli %c4_i32_384, %c8_i32_385 : i32
    %628 = tpu.assume_multiple %627, 8 : i32
    %629 = arith.truncf %626 : vector<8x128xf32> to vector<8x128xbf16>
    %c0_386 = arith.constant 0 : index
    %c0_387 = arith.constant 0 : index
    %c0_388 = arith.constant 0 : index
    %630 = vector.load %arg6[%c0_386, %c0_387, %c0_388] : memref<3x128x128xbf16, #tpu.memory_space<vmem>>, vector<1x128x128xbf16>
    %631 = vector.shape_cast %630 : vector<1x128x128xbf16> to vector<128x128xbf16>
    %cst_389 = arith.constant dense<0.000000e+00> : vector<8x128xf32>
    %632 = tpu.matmul %629, %631, %cst_389 {dimension_numbers = #tpu.dot_dimension_numbers<[1], [0], [0], [1], [0, 0, 1, 1], [], []>} : vector<8x128xbf16>, vector<128x128xbf16>, vector<8x128xf32> -> vector<8x128xf32>
    %c1_390 = arith.constant 1 : index
    %c0_391 = arith.constant 0 : index
    %c0_392 = arith.constant 0 : index
    %633 = vector.load %arg6[%c1_390, %c0_391, %c0_392] : memref<3x128x128xbf16, #tpu.memory_space<vmem>>, vector<1x128x128xbf16>
    %634 = vector.shape_cast %633 : vector<1x128x128xbf16> to vector<128x128xbf16>
    %cst_393 = arith.constant dense<0.000000e+00> : vector<8x128xf32>
    %635 = tpu.matmul %629, %634, %cst_393 {dimension_numbers = #tpu.dot_dimension_numbers<[1], [0], [0], [1], [0, 0, 1, 1], [], []>} : vector<8x128xbf16>, vector<128x128xbf16>, vector<8x128xf32> -> vector<8x128xf32>
    %c2_394 = arith.constant 2 : index
    %c0_395 = arith.constant 0 : index
    %c0_396 = arith.constant 0 : index
    %636 = vector.load %arg6[%c2_394, %c0_395, %c0_396] : memref<3x128x128xbf16, #tpu.memory_space<vmem>>, vector<1x128x128xbf16>
    %637 = vector.shape_cast %636 : vector<1x128x128xbf16> to vector<128x128xbf16>
    %cst_397 = arith.constant dense<0.000000e+00> : vector<8x128xf32>
    %638 = tpu.matmul %629, %637, %cst_397 {dimension_numbers = #tpu.dot_dimension_numbers<[1], [0], [0], [1], [0, 0, 1, 1], [], []>} : vector<8x128xbf16>, vector<128x128xbf16>, vector<8x128xf32> -> vector<8x128xf32>
    %c0_i32_398 = arith.constant 0 : i32
    %c0_i32_399 = arith.constant 0 : i32
    %639 = tpu.memref_slice %arg12[%c0_i32_277, %c0_i32_398, %c0_i32_399] : memref<3x64x128xf32, #tpu.memory_space<vmem>> -> memref<1x64x128xf32, #tpu.memory_space<vmem>>
    %640 = tpu.memref_squeeze %639 : memref<1x64x128xf32, #tpu.memory_space<vmem>> -> memref<64x128xf32, #tpu.memory_space<vmem>>
    %641 = arith.index_cast %628 : i32 to index
    %c0_400 = arith.constant 0 : index
    %642 = vector.load %640[%641, %c0_400] : memref<64x128xf32, #tpu.memory_space<vmem>>, vector<8x128xf32>
    %643 = arith.addf %642, %632 : vector<8x128xf32>
    %644 = arith.negf %643 : vector<8x128xf32>
    %645 = math.exp %644 : vector<8x128xf32>
    %cst_401 = arith.constant 1.000000e+00 : f32
    %646 = vector.broadcast %cst_401 : f32 to vector<8x128xf32>
    %647 = arith.addf %646, %645 : vector<8x128xf32>
    %648 = arith.divf %646, %647 : vector<8x128xf32>
    %c0_i32_402 = arith.constant 0 : i32
    %c0_i32_403 = arith.constant 0 : i32
    %649 = tpu.memref_slice %arg12[%c1_i32_278, %c0_i32_402, %c0_i32_403] : memref<3x64x128xf32, #tpu.memory_space<vmem>> -> memref<1x64x128xf32, #tpu.memory_space<vmem>>
    %650 = tpu.memref_squeeze %649 : memref<1x64x128xf32, #tpu.memory_space<vmem>> -> memref<64x128xf32, #tpu.memory_space<vmem>>
    %651 = arith.index_cast %628 : i32 to index
    %c0_404 = arith.constant 0 : index
    %652 = vector.load %650[%651, %c0_404] : memref<64x128xf32, #tpu.memory_space<vmem>>, vector<8x128xf32>
    %653 = arith.addf %652, %635 : vector<8x128xf32>
    %654 = arith.negf %653 : vector<8x128xf32>
    %655 = math.exp %654 : vector<8x128xf32>
    %cst_405 = arith.constant 1.000000e+00 : f32
    %656 = vector.broadcast %cst_405 : f32 to vector<8x128xf32>
    %657 = arith.addf %656, %655 : vector<8x128xf32>
    %658 = arith.divf %656, %657 : vector<8x128xf32>
    %c0_i32_406 = arith.constant 0 : i32
    %c0_i32_407 = arith.constant 0 : i32
    %659 = tpu.memref_slice %arg12[%c2_i32_279, %c0_i32_406, %c0_i32_407] : memref<3x64x128xf32, #tpu.memory_space<vmem>> -> memref<1x64x128xf32, #tpu.memory_space<vmem>>
    %660 = tpu.memref_squeeze %659 : memref<1x64x128xf32, #tpu.memory_space<vmem>> -> memref<64x128xf32, #tpu.memory_space<vmem>>
    %661 = arith.index_cast %628 : i32 to index
    %c0_408 = arith.constant 0 : index
    %662 = vector.load %660[%661, %c0_408] : memref<64x128xf32, #tpu.memory_space<vmem>>, vector<8x128xf32>
    %663 = arith.addf %638, %445 : vector<8x128xf32>
    %664 = arith.mulf %648, %663 : vector<8x128xf32>
    %665 = arith.addf %662, %664 : vector<8x128xf32>
    %666 = math.tanh %665 : vector<8x128xf32>
    %cst_409 = arith.constant 1.000000e+00 : f32
    %667 = vector.broadcast %cst_409 : f32 to vector<8x128xf32>
    %668 = arith.subf %667, %658 : vector<8x128xf32>
    %669 = arith.mulf %668, %666 : vector<8x128xf32>
    %670 = arith.mulf %658, %626 : vector<8x128xf32>
    %671 = arith.addf %669, %670 : vector<8x128xf32>
    %c5_i32_410 = arith.constant 5 : i32
    %c8_i32_411 = arith.constant 8 : i32
    %672 = arith.muli %c5_i32_410, %c8_i32_411 : i32
    %673 = tpu.assume_multiple %672, 8 : i32
    %674 = arith.truncf %671 : vector<8x128xf32> to vector<8x128xbf16>
    %c0_412 = arith.constant 0 : index
    %c0_413 = arith.constant 0 : index
    %c0_414 = arith.constant 0 : index
    %675 = vector.load %arg6[%c0_412, %c0_413, %c0_414] : memref<3x128x128xbf16, #tpu.memory_space<vmem>>, vector<1x128x128xbf16>
    %676 = vector.shape_cast %675 : vector<1x128x128xbf16> to vector<128x128xbf16>
    %cst_415 = arith.constant dense<0.000000e+00> : vector<8x128xf32>
    %677 = tpu.matmul %674, %676, %cst_415 {dimension_numbers = #tpu.dot_dimension_numbers<[1], [0], [0], [1], [0, 0, 1, 1], [], []>} : vector<8x128xbf16>, vector<128x128xbf16>, vector<8x128xf32> -> vector<8x128xf32>
    %c1_416 = arith.constant 1 : index
    %c0_417 = arith.constant 0 : index
    %c0_418 = arith.constant 0 : index
    %678 = vector.load %arg6[%c1_416, %c0_417, %c0_418] : memref<3x128x128xbf16, #tpu.memory_space<vmem>>, vector<1x128x128xbf16>
    %679 = vector.shape_cast %678 : vector<1x128x128xbf16> to vector<128x128xbf16>
    %cst_419 = arith.constant dense<0.000000e+00> : vector<8x128xf32>
    %680 = tpu.matmul %674, %679, %cst_419 {dimension_numbers = #tpu.dot_dimension_numbers<[1], [0], [0], [1], [0, 0, 1, 1], [], []>} : vector<8x128xbf16>, vector<128x128xbf16>, vector<8x128xf32> -> vector<8x128xf32>
    %c2_420 = arith.constant 2 : index
    %c0_421 = arith.constant 0 : index
    %c0_422 = arith.constant 0 : index
    %681 = vector.load %arg6[%c2_420, %c0_421, %c0_422] : memref<3x128x128xbf16, #tpu.memory_space<vmem>>, vector<1x128x128xbf16>
    %682 = vector.shape_cast %681 : vector<1x128x128xbf16> to vector<128x128xbf16>
    %cst_423 = arith.constant dense<0.000000e+00> : vector<8x128xf32>
    %683 = tpu.matmul %674, %682, %cst_423 {dimension_numbers = #tpu.dot_dimension_numbers<[1], [0], [0], [1], [0, 0, 1, 1], [], []>} : vector<8x128xbf16>, vector<128x128xbf16>, vector<8x128xf32> -> vector<8x128xf32>
    %c0_i32_424 = arith.constant 0 : i32
    %c0_i32_425 = arith.constant 0 : i32
    %684 = tpu.memref_slice %arg12[%c0_i32_277, %c0_i32_424, %c0_i32_425] : memref<3x64x128xf32, #tpu.memory_space<vmem>> -> memref<1x64x128xf32, #tpu.memory_space<vmem>>
    %685 = tpu.memref_squeeze %684 : memref<1x64x128xf32, #tpu.memory_space<vmem>> -> memref<64x128xf32, #tpu.memory_space<vmem>>
    %686 = arith.index_cast %673 : i32 to index
    %c0_426 = arith.constant 0 : index
    %687 = vector.load %685[%686, %c0_426] : memref<64x128xf32, #tpu.memory_space<vmem>>, vector<8x128xf32>
    %688 = arith.addf %687, %677 : vector<8x128xf32>
    %689 = arith.negf %688 : vector<8x128xf32>
    %690 = math.exp %689 : vector<8x128xf32>
    %cst_427 = arith.constant 1.000000e+00 : f32
    %691 = vector.broadcast %cst_427 : f32 to vector<8x128xf32>
    %692 = arith.addf %691, %690 : vector<8x128xf32>
    %693 = arith.divf %691, %692 : vector<8x128xf32>
    %c0_i32_428 = arith.constant 0 : i32
    %c0_i32_429 = arith.constant 0 : i32
    %694 = tpu.memref_slice %arg12[%c1_i32_278, %c0_i32_428, %c0_i32_429] : memref<3x64x128xf32, #tpu.memory_space<vmem>> -> memref<1x64x128xf32, #tpu.memory_space<vmem>>
    %695 = tpu.memref_squeeze %694 : memref<1x64x128xf32, #tpu.memory_space<vmem>> -> memref<64x128xf32, #tpu.memory_space<vmem>>
    %696 = arith.index_cast %673 : i32 to index
    %c0_430 = arith.constant 0 : index
    %697 = vector.load %695[%696, %c0_430] : memref<64x128xf32, #tpu.memory_space<vmem>>, vector<8x128xf32>
    %698 = arith.addf %697, %680 : vector<8x128xf32>
    %699 = arith.negf %698 : vector<8x128xf32>
    %700 = math.exp %699 : vector<8x128xf32>
    %cst_431 = arith.constant 1.000000e+00 : f32
    %701 = vector.broadcast %cst_431 : f32 to vector<8x128xf32>
    %702 = arith.addf %701, %700 : vector<8x128xf32>
    %703 = arith.divf %701, %702 : vector<8x128xf32>
    %c0_i32_432 = arith.constant 0 : i32
    %c0_i32_433 = arith.constant 0 : i32
    %704 = tpu.memref_slice %arg12[%c2_i32_279, %c0_i32_432, %c0_i32_433] : memref<3x64x128xf32, #tpu.memory_space<vmem>> -> memref<1x64x128xf32, #tpu.memory_space<vmem>>
    %705 = tpu.memref_squeeze %704 : memref<1x64x128xf32, #tpu.memory_space<vmem>> -> memref<64x128xf32, #tpu.memory_space<vmem>>
    %706 = arith.index_cast %673 : i32 to index
    %c0_434 = arith.constant 0 : index
    %707 = vector.load %705[%706, %c0_434] : memref<64x128xf32, #tpu.memory_space<vmem>>, vector<8x128xf32>
    %708 = arith.addf %683, %445 : vector<8x128xf32>
    %709 = arith.mulf %693, %708 : vector<8x128xf32>
    %710 = arith.addf %707, %709 : vector<8x128xf32>
    %711 = math.tanh %710 : vector<8x128xf32>
    %cst_435 = arith.constant 1.000000e+00 : f32
    %712 = vector.broadcast %cst_435 : f32 to vector<8x128xf32>
    %713 = arith.subf %712, %703 : vector<8x128xf32>
    %714 = arith.mulf %713, %711 : vector<8x128xf32>
    %715 = arith.mulf %703, %671 : vector<8x128xf32>
    %716 = arith.addf %714, %715 : vector<8x128xf32>
    %c6_i32_436 = arith.constant 6 : i32
    %c8_i32_437 = arith.constant 8 : i32
    %717 = arith.muli %c6_i32_436, %c8_i32_437 : i32
    %718 = tpu.assume_multiple %717, 8 : i32
    %719 = arith.truncf %716 : vector<8x128xf32> to vector<8x128xbf16>
    %c0_438 = arith.constant 0 : index
    %c0_439 = arith.constant 0 : index
    %c0_440 = arith.constant 0 : index
    %720 = vector.load %arg6[%c0_438, %c0_439, %c0_440] : memref<3x128x128xbf16, #tpu.memory_space<vmem>>, vector<1x128x128xbf16>
    %721 = vector.shape_cast %720 : vector<1x128x128xbf16> to vector<128x128xbf16>
    %cst_441 = arith.constant dense<0.000000e+00> : vector<8x128xf32>
    %722 = tpu.matmul %719, %721, %cst_441 {dimension_numbers = #tpu.dot_dimension_numbers<[1], [0], [0], [1], [0, 0, 1, 1], [], []>} : vector<8x128xbf16>, vector<128x128xbf16>, vector<8x128xf32> -> vector<8x128xf32>
    %c1_442 = arith.constant 1 : index
    %c0_443 = arith.constant 0 : index
    %c0_444 = arith.constant 0 : index
    %723 = vector.load %arg6[%c1_442, %c0_443, %c0_444] : memref<3x128x128xbf16, #tpu.memory_space<vmem>>, vector<1x128x128xbf16>
    %724 = vector.shape_cast %723 : vector<1x128x128xbf16> to vector<128x128xbf16>
    %cst_445 = arith.constant dense<0.000000e+00> : vector<8x128xf32>
    %725 = tpu.matmul %719, %724, %cst_445 {dimension_numbers = #tpu.dot_dimension_numbers<[1], [0], [0], [1], [0, 0, 1, 1], [], []>} : vector<8x128xbf16>, vector<128x128xbf16>, vector<8x128xf32> -> vector<8x128xf32>
    %c2_446 = arith.constant 2 : index
    %c0_447 = arith.constant 0 : index
    %c0_448 = arith.constant 0 : index
    %726 = vector.load %arg6[%c2_446, %c0_447, %c0_448] : memref<3x128x128xbf16, #tpu.memory_space<vmem>>, vector<1x128x128xbf16>
    %727 = vector.shape_cast %726 : vector<1x128x128xbf16> to vector<128x128xbf16>
    %cst_449 = arith.constant dense<0.000000e+00> : vector<8x128xf32>
    %728 = tpu.matmul %719, %727, %cst_449 {dimension_numbers = #tpu.dot_dimension_numbers<[1], [0], [0], [1], [0, 0, 1, 1], [], []>} : vector<8x128xbf16>, vector<128x128xbf16>, vector<8x128xf32> -> vector<8x128xf32>
    %c0_i32_450 = arith.constant 0 : i32
    %c0_i32_451 = arith.constant 0 : i32
    %729 = tpu.memref_slice %arg12[%c0_i32_277, %c0_i32_450, %c0_i32_451] : memref<3x64x128xf32, #tpu.memory_space<vmem>> -> memref<1x64x128xf32, #tpu.memory_space<vmem>>
    %730 = tpu.memref_squeeze %729 : memref<1x64x128xf32, #tpu.memory_space<vmem>> -> memref<64x128xf32, #tpu.memory_space<vmem>>
    %731 = arith.index_cast %718 : i32 to index
    %c0_452 = arith.constant 0 : index
    %732 = vector.load %730[%731, %c0_452] : memref<64x128xf32, #tpu.memory_space<vmem>>, vector<8x128xf32>
    %733 = arith.addf %732, %722 : vector<8x128xf32>
    %734 = arith.negf %733 : vector<8x128xf32>
    %735 = math.exp %734 : vector<8x128xf32>
    %cst_453 = arith.constant 1.000000e+00 : f32
    %736 = vector.broadcast %cst_453 : f32 to vector<8x128xf32>
    %737 = arith.addf %736, %735 : vector<8x128xf32>
    %738 = arith.divf %736, %737 : vector<8x128xf32>
    %c0_i32_454 = arith.constant 0 : i32
    %c0_i32_455 = arith.constant 0 : i32
    %739 = tpu.memref_slice %arg12[%c1_i32_278, %c0_i32_454, %c0_i32_455] : memref<3x64x128xf32, #tpu.memory_space<vmem>> -> memref<1x64x128xf32, #tpu.memory_space<vmem>>
    %740 = tpu.memref_squeeze %739 : memref<1x64x128xf32, #tpu.memory_space<vmem>> -> memref<64x128xf32, #tpu.memory_space<vmem>>
    %741 = arith.index_cast %718 : i32 to index
    %c0_456 = arith.constant 0 : index
    %742 = vector.load %740[%741, %c0_456] : memref<64x128xf32, #tpu.memory_space<vmem>>, vector<8x128xf32>
    %743 = arith.addf %742, %725 : vector<8x128xf32>
    %744 = arith.negf %743 : vector<8x128xf32>
    %745 = math.exp %744 : vector<8x128xf32>
    %cst_457 = arith.constant 1.000000e+00 : f32
    %746 = vector.broadcast %cst_457 : f32 to vector<8x128xf32>
    %747 = arith.addf %746, %745 : vector<8x128xf32>
    %748 = arith.divf %746, %747 : vector<8x128xf32>
    %c0_i32_458 = arith.constant 0 : i32
    %c0_i32_459 = arith.constant 0 : i32
    %749 = tpu.memref_slice %arg12[%c2_i32_279, %c0_i32_458, %c0_i32_459] : memref<3x64x128xf32, #tpu.memory_space<vmem>> -> memref<1x64x128xf32, #tpu.memory_space<vmem>>
    %750 = tpu.memref_squeeze %749 : memref<1x64x128xf32, #tpu.memory_space<vmem>> -> memref<64x128xf32, #tpu.memory_space<vmem>>
    %751 = arith.index_cast %718 : i32 to index
    %c0_460 = arith.constant 0 : index
    %752 = vector.load %750[%751, %c0_460] : memref<64x128xf32, #tpu.memory_space<vmem>>, vector<8x128xf32>
    %753 = arith.addf %728, %445 : vector<8x128xf32>
    %754 = arith.mulf %738, %753 : vector<8x128xf32>
    %755 = arith.addf %752, %754 : vector<8x128xf32>
    %756 = math.tanh %755 : vector<8x128xf32>
    %cst_461 = arith.constant 1.000000e+00 : f32
    %757 = vector.broadcast %cst_461 : f32 to vector<8x128xf32>
    %758 = arith.subf %757, %748 : vector<8x128xf32>
    %759 = arith.mulf %758, %756 : vector<8x128xf32>
    %760 = arith.mulf %748, %716 : vector<8x128xf32>
    %761 = arith.addf %759, %760 : vector<8x128xf32>
    %c7_i32_462 = arith.constant 7 : i32
    %c8_i32_463 = arith.constant 8 : i32
    %762 = arith.muli %c7_i32_462, %c8_i32_463 : i32
    %763 = tpu.assume_multiple %762, 8 : i32
    %764 = arith.truncf %761 : vector<8x128xf32> to vector<8x128xbf16>
    %c0_464 = arith.constant 0 : index
    %c0_465 = arith.constant 0 : index
    %c0_466 = arith.constant 0 : index
    %765 = vector.load %arg6[%c0_464, %c0_465, %c0_466] : memref<3x128x128xbf16, #tpu.memory_space<vmem>>, vector<1x128x128xbf16>
    %766 = vector.shape_cast %765 : vector<1x128x128xbf16> to vector<128x128xbf16>
    %cst_467 = arith.constant dense<0.000000e+00> : vector<8x128xf32>
    %767 = tpu.matmul %764, %766, %cst_467 {dimension_numbers = #tpu.dot_dimension_numbers<[1], [0], [0], [1], [0, 0, 1, 1], [], []>} : vector<8x128xbf16>, vector<128x128xbf16>, vector<8x128xf32> -> vector<8x128xf32>
    %c1_468 = arith.constant 1 : index
    %c0_469 = arith.constant 0 : index
    %c0_470 = arith.constant 0 : index
    %768 = vector.load %arg6[%c1_468, %c0_469, %c0_470] : memref<3x128x128xbf16, #tpu.memory_space<vmem>>, vector<1x128x128xbf16>
    %769 = vector.shape_cast %768 : vector<1x128x128xbf16> to vector<128x128xbf16>
    %cst_471 = arith.constant dense<0.000000e+00> : vector<8x128xf32>
    %770 = tpu.matmul %764, %769, %cst_471 {dimension_numbers = #tpu.dot_dimension_numbers<[1], [0], [0], [1], [0, 0, 1, 1], [], []>} : vector<8x128xbf16>, vector<128x128xbf16>, vector<8x128xf32> -> vector<8x128xf32>
    %c2_472 = arith.constant 2 : index
    %c0_473 = arith.constant 0 : index
    %c0_474 = arith.constant 0 : index
    %771 = vector.load %arg6[%c2_472, %c0_473, %c0_474] : memref<3x128x128xbf16, #tpu.memory_space<vmem>>, vector<1x128x128xbf16>
    %772 = vector.shape_cast %771 : vector<1x128x128xbf16> to vector<128x128xbf16>
    %cst_475 = arith.constant dense<0.000000e+00> : vector<8x128xf32>
    %773 = tpu.matmul %764, %772, %cst_475 {dimension_numbers = #tpu.dot_dimension_numbers<[1], [0], [0], [1], [0, 0, 1, 1], [], []>} : vector<8x128xbf16>, vector<128x128xbf16>, vector<8x128xf32> -> vector<8x128xf32>
    %c0_i32_476 = arith.constant 0 : i32
    %c0_i32_477 = arith.constant 0 : i32
    %774 = tpu.memref_slice %arg12[%c0_i32_277, %c0_i32_476, %c0_i32_477] : memref<3x64x128xf32, #tpu.memory_space<vmem>> -> memref<1x64x128xf32, #tpu.memory_space<vmem>>
    %775 = tpu.memref_squeeze %774 : memref<1x64x128xf32, #tpu.memory_space<vmem>> -> memref<64x128xf32, #tpu.memory_space<vmem>>
    %776 = arith.index_cast %763 : i32 to index
    %c0_478 = arith.constant 0 : index
    %777 = vector.load %775[%776, %c0_478] : memref<64x128xf32, #tpu.memory_space<vmem>>, vector<8x128xf32>
    %778 = arith.addf %777, %767 : vector<8x128xf32>
    %779 = arith.negf %778 : vector<8x128xf32>
    %780 = math.exp %779 : vector<8x128xf32>
    %cst_479 = arith.constant 1.000000e+00 : f32
    %781 = vector.broadcast %cst_479 : f32 to vector<8x128xf32>
    %782 = arith.addf %781, %780 : vector<8x128xf32>
    %783 = arith.divf %781, %782 : vector<8x128xf32>
    %c0_i32_480 = arith.constant 0 : i32
    %c0_i32_481 = arith.constant 0 : i32
    %784 = tpu.memref_slice %arg12[%c1_i32_278, %c0_i32_480, %c0_i32_481] : memref<3x64x128xf32, #tpu.memory_space<vmem>> -> memref<1x64x128xf32, #tpu.memory_space<vmem>>
    %785 = tpu.memref_squeeze %784 : memref<1x64x128xf32, #tpu.memory_space<vmem>> -> memref<64x128xf32, #tpu.memory_space<vmem>>
    %786 = arith.index_cast %763 : i32 to index
    %c0_482 = arith.constant 0 : index
    %787 = vector.load %785[%786, %c0_482] : memref<64x128xf32, #tpu.memory_space<vmem>>, vector<8x128xf32>
    %788 = arith.addf %787, %770 : vector<8x128xf32>
    %789 = arith.negf %788 : vector<8x128xf32>
    %790 = math.exp %789 : vector<8x128xf32>
    %cst_483 = arith.constant 1.000000e+00 : f32
    %791 = vector.broadcast %cst_483 : f32 to vector<8x128xf32>
    %792 = arith.addf %791, %790 : vector<8x128xf32>
    %793 = arith.divf %791, %792 : vector<8x128xf32>
    %c0_i32_484 = arith.constant 0 : i32
    %c0_i32_485 = arith.constant 0 : i32
    %794 = tpu.memref_slice %arg12[%c2_i32_279, %c0_i32_484, %c0_i32_485] : memref<3x64x128xf32, #tpu.memory_space<vmem>> -> memref<1x64x128xf32, #tpu.memory_space<vmem>>
    %795 = tpu.memref_squeeze %794 : memref<1x64x128xf32, #tpu.memory_space<vmem>> -> memref<64x128xf32, #tpu.memory_space<vmem>>
    %796 = arith.index_cast %763 : i32 to index
    %c0_486 = arith.constant 0 : index
    %797 = vector.load %795[%796, %c0_486] : memref<64x128xf32, #tpu.memory_space<vmem>>, vector<8x128xf32>
    %798 = arith.addf %773, %445 : vector<8x128xf32>
    %799 = arith.mulf %783, %798 : vector<8x128xf32>
    %800 = arith.addf %797, %799 : vector<8x128xf32>
    %801 = math.tanh %800 : vector<8x128xf32>
    %cst_487 = arith.constant 1.000000e+00 : f32
    %802 = vector.broadcast %cst_487 : f32 to vector<8x128xf32>
    %803 = arith.subf %802, %793 : vector<8x128xf32>
    %804 = arith.mulf %803, %801 : vector<8x128xf32>
    %805 = arith.mulf %793, %761 : vector<8x128xf32>
    %806 = arith.addf %804, %805 : vector<8x128xf32>
    %c8_i32_488 = arith.constant 8 : i32
    %807 = arith.truncf %806 : vector<8x128xf32> to vector<8x128xbf16>
    %c0_489 = arith.constant 0 : index
    %c0_490 = arith.constant 0 : index
    %808 = vector.load %arg9[%c0_489, %c0_490] : memref<128x128xbf16, #tpu.memory_space<vmem>>, vector<128x128xbf16>
    %cst_491 = arith.constant dense<0.000000e+00> : vector<8x128xf32>
    %809 = tpu.matmul %807, %808, %cst_491 {dimension_numbers = #tpu.dot_dimension_numbers<[1], [0], [0], [1], [0, 0, 1, 1], [], []>} : vector<8x128xbf16>, vector<128x128xbf16>, vector<8x128xf32> -> vector<8x128xf32>
    %c0_492 = arith.constant 0 : index
    %c0_493 = arith.constant 0 : index
    %810 = vector.load %arg10[%c0_492, %c0_493] : memref<1x128xf32, #tpu.memory_space<vmem>>, vector<1x128xf32>
    %811 = vector.broadcast %810 : vector<1x128xf32> to vector<8x128xf32>
    %812 = arith.addf %809, %811 : vector<8x128xf32>
    %c0_494 = arith.constant 0 : index
    %c0_495 = arith.constant 0 : index
    %813 = vector.load %arg11[%c0_494, %c0_495] : memref<8x128xf32, #tpu.memory_space<vmem>>, vector<8x128xf32>
    tpu.vector_store %arg11[%c0_494, %c0_495], %812 {strides = array<i32>} : memref<8x128xf32, #tpu.memory_space<vmem>>, vector<8x128xf32>,
    return
  }
}

</mosaic_0001>

<llo_original>
// kernel: tpu_custom_call.1
$region0: #{tpu_custom_call.1}
  #allocation0 [shape = 'u32[]', space=smem, size = 0x4, offset = 0x4, fixed_abs, tag = 'smem constant byte address 0x4 - core index']
  #allocation1 [shape = 'u32[144,128]{1,0:T(1,128)}', space=vmem, size = 0x12000, scoped, tag = 'internal scratch']
  #allocation2 [shape = 'f32[3,64,128]{2,1,0:T(8,128)}', space=vmem, size = 0x18000, scoped, tag = 'scratch operand']
  #allocation3 [shape = 'f32[64,128]{1,0:T(8,128)}', space=vmem, size = 0x8000, scoped, tag = 'scratch operand']
  %s0 = inlined_call_operand.hbm [shape: bf16[64,128], index: 0, kind: input, shape index: {}]
  %s1 = inlined_call_operand.hbm [shape: bf16[3,128,128], index: 1, kind: input, shape index: {}]
  %s2 = inlined_call_operand.hbm [shape: bf16[3,128,128], index: 2, kind: input, shape index: {}]
  %s3 = inlined_call_operand.vmem [shape: f32[3,1,128], index: 3, kind: input, shape index: {}]
  %s4 = inlined_call_operand.vmem [shape: f32[1,128], index: 4, kind: input, shape index: {}]
  %s5 = inlined_call_operand.hbm [shape: bf16[3,128,128], index: 5, kind: input, shape index: {}]
  %s6 = inlined_call_operand.hbm [shape: bf16[3,128,128], index: 6, kind: input, shape index: {}]
  %s7 = inlined_call_operand.vmem [shape: f32[3,1,128], index: 7, kind: input, shape index: {}]
  %s8 = inlined_call_operand.vmem [shape: f32[1,128], index: 8, kind: input, shape index: {}]
  %s9 = inlined_call_operand.hbm [shape: bf16[128,128], index: 9, kind: input, shape index: {}]
  %s10 = inlined_call_operand.vmem [shape: f32[1,128], index: 10, kind: input, shape index: {}]
  %s11 = inlined_call_operand.hbm [shape: f32[8,128], index: 11, kind: output, shape index: {}]
  %s12 = sld [smem:[#allocation0]]
  $region78: #{tpu_custom_call.1} parent=0
    _
  %s14 = ssub.s32 1, %s12
  %s15 = scalar_select 0, %s14, %s12
  $region1: #{tpu_custom_call.1} parent=0
    #allocation4 [shape = 'u8[16384]{0}', space=vmem, size = 0x4000, scoped, tag = 'input window, operand 0, single buffered']
    #allocation5 [shape = 's32[1]{0}', space=sflag, size = 0x4, scoped, tag = 'scoped memory for tpu_custom_call.1']
    #allocation6 [shape = 's32[1]{0}', space=sflag, size = 0x4, scoped, tag = 'scoped memory for tpu_custom_call.1']
    #allocation7 [shape = 'u8[98304]{0}', space=vmem, size = 0x18000, scoped, tag = 'input window, operand 1, single buffered']
    #allocation8 [shape = 's32[1]{0}', space=sflag, size = 0x4, scoped, tag = 'scoped memory for tpu_custom_call.1']
    #allocation9 [shape = 'u8[98304]{0}', space=vmem, size = 0x18000, scoped, tag = 'input window, operand 2, single buffered']
    #allocation10 [shape = 'u8[98304]{0}', space=vmem, size = 0x18000, scoped, tag = 'input window, operand 5, single buffered']
    #allocation11 [shape = 's32[1]{0}', space=sflag, size = 0x4, scoped, tag = 'scoped memory for tpu_custom_call.1']
    #allocation12 [shape = 'u8[98304]{0}', space=vmem, size = 0x18000, scoped, tag = 'input window, operand 6, single buffered']
    #allocation13 [shape = 'u8[32768]{0}', space=vmem, size = 0x8000, scoped, tag = 'input window, operand 9, single buffered']
    #allocation14 [shape = 's32[1]{0}', space=sflag, size = 0x4, scoped, tag = 'scoped memory for tpu_custom_call.1']
    #allocation15 [shape = 'u8[4096]{0}', space=vmem, size = 0x1000, scoped, tag = 'output window, operand 0, single buffered']
    %16 = vsyncpa [#allocation5], 0
    %17 = vsyncpa [#allocation8], 0
    %18 = vsyncpa [#allocation11], 0
    %19 = vsyncpa [#allocation14], 0
    %20 = vsyncpa [#allocation6], 0
    // Predicated region
    $region2: #{tpu_custom_call.1} parent=1 // pred_check
      _
    $region3: #{tpu_custom_call.1} parent=1 // pred_check_branch
      %22 = sbr.rel (0) target = $region5
    $region4: #{tpu_custom_call.1} parent=1 // pred_region
      %s24 = ssub.s32 512, 512
      %25 = vsyncadd [#allocation5], %s24
      %s26 = sshll.u32 [#allocation4], 4
      %s27 = int_to_ptr.vmem [resolvable:$true] %s26
      %32 = dma.hbm_to_vmem [thread:$0]  %s0, 512, %s27, [#allocation5], 64, 64, 4
    $region5: #{tpu_custom_call.1} parent=1 // pred_fallthru
      _
    // Predicated region
    $region6: #{tpu_custom_call.1} parent=1 // pred_check
      _
    $region7: #{tpu_custom_call.1} parent=1 // pred_check_branch
      %34 = sbr.rel (0) target = $region9
    $region8: #{tpu_custom_call.1} parent=1 // pred_region
      %s36 = ssub.s32 3072, 3072
      %37 = vsyncadd [#allocation8], %s36
      %s38 = sshll.u32 [#allocation7], 4
      %s39 = int_to_ptr.vmem [resolvable:$true] %s38
      %44 = dma.hbm_to_vmem [thread:$0]  %s1, 3072, %s39, [#allocation8], 64, 64, 4
    $region9: #{tpu_custom_call.1} parent=1 // pred_fallthru
      _
    // Predicated region
    $region10: #{tpu_custom_call.1} parent=1 // pred_check
      _
    $region11: #{tpu_custom_call.1} parent=1 // pred_check_branch
      %46 = sbr.rel (0) target = $region13
    $region12: #{tpu_custom_call.1} parent=1 // pred_region
      %s48 = ssub.s32 3072, 3072
      %49 = vsyncadd [#allocation8], %s48
      %s50 = sshll.u32 [#allocation9], 4
      %s51 = int_to_ptr.vmem [resolvable:$true] %s50
      %56 = dma.hbm_to_vmem [thread:$0]  %s2, 3072, %s51, [#allocation8], 64, 64, 4
    $region13: #{tpu_custom_call.1} parent=1 // pred_fallthru
      _
    // Predicated region
    $region14: #{tpu_custom_call.1} parent=1 // pred_check
      _
    $region15: #{tpu_custom_call.1} parent=1 // pred_check_branch
      %58 = sbr.rel (0) target = $region17
    $region16: #{tpu_custom_call.1} parent=1 // pred_region
      _
    $region17: #{tpu_custom_call.1} parent=1 // pred_fallthru
      _
    // Predicated region
    $region18: #{tpu_custom_call.1} parent=1 // pred_check
      _
    $region19: #{tpu_custom_call.1} parent=1 // pred_check_branch
      %60 = sbr.rel (0) target = $region21
    $region20: #{tpu_custom_call.1} parent=1 // pred_region
      _
    $region21: #{tpu_custom_call.1} parent=1 // pred_fallthru
      _
    // Predicated region
    $region22: #{tpu_custom_call.1} parent=1 // pred_check
      _
    $region23: #{tpu_custom_call.1} parent=1 // pred_check_branch
      %62 = sbr.rel (0) target = $region25
    $region24: #{tpu_custom_call.1} parent=1 // pred_region
      %s64 = ssub.s32 3072, 3072
      %65 = vsyncadd [#allocation11], %s64
      %s66 = sshll.u32 [#allocation10], 4
      %s67 = int_to_ptr.vmem [resolvable:$true] %s66
      %72 = dma.hbm_to_vmem [thread:$0]  %s5, 3072, %s67, [#allocation11], 64, 64, 4
    $region25: #{tpu_custom_call.1} parent=1 // pred_fallthru
      _
    // Predicated region
    $region26: #{tpu_custom_call.1} parent=1 // pred_check
      _
    $region27: #{tpu_custom_call.1} parent=1 // pred_check_branch
      %74 = sbr.rel (0) target = $region29
    $region28: #{tpu_custom_call.1} parent=1 // pred_region
      %s76 = ssub.s32 3072, 3072
      %77 = vsyncadd [#allocation11], %s76
      %s78 = sshll.u32 [#allocation12], 4
      %s79 = int_to_ptr.vmem [resolvable:$true] %s78
      %84 = dma.hbm_to_vmem [thread:$0]  %s6, 3072, %s79, [#allocation11], 64, 64, 4
    $region29: #{tpu_custom_call.1} parent=1 // pred_fallthru
      _
    // Predicated region
    $region30: #{tpu_custom_call.1} parent=1 // pred_check
      _
    $region31: #{tpu_custom_call.1} parent=1 // pred_check_branch
      %86 = sbr.rel (0) target = $region33
    $region32: #{tpu_custom_call.1} parent=1 // pred_region
      _
    $region33: #{tpu_custom_call.1} parent=1 // pred_fallthru
      _
    // Predicated region
    $region34: #{tpu_custom_call.1} parent=1 // pred_check
      _
    $region35: #{tpu_custom_call.1} parent=1 // pred_check_branch
      %88 = sbr.rel (0) target = $region37
    $region36: #{tpu_custom_call.1} parent=1 // pred_region
      _
    $region37: #{tpu_custom_call.1} parent=1 // pred_fallthru
      _
    // Predicated region
    $region38: #{tpu_custom_call.1} parent=1 // pred_check
      _
    $region39: #{tpu_custom_call.1} parent=1 // pred_check_branch
      %90 = sbr.rel (0) target = $region41
    $region40: #{tpu_custom_call.1} parent=1 // pred_region
      %s92 = ssub.s32 1024, 1024
      %93 = vsyncadd [#allocation14], %s92
      %s94 = sshll.u32 [#allocation13], 4
      %s95 = int_to_ptr.vmem [resolvable:$true] %s94
      %100 = dma.hbm_to_vmem [thread:$0]  %s9, 1024, %s95, [#allocation14], 64, 64, 4
    $region41: #{tpu_custom_call.1} parent=1 // pred_fallthru
      _
    // Predicated region
    $region42: #{tpu_custom_call.1} parent=1 // pred_check
      _
    $region43: #{tpu_custom_call.1} parent=1 // pred_check_branch
      %102 = sbr.rel (0) target = $region45
    $region44: #{tpu_custom_call.1} parent=1 // pred_region
      _
    $region45: #{tpu_custom_call.1} parent=1 // pred_fallthru
      _
    // Predicated region
    $region46: #{tpu_custom_call.1} parent=1 // pred_check
      _
    $region47: #{tpu_custom_call.1} parent=1 // pred_check_branch
      %104 = sbr.rel (0) target = $region49
    $region48: #{tpu_custom_call.1} parent=1 // pred_region
      %105 = dma.done [#allocation5], 512
    $region49: #{tpu_custom_call.1} parent=1 // pred_fallthru
      _
    // Predicated region
    $region50: #{tpu_custom_call.1} parent=1 // pred_check
      _
    $region51: #{tpu_custom_call.1} parent=1 // pred_check_branch
      %107 = sbr.rel (0) target = $region53
    $region52: #{tpu_custom_call.1} parent=1 // pred_region
      %108 = dma.done [#allocation8], 3072
    $region53: #{tpu_custom_call.1} parent=1 // pred_fallthru
      _
    // Predicated region
    $region54: #{tpu_custom_call.1} parent=1 // pred_check
      _
    $region55: #{tpu_custom_call.1} parent=1 // pred_check_branch
      %110 = sbr.rel (0) target = $region57
    $region56: #{tpu_custom_call.1} parent=1 // pred_region
      %111 = dma.done [#allocation8], 3072
    $region57: #{tpu_custom_call.1} parent=1 // pred_fallthru
      _
    // Predicated region
    $region58: #{tpu_custom_call.1} parent=1 // pred_check
      _
    $region59: #{tpu_custom_call.1} parent=1 // pred_check_branch
      %113 = sbr.rel (0) target = $region61
    $region60: #{tpu_custom_call.1} parent=1 // pred_region
      %114 = dma.done [#allocation11], 3072
    $region61: #{tpu_custom_call.1} parent=1 // pred_fallthru
      _
    // Predicated region
    $region62: #{tpu_custom_call.1} parent=1 // pred_check
      _
    $region63: #{tpu_custom_call.1} parent=1 // pred_check_branch
      %116 = sbr.rel (0) target = $region65
    $region64: #{tpu_custom_call.1} parent=1 // pred_region
      %117 = dma.done [#allocation11], 3072
    $region65: #{tpu_custom_call.1} parent=1 // pred_fallthru
      _
    // Predicated region
    $region66: #{tpu_custom_call.1} parent=1 // pred_check
      _
    $region67: #{tpu_custom_call.1} parent=1 // pred_check_branch
      %119 = sbr.rel (0) target = $region69
    $region68: #{tpu_custom_call.1} parent=1 // pred_region
      %120 = dma.done [#allocation14], 1024
    $region69: #{tpu_custom_call.1} parent=1 // pred_fallthru
      _
    %v122 = vld [vmem:[#allocation4] sm:$0xf]
    %v123 = vld [vmem:[#allocation4 + $0x4] sm:$0xf]
    %v124 = vld [vmem:[#allocation4 + $0x8] sm:$0xf]
    %v125 = vld [vmem:[#allocation4 + $0xc] sm:$0xf]
    %v126 = vld [vmem:[#allocation4 + $0x10] sm:$0xf]
    %v127 = vld [vmem:[#allocation4 + $0x14] sm:$0xf]
    %v128 = vld [vmem:[#allocation4 + $0x18] sm:$0xf]
    %v129 = vld [vmem:[#allocation4 + $0x1c] sm:$0xf]
    %v130 = vld [vmem:[#allocation7] sm:$0xf]
    %v131 = vld [vmem:[#allocation7 + $0x4] sm:$0xf]
    %v132 = vld [vmem:[#allocation7 + $0x8] sm:$0xf]
    %v133 = vld [vmem:[#allocation7 + $0xc] sm:$0xf]
    %v134 = vld [vmem:[#allocation7 + $0x10] sm:$0xf]
    %v135 = vld [vmem:[#allocation7 + $0x14] sm:$0xf]
    %v136 = vld [vmem:[#allocation7 + $0x18] sm:$0xf]
    %v137 = vld [vmem:[#allocation7 + $0x1c] sm:$0xf]
    %v138 = vld [vmem:[#allocation7 + $0x20] sm:$0xf]
    %v139 = vld [vmem:[#allocation7 + $0x24] sm:$0xf]
    %v140 = vld [vmem:[#allocation7 + $0x28] sm:$0xf]
    %v141 = vld [vmem:[#allocation7 + $0x2c] sm:$0xf]
    %v142 = vld [vmem:[#allocation7 + $0x30] sm:$0xf]
    %v143 = vld [vmem:[#allocation7 + $0x34] sm:$0xf]
    %v144 = vld [vmem:[#allocation7 + $0x38] sm:$0xf]
    %v145 = vld [vmem:[#allocation7 + $0x3c] sm:$0xf]
    %v146 = vld [vmem:[%s3] sm:$0x1]
    %v148 = vlaneseq
    %v149 = vshrl.u32 %v148, 7
    %v150 = vsub.s32 0, %v149
    %v151 = vrot.slane %v146, %v150
    %v161 = vunpack.c.l.b16 %v122
    %v162 = vunpack.c.l.b16 %v123
    %v163 = vunpack.c.l.b16 %v124
    %v164 = vunpack.c.l.b16 %v125
    %v165 = vunpack.c.l.b16 %v126
    %v166 = vunpack.c.l.b16 %v127
    %v167 = vunpack.c.l.b16 %v128
    %v168 = vunpack.c.l.b16 %v129
    %v169 = vpack.c.b16 %v162, %v161
    %v170 = vpack.c.b16 %v164, %v163
    %v171 = vpack.c.b16 %v166, %v165
    %v172 = vpack.c.b16 %v168, %v167
    %v193 = vunpack.c.l.b16 %v130
    %v194 = vunpack.c.l.b16 %v131
    %v195 = vunpack.c.l.b16 %v132
    %v196 = vunpack.c.l.b16 %v133
    %v197 = vunpack.c.l.b16 %v134
    %v198 = vunpack.c.l.b16 %v135
    %v199 = vunpack.c.l.b16 %v136
    %v200 = vunpack.c.l.b16 %v137
    %v201 = vunpack.c.l.b16 %v138
    %v202 = vunpack.c.l.b16 %v139
    %v203 = vunpack.c.l.b16 %v140
    %v204 = vunpack.c.l.b16 %v141
    %v205 = vunpack.c.l.b16 %v142
    %v206 = vunpack.c.l.b16 %v143
    %v207 = vunpack.c.l.b16 %v144
    %v208 = vunpack.c.l.b16 %v145
    %v209 = vpack.c.b16 %v194, %v193
    %v210 = vpack.c.b16 %v196, %v195
    %v211 = vpack.c.b16 %v198, %v197
    %v212 = vpack.c.b16 %v200, %v199
    %v213 = vpack.c.b16 %v202, %v201
    %v214 = vpack.c.b16 %v204, %v203
    %v215 = vpack.c.b16 %v206, %v205
    %v216 = vpack.c.b16 %v208, %v207
    %225 = vmatprep.subr.bf16.mxu0 0
    %226 = vmatpush1.bf16.msra.mxu0 %v209
    %227 = vmatprep.subr.bf16.mxu0 0
    %228 = vmatpush1.bf16.msra.mxu0 %v210
    %229 = vmatprep.subr.bf16.mxu0 0
    %230 = vmatpush1.bf16.msra.mxu0 %v211
    %231 = vmatprep.subr.bf16.mxu0 0
    %232 = vmatpush1.bf16.msra.mxu0 %v212
    %233 = vmatprep.subr.bf16.mxu0 0
    %234 = vmatpush1.bf16.msra.mxu0 %v213
    %235 = vmatprep.subr.bf16.mxu0 0
    %236 = vmatpush1.bf16.msra.mxu0 %v214
    %237 = vmatprep.subr.bf16.mxu0 0
    %238 = vmatpush1.bf16.msra.mxu0 %v215
    %239 = vmatprep.subr.bf16.mxu0 0
    %240 = vmatpush1.bf16.msra.mxu0 %v216
    %241 = vmatprep.subr.bf16.mxu0 0
    %242 = vmatpush1.bf16.msra.mxu0 0
    %243 = vmatprep.subr.bf16.mxu0 0
    %244 = vmatpush1.bf16.msra.mxu0 0
    %245 = vmatprep.subr.bf16.mxu0 0
    %246 = vmatpush1.bf16.msra.mxu0 0
    %247 = vmatprep.subr.bf16.mxu0 0
    %248 = vmatpush1.bf16.msra.mxu0 0
    %249 = vmatprep.subr.bf16.mxu0 0
    %250 = vmatpush1.bf16.msra.mxu0 0
    %251 = vmatprep.subr.bf16.mxu0 0
    %252 = vmatpush1.bf16.msra.mxu0 0
    %253 = vmatprep.subr.bf16.mxu0 0
    %254 = vmatpush1.bf16.msra.mxu0 0
    %255 = vmatprep.subr.bf16.mxu0 0
    %256 = vmatpush1.bf16.msra.mxu0 0
    %257 = vmatprep.mubr.bf16.mxu0 0
    %258 = vmatmul.mubr.bf16.gmra.mrb[0].mxu0 %v169
    %v259 = vpop.f32.mrb[0].mxu0
    %v260 = vadd.f32 %v151, %v259
    %v261 = vpop.f32.mrb[0].mxu0
    %v262 = vpop.f32.mrb[0].mxu0
    %v263 = vadd.f32 %v151, %v262
    %v264 = vpop.f32.mrb[0].mxu0
    %265 = vmatprep.mubr.bf16.mxu0 0
    %266 = vmatmul.mubr.bf16.gmra.mrb[0].mxu0 %v170
    %v267 = vpop.f32.mrb[0].mxu0
    %v268 = vadd.f32 %v151, %v267
    %v269 = vpop.f32.mrb[0].mxu0
    %v270 = vpop.f32.mrb[0].mxu0
    %v271 = vadd.f32 %v151, %v270
    %v272 = vpop.f32.mrb[0].mxu0
    %273 = vmatprep.mubr.bf16.mxu0 0
    %274 = vmatmul.mubr.bf16.gmra.mrb[0].mxu0 %v171
    %v275 = vpop.f32.mrb[0].mxu0
    %v276 = vadd.f32 %v151, %v275
    %v277 = vpop.f32.mrb[0].mxu0
    %v278 = vpop.f32.mrb[0].mxu0
    %v279 = vadd.f32 %v151, %v278
    %v280 = vpop.f32.mrb[0].mxu0
    %281 = vmatprep.mubr.bf16.mxu0 0
    %282 = vmatmul.mubr.bf16.gmra.mrb[0].mxu0 %v172
    %v283 = vpop.f32.mrb[0].mxu0
    %v284 = vadd.f32 %v151, %v283
    %v285 = vpop.f32.mrb[0].mxu0
    %v286 = vpop.f32.mrb[0].mxu0
    %v287 = vadd.f32 %v151, %v286
    %v288 = vpop.f32.mrb[0].mxu0
    %289 = vdwg.mxu0
    %290 = vst [vmem:[#allocation2] sm:$0xff] %v260
    %291 = vst [vmem:[#allocation2 + $0x8] sm:$0xff] %v263
    %292 = vst [vmem:[#allocation2 + $0x10] sm:$0xff] %v268
    %293 = vst [vmem:[#allocation2 + $0x18] sm:$0xff] %v271
    %294 = vst [vmem:[#allocation2 + $0x20] sm:$0xff] %v276
    %295 = vst [vmem:[#allocation2 + $0x28] sm:$0xff] %v279
    %296 = vst [vmem:[#allocation2 + $0x30] sm:$0xff] %v284
    %297 = vst [vmem:[#allocation2 + $0x38] sm:$0xff] %v287
    %s298 = scalar_lea.vmem [#allocation7], 64
    %v299 = vld [vmem:[%s298] sm:$0xf]
    %v300 = vld [vmem:[%s298 + $0x4] sm:$0xf]
    %v301 = vld [vmem:[%s298 + $0x8] sm:$0xf]
    %v302 = vld [vmem:[%s298 + $0xc] sm:$0xf]
    %v303 = vld [vmem:[%s298 + $0x10] sm:$0xf]
    %v304 = vld [vmem:[%s298 + $0x14] sm:$0xf]
    %v305 = vld [vmem:[%s298 + $0x18] sm:$0xf]
    %v306 = vld [vmem:[%s298 + $0x1c] sm:$0xf]
    %v307 = vld [vmem:[%s298 + $0x20] sm:$0xf]
    %v308 = vld [vmem:[%s298 + $0x24] sm:$0xf]
    %v309 = vld [vmem:[%s298 + $0x28] sm:$0xf]
    %v310 = vld [vmem:[%s298 + $0x2c] sm:$0xf]
    %v311 = vld [vmem:[%s298 + $0x30] sm:$0xf]
    %v312 = vld [vmem:[%s298 + $0x34] sm:$0xf]
    %v313 = vld [vmem:[%s298 + $0x38] sm:$0xf]
    %v314 = vld [vmem:[%s298 + $0x3c] sm:$0xf]
    %s315 = scalar_lea.vmem %s3, 1
    %v316 = vld [vmem:[%s315] sm:$0x1]
    %v318 = vlaneseq
    %v319 = vshrl.u32 %v318, 7
    %v320 = vsub.s32 0, %v319
    %v321 = vrot.slane %v316, %v320
    %v339 = vunpack.c.l.b16 %v299
    %v340 = vunpack.c.l.b16 %v300
    %v341 = vunpack.c.l.b16 %v301
    %v342 = vunpack.c.l.b16 %v302
    %v343 = vunpack.c.l.b16 %v303
    %v344 = vunpack.c.l.b16 %v304
    %v345 = vunpack.c.l.b16 %v305
    %v346 = vunpack.c.l.b16 %v306
    %v347 = vunpack.c.l.b16 %v307
    %v348 = vunpack.c.l.b16 %v308
    %v349 = vunpack.c.l.b16 %v309
    %v350 = vunpack.c.l.b16 %v310
    %v351 = vunpack.c.l.b16 %v311
    %v352 = vunpack.c.l.b16 %v312
    %v353 = vunpack.c.l.b16 %v313
    %v354 = vunpack.c.l.b16 %v314
    %v355 = vpack.c.b16 %v340, %v339
    %v356 = vpack.c.b16 %v342, %v341
    %v357 = vpack.c.b16 %v344, %v343
    %v358 = vpack.c.b16 %v346, %v345
    %v359 = vpack.c.b16 %v348, %v347
    %v360 = vpack.c.b16 %v350, %v349
    %v361 = vpack.c.b16 %v352, %v351
    %v362 = vpack.c.b16 %v354, %v353
    %371 = vmatprep.subr.bf16.mxu0 0
    %372 = vmatpush1.bf16.msra.mxu0 %v355
    %373 = vmatprep.subr.bf16.mxu0 0
    %374 = vmatpush1.bf16.msra.mxu0 %v356
    %375 = vmatprep.subr.bf16.mxu0 0
    %376 = vmatpush1.bf16.msra.mxu0 %v357
    %377 = vmatprep.subr.bf16.mxu0 0
    %378 = vmatpush1.bf16.msra.mxu0 %v358
    %379 = vmatprep.subr.bf16.mxu0 0
    %380 = vmatpush1.bf16.msra.mxu0 %v359
    %381 = vmatprep.subr.bf16.mxu0 0
    %382 = vmatpush1.bf16.msra.mxu0 %v360
    %383 = vmatprep.subr.bf16.mxu0 0
    %384 = vmatpush1.bf16.msra.mxu0 %v361
    %385 = vmatprep.subr.bf16.mxu0 0
    %386 = vmatpush1.bf16.msra.mxu0 %v362
    %387 = vmatprep.subr.bf16.mxu0 0
    %388 = vmatpush1.bf16.msra.mxu0 0
    %389 = vmatprep.subr.bf16.mxu0 0
    %390 = vmatpush1.bf16.msra.mxu0 0
    %391 = vmatprep.subr.bf16.mxu0 0
    %392 = vmatpush1.bf16.msra.mxu0 0
    %393 = vmatprep.subr.bf16.mxu0 0
    %394 = vmatpush1.bf16.msra.mxu0 0
    %395 = vmatprep.subr.bf16.mxu0 0
    %396 = vmatpush1.bf16.msra.mxu0 0
    %397 = vmatprep.subr.bf16.mxu0 0
    %398 = vmatpush1.bf16.msra.mxu0 0
    %399 = vmatprep.subr.bf16.mxu0 0
    %400 = vmatpush1.bf16.msra.mxu0 0
    %401 = vmatprep.subr.bf16.mxu0 0
    %402 = vmatpush1.bf16.msra.mxu0 0
    %403 = vmatprep.mubr.bf16.mxu0 0
    %404 = vmatmul.mubr.bf16.gmra.mrb[0].mxu0 %v169
    %v405 = vpop.f32.mrb[0].mxu0
    %v406 = vadd.f32 %v321, %v405
    %v407 = vpop.f32.mrb[0].mxu0
    %v408 = vpop.f32.mrb[0].mxu0
    %v409 = vadd.f32 %v321, %v408
    %v410 = vpop.f32.mrb[0].mxu0
    %411 = vmatprep.mubr.bf16.mxu0 0
    %412 = vmatmul.mubr.bf16.gmra.mrb[0].mxu0 %v170
    %v413 = vpop.f32.mrb[0].mxu0
    %v414 = vadd.f32 %v321, %v413
    %v415 = vpop.f32.mrb[0].mxu0
    %v416 = vpop.f32.mrb[0].mxu0
    %v417 = vadd.f32 %v321, %v416
    %v418 = vpop.f32.mrb[0].mxu0
    %419 = vmatprep.mubr.bf16.mxu0 0
    %420 = vmatmul.mubr.bf16.gmra.mrb[0].mxu0 %v171
    %v421 = vpop.f32.mrb[0].mxu0
    %v422 = vadd.f32 %v321, %v421
    %v423 = vpop.f32.mrb[0].mxu0
    %v424 = vpop.f32.mrb[0].mxu0
    %v425 = vadd.f32 %v321, %v424
    %v426 = vpop.f32.mrb[0].mxu0
    %427 = vmatprep.mubr.bf16.mxu0 0
    %428 = vmatmul.mubr.bf16.gmra.mrb[0].mxu0 %v172
    %v429 = vpop.f32.mrb[0].mxu0
    %v430 = vadd.f32 %v321, %v429
    %v431 = vpop.f32.mrb[0].mxu0
    %v432 = vpop.f32.mrb[0].mxu0
    %v433 = vadd.f32 %v321, %v432
    %v434 = vpop.f32.mrb[0].mxu0
    %435 = vdwg.mxu0
    %s436 = scalar_lea.vmem [#allocation2], 64
    %437 = vst [vmem:[%s436] sm:$0xff] %v406
    %438 = vst [vmem:[%s436 + $0x8] sm:$0xff] %v409
    %439 = vst [vmem:[%s436 + $0x10] sm:$0xff] %v414
    %440 = vst [vmem:[%s436 + $0x18] sm:$0xff] %v417
    %441 = vst [vmem:[%s436 + $0x20] sm:$0xff] %v422
    %442 = vst [vmem:[%s436 + $0x28] sm:$0xff] %v425
    %443 = vst [vmem:[%s436 + $0x30] sm:$0xff] %v430
    %444 = vst [vmem:[%s436 + $0x38] sm:$0xff] %v433
    %s445 = scalar_lea.vmem [#allocation7], 128
    %v446 = vld [vmem:[%s445] sm:$0xf]
    %v447 = vld [vmem:[%s445 + $0x4] sm:$0xf]
    %v448 = vld [vmem:[%s445 + $0x8] sm:$0xf]
    %v449 = vld [vmem:[%s445 + $0xc] sm:$0xf]
    %v450 = vld [vmem:[%s445 + $0x10] sm:$0xf]
    %v451 = vld [vmem:[%s445 + $0x14] sm:$0xf]
    %v452 = vld [vmem:[%s445 + $0x18] sm:$0xf]
    %v453 = vld [vmem:[%s445 + $0x1c] sm:$0xf]
    %v454 = vld [vmem:[%s445 + $0x20] sm:$0xf]
    %v455 = vld [vmem:[%s445 + $0x24] sm:$0xf]
    %v456 = vld [vmem:[%s445 + $0x28] sm:$0xf]
    %v457 = vld [vmem:[%s445 + $0x2c] sm:$0xf]
    %v458 = vld [vmem:[%s445 + $0x30] sm:$0xf]
    %v459 = vld [vmem:[%s445 + $0x34] sm:$0xf]
    %v460 = vld [vmem:[%s445 + $0x38] sm:$0xf]
    %v461 = vld [vmem:[%s445 + $0x3c] sm:$0xf]
    %s462 = scalar_lea.vmem %s3, 2
    %v463 = vld [vmem:[%s462] sm:$0x1]
    %v465 = vlaneseq
    %v466 = vshrl.u32 %v465, 7
    %v467 = vsub.s32 0, %v466
    %v468 = vrot.slane %v463, %v467
    %v486 = vunpack.c.l.b16 %v446
    %v487 = vunpack.c.l.b16 %v447
    %v488 = vunpack.c.l.b16 %v448
    %v489 = vunpack.c.l.b16 %v449
    %v490 = vunpack.c.l.b16 %v450
    %v491 = vunpack.c.l.b16 %v451
    %v492 = vunpack.c.l.b16 %v452
    %v493 = vunpack.c.l.b16 %v453
    %v494 = vunpack.c.l.b16 %v454
    %v495 = vunpack.c.l.b16 %v455
    %v496 = vunpack.c.l.b16 %v456
    %v497 = vunpack.c.l.b16 %v457
    %v498 = vunpack.c.l.b16 %v458
    %v499 = vunpack.c.l.b16 %v459
    %v500 = vunpack.c.l.b16 %v460
    %v501 = vunpack.c.l.b16 %v461
    %v502 = vpack.c.b16 %v487, %v486
    %v503 = vpack.c.b16 %v489, %v488
    %v504 = vpack.c.b16 %v491, %v490
    %v505 = vpack.c.b16 %v493, %v492
    %v506 = vpack.c.b16 %v495, %v494
    %v507 = vpack.c.b16 %v497, %v496
    %v508 = vpack.c.b16 %v499, %v498
    %v509 = vpack.c.b16 %v501, %v500
    %518 = vmatprep.subr.bf16.mxu0 0
    %519 = vmatpush1.bf16.msra.mxu0 %v502
    %520 = vmatprep.subr.bf16.mxu0 0
    %521 = vmatpush1.bf16.msra.mxu0 %v503
    %522 = vmatprep.subr.bf16.mxu0 0
    %523 = vmatpush1.bf16.msra.mxu0 %v504
    %524 = vmatprep.subr.bf16.mxu0 0
    %525 = vmatpush1.bf16.msra.mxu0 %v505
    %526 = vmatprep.subr.bf16.mxu0 0
    %527 = vmatpush1.bf16.msra.mxu0 %v506
    %528 = vmatprep.subr.bf16.mxu0 0
    %529 = vmatpush1.bf16.msra.mxu0 %v507
    %530 = vmatprep.subr.bf16.mxu0 0
    %531 = vmatpush1.bf16.msra.mxu0 %v508
    %532 = vmatprep.subr.bf16.mxu0 0
    %533 = vmatpush1.bf16.msra.mxu0 %v509
    %534 = vmatprep.subr.bf16.mxu0 0
    %535 = vmatpush1.bf16.msra.mxu0 0
    %536 = vmatprep.subr.bf16.mxu0 0
    %537 = vmatpush1.bf16.msra.mxu0 0
    %538 = vmatprep.subr.bf16.mxu0 0
    %539 = vmatpush1.bf16.msra.mxu0 0
    %540 = vmatprep.subr.bf16.mxu0 0
    %541 = vmatpush1.bf16.msra.mxu0 0
    %542 = vmatprep.subr.bf16.mxu0 0
    %543 = vmatpush1.bf16.msra.mxu0 0
    %544 = vmatprep.subr.bf16.mxu0 0
    %545 = vmatpush1.bf16.msra.mxu0 0
    %546 = vmatprep.subr.bf16.mxu0 0
    %547 = vmatpush1.bf16.msra.mxu0 0
    %548 = vmatprep.subr.bf16.mxu0 0
    %549 = vmatpush1.bf16.msra.mxu0 0
    %550 = vmatprep.mubr.bf16.mxu0 0
    %551 = vmatmul.mubr.bf16.gmra.mrb[0].mxu0 %v169
    %v552 = vpop.f32.mrb[0].mxu0
    %v553 = vadd.f32 %v468, %v552
    %v554 = vpop.f32.mrb[0].mxu0
    %v555 = vpop.f32.mrb[0].mxu0
    %v556 = vadd.f32 %v468, %v555
    %v557 = vpop.f32.mrb[0].mxu0
    %558 = vmatprep.mubr.bf16.mxu0 0
    %559 = vmatmul.mubr.bf16.gmra.mrb[0].mxu0 %v170
    %v560 = vpop.f32.mrb[0].mxu0
    %v561 = vadd.f32 %v468, %v560
    %v562 = vpop.f32.mrb[0].mxu0
    %v563 = vpop.f32.mrb[0].mxu0
    %v564 = vadd.f32 %v468, %v563
    %v565 = vpop.f32.mrb[0].mxu0
    %566 = vmatprep.mubr.bf16.mxu0 0
    %567 = vmatmul.mubr.bf16.gmra.mrb[0].mxu0 %v171
    %v568 = vpop.f32.mrb[0].mxu0
    %v569 = vadd.f32 %v468, %v568
    %v570 = vpop.f32.mrb[0].mxu0
    %v571 = vpop.f32.mrb[0].mxu0
    %v572 = vadd.f32 %v468, %v571
    %v573 = vpop.f32.mrb[0].mxu0
    %574 = vmatprep.mubr.bf16.mxu0 0
    %575 = vmatmul.mubr.bf16.gmra.mrb[0].mxu0 %v172
    %v576 = vpop.f32.mrb[0].mxu0
    %v577 = vadd.f32 %v468, %v576
    %v578 = vpop.f32.mrb[0].mxu0
    %v579 = vpop.f32.mrb[0].mxu0
    %v580 = vadd.f32 %v468, %v579
    %v581 = vpop.f32.mrb[0].mxu0
    %582 = vdwg.mxu0
    %s583 = scalar_lea.vmem [#allocation2], 128
    %584 = vst [vmem:[%s583] sm:$0xff] %v553
    %585 = vst [vmem:[%s583 + $0x8] sm:$0xff] %v556
    %586 = vst [vmem:[%s583 + $0x10] sm:$0xff] %v561
    %587 = vst [vmem:[%s583 + $0x18] sm:$0xff] %v564
    %588 = vst [vmem:[%s583 + $0x20] sm:$0xff] %v569
    %589 = vst [vmem:[%s583 + $0x28] sm:$0xff] %v572
    %590 = vst [vmem:[%s583 + $0x30] sm:$0xff] %v577
    %591 = vst [vmem:[%s583 + $0x38] sm:$0xff] %v580
    %v592 = vld [vmem:[%s4] sm:$0x1]
    %v594 = vlaneseq
    %v595 = vshrl.u32 %v594, 7
    %v596 = vsub.s32 0, %v595
    %v597 = vrot.slane %v592, %v596
    %v599 = vld [vmem:[#allocation9] sm:$0xf]
    %v600 = vld [vmem:[#allocation9 + $0x4] sm:$0xf]
    %v601 = vld [vmem:[#allocation9 + $0x8] sm:$0xf]
    %v602 = vld [vmem:[#allocation9 + $0xc] sm:$0xf]
    %v603 = vld [vmem:[#allocation9 + $0x10] sm:$0xf]
    %v604 = vld [vmem:[#allocation9 + $0x14] sm:$0xf]
    %v605 = vld [vmem:[#allocation9 + $0x18] sm:$0xf]
    %v606 = vld [vmem:[#allocation9 + $0x1c] sm:$0xf]
    %v607 = vld [vmem:[#allocation9 + $0x20] sm:$0xf]
    %v608 = vld [vmem:[#allocation9 + $0x24] sm:$0xf]
    %v609 = vld [vmem:[#allocation9 + $0x28] sm:$0xf]
    %v610 = vld [vmem:[#allocation9 + $0x2c] sm:$0xf]
    %v611 = vld [vmem:[#allocation9 + $0x30] sm:$0xf]
    %v612 = vld [vmem:[#allocation9 + $0x34] sm:$0xf]
    %v613 = vld [vmem:[#allocation9 + $0x38] sm:$0xf]
    %v614 = vld [vmem:[#allocation9 + $0x3c] sm:$0xf]
    %v631 = vunpack.c.l.b16 %v599
    %v632 = vunpack.c.l.b16 %v600
    %v633 = vunpack.c.l.b16 %v601
    %v634 = vunpack.c.l.b16 %v602
    %v635 = vunpack.c.l.b16 %v603
    %v636 = vunpack.c.l.b16 %v604
    %v637 = vunpack.c.l.b16 %v605
    %v638 = vunpack.c.l.b16 %v606
    %v639 = vunpack.c.l.b16 %v607
    %v640 = vunpack.c.l.b16 %v608
    %v641 = vunpack.c.l.b16 %v609
    %v642 = vunpack.c.l.b16 %v610
    %v643 = vunpack.c.l.b16 %v611
    %v644 = vunpack.c.l.b16 %v612
    %v645 = vunpack.c.l.b16 %v613
    %v646 = vunpack.c.l.b16 %v614
    %v647 = vpack.c.b16 %v632, %v631
    %v648 = vpack.c.b16 %v634, %v633
    %v649 = vpack.c.b16 %v636, %v635
    %v650 = vpack.c.b16 %v638, %v637
    %v651 = vpack.c.b16 %v640, %v639
    %v652 = vpack.c.b16 %v642, %v641
    %v653 = vpack.c.b16 %v644, %v643
    %v654 = vpack.c.b16 %v646, %v645
    %663 = vmatprep.subr.bf16.mxu0 0
    %664 = vmatpush1.bf16.msra.mxu0 %v647
    %665 = vmatprep.subr.bf16.mxu0 0
    %666 = vmatpush1.bf16.msra.mxu0 %v648
    %667 = vmatprep.subr.bf16.mxu0 0
    %668 = vmatpush1.bf16.msra.mxu0 %v649
    %669 = vmatprep.subr.bf16.mxu0 0
    %670 = vmatpush1.bf16.msra.mxu0 %v650
    %671 = vmatprep.subr.bf16.mxu0 0
    %672 = vmatpush1.bf16.msra.mxu0 %v651
    %673 = vmatprep.subr.bf16.mxu0 0
    %674 = vmatpush1.bf16.msra.mxu0 %v652
    %675 = vmatprep.subr.bf16.mxu0 0
    %676 = vmatpush1.bf16.msra.mxu0 %v653
    %677 = vmatprep.subr.bf16.mxu0 0
    %678 = vmatpush1.bf16.msra.mxu0 %v654
    %679 = vmatprep.subr.bf16.mxu0 0
    %680 = vmatpush1.bf16.msra.mxu0 0
    %681 = vmatprep.subr.bf16.mxu0 0
    %682 = vmatpush1.bf16.msra.mxu0 0
    %683 = vmatprep.subr.bf16.mxu0 0
    %684 = vmatpush1.bf16.msra.mxu0 0
    %685 = vmatprep.subr.bf16.mxu0 0
    %686 = vmatpush1.bf16.msra.mxu0 0
    %687 = vmatprep.subr.bf16.mxu0 0
    %688 = vmatpush1.bf16.msra.mxu0 0
    %689 = vmatprep.subr.bf16.mxu0 0
    %690 = vmatpush1.bf16.msra.mxu0 0
    %691 = vmatprep.subr.bf16.mxu0 0
    %692 = vmatpush1.bf16.msra.mxu0 0
    %693 = vmatprep.subr.bf16.mxu0 0
    %694 = vmatpush1.bf16.msra.mxu0 0
    %695 = vmatprep.mubr.bf16.mxu0 0
    %696 = vmatmul.mubr.bf16.gmra.mrb[0].mxu0 0
    %v697 = vpop.f32.mrb[0].mxu0
    %v698 = vadd.f32 0.0, %v697
    %v699 = vpop.f32.mrb[0].mxu0
    %v700 = vpop.f32.mrb[0].mxu0
    %v701 = vpop.f32.mrb[0].mxu0
    %702 = vdwg.mxu0
    %s703 = scalar_lea.vmem [#allocation9], 64
    %v704 = vld [vmem:[%s703] sm:$0xf]
    %v705 = vld [vmem:[%s703 + $0x4] sm:$0xf]
    %v706 = vld [vmem:[%s703 + $0x8] sm:$0xf]
    %v707 = vld [vmem:[%s703 + $0xc] sm:$0xf]
    %v708 = vld [vmem:[%s703 + $0x10] sm:$0xf]
    %v709 = vld [vmem:[%s703 + $0x14] sm:$0xf]
    %v710 = vld [vmem:[%s703 + $0x18] sm:$0xf]
    %v711 = vld [vmem:[%s703 + $0x1c] sm:$0xf]
    %v712 = vld [vmem:[%s703 + $0x20] sm:$0xf]
    %v713 = vld [vmem:[%s703 + $0x24] sm:$0xf]
    %v714 = vld [vmem:[%s703 + $0x28] sm:$0xf]
    %v715 = vld [vmem:[%s703 + $0x2c] sm:$0xf]
    %v716 = vld [vmem:[%s703 + $0x30] sm:$0xf]
    %v717 = vld [vmem:[%s703 + $0x34] sm:$0xf]
    %v718 = vld [vmem:[%s703 + $0x38] sm:$0xf]
    %v719 = vld [vmem:[%s703 + $0x3c] sm:$0xf]
    %v736 = vunpack.c.l.b16 %v704
    %v737 = vunpack.c.l.b16 %v705
    %v738 = vunpack.c.l.b16 %v706
    %v739 = vunpack.c.l.b16 %v707
    %v740 = vunpack.c.l.b16 %v708
    %v741 = vunpack.c.l.b16 %v709
    %v742 = vunpack.c.l.b16 %v710
    %v743 = vunpack.c.l.b16 %v711
    %v744 = vunpack.c.l.b16 %v712
    %v745 = vunpack.c.l.b16 %v713
    %v746 = vunpack.c.l.b16 %v714
    %v747 = vunpack.c.l.b16 %v715
    %v748 = vunpack.c.l.b16 %v716
    %v749 = vunpack.c.l.b16 %v717
    %v750 = vunpack.c.l.b16 %v718
    %v751 = vunpack.c.l.b16 %v719
    %v752 = vpack.c.b16 %v737, %v736
    %v753 = vpack.c.b16 %v739, %v738
    %v754 = vpack.c.b16 %v741, %v740
    %v755 = vpack.c.b16 %v743, %v742
    %v756 = vpack.c.b16 %v745, %v744
    %v757 = vpack.c.b16 %v747, %v746
    %v758 = vpack.c.b16 %v749, %v748
    %v759 = vpack.c.b16 %v751, %v750
    %768 = vmatprep.subr.bf16.mxu0 0
    %769 = vmatpush1.bf16.msra.mxu0 %v752
    %770 = vmatprep.subr.bf16.mxu0 0
    %771 = vmatpush1.bf16.msra.mxu0 %v753
    %772 = vmatprep.subr.bf16.mxu0 0
    %773 = vmatpush1.bf16.msra.mxu0 %v754
    %774 = vmatprep.subr.bf16.mxu0 0
    %775 = vmatpush1.bf16.msra.mxu0 %v755
    %776 = vmatprep.subr.bf16.mxu0 0
    %777 = vmatpush1.bf16.msra.mxu0 %v756
    %778 = vmatprep.subr.bf16.mxu0 0
    %779 = vmatpush1.bf16.msra.mxu0 %v757
    %780 = vmatprep.subr.bf16.mxu0 0
    %781 = vmatpush1.bf16.msra.mxu0 %v758
    %782 = vmatprep.subr.bf16.mxu0 0
    %783 = vmatpush1.bf16.msra.mxu0 %v759
    %784 = vmatprep.subr.bf16.mxu0 0
    %785 = vmatpush1.bf16.msra.mxu0 0
    %786 = vmatprep.subr.bf16.mxu0 0
    %787 = vmatpush1.bf16.msra.mxu0 0
    %788 = vmatprep.subr.bf16.mxu0 0
    %789 = vmatpush1.bf16.msra.mxu0 0
    %790 = vmatprep.subr.bf16.mxu0 0
    %791 = vmatpush1.bf16.msra.mxu0 0
    %792 = vmatprep.subr.bf16.mxu0 0
    %793 = vmatpush1.bf16.msra.mxu0 0
    %794 = vmatprep.subr.bf16.mxu0 0
    %795 = vmatpush1.bf16.msra.mxu0 0
    %796 = vmatprep.subr.bf16.mxu0 0
    %797 = vmatpush1.bf16.msra.mxu0 0
    %798 = vmatprep.subr.bf16.mxu0 0
    %799 = vmatpush1.bf16.msra.mxu0 0
    %800 = vmatprep.mubr.bf16.mxu0 0
    %801 = vmatmul.mubr.bf16.gmra.mrb[0].mxu0 0
    %v802 = vpop.f32.mrb[0].mxu0
    %v803 = vadd.f32 0.0, %v802
    %v804 = vpop.f32.mrb[0].mxu0
    %v805 = vpop.f32.mrb[0].mxu0
    %v806 = vpop.f32.mrb[0].mxu0
    %807 = vdwg.mxu0
    %s808 = scalar_lea.vmem [#allocation9], 128
    %v809 = vld [vmem:[%s808] sm:$0xf]
    %v810 = vld [vmem:[%s808 + $0x4] sm:$0xf]
    %v811 = vld [vmem:[%s808 + $0x8] sm:$0xf]
    %v812 = vld [vmem:[%s808 + $0xc] sm:$0xf]
    %v813 = vld [vmem:[%s808 + $0x10] sm:$0xf]
    %v814 = vld [vmem:[%s808 + $0x14] sm:$0xf]
    %v815 = vld [vmem:[%s808 + $0x18] sm:$0xf]
    %v816 = vld [vmem:[%s808 + $0x1c] sm:$0xf]
    %v817 = vld [vmem:[%s808 + $0x20] sm:$0xf]
    %v818 = vld [vmem:[%s808 + $0x24] sm:$0xf]
    %v819 = vld [vmem:[%s808 + $0x28] sm:$0xf]
    %v820 = vld [vmem:[%s808 + $0x2c] sm:$0xf]
    %v821 = vld [vmem:[%s808 + $0x30] sm:$0xf]
    %v822 = vld [vmem:[%s808 + $0x34] sm:$0xf]
    %v823 = vld [vmem:[%s808 + $0x38] sm:$0xf]
    %v824 = vld [vmem:[%s808 + $0x3c] sm:$0xf]
    %v825 = vld [vmem:[#allocation2] sm:$0xff]
    %v826 = vadd.f32 %v825, %v698
    %v827 = vxor.u32 %v826, 2147483648
    %v828 = vmul.f32 %v827, 1.442695
    %v829 = vpow.pop %v828
    %v830 = vadd.f32 %v829, 1.0
    %v831 = vrcp.pop %v830
    %v832 = vmul.f32 1.0, %v831
    %v833 = vld [vmem:[%s436] sm:$0xff]
    %v834 = vadd.f32 %v833, %v803
    %v835 = vxor.u32 %v834, 2147483648
    %v836 = vmul.f32 %v835, 1.442695
    %v837 = vpow.pop %v836
    %v838 = vadd.f32 %v837, 1.0
    %v839 = vrcp.pop %v838
    %v840 = vmul.f32 1.0, %v839
    %v841 = vld [vmem:[%s583] sm:$0xff]
    %v858 = vunpack.c.l.b16 %v809
    %v859 = vunpack.c.l.b16 %v810
    %v860 = vunpack.c.l.b16 %v811
    %v861 = vunpack.c.l.b16 %v812
    %v862 = vunpack.c.l.b16 %v813
    %v863 = vunpack.c.l.b16 %v814
    %v864 = vunpack.c.l.b16 %v815
    %v865 = vunpack.c.l.b16 %v816
    %v866 = vunpack.c.l.b16 %v817
    %v867 = vunpack.c.l.b16 %v818
    %v868 = vunpack.c.l.b16 %v819
    %v869 = vunpack.c.l.b16 %v820
    %v870 = vunpack.c.l.b16 %v821
    %v871 = vunpack.c.l.b16 %v822
    %v872 = vunpack.c.l.b16 %v823
    %v873 = vunpack.c.l.b16 %v824
    %v874 = vpack.c.b16 %v859, %v858
    %v875 = vpack.c.b16 %v861, %v860
    %v876 = vpack.c.b16 %v863, %v862
    %v877 = vpack.c.b16 %v865, %v864
    %v878 = vpack.c.b16 %v867, %v866
    %v879 = vpack.c.b16 %v869, %v868
    %v880 = vpack.c.b16 %v871, %v870
    %v881 = vpack.c.b16 %v873, %v872
    %890 = vmatprep.subr.bf16.mxu0 0
    %891 = vmatpush1.bf16.msra.mxu0 %v874
    %892 = vmatprep.subr.bf16.mxu0 0
    %893 = vmatpush1.bf16.msra.mxu0 %v875
    %894 = vmatprep.subr.bf16.mxu0 0
    %895 = vmatpush1.bf16.msra.mxu0 %v876
    %896 = vmatprep.subr.bf16.mxu0 0
    %897 = vmatpush1.bf16.msra.mxu0 %v877
    %898 = vmatprep.subr.bf16.mxu0 0
    %899 = vmatpush1.bf16.msra.mxu0 %v878
    %900 = vmatprep.subr.bf16.mxu0 0
    %901 = vmatpush1.bf16.msra.mxu0 %v879
    %902 = vmatprep.subr.bf16.mxu0 0
    %903 = vmatpush1.bf16.msra.mxu0 %v880
    %904 = vmatprep.subr.bf16.mxu0 0
    %905 = vmatpush1.bf16.msra.mxu0 %v881
    %906 = vmatprep.subr.bf16.mxu0 0
    %907 = vmatpush1.bf16.msra.mxu0 0
    %908 = vmatprep.subr.bf16.mxu0 0
    %909 = vmatpush1.bf16.msra.mxu0 0
    %910 = vmatprep.subr.bf16.mxu0 0
    %911 = vmatpush1.bf16.msra.mxu0 0
    %912 = vmatprep.subr.bf16.mxu0 0
    %913 = vmatpush1.bf16.msra.mxu0 0
    %914 = vmatprep.subr.bf16.mxu0 0
    %915 = vmatpush1.bf16.msra.mxu0 0
    %916 = vmatprep.subr.bf16.mxu0 0
    %917 = vmatpush1.bf16.msra.mxu0 0
    %918 = vmatprep.subr.bf16.mxu0 0
    %919 = vmatpush1.bf16.msra.mxu0 0
    %920 = vmatprep.subr.bf16.mxu0 0
    %921 = vmatpush1.bf16.msra.mxu0 0
    %922 = vmatprep.mubr.bf16.mxu0 0
    %923 = vmatmul.mubr.bf16.gmra.mrb[0].mxu0 0
    %v924 = vpop.f32.mrb[0].mxu0
    %v925 = vadd.f32 %v597, %v924
    %v926 = vpop.f32.mrb[0].mxu0
    %v927 = vpop.f32.mrb[0].mxu0
    %v928 = vpop.f32.mrb[0].mxu0
    %929 = vdwg.mxu0
    %v930 = vmul.f32 %v832, %v925
    %v931 = vadd.f32 %v841, %v930
    %v932 = vtanh.pop %v931
    %v933 = vsub.f32 1.0, %v840
    %v934 = vmul.f32 %v933, %v932
    %v935 = vmul.f32 %v840, 0.0
    %v936 = vadd.f32 %v934, %v935
    %937 = vst [vmem:[#allocation3] sm:$0xff] %v936
    %v938 = vpack.c.bf16 %v936, %v936
    %v939 = vld [vmem:[#allocation9] sm:$0xf]
    %v940 = vld [vmem:[#allocation9 + $0x4] sm:$0xf]
    %v941 = vld [vmem:[#allocation9 + $0x8] sm:$0xf]
    %v942 = vld [vmem:[#allocation9 + $0xc] sm:$0xf]
    %v943 = vld [vmem:[#allocation9 + $0x10] sm:$0xf]
    %v944 = vld [vmem:[#allocation9 + $0x14] sm:$0xf]
    %v945 = vld [vmem:[#allocation9 + $0x18] sm:$0xf]
    %v946 = vld [vmem:[#allocation9 + $0x1c] sm:$0xf]
    %v947 = vld [vmem:[#allocation9 + $0x20] sm:$0xf]
    %v948 = vld [vmem:[#allocation9 + $0x24] sm:$0xf]
    %v949 = vld [vmem:[#allocation9 + $0x28] sm:$0xf]
    %v950 = vld [vmem:[#allocation9 + $0x2c] sm:$0xf]
    %v951 = vld [vmem:[#allocation9 + $0x30] sm:$0xf]
    %v952 = vld [vmem:[#allocation9 + $0x34] sm:$0xf]
    %v953 = vld [vmem:[#allocation9 + $0x38] sm:$0xf]
    %v954 = vld [vmem:[#allocation9 + $0x3c] sm:$0xf]
    %v971 = vunpack.c.l.b16 %v939
    %v972 = vunpack.c.l.b16 %v940
    %v973 = vunpack.c.l.b16 %v941
    %v974 = vunpack.c.l.b16 %v942
    %v975 = vunpack.c.l.b16 %v943
    %v976 = vunpack.c.l.b16 %v944
    %v977 = vunpack.c.l.b16 %v945
    %v978 = vunpack.c.l.b16 %v946
    %v979 = vunpack.c.l.b16 %v947
    %v980 = vunpack.c.l.b16 %v948
    %v981 = vunpack.c.l.b16 %v949
    %v982 = vunpack.c.l.b16 %v950
    %v983 = vunpack.c.l.b16 %v951
    %v984 = vunpack.c.l.b16 %v952
    %v985 = vunpack.c.l.b16 %v953
    %v986 = vunpack.c.l.b16 %v954
    %v987 = vpack.c.b16 %v972, %v971
    %v988 = vpack.c.b16 %v974, %v973
    %v989 = vpack.c.b16 %v976, %v975
    %v990 = vpack.c.b16 %v978, %v977
    %v991 = vpack.c.b16 %v980, %v979
    %v992 = vpack.c.b16 %v982, %v981
    %v993 = vpack.c.b16 %v984, %v983
    %v994 = vpack.c.b16 %v986, %v985
    %1003 = vmatprep.subr.bf16.mxu0 0
    %1004 = vmatpush1.bf16.msra.mxu0 %v987
    %1005 = vmatprep.subr.bf16.mxu0 0
    %1006 = vmatpush1.bf16.msra.mxu0 %v988
    %1007 = vmatprep.subr.bf16.mxu0 0
    %1008 = vmatpush1.bf16.msra.mxu0 %v989
    %1009 = vmatprep.subr.bf16.mxu0 0
    %1010 = vmatpush1.bf16.msra.mxu0 %v990
    %1011 = vmatprep.subr.bf16.mxu0 0
    %1012 = vmatpush1.bf16.msra.mxu0 %v991
    %1013 = vmatprep.subr.bf16.mxu0 0
    %1014 = vmatpush1.bf16.msra.mxu0 %v992
    %1015 = vmatprep.subr.bf16.mxu0 0
    %1016 = vmatpush1.bf16.msra.mxu0 %v993
    %1017 = vmatprep.subr.bf16.mxu0 0
    %1018 = vmatpush1.bf16.msra.mxu0 %v994
    %1019 = vmatprep.subr.bf16.mxu0 0
    %1020 = vmatpush1.bf16.msra.mxu0 0
    %1021 = vmatprep.subr.bf16.mxu0 0
    %1022 = vmatpush1.bf16.msra.mxu0 0
    %1023 = vmatprep.subr.bf16.mxu0 0
    %1024 = vmatpush1.bf16.msra.mxu0 0
    %1025 = vmatprep.subr.bf16.mxu0 0
    %1026 = vmatpush1.bf16.msra.mxu0 0
    %1027 = vmatprep.subr.bf16.mxu0 0
    %1028 = vmatpush1.bf16.msra.mxu0 0
    %1029 = vmatprep.subr.bf16.mxu0 0
    %1030 = vmatpush1.bf16.msra.mxu0 0
    %1031 = vmatprep.subr.bf16.mxu0 0
    %1032 = vmatpush1.bf16.msra.mxu0 0
    %1033 = vmatprep.subr.bf16.mxu0 0
    %1034 = vmatpush1.bf16.msra.mxu0 0
    %1035 = vmatprep.mubr.bf16.mxu0 0
    %1036 = vmatmul.mubr.bf16.gmra.mrb[0].mxu0 %v938
    %v1037 = vpop.f32.mrb[0].mxu0
    %v1038 = vadd.f32 0.0, %v1037
    %v1039 = vpop.f32.mrb[0].mxu0
    %v1040 = vpop.f32.mrb[0].mxu0
    %v1041 = vpop.f32.mrb[0].mxu0
    %1042 = vdwg.mxu0
    %v1043 = vld [vmem:[%s703] sm:$0xf]
    %v1044 = vld [vmem:[%s703 + $0x4] sm:$0xf]
    %v1045 = vld [vmem:[%s703 + $0x8] sm:$0xf]
    %v1046 = vld [vmem:[%s703 + $0xc] sm:$0xf]
    %v1047 = vld [vmem:[%s703 + $0x10] sm:$0xf]
    %v1048 = vld [vmem:[%s703 + $0x14] sm:$0xf]
    %v1049 = vld [vmem:[%s703 + $0x18] sm:$0xf]
    %v1050 = vld [vmem:[%s703 + $0x1c] sm:$0xf]
    %v1051 = vld [vmem:[%s703 + $0x20] sm:$0xf]
    %v1052 = vld [vmem:[%s703 + $0x24] sm:$0xf]
    %v1053 = vld [vmem:[%s703 + $0x28] sm:$0xf]
    %v1054 = vld [vmem:[%s703 + $0x2c] sm:$0xf]
    %v1055 = vld [vmem:[%s703 + $0x30] sm:$0xf]
    %v1056 = vld [vmem:[%s703 + $0x34] sm:$0xf]
    %v1057 = vld [vmem:[%s703 + $0x38] sm:$0xf]
    %v1058 = vld [vmem:[%s703 + $0x3c] sm:$0xf]
    %v1075 = vunpack.c.l.b16 %v1043
    %v1076 = vunpack.c.l.b16 %v1044
    %v1077 = vunpack.c.l.b16 %v1045
    %v1078 = vunpack.c.l.b16 %v1046
    %v1079 = vunpack.c.l.b16 %v1047
    %v1080 = vunpack.c.l.b16 %v1048
    %v1081 = vunpack.c.l.b16 %v1049
    %v1082 = vunpack.c.l.b16 %v1050
    %v1083 = vunpack.c.l.b16 %v1051
    %v1084 = vunpack.c.l.b16 %v1052
    %v1085 = vunpack.c.l.b16 %v1053
    %v1086 = vunpack.c.l.b16 %v1054
    %v1087 = vunpack.c.l.b16 %v1055
    %v1088 = vunpack.c.l.b16 %v1056
    %v1089 = vunpack.c.l.b16 %v1057
    %v1090 = vunpack.c.l.b16 %v1058
    %v1091 = vpack.c.b16 %v1076, %v1075
    %v1092 = vpack.c.b16 %v1078, %v1077
    %v1093 = vpack.c.b16 %v1080, %v1079
    %v1094 = vpack.c.b16 %v1082, %v1081
    %v1095 = vpack.c.b16 %v1084, %v1083
    %v1096 = vpack.c.b16 %v1086, %v1085
    %v1097 = vpack.c.b16 %v1088, %v1087
    %v1098 = vpack.c.b16 %v1090, %v1089
    %1107 = vmatprep.subr.bf16.mxu0 0
    %1108 = vmatpush1.bf16.msra.mxu0 %v1091
    %1109 = vmatprep.subr.bf16.mxu0 0
    %1110 = vmatpush1.bf16.msra.mxu0 %v1092
    %1111 = vmatprep.subr.bf16.mxu0 0
    %1112 = vmatpush1.bf16.msra.mxu0 %v1093
    %1113 = vmatprep.subr.bf16.mxu0 0
    %1114 = vmatpush1.bf16.msra.mxu0 %v1094
    %1115 = vmatprep.subr.bf16.mxu0 0
    %1116 = vmatpush1.bf16.msra.mxu0 %v1095
    %1117 = vmatprep.subr.bf16.mxu0 0
    %1118 = vmatpush1.bf16.msra.mxu0 %v1096
    %1119 = vmatprep.subr.bf16.mxu0 0
    %1120 = vmatpush1.bf16.msra.mxu0 %v1097
    %1121 = vmatprep.subr.bf16.mxu0 0
    %1122 = vmatpush1.bf16.msra.mxu0 %v1098
    %1123 = vmatprep.subr.bf16.mxu0 0
    %1124 = vmatpush1.bf16.msra.mxu0 0
    %1125 = vmatprep.subr.bf16.mxu0 0
    %1126 = vmatpush1.bf16.msra.mxu0 0
    %1127 = vmatprep.subr.bf16.mxu0 0
    %1128 = vmatpush1.bf16.msra.mxu0 0
    %1129 = vmatprep.subr.bf16.mxu0 0
    %1130 = vmatpush1.bf16.msra.mxu0 0
    %1131 = vmatprep.subr.bf16.mxu0 0
    %1132 = vmatpush1.bf16.msra.mxu0 0
    %1133 = vmatprep.subr.bf16.mxu0 0
    %1134 = vmatpush1.bf16.msra.mxu0 0
    %1135 = vmatprep.subr.bf16.mxu0 0
    %1136 = vmatpush1.bf16.msra.mxu0 0
    %1137 = vmatprep.subr.bf16.mxu0 0
    %1138 = vmatpush1.bf16.msra.mxu0 0
    %1139 = vmatprep.mubr.bf16.mxu0 0
    %1140 = vmatmul.mubr.bf16.gmra.mrb[0].mxu0 %v938
    %v1141 = vpop.f32.mrb[0].mxu0
    %v1142 = vadd.f32 0.0, %v1141
    %v1143 = vpop.f32.mrb[0].mxu0
    %v1144 = vpop.f32.mrb[0].mxu0
    %v1145 = vpop.f32.mrb[0].mxu0
    %1146 = vdwg.mxu0
    %v1147 = vld [vmem:[%s808] sm:$0xf]
    %v1148 = vld [vmem:[%s808 + $0x4] sm:$0xf]
    %v1149 = vld [vmem:[%s808 + $0x8] sm:$0xf]
    %v1150 = vld [vmem:[%s808 + $0xc] sm:$0xf]
    %v1151 = vld [vmem:[%s808 + $0x10] sm:$0xf]
    %v1152 = vld [vmem:[%s808 + $0x14] sm:$0xf]
    %v1153 = vld [vmem:[%s808 + $0x18] sm:$0xf]
    %v1154 = vld [vmem:[%s808 + $0x1c] sm:$0xf]
    %v1155 = vld [vmem:[%s808 + $0x20] sm:$0xf]
    %v1156 = vld [vmem:[%s808 + $0x24] sm:$0xf]
    %v1157 = vld [vmem:[%s808 + $0x28] sm:$0xf]
    %v1158 = vld [vmem:[%s808 + $0x2c] sm:$0xf]
    %v1159 = vld [vmem:[%s808 + $0x30] sm:$0xf]
    %v1160 = vld [vmem:[%s808 + $0x34] sm:$0xf]
    %v1161 = vld [vmem:[%s808 + $0x38] sm:$0xf]
    %v1162 = vld [vmem:[%s808 + $0x3c] sm:$0xf]
    %s1163 = scalar_lea.vmem [#allocation2], 8
    %v1164 = vld [vmem:[%s1163] sm:$0xff]
    %v1165 = vadd.f32 %v1164, %v1038
    %v1166 = vxor.u32 %v1165, 2147483648
    %v1167 = vmul.f32 %v1166, 1.442695
    %v1168 = vpow.pop %v1167
    %v1169 = vadd.f32 %v1168, 1.0
    %v1170 = vrcp.pop %v1169
    %v1171 = vmul.f32 1.0, %v1170
    %s1172 = scalar_lea.vmem %s436, 8 [#allocation2]
    %v1173 = vld [vmem:[%s1172] sm:$0xff]
    %v1174 = vadd.f32 %v1173, %v1142
    %v1175 = vxor.u32 %v1174, 2147483648
    %v1176 = vmul.f32 %v1175, 1.442695
    %v1177 = vpow.pop %v1176
    %v1178 = vadd.f32 %v1177, 1.0
    %v1179 = vrcp.pop %v1178
    %v1180 = vmul.f32 1.0, %v1179
    %s1181 = scalar_lea.vmem %s583, 8 [#allocation2]
    %v1182 = vld [vmem:[%s1181] sm:$0xff]
    %v1199 = vunpack.c.l.b16 %v1147
    %v1200 = vunpack.c.l.b16 %v1148
    %v1201 = vunpack.c.l.b16 %v1149
    %v1202 = vunpack.c.l.b16 %v1150
    %v1203 = vunpack.c.l.b16 %v1151
    %v1204 = vunpack.c.l.b16 %v1152
    %v1205 = vunpack.c.l.b16 %v1153
    %v1206 = vunpack.c.l.b16 %v1154
    %v1207 = vunpack.c.l.b16 %v1155
    %v1208 = vunpack.c.l.b16 %v1156
    %v1209 = vunpack.c.l.b16 %v1157
    %v1210 = vunpack.c.l.b16 %v1158
    %v1211 = vunpack.c.l.b16 %v1159
    %v1212 = vunpack.c.l.b16 %v1160
    %v1213 = vunpack.c.l.b16 %v1161
    %v1214 = vunpack.c.l.b16 %v1162
    %v1215 = vpack.c.b16 %v1200, %v1199
    %v1216 = vpack.c.b16 %v1202, %v1201
    %v1217 = vpack.c.b16 %v1204, %v1203
    %v1218 = vpack.c.b16 %v1206, %v1205
    %v1219 = vpack.c.b16 %v1208, %v1207
    %v1220 = vpack.c.b16 %v1210, %v1209
    %v1221 = vpack.c.b16 %v1212, %v1211
    %v1222 = vpack.c.b16 %v1214, %v1213
    %1231 = vmatprep.subr.bf16.mxu0 0
    %1232 = vmatpush1.bf16.msra.mxu0 %v1215
    %1233 = vmatprep.subr.bf16.mxu0 0
    %1234 = vmatpush1.bf16.msra.mxu0 %v1216
    %1235 = vmatprep.subr.bf16.mxu0 0
    %1236 = vmatpush1.bf16.msra.mxu0 %v1217
    %1237 = vmatprep.subr.bf16.mxu0 0
    %1238 = vmatpush1.bf16.msra.mxu0 %v1218
    %1239 = vmatprep.subr.bf16.mxu0 0
    %1240 = vmatpush1.bf16.msra.mxu0 %v1219
    %1241 = vmatprep.subr.bf16.mxu0 0
    %1242 = vmatpush1.bf16.msra.mxu0 %v1220
    %1243 = vmatprep.subr.bf16.mxu0 0
    %1244 = vmatpush1.bf16.msra.mxu0 %v1221
    %1245 = vmatprep.subr.bf16.mxu0 0
    %1246 = vmatpush1.bf16.msra.mxu0 %v1222
    %1247 = vmatprep.subr.bf16.mxu0 0
    %1248 = vmatpush1.bf16.msra.mxu0 0
    %1249 = vmatprep.subr.bf16.mxu0 0
    %1250 = vmatpush1.bf16.msra.mxu0 0
    %1251 = vmatprep.subr.bf16.mxu0 0
    %1252 = vmatpush1.bf16.msra.mxu0 0
    %1253 = vmatprep.subr.bf16.mxu0 0
    %1254 = vmatpush1.bf16.msra.mxu0 0
    %1255 = vmatprep.subr.bf16.mxu0 0
    %1256 = vmatpush1.bf16.msra.mxu0 0
    %1257 = vmatprep.subr.bf16.mxu0 0
    %1258 = vmatpush1.bf16.msra.mxu0 0
    %1259 = vmatprep.subr.bf16.mxu0 0
    %1260 = vmatpush1.bf16.msra.mxu0 0
    %1261 = vmatprep.subr.bf16.mxu0 0
    %1262 = vmatpush1.bf16.msra.mxu0 0
    %1263 = vmatprep.mubr.bf16.mxu0 0
    %1264 = vmatmul.mubr.bf16.gmra.mrb[0].mxu0 %v938
    %v1265 = vpop.f32.mrb[0].mxu0
    %v1266 = vadd.f32 %v597, %v1265
    %v1267 = vpop.f32.mrb[0].mxu0
    %v1268 = vpop.f32.mrb[0].mxu0
    %v1269 = vpop.f32.mrb[0].mxu0
    %1270 = vdwg.mxu0
    %v1271 = vmul.f32 %v1171, %v1266
    %v1272 = vadd.f32 %v1182, %v1271
    %v1273 = vtanh.pop %v1272
    %v1274 = vsub.f32 1.0, %v1180
    %v1275 = vmul.f32 %v1274, %v1273
    %v1276 = vmul.f32 %v1180, %v936
    %v1277 = vadd.f32 %v1275, %v1276
    %s1278 = scalar_lea.vmem [#allocation3], 8
    %1279 = vst [vmem:[%s1278] sm:$0xff] %v1277
    %v1280 = vpack.c.bf16 %v1277, %v1277
    %v1281 = vld [vmem:[#allocation9] sm:$0xf]
    %v1282 = vld [vmem:[#allocation9 + $0x4] sm:$0xf]
    %v1283 = vld [vmem:[#allocation9 + $0x8] sm:$0xf]
    %v1284 = vld [vmem:[#allocation9 + $0xc] sm:$0xf]
    %v1285 = vld [vmem:[#allocation9 + $0x10] sm:$0xf]
    %v1286 = vld [vmem:[#allocation9 + $0x14] sm:$0xf]
    %v1287 = vld [vmem:[#allocation9 + $0x18] sm:$0xf]
    %v1288 = vld [vmem:[#allocation9 + $0x1c] sm:$0xf]
    %v1289 = vld [vmem:[#allocation9 + $0x20] sm:$0xf]
    %v1290 = vld [vmem:[#allocation9 + $0x24] sm:$0xf]
    %v1291 = vld [vmem:[#allocation9 + $0x28] sm:$0xf]
    %v1292 = vld [vmem:[#allocation9 + $0x2c] sm:$0xf]
    %v1293 = vld [vmem:[#allocation9 + $0x30] sm:$0xf]
    %v1294 = vld [vmem:[#allocation9 + $0x34] sm:$0xf]
    %v1295 = vld [vmem:[#allocation9 + $0x38] sm:$0xf]
    %v1296 = vld [vmem:[#allocation9 + $0x3c] sm:$0xf]
    %v1313 = vunpack.c.l.b16 %v1281
    %v1314 = vunpack.c.l.b16 %v1282
    %v1315 = vunpack.c.l.b16 %v1283
    %v1316 = vunpack.c.l.b16 %v1284
    %v1317 = vunpack.c.l.b16 %v1285
    %v1318 = vunpack.c.l.b16 %v1286
    %v1319 = vunpack.c.l.b16 %v1287
    %v1320 = vunpack.c.l.b16 %v1288
    %v1321 = vunpack.c.l.b16 %v1289
    %v1322 = vunpack.c.l.b16 %v1290
    %v1323 = vunpack.c.l.b16 %v1291
    %v1324 = vunpack.c.l.b16 %v1292
    %v1325 = vunpack.c.l.b16 %v1293
    %v1326 = vunpack.c.l.b16 %v1294
    %v1327 = vunpack.c.l.b16 %v1295
    %v1328 = vunpack.c.l.b16 %v1296
    %v1329 = vpack.c.b16 %v1314, %v1313
    %v1330 = vpack.c.b16 %v1316, %v1315
    %v1331 = vpack.c.b16 %v1318, %v1317
    %v1332 = vpack.c.b16 %v1320, %v1319
    %v1333 = vpack.c.b16 %v1322, %v1321
    %v1334 = vpack.c.b16 %v1324, %v1323
    %v1335 = vpack.c.b16 %v1326, %v1325
    %v1336 = vpack.c.b16 %v1328, %v1327
    %1345 = vmatprep.subr.bf16.mxu0 0
    %1346 = vmatpush1.bf16.msra.mxu0 %v1329
    %1347 = vmatprep.subr.bf16.mxu0 0
    %1348 = vmatpush1.bf16.msra.mxu0 %v1330
    %1349 = vmatprep.subr.bf16.mxu0 0
    %1350 = vmatpush1.bf16.msra.mxu0 %v1331
    %1351 = vmatprep.subr.bf16.mxu0 0
    %1352 = vmatpush1.bf16.msra.mxu0 %v1332
    %1353 = vmatprep.subr.bf16.mxu0 0
    %1354 = vmatpush1.bf16.msra.mxu0 %v1333
    %1355 = vmatprep.subr.bf16.mxu0 0
    %1356 = vmatpush1.bf16.msra.mxu0 %v1334
    %1357 = vmatprep.subr.bf16.mxu0 0
    %1358 = vmatpush1.bf16.msra.mxu0 %v1335
    %1359 = vmatprep.subr.bf16.mxu0 0
    %1360 = vmatpush1.bf16.msra.mxu0 %v1336
    %1361 = vmatprep.subr.bf16.mxu0 0
    %1362 = vmatpush1.bf16.msra.mxu0 0
    %1363 = vmatprep.subr.bf16.mxu0 0
    %1364 = vmatpush1.bf16.msra.mxu0 0
    %1365 = vmatprep.subr.bf16.mxu0 0
    %1366 = vmatpush1.bf16.msra.mxu0 0
    %1367 = vmatprep.subr.bf16.mxu0 0
    %1368 = vmatpush1.bf16.msra.mxu0 0
    %1369 = vmatprep.subr.bf16.mxu0 0
    %1370 = vmatpush1.bf16.msra.mxu0 0
    %1371 = vmatprep.subr.bf16.mxu0 0
    %1372 = vmatpush1.bf16.msra.mxu0 0
    %1373 = vmatprep.subr.bf16.mxu0 0
    %1374 = vmatpush1.bf16.msra.mxu0 0
    %1375 = vmatprep.subr.bf16.mxu0 0
    %1376 = vmatpush1.bf16.msra.mxu0 0
    %1377 = vmatprep.mubr.bf16.mxu0 0
    %1378 = vmatmul.mubr.bf16.gmra.mrb[0].mxu0 %v1280
    %v1379 = vpop.f32.mrb[0].mxu0
    %v1380 = vadd.f32 0.0, %v1379
    %v1381 = vpop.f32.mrb[0].mxu0
    %v1382 = vpop.f32.mrb[0].mxu0
    %v1383 = vpop.f32.mrb[0].mxu0
    %1384 = vdwg.mxu0
    %v1385 = vld [vmem:[%s703] sm:$0xf]
    %v1386 = vld [vmem:[%s703 + $0x4] sm:$0xf]
    %v1387 = vld [vmem:[%s703 + $0x8] sm:$0xf]
    %v1388 = vld [vmem:[%s703 + $0xc] sm:$0xf]
    %v1389 = vld [vmem:[%s703 + $0x10] sm:$0xf]
    %v1390 = vld [vmem:[%s703 + $0x14] sm:$0xf]
    %v1391 = vld [vmem:[%s703 + $0x18] sm:$0xf]
    %v1392 = vld [vmem:[%s703 + $0x1c] sm:$0xf]
    %v1393 = vld [vmem:[%s703 + $0x20] sm:$0xf]
    %v1394 = vld [vmem:[%s703 + $0x24] sm:$0xf]
    %v1395 = vld [vmem:[%s703 + $0x28] sm:$0xf]
    %v1396 = vld [vmem:[%s703 + $0x2c] sm:$0xf]
    %v1397 = vld [vmem:[%s703 + $0x30] sm:$0xf]
    %v1398 = vld [vmem:[%s703 + $0x34] sm:$0xf]
    %v1399 = vld [vmem:[%s703 + $0x38] sm:$0xf]
    %v1400 = vld [vmem:[%s703 + $0x3c] sm:$0xf]
    %v1417 = vunpack.c.l.b16 %v1385
    %v1418 = vunpack.c.l.b16 %v1386
    %v1419 = vunpack.c.l.b16 %v1387
    %v1420 = vunpack.c.l.b16 %v1388
    %v1421 = vunpack.c.l.b16 %v1389
    %v1422 = vunpack.c.l.b16 %v1390
    %v1423 = vunpack.c.l.b16 %v1391
    %v1424 = vunpack.c.l.b16 %v1392
    %v1425 = vunpack.c.l.b16 %v1393
    %v1426 = vunpack.c.l.b16 %v1394
    %v1427 = vunpack.c.l.b16 %v1395
    %v1428 = vunpack.c.l.b16 %v1396
    %v1429 = vunpack.c.l.b16 %v1397
    %v1430 = vunpack.c.l.b16 %v1398
    %v1431 = vunpack.c.l.b16 %v1399
    %v1432 = vunpack.c.l.b16 %v1400
    %v1433 = vpack.c.b16 %v1418, %v1417
    %v1434 = vpack.c.b16 %v1420, %v1419
    %v1435 = vpack.c.b16 %v1422, %v1421
    %v1436 = vpack.c.b16 %v1424, %v1423
    %v1437 = vpack.c.b16 %v1426, %v1425
    %v1438 = vpack.c.b16 %v1428, %v1427
    %v1439 = vpack.c.b16 %v1430, %v1429
    %v1440 = vpack.c.b16 %v1432, %v1431
    %1449 = vmatprep.subr.bf16.mxu0 0
    %1450 = vmatpush1.bf16.msra.mxu0 %v1433
    %1451 = vmatprep.subr.bf16.mxu0 0
    %1452 = vmatpush1.bf16.msra.mxu0 %v1434
    %1453 = vmatprep.subr.bf16.mxu0 0
    %1454 = vmatpush1.bf16.msra.mxu0 %v1435
    %1455 = vmatprep.subr.bf16.mxu0 0
    %1456 = vmatpush1.bf16.msra.mxu0 %v1436
    %1457 = vmatprep.subr.bf16.mxu0 0
    %1458 = vmatpush1.bf16.msra.mxu0 %v1437
    %1459 = vmatprep.subr.bf16.mxu0 0
    %1460 = vmatpush1.bf16.msra.mxu0 %v1438
    %1461 = vmatprep.subr.bf16.mxu0 0
    %1462 = vmatpush1.bf16.msra.mxu0 %v1439
    %1463 = vmatprep.subr.bf16.mxu0 0
    %1464 = vmatpush1.bf16.msra.mxu0 %v1440
    %1465 = vmatprep.subr.bf16.mxu0 0
    %1466 = vmatpush1.bf16.msra.mxu0 0
    %1467 = vmatprep.subr.bf16.mxu0 0
    %1468 = vmatpush1.bf16.msra.mxu0 0
    %1469 = vmatprep.subr.bf16.mxu0 0
    %1470 = vmatpush1.bf16.msra.mxu0 0
    %1471 = vmatprep.subr.bf16.mxu0 0
    %1472 = vmatpush1.bf16.msra.mxu0 0
    %1473 = vmatprep.subr.bf16.mxu0 0
    %1474 = vmatpush1.bf16.msra.mxu0 0
    %1475 = vmatprep.subr.bf16.mxu0 0
    %1476 = vmatpush1.bf16.msra.mxu0 0
    %1477 = vmatprep.subr.bf16.mxu0 0
    %1478 = vmatpush1.bf16.msra.mxu0 0
    %1479 = vmatprep.subr.bf16.mxu0 0
    %1480 = vmatpush1.bf16.msra.mxu0 0
    %1481 = vmatprep.mubr.bf16.mxu0 0
    %1482 = vmatmul.mubr.bf16.gmra.mrb[0].mxu0 %v1280
    %v1483 = vpop.f32.mrb[0].mxu0
    %v1484 = vadd.f32 0.0, %v1483
    %v1485 = vpop.f32.mrb[0].mxu0
    %v1486 = vpop.f32.mrb[0].mxu0
    %v1487 = vpop.f32.mrb[0].mxu0
    %1488 = vdwg.mxu0
    %v1489 = vld [vmem:[%s808] sm:$0xf]
    %v1490 = vld [vmem:[%s808 + $0x4] sm:$0xf]
    %v1491 = vld [vmem:[%s808 + $0x8] sm:$0xf]
    %v1492 = vld [vmem:[%s808 + $0xc] sm:$0xf]
    %v1493 = vld [vmem:[%s808 + $0x10] sm:$0xf]
    %v1494 = vld [vmem:[%s808 + $0x14] sm:$0xf]
    %v1495 = vld [vmem:[%s808 + $0x18] sm:$0xf]
    %v1496 = vld [vmem:[%s808 + $0x1c] sm:$0xf]
    %v1497 = vld [vmem:[%s808 + $0x20] sm:$0xf]
    %v1498 = vld [vmem:[%s808 + $0x24] sm:$0xf]
    %v1499 = vld [vmem:[%s808 + $0x28] sm:$0xf]
    %v1500 = vld [vmem:[%s808 + $0x2c] sm:$0xf]
    %v1501 = vld [vmem:[%s808 + $0x30] sm:$0xf]
    %v1502 = vld [vmem:[%s808 + $0x34] sm:$0xf]
    %v1503 = vld [vmem:[%s808 + $0x38] sm:$0xf]
    %v1504 = vld [vmem:[%s808 + $0x3c] sm:$0xf]
    %s1505 = scalar_lea.vmem [#allocation2], 16
    %v1506 = vld [vmem:[%s1505] sm:$0xff]
    %v1507 = vadd.f32 %v1506, %v1380
    %v1508 = vxor.u32 %v1507, 2147483648
    %v1509 = vmul.f32 %v1508, 1.442695
    %v1510 = vpow.pop %v1509
    %v1511 = vadd.f32 %v1510, 1.0
    %v1512 = vrcp.pop %v1511
    %v1513 = vmul.f32 1.0, %v1512
    %s1514 = scalar_lea.vmem %s436, 16 [#allocation2]
    %v1515 = vld [vmem:[%s1514] sm:$0xff]
    %v1516 = vadd.f32 %v1515, %v1484
    %v1517 = vxor.u32 %v1516, 2147483648
    %v1518 = vmul.f32 %v1517, 1.442695
    %v1519 = vpow.pop %v1518
    %v1520 = vadd.f32 %v1519, 1.0
    %v1521 = vrcp.pop %v1520
    %v1522 = vmul.f32 1.0, %v1521
    %s1523 = scalar_lea.vmem %s583, 16 [#allocation2]
    %v1524 = vld [vmem:[%s1523] sm:$0xff]
    %v1541 = vunpack.c.l.b16 %v1489
    %v1542 = vunpack.c.l.b16 %v1490
    %v1543 = vunpack.c.l.b16 %v1491
    %v1544 = vunpack.c.l.b16 %v1492
    %v1545 = vunpack.c.l.b16 %v1493
    %v1546 = vunpack.c.l.b16 %v1494
    %v1547 = vunpack.c.l.b16 %v1495
    %v1548 = vunpack.c.l.b16 %v1496
    %v1549 = vunpack.c.l.b16 %v1497
    %v1550 = vunpack.c.l.b16 %v1498
    %v1551 = vunpack.c.l.b16 %v1499
    %v1552 = vunpack.c.l.b16 %v1500
    %v1553 = vunpack.c.l.b16 %v1501
    %v1554 = vunpack.c.l.b16 %v1502
    %v1555 = vunpack.c.l.b16 %v1503
    %v1556 = vunpack.c.l.b16 %v1504
    %v1557 = vpack.c.b16 %v1542, %v1541
    %v1558 = vpack.c.b16 %v1544, %v1543
    %v1559 = vpack.c.b16 %v1546, %v1545
    %v1560 = vpack.c.b16 %v1548, %v1547
    %v1561 = vpack.c.b16 %v1550, %v1549
    %v1562 = vpack.c.b16 %v1552, %v1551
    %v1563 = vpack.c.b16 %v1554, %v1553
    %v1564 = vpack.c.b16 %v1556, %v1555
    %1573 = vmatprep.subr.bf16.mxu0 0
    %1574 = vmatpush1.bf16.msra.mxu0 %v1557
    %1575 = vmatprep.subr.bf16.mxu0 0
    %1576 = vmatpush1.bf16.msra.mxu0 %v1558
    %1577 = vmatprep.subr.bf16.mxu0 0
    %1578 = vmatpush1.bf16.msra.mxu0 %v1559
    %1579 = vmatprep.subr.bf16.mxu0 0
    %1580 = vmatpush1.bf16.msra.mxu0 %v1560
    %1581 = vmatprep.subr.bf16.mxu0 0
    %1582 = vmatpush1.bf16.msra.mxu0 %v1561
    %1583 = vmatprep.subr.bf16.mxu0 0
    %1584 = vmatpush1.bf16.msra.mxu0 %v1562
    %1585 = vmatprep.subr.bf16.mxu0 0
    %1586 = vmatpush1.bf16.msra.mxu0 %v1563
    %1587 = vmatprep.subr.bf16.mxu0 0
    %1588 = vmatpush1.bf16.msra.mxu0 %v1564
    %1589 = vmatprep.subr.bf16.mxu0 0
    %1590 = vmatpush1.bf16.msra.mxu0 0
    %1591 = vmatprep.subr.bf16.mxu0 0
    %1592 = vmatpush1.bf16.msra.mxu0 0
    %1593 = vmatprep.subr.bf16.mxu0 0
    %1594 = vmatpush1.bf16.msra.mxu0 0
    %1595 = vmatprep.subr.bf16.mxu0 0
    %1596 = vmatpush1.bf16.msra.mxu0 0
    %1597 = vmatprep.subr.bf16.mxu0 0
    %1598 = vmatpush1.bf16.msra.mxu0 0
    %1599 = vmatprep.subr.bf16.mxu0 0
    %1600 = vmatpush1.bf16.msra.mxu0 0
    %1601 = vmatprep.subr.bf16.mxu0 0
    %1602 = vmatpush1.bf16.msra.mxu0 0
    %1603 = vmatprep.subr.bf16.mxu0 0
    %1604 = vmatpush1.bf16.msra.mxu0 0
    %1605 = vmatprep.mubr.bf16.mxu0 0
    %1606 = vmatmul.mubr.bf16.gmra.mrb[0].mxu0 %v1280
    %v1607 = vpop.f32.mrb[0].mxu0
    %v1608 = vadd.f32 %v597, %v1607
    %v1609 = vpop.f32.mrb[0].mxu0
    %v1610 = vpop.f32.mrb[0].mxu0
    %v1611 = vpop.f32.mrb[0].mxu0
    %1612 = vdwg.mxu0
    %v1613 = vmul.f32 %v1513, %v1608
    %v1614 = vadd.f32 %v1524, %v1613
    %v1615 = vtanh.pop %v1614
    %v1616 = vsub.f32 1.0, %v1522
    %v1617 = vmul.f32 %v1616, %v1615
    %v1618 = vmul.f32 %v1522, %v1277
    %v1619 = vadd.f32 %v1617, %v1618
    %s1620 = scalar_lea.vmem [#allocation3], 16
    %1621 = vst [vmem:[%s1620] sm:$0xff] %v1619
    %v1622 = vpack.c.bf16 %v1619, %v1619
    %v1623 = vld [vmem:[#allocation9] sm:$0xf]
    %v1624 = vld [vmem:[#allocation9 + $0x4] sm:$0xf]
    %v1625 = vld [vmem:[#allocation9 + $0x8] sm:$0xf]
    %v1626 = vld [vmem:[#allocation9 + $0xc] sm:$0xf]
    %v1627 = vld [vmem:[#allocation9 + $0x10] sm:$0xf]
    %v1628 = vld [vmem:[#allocation9 + $0x14] sm:$0xf]
    %v1629 = vld [vmem:[#allocation9 + $0x18] sm:$0xf]
    %v1630 = vld [vmem:[#allocation9 + $0x1c] sm:$0xf]
    %v1631 = vld [vmem:[#allocation9 + $0x20] sm:$0xf]
    %v1632 = vld [vmem:[#allocation9 + $0x24] sm:$0xf]
    %v1633 = vld [vmem:[#allocation9 + $0x28] sm:$0xf]
    %v1634 = vld [vmem:[#allocation9 + $0x2c] sm:$0xf]
    %v1635 = vld [vmem:[#allocation9 + $0x30] sm:$0xf]
    %v1636 = vld [vmem:[#allocation9 + $0x34] sm:$0xf]
    %v1637 = vld [vmem:[#allocation9 + $0x38] sm:$0xf]
    %v1638 = vld [vmem:[#allocation9 + $0x3c] sm:$0xf]
    %v1655 = vunpack.c.l.b16 %v1623
    %v1656 = vunpack.c.l.b16 %v1624
    %v1657 = vunpack.c.l.b16 %v1625
    %v1658 = vunpack.c.l.b16 %v1626
    %v1659 = vunpack.c.l.b16 %v1627
    %v1660 = vunpack.c.l.b16 %v1628
    %v1661 = vunpack.c.l.b16 %v1629
    %v1662 = vunpack.c.l.b16 %v1630
    %v1663 = vunpack.c.l.b16 %v1631
    %v1664 = vunpack.c.l.b16 %v1632
    %v1665 = vunpack.c.l.b16 %v1633
    %v1666 = vunpack.c.l.b16 %v1634
    %v1667 = vunpack.c.l.b16 %v1635
    %v1668 = vunpack.c.l.b16 %v1636
    %v1669 = vunpack.c.l.b16 %v1637
    %v1670 = vunpack.c.l.b16 %v1638
    %v1671 = vpack.c.b16 %v1656, %v1655
    %v1672 = vpack.c.b16 %v1658, %v1657
    %v1673 = vpack.c.b16 %v1660, %v1659
    %v1674 = vpack.c.b16 %v1662, %v1661
    %v1675 = vpack.c.b16 %v1664, %v1663
    %v1676 = vpack.c.b16 %v1666, %v1665
    %v1677 = vpack.c.b16 %v1668, %v1667
    %v1678 = vpack.c.b16 %v1670, %v1669
    %1687 = vmatprep.subr.bf16.mxu0 0
    %1688 = vmatpush1.bf16.msra.mxu0 %v1671
    %1689 = vmatprep.subr.bf16.mxu0 0
    %1690 = vmatpush1.bf16.msra.mxu0 %v1672
    %1691 = vmatprep.subr.bf16.mxu0 0
    %1692 = vmatpush1.bf16.msra.mxu0 %v1673
    %1693 = vmatprep.subr.bf16.mxu0 0
    %1694 = vmatpush1.bf16.msra.mxu0 %v1674
    %1695 = vmatprep.subr.bf16.mxu0 0
    %1696 = vmatpush1.bf16.msra.mxu0 %v1675
    %1697 = vmatprep.subr.bf16.mxu0 0
    %1698 = vmatpush1.bf16.msra.mxu0 %v1676
    %1699 = vmatprep.subr.bf16.mxu0 0
    %1700 = vmatpush1.bf16.msra.mxu0 %v1677
    %1701 = vmatprep.subr.bf16.mxu0 0
    %1702 = vmatpush1.bf16.msra.mxu0 %v1678
    %1703 = vmatprep.subr.bf16.mxu0 0
    %1704 = vmatpush1.bf16.msra.mxu0 0
    %1705 = vmatprep.subr.bf16.mxu0 0
    %1706 = vmatpush1.bf16.msra.mxu0 0
    %1707 = vmatprep.subr.bf16.mxu0 0
    %1708 = vmatpush1.bf16.msra.mxu0 0
    %1709 = vmatprep.subr.bf16.mxu0 0
    %1710 = vmatpush1.bf16.msra.mxu0 0
    %1711 = vmatprep.subr.bf16.mxu0 0
    %1712 = vmatpush1.bf16.msra.mxu0 0
    %1713 = vmatprep.subr.bf16.mxu0 0
    %1714 = vmatpush1.bf16.msra.mxu0 0
    %1715 = vmatprep.subr.bf16.mxu0 0
    %1716 = vmatpush1.bf16.msra.mxu0 0
    %1717 = vmatprep.subr.bf16.mxu0 0
    %1718 = vmatpush1.bf16.msra.mxu0 0
    %1719 = vmatprep.mubr.bf16.mxu0 0
    %1720 = vmatmul.mubr.bf16.gmra.mrb[0].mxu0 %v1622
    %v1721 = vpop.f32.mrb[0].mxu0
    %v1722 = vadd.f32 0.0, %v1721
    %v1723 = vpop.f32.mrb[0].mxu0
    %v1724 = vpop.f32.mrb[0].mxu0
    %v1725 = vpop.f32.mrb[0].mxu0
    %1726 = vdwg.mxu0
    %v1727 = vld [vmem:[%s703] sm:$0xf]
    %v1728 = vld [vmem:[%s703 + $0x4] sm:$0xf]
    %v1729 = vld [vmem:[%s703 + $0x8] sm:$0xf]
    %v1730 = vld [vmem:[%s703 + $0xc] sm:$0xf]
    %v1731 = vld [vmem:[%s703 + $0x10] sm:$0xf]
    %v1732 = vld [vmem:[%s703 + $0x14] sm:$0xf]
    %v1733 = vld [vmem:[%s703 + $0x18] sm:$0xf]
    %v1734 = vld [vmem:[%s703 + $0x1c] sm:$0xf]
    %v1735 = vld [vmem:[%s703 + $0x20] sm:$0xf]
    %v1736 = vld [vmem:[%s703 + $0x24] sm:$0xf]
    %v1737 = vld [vmem:[%s703 + $0x28] sm:$0xf]
    %v1738 = vld [vmem:[%s703 + $0x2c] sm:$0xf]
    %v1739 = vld [vmem:[%s703 + $0x30] sm:$0xf]
    %v1740 = vld [vmem:[%s703 + $0x34] sm:$0xf]
    %v1741 = vld [vmem:[%s703 + $0x38] sm:$0xf]
    %v1742 = vld [vmem:[%s703 + $0x3c] sm:$0xf]
    %v1759 = vunpack.c.l.b16 %v1727
    %v1760 = vunpack.c.l.b16 %v1728
    %v1761 = vunpack.c.l.b16 %v1729
    %v1762 = vunpack.c.l.b16 %v1730
    %v1763 = vunpack.c.l.b16 %v1731
    %v1764 = vunpack.c.l.b16 %v1732
    %v1765 = vunpack.c.l.b16 %v1733
    %v1766 = vunpack.c.l.b16 %v1734
    %v1767 = vunpack.c.l.b16 %v1735
    %v1768 = vunpack.c.l.b16 %v1736
    %v1769 = vunpack.c.l.b16 %v1737
    %v1770 = vunpack.c.l.b16 %v1738
    %v1771 = vunpack.c.l.b16 %v1739
    %v1772 = vunpack.c.l.b16 %v1740
    %v1773 = vunpack.c.l.b16 %v1741
    %v1774 = vunpack.c.l.b16 %v1742
    %v1775 = vpack.c.b16 %v1760, %v1759
    %v1776 = vpack.c.b16 %v1762, %v1761
    %v1777 = vpack.c.b16 %v1764, %v1763
    %v1778 = vpack.c.b16 %v1766, %v1765
    %v1779 = vpack.c.b16 %v1768, %v1767
    %v1780 = vpack.c.b16 %v1770, %v1769
    %v1781 = vpack.c.b16 %v1772, %v1771
    %v1782 = vpack.c.b16 %v1774, %v1773
    %1791 = vmatprep.subr.bf16.mxu0 0
    %1792 = vmatpush1.bf16.msra.mxu0 %v1775
    %1793 = vmatprep.subr.bf16.mxu0 0
    %1794 = vmatpush1.bf16.msra.mxu0 %v1776
    %1795 = vmatprep.subr.bf16.mxu0 0
    %1796 = vmatpush1.bf16.msra.mxu0 %v1777
    %1797 = vmatprep.subr.bf16.mxu0 0
    %1798 = vmatpush1.bf16.msra.mxu0 %v1778
    %1799 = vmatprep.subr.bf16.mxu0 0
    %1800 = vmatpush1.bf16.msra.mxu0 %v1779
    %1801 = vmatprep.subr.bf16.mxu0 0
    %1802 = vmatpush1.bf16.msra.mxu0 %v1780
    %1803 = vmatprep.subr.bf16.mxu0 0
    %1804 = vmatpush1.bf16.msra.mxu0 %v1781
    %1805 = vmatprep.subr.bf16.mxu0 0
    %1806 = vmatpush1.bf16.msra.mxu0 %v1782
    %1807 = vmatprep.subr.bf16.mxu0 0
    %1808 = vmatpush1.bf16.msra.mxu0 0
    %1809 = vmatprep.subr.bf16.mxu0 0
    %1810 = vmatpush1.bf16.msra.mxu0 0
    %1811 = vmatprep.subr.bf16.mxu0 0
    %1812 = vmatpush1.bf16.msra.mxu0 0
    %1813 = vmatprep.subr.bf16.mxu0 0
    %1814 = vmatpush1.bf16.msra.mxu0 0
    %1815 = vmatprep.subr.bf16.mxu0 0
    %1816 = vmatpush1.bf16.msra.mxu0 0
    %1817 = vmatprep.subr.bf16.mxu0 0
    %1818 = vmatpush1.bf16.msra.mxu0 0
    %1819 = vmatprep.subr.bf16.mxu0 0
    %1820 = vmatpush1.bf16.msra.mxu0 0
    %1821 = vmatprep.subr.bf16.mxu0 0
    %1822 = vmatpush1.bf16.msra.mxu0 0
    %1823 = vmatprep.mubr.bf16.mxu0 0
    %1824 = vmatmul.mubr.bf16.gmra.mrb[0].mxu0 %v1622
    %v1825 = vpop.f32.mrb[0].mxu0
    %v1826 = vadd.f32 0.0, %v1825
    %v1827 = vpop.f32.mrb[0].mxu0
    %v1828 = vpop.f32.mrb[0].mxu0
    %v1829 = vpop.f32.mrb[0].mxu0
    %1830 = vdwg.mxu0
    %v1831 = vld [vmem:[%s808] sm:$0xf]
    %v1832 = vld [vmem:[%s808 + $0x4] sm:$0xf]
    %v1833 = vld [vmem:[%s808 + $0x8] sm:$0xf]
    %v1834 = vld [vmem:[%s808 + $0xc] sm:$0xf]
    %v1835 = vld [vmem:[%s808 + $0x10] sm:$0xf]
    %v1836 = vld [vmem:[%s808 + $0x14] sm:$0xf]
    %v1837 = vld [vmem:[%s808 + $0x18] sm:$0xf]
    %v1838 = vld [vmem:[%s808 + $0x1c] sm:$0xf]
    %v1839 = vld [vmem:[%s808 + $0x20] sm:$0xf]
    %v1840 = vld [vmem:[%s808 + $0x24] sm:$0xf]
    %v1841 = vld [vmem:[%s808 + $0x28] sm:$0xf]
    %v1842 = vld [vmem:[%s808 + $0x2c] sm:$0xf]
    %v1843 = vld [vmem:[%s808 + $0x30] sm:$0xf]
    %v1844 = vld [vmem:[%s808 + $0x34] sm:$0xf]
    %v1845 = vld [vmem:[%s808 + $0x38] sm:$0xf]
    %v1846 = vld [vmem:[%s808 + $0x3c] sm:$0xf]
    %s1847 = scalar_lea.vmem [#allocation2], 24
    %v1848 = vld [vmem:[%s1847] sm:$0xff]
    %v1849 = vadd.f32 %v1848, %v1722
    %v1850 = vxor.u32 %v1849, 2147483648
    %v1851 = vmul.f32 %v1850, 1.442695
    %v1852 = vpow.pop %v1851
    %v1853 = vadd.f32 %v1852, 1.0
    %v1854 = vrcp.pop %v1853
    %v1855 = vmul.f32 1.0, %v1854
    %s1856 = scalar_lea.vmem %s436, 24 [#allocation2]
    %v1857 = vld [vmem:[%s1856] sm:$0xff]
    %v1858 = vadd.f32 %v1857, %v1826
    %v1859 = vxor.u32 %v1858, 2147483648
    %v1860 = vmul.f32 %v1859, 1.442695
    %v1861 = vpow.pop %v1860
    %v1862 = vadd.f32 %v1861, 1.0
    %v1863 = vrcp.pop %v1862
    %v1864 = vmul.f32 1.0, %v1863
    %s1865 = scalar_lea.vmem %s583, 24 [#allocation2]
    %v1866 = vld [vmem:[%s1865] sm:$0xff]
    %v1883 = vunpack.c.l.b16 %v1831
    %v1884 = vunpack.c.l.b16 %v1832
    %v1885 = vunpack.c.l.b16 %v1833
    %v1886 = vunpack.c.l.b16 %v1834
    %v1887 = vunpack.c.l.b16 %v1835
    %v1888 = vunpack.c.l.b16 %v1836
    %v1889 = vunpack.c.l.b16 %v1837
    %v1890 = vunpack.c.l.b16 %v1838
    %v1891 = vunpack.c.l.b16 %v1839
    %v1892 = vunpack.c.l.b16 %v1840
    %v1893 = vunpack.c.l.b16 %v1841
    %v1894 = vunpack.c.l.b16 %v1842
    %v1895 = vunpack.c.l.b16 %v1843
    %v1896 = vunpack.c.l.b16 %v1844
    %v1897 = vunpack.c.l.b16 %v1845
    %v1898 = vunpack.c.l.b16 %v1846
    %v1899 = vpack.c.b16 %v1884, %v1883
    %v1900 = vpack.c.b16 %v1886, %v1885
    %v1901 = vpack.c.b16 %v1888, %v1887
    %v1902 = vpack.c.b16 %v1890, %v1889
    %v1903 = vpack.c.b16 %v1892, %v1891
    %v1904 = vpack.c.b16 %v1894, %v1893
    %v1905 = vpack.c.b16 %v1896, %v1895
    %v1906 = vpack.c.b16 %v1898, %v1897
    %1915 = vmatprep.subr.bf16.mxu0 0
    %1916 = vmatpush1.bf16.msra.mxu0 %v1899
    %1917 = vmatprep.subr.bf16.mxu0 0
    %1918 = vmatpush1.bf16.msra.mxu0 %v1900
    %1919 = vmatprep.subr.bf16.mxu0 0
    %1920 = vmatpush1.bf16.msra.mxu0 %v1901
    %1921 = vmatprep.subr.bf16.mxu0 0
    %1922 = vmatpush1.bf16.msra.mxu0 %v1902
    %1923 = vmatprep.subr.bf16.mxu0 0
    %1924 = vmatpush1.bf16.msra.mxu0 %v1903
    %1925 = vmatprep.subr.bf16.mxu0 0
    %1926 = vmatpush1.bf16.msra.mxu0 %v1904
    %1927 = vmatprep.subr.bf16.mxu0 0
    %1928 = vmatpush1.bf16.msra.mxu0 %v1905
    %1929 = vmatprep.subr.bf16.mxu0 0
    %1930 = vmatpush1.bf16.msra.mxu0 %v1906
    %1931 = vmatprep.subr.bf16.mxu0 0
    %1932 = vmatpush1.bf16.msra.mxu0 0
    %1933 = vmatprep.subr.bf16.mxu0 0
    %1934 = vmatpush1.bf16.msra.mxu0 0
    %1935 = vmatprep.subr.bf16.mxu0 0
    %1936 = vmatpush1.bf16.msra.mxu0 0
    %1937 = vmatprep.subr.bf16.mxu0 0
    %1938 = vmatpush1.bf16.msra.mxu0 0
    %1939 = vmatprep.subr.bf16.mxu0 0
    %1940 = vmatpush1.bf16.msra.mxu0 0
    %1941 = vmatprep.subr.bf16.mxu0 0
    %1942 = vmatpush1.bf16.msra.mxu0 0
    %1943 = vmatprep.subr.bf16.mxu0 0
    %1944 = vmatpush1.bf16.msra.mxu0 0
    %1945 = vmatprep.subr.bf16.mxu0 0
    %1946 = vmatpush1.bf16.msra.mxu0 0
    %1947 = vmatprep.mubr.bf16.mxu0 0
    %1948 = vmatmul.mubr.bf16.gmra.mrb[0].mxu0 %v1622
    %v1949 = vpop.f32.mrb[0].mxu0
    %v1950 = vadd.f32 %v597, %v1949
    %v1951 = vpop.f32.mrb[0].mxu0
    %v1952 = vpop.f32.mrb[0].mxu0
    %v1953 = vpop.f32.mrb[0].mxu0
    %1954 = vdwg.mxu0
    %v1955 = vmul.f32 %v1855, %v1950
    %v1956 = vadd.f32 %v1866, %v1955
    %v1957 = vtanh.pop %v1956
    %v1958 = vsub.f32 1.0, %v1864
    %v1959 = vmul.f32 %v1958, %v1957
    %v1960 = vmul.f32 %v1864, %v1619
    %v1961 = vadd.f32 %v1959, %v1960
    %s1962 = scalar_lea.vmem [#allocation3], 24
    %1963 = vst [vmem:[%s1962] sm:$0xff] %v1961
    %v1964 = vpack.c.bf16 %v1961, %v1961
    %v1965 = vld [vmem:[#allocation9] sm:$0xf]
    %v1966 = vld [vmem:[#allocation9 + $0x4] sm:$0xf]
    %v1967 = vld [vmem:[#allocation9 + $0x8] sm:$0xf]
    %v1968 = vld [vmem:[#allocation9 + $0xc] sm:$0xf]
    %v1969 = vld [vmem:[#allocation9 + $0x10] sm:$0xf]
    %v1970 = vld [vmem:[#allocation9 + $0x14] sm:$0xf]
    %v1971 = vld [vmem:[#allocation9 + $0x18] sm:$0xf]
    %v1972 = vld [vmem:[#allocation9 + $0x1c] sm:$0xf]
    %v1973 = vld [vmem:[#allocation9 + $0x20] sm:$0xf]
    %v1974 = vld [vmem:[#allocation9 + $0x24] sm:$0xf]
    %v1975 = vld [vmem:[#allocation9 + $0x28] sm:$0xf]
    %v1976 = vld [vmem:[#allocation9 + $0x2c] sm:$0xf]
    %v1977 = vld [vmem:[#allocation9 + $0x30] sm:$0xf]
    %v1978 = vld [vmem:[#allocation9 + $0x34] sm:$0xf]
    %v1979 = vld [vmem:[#allocation9 + $0x38] sm:$0xf]
    %v1980 = vld [vmem:[#allocation9 + $0x3c] sm:$0xf]
    %v1997 = vunpack.c.l.b16 %v1965
    %v1998 = vunpack.c.l.b16 %v1966
    %v1999 = vunpack.c.l.b16 %v1967
    %v2000 = vunpack.c.l.b16 %v1968
    %v2001 = vunpack.c.l.b16 %v1969
    %v2002 = vunpack.c.l.b16 %v1970
    %v2003 = vunpack.c.l.b16 %v1971
    %v2004 = vunpack.c.l.b16 %v1972
    %v2005 = vunpack.c.l.b16 %v1973
    %v2006 = vunpack.c.l.b16 %v1974
    %v2007 = vunpack.c.l.b16 %v1975
    %v2008 = vunpack.c.l.b16 %v1976
    %v2009 = vunpack.c.l.b16 %v1977
    %v2010 = vunpack.c.l.b16 %v1978
    %v2011 = vunpack.c.l.b16 %v1979
    %v2012 = vunpack.c.l.b16 %v1980
    %v2013 = vpack.c.b16 %v1998, %v1997
    %v2014 = vpack.c.b16 %v2000, %v1999
    %v2015 = vpack.c.b16 %v2002, %v2001
    %v2016 = vpack.c.b16 %v2004, %v2003
    %v2017 = vpack.c.b16 %v2006, %v2005
    %v2018 = vpack.c.b16 %v2008, %v2007
    %v2019 = vpack.c.b16 %v2010, %v2009
    %v2020 = vpack.c.b16 %v2012, %v2011
    %2029 = vmatprep.subr.bf16.mxu0 0
    %2030 = vmatpush1.bf16.msra.mxu0 %v2013
    %2031 = vmatprep.subr.bf16.mxu0 0
    %2032 = vmatpush1.bf16.msra.mxu0 %v2014
    %2033 = vmatprep.subr.bf16.mxu0 0
    %2034 = vmatpush1.bf16.msra.mxu0 %v2015
    %2035 = vmatprep.subr.bf16.mxu0 0
    %2036 = vmatpush1.bf16.msra.mxu0 %v2016
    %2037 = vmatprep.subr.bf16.mxu0 0
    %2038 = vmatpush1.bf16.msra.mxu0 %v2017
    %2039 = vmatprep.subr.bf16.mxu0 0
    %2040 = vmatpush1.bf16.msra.mxu0 %v2018
    %2041 = vmatprep.subr.bf16.mxu0 0
    %2042 = vmatpush1.bf16.msra.mxu0 %v2019
    %2043 = vmatprep.subr.bf16.mxu0 0
    %2044 = vmatpush1.bf16.msra.mxu0 %v2020
    %2045 = vmatprep.subr.bf16.mxu0 0
    %2046 = vmatpush1.bf16.msra.mxu0 0
    %2047 = vmatprep.subr.bf16.mxu0 0
    %2048 = vmatpush1.bf16.msra.mxu0 0
    %2049 = vmatprep.subr.bf16.mxu0 0
    %2050 = vmatpush1.bf16.msra.mxu0 0
    %2051 = vmatprep.subr.bf16.mxu0 0
    %2052 = vmatpush1.bf16.msra.mxu0 0
    %2053 = vmatprep.subr.bf16.mxu0 0
    %2054 = vmatpush1.bf16.msra.mxu0 0
    %2055 = vmatprep.subr.bf16.mxu0 0
    %2056 = vmatpush1.bf16.msra.mxu0 0
    %2057 = vmatprep.subr.bf16.mxu0 0
    %2058 = vmatpush1.bf16.msra.mxu0 0
    %2059 = vmatprep.subr.bf16.mxu0 0
    %2060 = vmatpush1.bf16.msra.mxu0 0
    %2061 = vmatprep.mubr.bf16.mxu0 0
    %2062 = vmatmul.mubr.bf16.gmra.mrb[0].mxu0 %v1964
    %v2063 = vpop.f32.mrb[0].mxu0
    %v2064 = vadd.f32 0.0, %v2063
    %v2065 = vpop.f32.mrb[0].mxu0
    %v2066 = vpop.f32.mrb[0].mxu0
    %v2067 = vpop.f32.mrb[0].mxu0
    %2068 = vdwg.mxu0
    %v2069 = vld [vmem:[%s703] sm:$0xf]
    %v2070 = vld [vmem:[%s703 + $0x4] sm:$0xf]
    %v2071 = vld [vmem:[%s703 + $0x8] sm:$0xf]
    %v2072 = vld [vmem:[%s703 + $0xc] sm:$0xf]
    %v2073 = vld [vmem:[%s703 + $0x10] sm:$0xf]
    %v2074 = vld [vmem:[%s703 + $0x14] sm:$0xf]
    %v2075 = vld [vmem:[%s703 + $0x18] sm:$0xf]
    %v2076 = vld [vmem:[%s703 + $0x1c] sm:$0xf]
    %v2077 = vld [vmem:[%s703 + $0x20] sm:$0xf]
    %v2078 = vld [vmem:[%s703 + $0x24] sm:$0xf]
    %v2079 = vld [vmem:[%s703 + $0x28] sm:$0xf]
    %v2080 = vld [vmem:[%s703 + $0x2c] sm:$0xf]
    %v2081 = vld [vmem:[%s703 + $0x30] sm:$0xf]
    %v2082 = vld [vmem:[%s703 + $0x34] sm:$0xf]
    %v2083 = vld [vmem:[%s703 + $0x38] sm:$0xf]
    %v2084 = vld [vmem:[%s703 + $0x3c] sm:$0xf]
    %v2101 = vunpack.c.l.b16 %v2069
    %v2102 = vunpack.c.l.b16 %v2070
    %v2103 = vunpack.c.l.b16 %v2071
    %v2104 = vunpack.c.l.b16 %v2072
    %v2105 = vunpack.c.l.b16 %v2073
    %v2106 = vunpack.c.l.b16 %v2074
    %v2107 = vunpack.c.l.b16 %v2075
    %v2108 = vunpack.c.l.b16 %v2076
    %v2109 = vunpack.c.l.b16 %v2077
    %v2110 = vunpack.c.l.b16 %v2078
    %v2111 = vunpack.c.l.b16 %v2079
    %v2112 = vunpack.c.l.b16 %v2080
    %v2113 = vunpack.c.l.b16 %v2081
    %v2114 = vunpack.c.l.b16 %v2082
    %v2115 = vunpack.c.l.b16 %v2083
    %v2116 = vunpack.c.l.b16 %v2084
    %v2117 = vpack.c.b16 %v2102, %v2101
    %v2118 = vpack.c.b16 %v2104, %v2103
    %v2119 = vpack.c.b16 %v2106, %v2105
    %v2120 = vpack.c.b16 %v2108, %v2107
    %v2121 = vpack.c.b16 %v2110, %v2109
    %v2122 = vpack.c.b16 %v2112, %v2111
    %v2123 = vpack.c.b16 %v2114, %v2113
    %v2124 = vpack.c.b16 %v2116, %v2115
    %2133 = vmatprep.subr.bf16.mxu0 0
    %2134 = vmatpush1.bf16.msra.mxu0 %v2117
    %2135 = vmatprep.subr.bf16.mxu0 0
    %2136 = vmatpush1.bf16.msra.mxu0 %v2118
    %2137 = vmatprep.subr.bf16.mxu0 0
    %2138 = vmatpush1.bf16.msra.mxu0 %v2119
    %2139 = vmatprep.subr.bf16.mxu0 0
    %2140 = vmatpush1.bf16.msra.mxu0 %v2120
    %2141 = vmatprep.subr.bf16.mxu0 0
    %2142 = vmatpush1.bf16.msra.mxu0 %v2121
    %2143 = vmatprep.subr.bf16.mxu0 0
    %2144 = vmatpush1.bf16.msra.mxu0 %v2122
    %2145 = vmatprep.subr.bf16.mxu0 0
    %2146 = vmatpush1.bf16.msra.mxu0 %v2123
    %2147 = vmatprep.subr.bf16.mxu0 0
    %2148 = vmatpush1.bf16.msra.mxu0 %v2124
    %2149 = vmatprep.subr.bf16.mxu0 0
    %2150 = vmatpush1.bf16.msra.mxu0 0
    %2151 = vmatprep.subr.bf16.mxu0 0
    %2152 = vmatpush1.bf16.msra.mxu0 0
    %2153 = vmatprep.subr.bf16.mxu0 0
    %2154 = vmatpush1.bf16.msra.mxu0 0
    %2155 = vmatprep.subr.bf16.mxu0 0
    %2156 = vmatpush1.bf16.msra.mxu0 0
    %2157 = vmatprep.subr.bf16.mxu0 0
    %2158 = vmatpush1.bf16.msra.mxu0 0
    %2159 = vmatprep.subr.bf16.mxu0 0
    %2160 = vmatpush1.bf16.msra.mxu0 0
    %2161 = vmatprep.subr.bf16.mxu0 0
    %2162 = vmatpush1.bf16.msra.mxu0 0
    %2163 = vmatprep.subr.bf16.mxu0 0
    %2164 = vmatpush1.bf16.msra.mxu0 0
    %2165 = vmatprep.mubr.bf16.mxu0 0
    %2166 = vmatmul.mubr.bf16.gmra.mrb[0].mxu0 %v1964
    %v2167 = vpop.f32.mrb[0].mxu0
    %v2168 = vadd.f32 0.0, %v2167
    %v2169 = vpop.f32.mrb[0].mxu0
    %v2170 = vpop.f32.mrb[0].mxu0
    %v2171 = vpop.f32.mrb[0].mxu0
    %2172 = vdwg.mxu0
    %v2173 = vld [vmem:[%s808] sm:$0xf]
    %v2174 = vld [vmem:[%s808 + $0x4] sm:$0xf]
    %v2175 = vld [vmem:[%s808 + $0x8] sm:$0xf]
    %v2176 = vld [vmem:[%s808 + $0xc] sm:$0xf]
    %v2177 = vld [vmem:[%s808 + $0x10] sm:$0xf]
    %v2178 = vld [vmem:[%s808 + $0x14] sm:$0xf]
    %v2179 = vld [vmem:[%s808 + $0x18] sm:$0xf]
    %v2180 = vld [vmem:[%s808 + $0x1c] sm:$0xf]
    %v2181 = vld [vmem:[%s808 + $0x20] sm:$0xf]
    %v2182 = vld [vmem:[%s808 + $0x24] sm:$0xf]
    %v2183 = vld [vmem:[%s808 + $0x28] sm:$0xf]
    %v2184 = vld [vmem:[%s808 + $0x2c] sm:$0xf]
    %v2185 = vld [vmem:[%s808 + $0x30] sm:$0xf]
    %v2186 = vld [vmem:[%s808 + $0x34] sm:$0xf]
    %v2187 = vld [vmem:[%s808 + $0x38] sm:$0xf]
    %v2188 = vld [vmem:[%s808 + $0x3c] sm:$0xf]
    %s2189 = scalar_lea.vmem [#allocation2], 32
    %v2190 = vld [vmem:[%s2189] sm:$0xff]
    %v2191 = vadd.f32 %v2190, %v2064
    %v2192 = vxor.u32 %v2191, 2147483648
    %v2193 = vmul.f32 %v2192, 1.442695
    %v2194 = vpow.pop %v2193
    %v2195 = vadd.f32 %v2194, 1.0
    %v2196 = vrcp.pop %v2195
    %v2197 = vmul.f32 1.0, %v2196
    %s2198 = scalar_lea.vmem %s436, 32 [#allocation2]
    %v2199 = vld [vmem:[%s2198] sm:$0xff]
    %v2200 = vadd.f32 %v2199, %v2168
    %v2201 = vxor.u32 %v2200, 2147483648
    %v2202 = vmul.f32 %v2201, 1.442695
    %v2203 = vpow.pop %v2202
    %v2204 = vadd.f32 %v2203, 1.0
    %v2205 = vrcp.pop %v2204
    %v2206 = vmul.f32 1.0, %v2205
    %s2207 = scalar_lea.vmem %s583, 32 [#allocation2]
    %v2208 = vld [vmem:[%s2207] sm:$0xff]
    %v2225 = vunpack.c.l.b16 %v2173
    %v2226 = vunpack.c.l.b16 %v2174
    %v2227 = vunpack.c.l.b16 %v2175
    %v2228 = vunpack.c.l.b16 %v2176
    %v2229 = vunpack.c.l.b16 %v2177
    %v2230 = vunpack.c.l.b16 %v2178
    %v2231 = vunpack.c.l.b16 %v2179
    %v2232 = vunpack.c.l.b16 %v2180
    %v2233 = vunpack.c.l.b16 %v2181
    %v2234 = vunpack.c.l.b16 %v2182
    %v2235 = vunpack.c.l.b16 %v2183
    %v2236 = vunpack.c.l.b16 %v2184
    %v2237 = vunpack.c.l.b16 %v2185
    %v2238 = vunpack.c.l.b16 %v2186
    %v2239 = vunpack.c.l.b16 %v2187
    %v2240 = vunpack.c.l.b16 %v2188
    %v2241 = vpack.c.b16 %v2226, %v2225
    %v2242 = vpack.c.b16 %v2228, %v2227
    %v2243 = vpack.c.b16 %v2230, %v2229
    %v2244 = vpack.c.b16 %v2232, %v2231
    %v2245 = vpack.c.b16 %v2234, %v2233
    %v2246 = vpack.c.b16 %v2236, %v2235
    %v2247 = vpack.c.b16 %v2238, %v2237
    %v2248 = vpack.c.b16 %v2240, %v2239
    %2257 = vmatprep.subr.bf16.mxu0 0
    %2258 = vmatpush1.bf16.msra.mxu0 %v2241
    %2259 = vmatprep.subr.bf16.mxu0 0
    %2260 = vmatpush1.bf16.msra.mxu0 %v2242
    %2261 = vmatprep.subr.bf16.mxu0 0
    %2262 = vmatpush1.bf16.msra.mxu0 %v2243
    %2263 = vmatprep.subr.bf16.mxu0 0
    %2264 = vmatpush1.bf16.msra.mxu0 %v2244
    %2265 = vmatprep.subr.bf16.mxu0 0
    %2266 = vmatpush1.bf16.msra.mxu0 %v2245
    %2267 = vmatprep.subr.bf16.mxu0 0
    %2268 = vmatpush1.bf16.msra.mxu0 %v2246
    %2269 = vmatprep.subr.bf16.mxu0 0
    %2270 = vmatpush1.bf16.msra.mxu0 %v2247
    %2271 = vmatprep.subr.bf16.mxu0 0
    %2272 = vmatpush1.bf16.msra.mxu0 %v2248
    %2273 = vmatprep.subr.bf16.mxu0 0
    %2274 = vmatpush1.bf16.msra.mxu0 0
    %2275 = vmatprep.subr.bf16.mxu0 0
    %2276 = vmatpush1.bf16.msra.mxu0 0
    %2277 = vmatprep.subr.bf16.mxu0 0
    %2278 = vmatpush1.bf16.msra.mxu0 0
    %2279 = vmatprep.subr.bf16.mxu0 0
    %2280 = vmatpush1.bf16.msra.mxu0 0
    %2281 = vmatprep.subr.bf16.mxu0 0
    %2282 = vmatpush1.bf16.msra.mxu0 0
    %2283 = vmatprep.subr.bf16.mxu0 0
    %2284 = vmatpush1.bf16.msra.mxu0 0
    %2285 = vmatprep.subr.bf16.mxu0 0
    %2286 = vmatpush1.bf16.msra.mxu0 0
    %2287 = vmatprep.subr.bf16.mxu0 0
    %2288 = vmatpush1.bf16.msra.mxu0 0
    %2289 = vmatprep.mubr.bf16.mxu0 0
    %2290 = vmatmul.mubr.bf16.gmra.mrb[0].mxu0 %v1964
    %v2291 = vpop.f32.mrb[0].mxu0
    %v2292 = vadd.f32 %v597, %v2291
    %v2293 = vpop.f32.mrb[0].mxu0
    %v2294 = vpop.f32.mrb[0].mxu0
    %v2295 = vpop.f32.mrb[0].mxu0
    %2296 = vdwg.mxu0
    %v2297 = vmul.f32 %v2197, %v2292
    %v2298 = vadd.f32 %v2208, %v2297
    %v2299 = vtanh.pop %v2298
    %v2300 = vsub.f32 1.0, %v2206
    %v2301 = vmul.f32 %v2300, %v2299
    %v2302 = vmul.f32 %v2206, %v1961
    %v2303 = vadd.f32 %v2301, %v2302
    %s2304 = scalar_lea.vmem [#allocation3], 32
    %2305 = vst [vmem:[%s2304] sm:$0xff] %v2303
    %v2306 = vpack.c.bf16 %v2303, %v2303
    %v2307 = vld [vmem:[#allocation9] sm:$0xf]
    %v2308 = vld [vmem:[#allocation9 + $0x4] sm:$0xf]
    %v2309 = vld [vmem:[#allocation9 + $0x8] sm:$0xf]
    %v2310 = vld [vmem:[#allocation9 + $0xc] sm:$0xf]
    %v2311 = vld [vmem:[#allocation9 + $0x10] sm:$0xf]
    %v2312 = vld [vmem:[#allocation9 + $0x14] sm:$0xf]
    %v2313 = vld [vmem:[#allocation9 + $0x18] sm:$0xf]
    %v2314 = vld [vmem:[#allocation9 + $0x1c] sm:$0xf]
    %v2315 = vld [vmem:[#allocation9 + $0x20] sm:$0xf]
    %v2316 = vld [vmem:[#allocation9 + $0x24] sm:$0xf]
    %v2317 = vld [vmem:[#allocation9 + $0x28] sm:$0xf]
    %v2318 = vld [vmem:[#allocation9 + $0x2c] sm:$0xf]
    %v2319 = vld [vmem:[#allocation9 + $0x30] sm:$0xf]
    %v2320 = vld [vmem:[#allocation9 + $0x34] sm:$0xf]
    %v2321 = vld [vmem:[#allocation9 + $0x38] sm:$0xf]
    %v2322 = vld [vmem:[#allocation9 + $0x3c] sm:$0xf]
    %v2339 = vunpack.c.l.b16 %v2307
    %v2340 = vunpack.c.l.b16 %v2308
    %v2341 = vunpack.c.l.b16 %v2309
    %v2342 = vunpack.c.l.b16 %v2310
    %v2343 = vunpack.c.l.b16 %v2311
    %v2344 = vunpack.c.l.b16 %v2312
    %v2345 = vunpack.c.l.b16 %v2313
    %v2346 = vunpack.c.l.b16 %v2314
    %v2347 = vunpack.c.l.b16 %v2315
    %v2348 = vunpack.c.l.b16 %v2316
    %v2349 = vunpack.c.l.b16 %v2317
    %v2350 = vunpack.c.l.b16 %v2318
    %v2351 = vunpack.c.l.b16 %v2319
    %v2352 = vunpack.c.l.b16 %v2320
    %v2353 = vunpack.c.l.b16 %v2321
    %v2354 = vunpack.c.l.b16 %v2322
    %v2355 = vpack.c.b16 %v2340, %v2339
    %v2356 = vpack.c.b16 %v2342, %v2341
    %v2357 = vpack.c.b16 %v2344, %v2343
    %v2358 = vpack.c.b16 %v2346, %v2345
    %v2359 = vpack.c.b16 %v2348, %v2347
    %v2360 = vpack.c.b16 %v2350, %v2349
    %v2361 = vpack.c.b16 %v2352, %v2351
    %v2362 = vpack.c.b16 %v2354, %v2353
    %2371 = vmatprep.subr.bf16.mxu0 0
    %2372 = vmatpush1.bf16.msra.mxu0 %v2355
    %2373 = vmatprep.subr.bf16.mxu0 0
    %2374 = vmatpush1.bf16.msra.mxu0 %v2356
    %2375 = vmatprep.subr.bf16.mxu0 0
    %2376 = vmatpush1.bf16.msra.mxu0 %v2357
    %2377 = vmatprep.subr.bf16.mxu0 0
    %2378 = vmatpush1.bf16.msra.mxu0 %v2358
    %2379 = vmatprep.subr.bf16.mxu0 0
    %2380 = vmatpush1.bf16.msra.mxu0 %v2359
    %2381 = vmatprep.subr.bf16.mxu0 0
    %2382 = vmatpush1.bf16.msra.mxu0 %v2360
    %2383 = vmatprep.subr.bf16.mxu0 0
    %2384 = vmatpush1.bf16.msra.mxu0 %v2361
    %2385 = vmatprep.subr.bf16.mxu0 0
    %2386 = vmatpush1.bf16.msra.mxu0 %v2362
    %2387 = vmatprep.subr.bf16.mxu0 0
    %2388 = vmatpush1.bf16.msra.mxu0 0
    %2389 = vmatprep.subr.bf16.mxu0 0
    %2390 = vmatpush1.bf16.msra.mxu0 0
    %2391 = vmatprep.subr.bf16.mxu0 0
    %2392 = vmatpush1.bf16.msra.mxu0 0
    %2393 = vmatprep.subr.bf16.mxu0 0
    %2394 = vmatpush1.bf16.msra.mxu0 0
    %2395 = vmatprep.subr.bf16.mxu0 0
    %2396 = vmatpush1.bf16.msra.mxu0 0
    %2397 = vmatprep.subr.bf16.mxu0 0
    %2398 = vmatpush1.bf16.msra.mxu0 0
    %2399 = vmatprep.subr.bf16.mxu0 0
    %2400 = vmatpush1.bf16.msra.mxu0 0
    %2401 = vmatprep.subr.bf16.mxu0 0
    %2402 = vmatpush1.bf16.msra.mxu0 0
    %2403 = vmatprep.mubr.bf16.mxu0 0
    %2404 = vmatmul.mubr.bf16.gmra.mrb[0].mxu0 %v2306
    %v2405 = vpop.f32.mrb[0].mxu0
    %v2406 = vadd.f32 0.0, %v2405
    %v2407 = vpop.f32.mrb[0].mxu0
    %v2408 = vpop.f32.mrb[0].mxu0
    %v2409 = vpop.f32.mrb[0].mxu0
    %2410 = vdwg.mxu0
    %v2411 = vld [vmem:[%s703] sm:$0xf]
    %v2412 = vld [vmem:[%s703 + $0x4] sm:$0xf]
    %v2413 = vld [vmem:[%s703 + $0x8] sm:$0xf]
    %v2414 = vld [vmem:[%s703 + $0xc] sm:$0xf]
    %v2415 = vld [vmem:[%s703 + $0x10] sm:$0xf]
    %v2416 = vld [vmem:[%s703 + $0x14] sm:$0xf]
    %v2417 = vld [vmem:[%s703 + $0x18] sm:$0xf]
    %v2418 = vld [vmem:[%s703 + $0x1c] sm:$0xf]
    %v2419 = vld [vmem:[%s703 + $0x20] sm:$0xf]
    %v2420 = vld [vmem:[%s703 + $0x24] sm:$0xf]
    %v2421 = vld [vmem:[%s703 + $0x28] sm:$0xf]
    %v2422 = vld [vmem:[%s703 + $0x2c] sm:$0xf]
    %v2423 = vld [vmem:[%s703 + $0x30] sm:$0xf]
    %v2424 = vld [vmem:[%s703 + $0x34] sm:$0xf]
    %v2425 = vld [vmem:[%s703 + $0x38] sm:$0xf]
    %v2426 = vld [vmem:[%s703 + $0x3c] sm:$0xf]
    %v2443 = vunpack.c.l.b16 %v2411
    %v2444 = vunpack.c.l.b16 %v2412
    %v2445 = vunpack.c.l.b16 %v2413
    %v2446 = vunpack.c.l.b16 %v2414
    %v2447 = vunpack.c.l.b16 %v2415
    %v2448 = vunpack.c.l.b16 %v2416
    %v2449 = vunpack.c.l.b16 %v2417
    %v2450 = vunpack.c.l.b16 %v2418
    %v2451 = vunpack.c.l.b16 %v2419
    %v2452 = vunpack.c.l.b16 %v2420
    %v2453 = vunpack.c.l.b16 %v2421
    %v2454 = vunpack.c.l.b16 %v2422
    %v2455 = vunpack.c.l.b16 %v2423
    %v2456 = vunpack.c.l.b16 %v2424
    %v2457 = vunpack.c.l.b16 %v2425
    %v2458 = vunpack.c.l.b16 %v2426
    %v2459 = vpack.c.b16 %v2444, %v2443
    %v2460 = vpack.c.b16 %v2446, %v2445
    %v2461 = vpack.c.b16 %v2448, %v2447
    %v2462 = vpack.c.b16 %v2450, %v2449
    %v2463 = vpack.c.b16 %v2452, %v2451
    %v2464 = vpack.c.b16 %v2454, %v2453
    %v2465 = vpack.c.b16 %v2456, %v2455
    %v2466 = vpack.c.b16 %v2458, %v2457
    %2475 = vmatprep.subr.bf16.mxu0 0
    %2476 = vmatpush1.bf16.msra.mxu0 %v2459
    %2477 = vmatprep.subr.bf16.mxu0 0
    %2478 = vmatpush1.bf16.msra.mxu0 %v2460
    %2479 = vmatprep.subr.bf16.mxu0 0
    %2480 = vmatpush1.bf16.msra.mxu0 %v2461
    %2481 = vmatprep.subr.bf16.mxu0 0
    %2482 = vmatpush1.bf16.msra.mxu0 %v2462
    %2483 = vmatprep.subr.bf16.mxu0 0
    %2484 = vmatpush1.bf16.msra.mxu0 %v2463
    %2485 = vmatprep.subr.bf16.mxu0 0
    %2486 = vmatpush1.bf16.msra.mxu0 %v2464
    %2487 = vmatprep.subr.bf16.mxu0 0
    %2488 = vmatpush1.bf16.msra.mxu0 %v2465
    %2489 = vmatprep.subr.bf16.mxu0 0
    %2490 = vmatpush1.bf16.msra.mxu0 %v2466
    %2491 = vmatprep.subr.bf16.mxu0 0
    %2492 = vmatpush1.bf16.msra.mxu0 0
    %2493 = vmatprep.subr.bf16.mxu0 0
    %2494 = vmatpush1.bf16.msra.mxu0 0
    %2495 = vmatprep.subr.bf16.mxu0 0
    %2496 = vmatpush1.bf16.msra.mxu0 0
    %2497 = vmatprep.subr.bf16.mxu0 0
    %2498 = vmatpush1.bf16.msra.mxu0 0
    %2499 = vmatprep.subr.bf16.mxu0 0
    %2500 = vmatpush1.bf16.msra.mxu0 0
    %2501 = vmatprep.subr.bf16.mxu0 0
    %2502 = vmatpush1.bf16.msra.mxu0 0
    %2503 = vmatprep.subr.bf16.mxu0 0
    %2504 = vmatpush1.bf16.msra.mxu0 0
    %2505 = vmatprep.subr.bf16.mxu0 0
    %2506 = vmatpush1.bf16.msra.mxu0 0
    %2507 = vmatprep.mubr.bf16.mxu0 0
    %2508 = vmatmul.mubr.bf16.gmra.mrb[0].mxu0 %v2306
    %v2509 = vpop.f32.mrb[0].mxu0
    %v2510 = vadd.f32 0.0, %v2509
    %v2511 = vpop.f32.mrb[0].mxu0
    %v2512 = vpop.f32.mrb[0].mxu0
    %v2513 = vpop.f32.mrb[0].mxu0
    %2514 = vdwg.mxu0
    %v2515 = vld [vmem:[%s808] sm:$0xf]
    %v2516 = vld [vmem:[%s808 + $0x4] sm:$0xf]
    %v2517 = vld [vmem:[%s808 + $0x8] sm:$0xf]
    %v2518 = vld [vmem:[%s808 + $0xc] sm:$0xf]
    %v2519 = vld [vmem:[%s808 + $0x10] sm:$0xf]
    %v2520 = vld [vmem:[%s808 + $0x14] sm:$0xf]
    %v2521 = vld [vmem:[%s808 + $0x18] sm:$0xf]
    %v2522 = vld [vmem:[%s808 + $0x1c] sm:$0xf]
    %v2523 = vld [vmem:[%s808 + $0x20] sm:$0xf]
    %v2524 = vld [vmem:[%s808 + $0x24] sm:$0xf]
    %v2525 = vld [vmem:[%s808 + $0x28] sm:$0xf]
    %v2526 = vld [vmem:[%s808 + $0x2c] sm:$0xf]
    %v2527 = vld [vmem:[%s808 + $0x30] sm:$0xf]
    %v2528 = vld [vmem:[%s808 + $0x34] sm:$0xf]
    %v2529 = vld [vmem:[%s808 + $0x38] sm:$0xf]
    %v2530 = vld [vmem:[%s808 + $0x3c] sm:$0xf]
    %s2531 = scalar_lea.vmem [#allocation2], 40
    %v2532 = vld [vmem:[%s2531] sm:$0xff]
    %v2533 = vadd.f32 %v2532, %v2406
    %v2534 = vxor.u32 %v2533, 2147483648
    %v2535 = vmul.f32 %v2534, 1.442695
    %v2536 = vpow.pop %v2535
    %v2537 = vadd.f32 %v2536, 1.0
    %v2538 = vrcp.pop %v2537
    %v2539 = vmul.f32 1.0, %v2538
    %s2540 = scalar_lea.vmem %s436, 40 [#allocation2]
    %v2541 = vld [vmem:[%s2540] sm:$0xff]
    %v2542 = vadd.f32 %v2541, %v2510
    %v2543 = vxor.u32 %v2542, 2147483648
    %v2544 = vmul.f32 %v2543, 1.442695
    %v2545 = vpow.pop %v2544
    %v2546 = vadd.f32 %v2545, 1.0
    %v2547 = vrcp.pop %v2546
    %v2548 = vmul.f32 1.0, %v2547
    %s2549 = scalar_lea.vmem %s583, 40 [#allocation2]
    %v2550 = vld [vmem:[%s2549] sm:$0xff]
    %v2567 = vunpack.c.l.b16 %v2515
    %v2568 = vunpack.c.l.b16 %v2516
    %v2569 = vunpack.c.l.b16 %v2517
    %v2570 = vunpack.c.l.b16 %v2518
    %v2571 = vunpack.c.l.b16 %v2519
    %v2572 = vunpack.c.l.b16 %v2520
    %v2573 = vunpack.c.l.b16 %v2521
    %v2574 = vunpack.c.l.b16 %v2522
    %v2575 = vunpack.c.l.b16 %v2523
    %v2576 = vunpack.c.l.b16 %v2524
    %v2577 = vunpack.c.l.b16 %v2525
    %v2578 = vunpack.c.l.b16 %v2526
    %v2579 = vunpack.c.l.b16 %v2527
    %v2580 = vunpack.c.l.b16 %v2528
    %v2581 = vunpack.c.l.b16 %v2529
    %v2582 = vunpack.c.l.b16 %v2530
    %v2583 = vpack.c.b16 %v2568, %v2567
    %v2584 = vpack.c.b16 %v2570, %v2569
    %v2585 = vpack.c.b16 %v2572, %v2571
    %v2586 = vpack.c.b16 %v2574, %v2573
    %v2587 = vpack.c.b16 %v2576, %v2575
    %v2588 = vpack.c.b16 %v2578, %v2577
    %v2589 = vpack.c.b16 %v2580, %v2579
    %v2590 = vpack.c.b16 %v2582, %v2581
    %2599 = vmatprep.subr.bf16.mxu0 0
    %2600 = vmatpush1.bf16.msra.mxu0 %v2583
    %2601 = vmatprep.subr.bf16.mxu0 0
    %2602 = vmatpush1.bf16.msra.mxu0 %v2584
    %2603 = vmatprep.subr.bf16.mxu0 0
    %2604 = vmatpush1.bf16.msra.mxu0 %v2585
    %2605 = vmatprep.subr.bf16.mxu0 0
    %2606 = vmatpush1.bf16.msra.mxu0 %v2586
    %2607 = vmatprep.subr.bf16.mxu0 0
    %2608 = vmatpush1.bf16.msra.mxu0 %v2587
    %2609 = vmatprep.subr.bf16.mxu0 0
    %2610 = vmatpush1.bf16.msra.mxu0 %v2588
    %2611 = vmatprep.subr.bf16.mxu0 0
    %2612 = vmatpush1.bf16.msra.mxu0 %v2589
    %2613 = vmatprep.subr.bf16.mxu0 0
    %2614 = vmatpush1.bf16.msra.mxu0 %v2590
    %2615 = vmatprep.subr.bf16.mxu0 0
    %2616 = vmatpush1.bf16.msra.mxu0 0
    %2617 = vmatprep.subr.bf16.mxu0 0
    %2618 = vmatpush1.bf16.msra.mxu0 0
    %2619 = vmatprep.subr.bf16.mxu0 0
    %2620 = vmatpush1.bf16.msra.mxu0 0
    %2621 = vmatprep.subr.bf16.mxu0 0
    %2622 = vmatpush1.bf16.msra.mxu0 0
    %2623 = vmatprep.subr.bf16.mxu0 0
    %2624 = vmatpush1.bf16.msra.mxu0 0
    %2625 = vmatprep.subr.bf16.mxu0 0
    %2626 = vmatpush1.bf16.msra.mxu0 0
    %2627 = vmatprep.subr.bf16.mxu0 0
    %2628 = vmatpush1.bf16.msra.mxu0 0
    %2629 = vmatprep.subr.bf16.mxu0 0
    %2630 = vmatpush1.bf16.msra.mxu0 0
    %2631 = vmatprep.mubr.bf16.mxu0 0
    %2632 = vmatmul.mubr.bf16.gmra.mrb[0].mxu0 %v2306
    %v2633 = vpop.f32.mrb[0].mxu0
    %v2634 = vadd.f32 %v597, %v2633
    %v2635 = vpop.f32.mrb[0].mxu0
    %v2636 = vpop.f32.mrb[0].mxu0
    %v2637 = vpop.f32.mrb[0].mxu0
    %2638 = vdwg.mxu0
    %v2639 = vmul.f32 %v2539, %v2634
    %v2640 = vadd.f32 %v2550, %v2639
    %v2641 = vtanh.pop %v2640
    %v2642 = vsub.f32 1.0, %v2548
    %v2643 = vmul.f32 %v2642, %v2641
    %v2644 = vmul.f32 %v2548, %v2303
    %v2645 = vadd.f32 %v2643, %v2644
    %s2646 = scalar_lea.vmem [#allocation3], 40
    %2647 = vst [vmem:[%s2646] sm:$0xff] %v2645
    %v2648 = vpack.c.bf16 %v2645, %v2645
    %v2649 = vld [vmem:[#allocation9] sm:$0xf]
    %v2650 = vld [vmem:[#allocation9 + $0x4] sm:$0xf]
    %v2651 = vld [vmem:[#allocation9 + $0x8] sm:$0xf]
    %v2652 = vld [vmem:[#allocation9 + $0xc] sm:$0xf]
    %v2653 = vld [vmem:[#allocation9 + $0x10] sm:$0xf]
    %v2654 = vld [vmem:[#allocation9 + $0x14] sm:$0xf]
    %v2655 = vld [vmem:[#allocation9 + $0x18] sm:$0xf]
    %v2656 = vld [vmem:[#allocation9 + $0x1c] sm:$0xf]
    %v2657 = vld [vmem:[#allocation9 + $0x20] sm:$0xf]
    %v2658 = vld [vmem:[#allocation9 + $0x24] sm:$0xf]
    %v2659 = vld [vmem:[#allocation9 + $0x28] sm:$0xf]
    %v2660 = vld [vmem:[#allocation9 + $0x2c] sm:$0xf]
    %v2661 = vld [vmem:[#allocation9 + $0x30] sm:$0xf]
    %v2662 = vld [vmem:[#allocation9 + $0x34] sm:$0xf]
    %v2663 = vld [vmem:[#allocation9 + $0x38] sm:$0xf]
    %v2664 = vld [vmem:[#allocation9 + $0x3c] sm:$0xf]
    %v2681 = vunpack.c.l.b16 %v2649
    %v2682 = vunpack.c.l.b16 %v2650
    %v2683 = vunpack.c.l.b16 %v2651
    %v2684 = vunpack.c.l.b16 %v2652
    %v2685 = vunpack.c.l.b16 %v2653
    %v2686 = vunpack.c.l.b16 %v2654
    %v2687 = vunpack.c.l.b16 %v2655
    %v2688 = vunpack.c.l.b16 %v2656
    %v2689 = vunpack.c.l.b16 %v2657
    %v2690 = vunpack.c.l.b16 %v2658
    %v2691 = vunpack.c.l.b16 %v2659
    %v2692 = vunpack.c.l.b16 %v2660
    %v2693 = vunpack.c.l.b16 %v2661
    %v2694 = vunpack.c.l.b16 %v2662
    %v2695 = vunpack.c.l.b16 %v2663
    %v2696 = vunpack.c.l.b16 %v2664
    %v2697 = vpack.c.b16 %v2682, %v2681
    %v2698 = vpack.c.b16 %v2684, %v2683
    %v2699 = vpack.c.b16 %v2686, %v2685
    %v2700 = vpack.c.b16 %v2688, %v2687
    %v2701 = vpack.c.b16 %v2690, %v2689
    %v2702 = vpack.c.b16 %v2692, %v2691
    %v2703 = vpack.c.b16 %v2694, %v2693
    %v2704 = vpack.c.b16 %v2696, %v2695
    %2713 = vmatprep.subr.bf16.mxu0 0
    %2714 = vmatpush1.bf16.msra.mxu0 %v2697
    %2715 = vmatprep.subr.bf16.mxu0 0
    %2716 = vmatpush1.bf16.msra.mxu0 %v2698
    %2717 = vmatprep.subr.bf16.mxu0 0
    %2718 = vmatpush1.bf16.msra.mxu0 %v2699
    %2719 = vmatprep.subr.bf16.mxu0 0
    %2720 = vmatpush1.bf16.msra.mxu0 %v2700
    %2721 = vmatprep.subr.bf16.mxu0 0
    %2722 = vmatpush1.bf16.msra.mxu0 %v2701
    %2723 = vmatprep.subr.bf16.mxu0 0
    %2724 = vmatpush1.bf16.msra.mxu0 %v2702
    %2725 = vmatprep.subr.bf16.mxu0 0
    %2726 = vmatpush1.bf16.msra.mxu0 %v2703
    %2727 = vmatprep.subr.bf16.mxu0 0
    %2728 = vmatpush1.bf16.msra.mxu0 %v2704
    %2729 = vmatprep.subr.bf16.mxu0 0
    %2730 = vmatpush1.bf16.msra.mxu0 0
    %2731 = vmatprep.subr.bf16.mxu0 0
    %2732 = vmatpush1.bf16.msra.mxu0 0
    %2733 = vmatprep.subr.bf16.mxu0 0
    %2734 = vmatpush1.bf16.msra.mxu0 0
    %2735 = vmatprep.subr.bf16.mxu0 0
    %2736 = vmatpush1.bf16.msra.mxu0 0
    %2737 = vmatprep.subr.bf16.mxu0 0
    %2738 = vmatpush1.bf16.msra.mxu0 0
    %2739 = vmatprep.subr.bf16.mxu0 0
    %2740 = vmatpush1.bf16.msra.mxu0 0
    %2741 = vmatprep.subr.bf16.mxu0 0
    %2742 = vmatpush1.bf16.msra.mxu0 0
    %2743 = vmatprep.subr.bf16.mxu0 0
    %2744 = vmatpush1.bf16.msra.mxu0 0
    %2745 = vmatprep.mubr.bf16.mxu0 0
    %2746 = vmatmul.mubr.bf16.gmra.mrb[0].mxu0 %v2648
    %v2747 = vpop.f32.mrb[0].mxu0
    %v2748 = vadd.f32 0.0, %v2747
    %v2749 = vpop.f32.mrb[0].mxu0
    %v2750 = vpop.f32.mrb[0].mxu0
    %v2751 = vpop.f32.mrb[0].mxu0
    %2752 = vdwg.mxu0
    %v2753 = vld [vmem:[%s703] sm:$0xf]
    %v2754 = vld [vmem:[%s703 + $0x4] sm:$0xf]
    %v2755 = vld [vmem:[%s703 + $0x8] sm:$0xf]
    %v2756 = vld [vmem:[%s703 + $0xc] sm:$0xf]
    %v2757 = vld [vmem:[%s703 + $0x10] sm:$0xf]
    %v2758 = vld [vmem:[%s703 + $0x14] sm:$0xf]
    %v2759 = vld [vmem:[%s703 + $0x18] sm:$0xf]
    %v2760 = vld [vmem:[%s703 + $0x1c] sm:$0xf]
    %v2761 = vld [vmem:[%s703 + $0x20] sm:$0xf]
    %v2762 = vld [vmem:[%s703 + $0x24] sm:$0xf]
    %v2763 = vld [vmem:[%s703 + $0x28] sm:$0xf]
    %v2764 = vld [vmem:[%s703 + $0x2c] sm:$0xf]
    %v2765 = vld [vmem:[%s703 + $0x30] sm:$0xf]
    %v2766 = vld [vmem:[%s703 + $0x34] sm:$0xf]
    %v2767 = vld [vmem:[%s703 + $0x38] sm:$0xf]
    %v2768 = vld [vmem:[%s703 + $0x3c] sm:$0xf]
    %v2785 = vunpack.c.l.b16 %v2753
    %v2786 = vunpack.c.l.b16 %v2754
    %v2787 = vunpack.c.l.b16 %v2755
    %v2788 = vunpack.c.l.b16 %v2756
    %v2789 = vunpack.c.l.b16 %v2757
    %v2790 = vunpack.c.l.b16 %v2758
    %v2791 = vunpack.c.l.b16 %v2759
    %v2792 = vunpack.c.l.b16 %v2760
    %v2793 = vunpack.c.l.b16 %v2761
    %v2794 = vunpack.c.l.b16 %v2762
    %v2795 = vunpack.c.l.b16 %v2763
    %v2796 = vunpack.c.l.b16 %v2764
    %v2797 = vunpack.c.l.b16 %v2765
    %v2798 = vunpack.c.l.b16 %v2766
    %v2799 = vunpack.c.l.b16 %v2767
    %v2800 = vunpack.c.l.b16 %v2768
    %v2801 = vpack.c.b16 %v2786, %v2785
    %v2802 = vpack.c.b16 %v2788, %v2787
    %v2803 = vpack.c.b16 %v2790, %v2789
    %v2804 = vpack.c.b16 %v2792, %v2791
    %v2805 = vpack.c.b16 %v2794, %v2793
    %v2806 = vpack.c.b16 %v2796, %v2795
    %v2807 = vpack.c.b16 %v2798, %v2797
    %v2808 = vpack.c.b16 %v2800, %v2799
    %2817 = vmatprep.subr.bf16.mxu0 0
    %2818 = vmatpush1.bf16.msra.mxu0 %v2801
    %2819 = vmatprep.subr.bf16.mxu0 0
    %2820 = vmatpush1.bf16.msra.mxu0 %v2802
    %2821 = vmatprep.subr.bf16.mxu0 0
    %2822 = vmatpush1.bf16.msra.mxu0 %v2803
    %2823 = vmatprep.subr.bf16.mxu0 0
    %2824 = vmatpush1.bf16.msra.mxu0 %v2804
    %2825 = vmatprep.subr.bf16.mxu0 0
    %2826 = vmatpush1.bf16.msra.mxu0 %v2805
    %2827 = vmatprep.subr.bf16.mxu0 0
    %2828 = vmatpush1.bf16.msra.mxu0 %v2806
    %2829 = vmatprep.subr.bf16.mxu0 0
    %2830 = vmatpush1.bf16.msra.mxu0 %v2807
    %2831 = vmatprep.subr.bf16.mxu0 0
    %2832 = vmatpush1.bf16.msra.mxu0 %v2808
    %2833 = vmatprep.subr.bf16.mxu0 0
    %2834 = vmatpush1.bf16.msra.mxu0 0
    %2835 = vmatprep.subr.bf16.mxu0 0
    %2836 = vmatpush1.bf16.msra.mxu0 0
    %2837 = vmatprep.subr.bf16.mxu0 0
    %2838 = vmatpush1.bf16.msra.mxu0 0
    %2839 = vmatprep.subr.bf16.mxu0 0
    %2840 = vmatpush1.bf16.msra.mxu0 0
    %2841 = vmatprep.subr.bf16.mxu0 0
    %2842 = vmatpush1.bf16.msra.mxu0 0
    %2843 = vmatprep.subr.bf16.mxu0 0
    %2844 = vmatpush1.bf16.msra.mxu0 0
    %2845 = vmatprep.subr.bf16.mxu0 0
    %2846 = vmatpush1.bf16.msra.mxu0 0
    %2847 = vmatprep.subr.bf16.mxu0 0
    %2848 = vmatpush1.bf16.msra.mxu0 0
    %2849 = vmatprep.mubr.bf16.mxu0 0
    %2850 = vmatmul.mubr.bf16.gmra.mrb[0].mxu0 %v2648
    %v2851 = vpop.f32.mrb[0].mxu0
    %v2852 = vadd.f32 0.0, %v2851
    %v2853 = vpop.f32.mrb[0].mxu0
    %v2854 = vpop.f32.mrb[0].mxu0
    %v2855 = vpop.f32.mrb[0].mxu0
    %2856 = vdwg.mxu0
    %v2857 = vld [vmem:[%s808] sm:$0xf]
    %v2858 = vld [vmem:[%s808 + $0x4] sm:$0xf]
    %v2859 = vld [vmem:[%s808 + $0x8] sm:$0xf]
    %v2860 = vld [vmem:[%s808 + $0xc] sm:$0xf]
    %v2861 = vld [vmem:[%s808 + $0x10] sm:$0xf]
    %v2862 = vld [vmem:[%s808 + $0x14] sm:$0xf]
    %v2863 = vld [vmem:[%s808 + $0x18] sm:$0xf]
    %v2864 = vld [vmem:[%s808 + $0x1c] sm:$0xf]
    %v2865 = vld [vmem:[%s808 + $0x20] sm:$0xf]
    %v2866 = vld [vmem:[%s808 + $0x24] sm:$0xf]
    %v2867 = vld [vmem:[%s808 + $0x28] sm:$0xf]
    %v2868 = vld [vmem:[%s808 + $0x2c] sm:$0xf]
    %v2869 = vld [vmem:[%s808 + $0x30] sm:$0xf]
    %v2870 = vld [vmem:[%s808 + $0x34] sm:$0xf]
    %v2871 = vld [vmem:[%s808 + $0x38] sm:$0xf]
    %v2872 = vld [vmem:[%s808 + $0x3c] sm:$0xf]
    %s2873 = scalar_lea.vmem [#allocation2], 48
    %v2874 = vld [vmem:[%s2873] sm:$0xff]
    %v2875 = vadd.f32 %v2874, %v2748
    %v2876 = vxor.u32 %v2875, 2147483648
    %v2877 = vmul.f32 %v2876, 1.442695
    %v2878 = vpow.pop %v2877
    %v2879 = vadd.f32 %v2878, 1.0
    %v2880 = vrcp.pop %v2879
    %v2881 = vmul.f32 1.0, %v2880
    %s2882 = scalar_lea.vmem %s436, 48 [#allocation2]
    %v2883 = vld [vmem:[%s2882] sm:$0xff]
    %v2884 = vadd.f32 %v2883, %v2852
    %v2885 = vxor.u32 %v2884, 2147483648
    %v2886 = vmul.f32 %v2885, 1.442695
    %v2887 = vpow.pop %v2886
    %v2888 = vadd.f32 %v2887, 1.0
    %v2889 = vrcp.pop %v2888
    %v2890 = vmul.f32 1.0, %v2889
    %s2891 = scalar_lea.vmem %s583, 48 [#allocation2]
    %v2892 = vld [vmem:[%s2891] sm:$0xff]
    %v2909 = vunpack.c.l.b16 %v2857
    %v2910 = vunpack.c.l.b16 %v2858
    %v2911 = vunpack.c.l.b16 %v2859
    %v2912 = vunpack.c.l.b16 %v2860
    %v2913 = vunpack.c.l.b16 %v2861
    %v2914 = vunpack.c.l.b16 %v2862
    %v2915 = vunpack.c.l.b16 %v2863
    %v2916 = vunpack.c.l.b16 %v2864
    %v2917 = vunpack.c.l.b16 %v2865
    %v2918 = vunpack.c.l.b16 %v2866
    %v2919 = vunpack.c.l.b16 %v2867
    %v2920 = vunpack.c.l.b16 %v2868
    %v2921 = vunpack.c.l.b16 %v2869
    %v2922 = vunpack.c.l.b16 %v2870
    %v2923 = vunpack.c.l.b16 %v2871
    %v2924 = vunpack.c.l.b16 %v2872
    %v2925 = vpack.c.b16 %v2910, %v2909
    %v2926 = vpack.c.b16 %v2912, %v2911
    %v2927 = vpack.c.b16 %v2914, %v2913
    %v2928 = vpack.c.b16 %v2916, %v2915
    %v2929 = vpack.c.b16 %v2918, %v2917
    %v2930 = vpack.c.b16 %v2920, %v2919
    %v2931 = vpack.c.b16 %v2922, %v2921
    %v2932 = vpack.c.b16 %v2924, %v2923
    %2941 = vmatprep.subr.bf16.mxu0 0
    %2942 = vmatpush1.bf16.msra.mxu0 %v2925
    %2943 = vmatprep.subr.bf16.mxu0 0
    %2944 = vmatpush1.bf16.msra.mxu0 %v2926
    %2945 = vmatprep.subr.bf16.mxu0 0
    %2946 = vmatpush1.bf16.msra.mxu0 %v2927
    %2947 = vmatprep.subr.bf16.mxu0 0
    %2948 = vmatpush1.bf16.msra.mxu0 %v2928
    %2949 = vmatprep.subr.bf16.mxu0 0
    %2950 = vmatpush1.bf16.msra.mxu0 %v2929
    %2951 = vmatprep.subr.bf16.mxu0 0
    %2952 = vmatpush1.bf16.msra.mxu0 %v2930
    %2953 = vmatprep.subr.bf16.mxu0 0
    %2954 = vmatpush1.bf16.msra.mxu0 %v2931
    %2955 = vmatprep.subr.bf16.mxu0 0
    %2956 = vmatpush1.bf16.msra.mxu0 %v2932
    %2957 = vmatprep.subr.bf16.mxu0 0
    %2958 = vmatpush1.bf16.msra.mxu0 0
    %2959 = vmatprep.subr.bf16.mxu0 0
    %2960 = vmatpush1.bf16.msra.mxu0 0
    %2961 = vmatprep.subr.bf16.mxu0 0
    %2962 = vmatpush1.bf16.msra.mxu0 0
    %2963 = vmatprep.subr.bf16.mxu0 0
    %2964 = vmatpush1.bf16.msra.mxu0 0
    %2965 = vmatprep.subr.bf16.mxu0 0
    %2966 = vmatpush1.bf16.msra.mxu0 0
    %2967 = vmatprep.subr.bf16.mxu0 0
    %2968 = vmatpush1.bf16.msra.mxu0 0
    %2969 = vmatprep.subr.bf16.mxu0 0
    %2970 = vmatpush1.bf16.msra.mxu0 0
    %2971 = vmatprep.subr.bf16.mxu0 0
    %2972 = vmatpush1.bf16.msra.mxu0 0
    %2973 = vmatprep.mubr.bf16.mxu0 0
    %2974 = vmatmul.mubr.bf16.gmra.mrb[0].mxu0 %v2648
    %v2975 = vpop.f32.mrb[0].mxu0
    %v2976 = vadd.f32 %v597, %v2975
    %v2977 = vpop.f32.mrb[0].mxu0
    %v2978 = vpop.f32.mrb[0].mxu0
    %v2979 = vpop.f32.mrb[0].mxu0
    %2980 = vdwg.mxu0
    %v2981 = vmul.f32 %v2881, %v2976
    %v2982 = vadd.f32 %v2892, %v2981
    %v2983 = vtanh.pop %v2982
    %v2984 = vsub.f32 1.0, %v2890
    %v2985 = vmul.f32 %v2984, %v2983
    %v2986 = vmul.f32 %v2890, %v2645
    %v2987 = vadd.f32 %v2985, %v2986
    %s2988 = scalar_lea.vmem [#allocation3], 48
    %2989 = vst [vmem:[%s2988] sm:$0xff] %v2987
    %v2990 = vpack.c.bf16 %v2987, %v2987
    %v2991 = vld [vmem:[#allocation9] sm:$0xf]
    %v2992 = vld [vmem:[#allocation9 + $0x4] sm:$0xf]
    %v2993 = vld [vmem:[#allocation9 + $0x8] sm:$0xf]
    %v2994 = vld [vmem:[#allocation9 + $0xc] sm:$0xf]
    %v2995 = vld [vmem:[#allocation9 + $0x10] sm:$0xf]
    %v2996 = vld [vmem:[#allocation9 + $0x14] sm:$0xf]
    %v2997 = vld [vmem:[#allocation9 + $0x18] sm:$0xf]
    %v2998 = vld [vmem:[#allocation9 + $0x1c] sm:$0xf]
    %v2999 = vld [vmem:[#allocation9 + $0x20] sm:$0xf]
    %v3000 = vld [vmem:[#allocation9 + $0x24] sm:$0xf]
    %v3001 = vld [vmem:[#allocation9 + $0x28] sm:$0xf]
    %v3002 = vld [vmem:[#allocation9 + $0x2c] sm:$0xf]
    %v3003 = vld [vmem:[#allocation9 + $0x30] sm:$0xf]
    %v3004 = vld [vmem:[#allocation9 + $0x34] sm:$0xf]
    %v3005 = vld [vmem:[#allocation9 + $0x38] sm:$0xf]
    %v3006 = vld [vmem:[#allocation9 + $0x3c] sm:$0xf]
    %v3023 = vunpack.c.l.b16 %v2991
    %v3024 = vunpack.c.l.b16 %v2992
    %v3025 = vunpack.c.l.b16 %v2993
    %v3026 = vunpack.c.l.b16 %v2994
    %v3027 = vunpack.c.l.b16 %v2995
    %v3028 = vunpack.c.l.b16 %v2996
    %v3029 = vunpack.c.l.b16 %v2997
    %v3030 = vunpack.c.l.b16 %v2998
    %v3031 = vunpack.c.l.b16 %v2999
    %v3032 = vunpack.c.l.b16 %v3000
    %v3033 = vunpack.c.l.b16 %v3001
    %v3034 = vunpack.c.l.b16 %v3002
    %v3035 = vunpack.c.l.b16 %v3003
    %v3036 = vunpack.c.l.b16 %v3004
    %v3037 = vunpack.c.l.b16 %v3005
    %v3038 = vunpack.c.l.b16 %v3006
    %v3039 = vpack.c.b16 %v3024, %v3023
    %v3040 = vpack.c.b16 %v3026, %v3025
    %v3041 = vpack.c.b16 %v3028, %v3027
    %v3042 = vpack.c.b16 %v3030, %v3029
    %v3043 = vpack.c.b16 %v3032, %v3031
    %v3044 = vpack.c.b16 %v3034, %v3033
    %v3045 = vpack.c.b16 %v3036, %v3035
    %v3046 = vpack.c.b16 %v3038, %v3037
    %3055 = vmatprep.subr.bf16.mxu0 0
    %3056 = vmatpush1.bf16.msra.mxu0 %v3039
    %3057 = vmatprep.subr.bf16.mxu0 0
    %3058 = vmatpush1.bf16.msra.mxu0 %v3040
    %3059 = vmatprep.subr.bf16.mxu0 0
    %3060 = vmatpush1.bf16.msra.mxu0 %v3041
    %3061 = vmatprep.subr.bf16.mxu0 0
    %3062 = vmatpush1.bf16.msra.mxu0 %v3042
    %3063 = vmatprep.subr.bf16.mxu0 0
    %3064 = vmatpush1.bf16.msra.mxu0 %v3043
    %3065 = vmatprep.subr.bf16.mxu0 0
    %3066 = vmatpush1.bf16.msra.mxu0 %v3044
    %3067 = vmatprep.subr.bf16.mxu0 0
    %3068 = vmatpush1.bf16.msra.mxu0 %v3045
    %3069 = vmatprep.subr.bf16.mxu0 0
    %3070 = vmatpush1.bf16.msra.mxu0 %v3046
    %3071 = vmatprep.subr.bf16.mxu0 0
    %3072 = vmatpush1.bf16.msra.mxu0 0
    %3073 = vmatprep.subr.bf16.mxu0 0
    %3074 = vmatpush1.bf16.msra.mxu0 0
    %3075 = vmatprep.subr.bf16.mxu0 0
    %3076 = vmatpush1.bf16.msra.mxu0 0
    %3077 = vmatprep.subr.bf16.mxu0 0
    %3078 = vmatpush1.bf16.msra.mxu0 0
    %3079 = vmatprep.subr.bf16.mxu0 0
    %3080 = vmatpush1.bf16.msra.mxu0 0
    %3081 = vmatprep.subr.bf16.mxu0 0
    %3082 = vmatpush1.bf16.msra.mxu0 0
    %3083 = vmatprep.subr.bf16.mxu0 0
    %3084 = vmatpush1.bf16.msra.mxu0 0
    %3085 = vmatprep.subr.bf16.mxu0 0
    %3086 = vmatpush1.bf16.msra.mxu0 0
    %3087 = vmatprep.mubr.bf16.mxu0 0
    %3088 = vmatmul.mubr.bf16.gmra.mrb[0].mxu0 %v2990
    %v3089 = vpop.f32.mrb[0].mxu0
    %v3090 = vadd.f32 0.0, %v3089
    %v3091 = vpop.f32.mrb[0].mxu0
    %v3092 = vpop.f32.mrb[0].mxu0
    %v3093 = vpop.f32.mrb[0].mxu0
    %3094 = vdwg.mxu0
    %v3095 = vld [vmem:[%s703] sm:$0xf]
    %v3096 = vld [vmem:[%s703 + $0x4] sm:$0xf]
    %v3097 = vld [vmem:[%s703 + $0x8] sm:$0xf]
    %v3098 = vld [vmem:[%s703 + $0xc] sm:$0xf]
    %v3099 = vld [vmem:[%s703 + $0x10] sm:$0xf]
    %v3100 = vld [vmem:[%s703 + $0x14] sm:$0xf]
    %v3101 = vld [vmem:[%s703 + $0x18] sm:$0xf]
    %v3102 = vld [vmem:[%s703 + $0x1c] sm:$0xf]
    %v3103 = vld [vmem:[%s703 + $0x20] sm:$0xf]
    %v3104 = vld [vmem:[%s703 + $0x24] sm:$0xf]
    %v3105 = vld [vmem:[%s703 + $0x28] sm:$0xf]
    %v3106 = vld [vmem:[%s703 + $0x2c] sm:$0xf]
    %v3107 = vld [vmem:[%s703 + $0x30] sm:$0xf]
    %v3108 = vld [vmem:[%s703 + $0x34] sm:$0xf]
    %v3109 = vld [vmem:[%s703 + $0x38] sm:$0xf]
    %v3110 = vld [vmem:[%s703 + $0x3c] sm:$0xf]
    %v3127 = vunpack.c.l.b16 %v3095
    %v3128 = vunpack.c.l.b16 %v3096
    %v3129 = vunpack.c.l.b16 %v3097
    %v3130 = vunpack.c.l.b16 %v3098
    %v3131 = vunpack.c.l.b16 %v3099
    %v3132 = vunpack.c.l.b16 %v3100
    %v3133 = vunpack.c.l.b16 %v3101
    %v3134 = vunpack.c.l.b16 %v3102
    %v3135 = vunpack.c.l.b16 %v3103
    %v3136 = vunpack.c.l.b16 %v3104
    %v3137 = vunpack.c.l.b16 %v3105
    %v3138 = vunpack.c.l.b16 %v3106
    %v3139 = vunpack.c.l.b16 %v3107
    %v3140 = vunpack.c.l.b16 %v3108
    %v3141 = vunpack.c.l.b16 %v3109
    %v3142 = vunpack.c.l.b16 %v3110
    %v3143 = vpack.c.b16 %v3128, %v3127
    %v3144 = vpack.c.b16 %v3130, %v3129
    %v3145 = vpack.c.b16 %v3132, %v3131
    %v3146 = vpack.c.b16 %v3134, %v3133
    %v3147 = vpack.c.b16 %v3136, %v3135
    %v3148 = vpack.c.b16 %v3138, %v3137
    %v3149 = vpack.c.b16 %v3140, %v3139
    %v3150 = vpack.c.b16 %v3142, %v3141
    %3159 = vmatprep.subr.bf16.mxu0 0
    %3160 = vmatpush1.bf16.msra.mxu0 %v3143
    %3161 = vmatprep.subr.bf16.mxu0 0
    %3162 = vmatpush1.bf16.msra.mxu0 %v3144
    %3163 = vmatprep.subr.bf16.mxu0 0
    %3164 = vmatpush1.bf16.msra.mxu0 %v3145
    %3165 = vmatprep.subr.bf16.mxu0 0
    %3166 = vmatpush1.bf16.msra.mxu0 %v3146
    %3167 = vmatprep.subr.bf16.mxu0 0
    %3168 = vmatpush1.bf16.msra.mxu0 %v3147
    %3169 = vmatprep.subr.bf16.mxu0 0
    %3170 = vmatpush1.bf16.msra.mxu0 %v3148
    %3171 = vmatprep.subr.bf16.mxu0 0
    %3172 = vmatpush1.bf16.msra.mxu0 %v3149
    %3173 = vmatprep.subr.bf16.mxu0 0
    %3174 = vmatpush1.bf16.msra.mxu0 %v3150
    %3175 = vmatprep.subr.bf16.mxu0 0
    %3176 = vmatpush1.bf16.msra.mxu0 0
    %3177 = vmatprep.subr.bf16.mxu0 0
    %3178 = vmatpush1.bf16.msra.mxu0 0
    %3179 = vmatprep.subr.bf16.mxu0 0
    %3180 = vmatpush1.bf16.msra.mxu0 0
    %3181 = vmatprep.subr.bf16.mxu0 0
    %3182 = vmatpush1.bf16.msra.mxu0 0
    %3183 = vmatprep.subr.bf16.mxu0 0
    %3184 = vmatpush1.bf16.msra.mxu0 0
    %3185 = vmatprep.subr.bf16.mxu0 0
    %3186 = vmatpush1.bf16.msra.mxu0 0
    %3187 = vmatprep.subr.bf16.mxu0 0
    %3188 = vmatpush1.bf16.msra.mxu0 0
    %3189 = vmatprep.subr.bf16.mxu0 0
    %3190 = vmatpush1.bf16.msra.mxu0 0
    %3191 = vmatprep.mubr.bf16.mxu0 0
    %3192 = vmatmul.mubr.bf16.gmra.mrb[0].mxu0 %v2990
    %v3193 = vpop.f32.mrb[0].mxu0
    %v3194 = vadd.f32 0.0, %v3193
    %v3195 = vpop.f32.mrb[0].mxu0
    %v3196 = vpop.f32.mrb[0].mxu0
    %v3197 = vpop.f32.mrb[0].mxu0
    %3198 = vdwg.mxu0
    %v3199 = vld [vmem:[%s808] sm:$0xf]
    %v3200 = vld [vmem:[%s808 + $0x4] sm:$0xf]
    %v3201 = vld [vmem:[%s808 + $0x8] sm:$0xf]
    %v3202 = vld [vmem:[%s808 + $0xc] sm:$0xf]
    %v3203 = vld [vmem:[%s808 + $0x10] sm:$0xf]
    %v3204 = vld [vmem:[%s808 + $0x14] sm:$0xf]
    %v3205 = vld [vmem:[%s808 + $0x18] sm:$0xf]
    %v3206 = vld [vmem:[%s808 + $0x1c] sm:$0xf]
    %v3207 = vld [vmem:[%s808 + $0x20] sm:$0xf]
    %v3208 = vld [vmem:[%s808 + $0x24] sm:$0xf]
    %v3209 = vld [vmem:[%s808 + $0x28] sm:$0xf]
    %v3210 = vld [vmem:[%s808 + $0x2c] sm:$0xf]
    %v3211 = vld [vmem:[%s808 + $0x30] sm:$0xf]
    %v3212 = vld [vmem:[%s808 + $0x34] sm:$0xf]
    %v3213 = vld [vmem:[%s808 + $0x38] sm:$0xf]
    %v3214 = vld [vmem:[%s808 + $0x3c] sm:$0xf]
    %s3215 = scalar_lea.vmem [#allocation2], 56
    %v3216 = vld [vmem:[%s3215] sm:$0xff]
    %v3217 = vadd.f32 %v3216, %v3090
    %v3218 = vxor.u32 %v3217, 2147483648
    %v3219 = vmul.f32 %v3218, 1.442695
    %v3220 = vpow.pop %v3219
    %v3221 = vadd.f32 %v3220, 1.0
    %v3222 = vrcp.pop %v3221
    %v3223 = vmul.f32 1.0, %v3222
    %s3224 = scalar_lea.vmem %s436, 56 [#allocation2]
    %v3225 = vld [vmem:[%s3224] sm:$0xff]
    %v3226 = vadd.f32 %v3225, %v3194
    %v3227 = vxor.u32 %v3226, 2147483648
    %v3228 = vmul.f32 %v3227, 1.442695
    %v3229 = vpow.pop %v3228
    %v3230 = vadd.f32 %v3229, 1.0
    %v3231 = vrcp.pop %v3230
    %v3232 = vmul.f32 1.0, %v3231
    %s3233 = scalar_lea.vmem %s583, 56 [#allocation2]
    %v3234 = vld [vmem:[%s3233] sm:$0xff]
    %v3251 = vunpack.c.l.b16 %v3199
    %v3252 = vunpack.c.l.b16 %v3200
    %v3253 = vunpack.c.l.b16 %v3201
    %v3254 = vunpack.c.l.b16 %v3202
    %v3255 = vunpack.c.l.b16 %v3203
    %v3256 = vunpack.c.l.b16 %v3204
    %v3257 = vunpack.c.l.b16 %v3205
    %v3258 = vunpack.c.l.b16 %v3206
    %v3259 = vunpack.c.l.b16 %v3207
    %v3260 = vunpack.c.l.b16 %v3208
    %v3261 = vunpack.c.l.b16 %v3209
    %v3262 = vunpack.c.l.b16 %v3210
    %v3263 = vunpack.c.l.b16 %v3211
    %v3264 = vunpack.c.l.b16 %v3212
    %v3265 = vunpack.c.l.b16 %v3213
    %v3266 = vunpack.c.l.b16 %v3214
    %v3267 = vpack.c.b16 %v3252, %v3251
    %v3268 = vpack.c.b16 %v3254, %v3253
    %v3269 = vpack.c.b16 %v3256, %v3255
    %v3270 = vpack.c.b16 %v3258, %v3257
    %v3271 = vpack.c.b16 %v3260, %v3259
    %v3272 = vpack.c.b16 %v3262, %v3261
    %v3273 = vpack.c.b16 %v3264, %v3263
    %v3274 = vpack.c.b16 %v3266, %v3265
    %3283 = vmatprep.subr.bf16.mxu0 0
    %3284 = vmatpush1.bf16.msra.mxu0 %v3267
    %3285 = vmatprep.subr.bf16.mxu0 0
    %3286 = vmatpush1.bf16.msra.mxu0 %v3268
    %3287 = vmatprep.subr.bf16.mxu0 0
    %3288 = vmatpush1.bf16.msra.mxu0 %v3269
    %3289 = vmatprep.subr.bf16.mxu0 0
    %3290 = vmatpush1.bf16.msra.mxu0 %v3270
    %3291 = vmatprep.subr.bf16.mxu0 0
    %3292 = vmatpush1.bf16.msra.mxu0 %v3271
    %3293 = vmatprep.subr.bf16.mxu0 0
    %3294 = vmatpush1.bf16.msra.mxu0 %v3272
    %3295 = vmatprep.subr.bf16.mxu0 0
    %3296 = vmatpush1.bf16.msra.mxu0 %v3273
    %3297 = vmatprep.subr.bf16.mxu0 0
    %3298 = vmatpush1.bf16.msra.mxu0 %v3274
    %3299 = vmatprep.subr.bf16.mxu0 0
    %3300 = vmatpush1.bf16.msra.mxu0 0
    %3301 = vmatprep.subr.bf16.mxu0 0
    %3302 = vmatpush1.bf16.msra.mxu0 0
    %3303 = vmatprep.subr.bf16.mxu0 0
    %3304 = vmatpush1.bf16.msra.mxu0 0
    %3305 = vmatprep.subr.bf16.mxu0 0
    %3306 = vmatpush1.bf16.msra.mxu0 0
    %3307 = vmatprep.subr.bf16.mxu0 0
    %3308 = vmatpush1.bf16.msra.mxu0 0
    %3309 = vmatprep.subr.bf16.mxu0 0
    %3310 = vmatpush1.bf16.msra.mxu0 0
    %3311 = vmatprep.subr.bf16.mxu0 0
    %3312 = vmatpush1.bf16.msra.mxu0 0
    %3313 = vmatprep.subr.bf16.mxu0 0
    %3314 = vmatpush1.bf16.msra.mxu0 0
    %3315 = vmatprep.mubr.bf16.mxu0 0
    %3316 = vmatmul.mubr.bf16.gmra.mrb[0].mxu0 %v2990
    %v3317 = vpop.f32.mrb[0].mxu0
    %v3318 = vadd.f32 %v597, %v3317
    %v3319 = vpop.f32.mrb[0].mxu0
    %v3320 = vpop.f32.mrb[0].mxu0
    %v3321 = vpop.f32.mrb[0].mxu0
    %3322 = vdwg.mxu0
    %v3323 = vmul.f32 %v3223, %v3318
    %v3324 = vadd.f32 %v3234, %v3323
    %v3325 = vtanh.pop %v3324
    %v3326 = vsub.f32 1.0, %v3232
    %v3327 = vmul.f32 %v3326, %v3325
    %v3328 = vmul.f32 %v3232, %v2987
    %v3329 = vadd.f32 %v3327, %v3328
    %s3330 = scalar_lea.vmem [#allocation3], 56
    %3331 = vst [vmem:[%s3330] sm:$0xff] %v3329
    %v3332 = vld [vmem:[#allocation3] sm:$0xff]
    %v3333 = vld [vmem:[#allocation3 + $0x8] sm:$0xff]
    %v3334 = vld [vmem:[#allocation3 + $0x10] sm:$0xff]
    %v3335 = vld [vmem:[#allocation3 + $0x18] sm:$0xff]
    %v3336 = vld [vmem:[#allocation3 + $0x20] sm:$0xff]
    %v3337 = vld [vmem:[#allocation3 + $0x28] sm:$0xff]
    %v3338 = vld [vmem:[#allocation3 + $0x30] sm:$0xff]
    %v3339 = vld [vmem:[#allocation3 + $0x38] sm:$0xff]
    %v3340 = vpack.c.bf16 %v3333, %v3332
    %v3341 = vpack.c.bf16 %v3335, %v3334
    %v3342 = vpack.c.bf16 %v3337, %v3336
    %v3343 = vpack.c.bf16 %v3339, %v3338
    %v3344 = vld [vmem:[#allocation10] sm:$0xf]
    %v3345 = vld [vmem:[#allocation10 + $0x4] sm:$0xf]
    %v3346 = vld [vmem:[#allocation10 + $0x8] sm:$0xf]
    %v3347 = vld [vmem:[#allocation10 + $0xc] sm:$0xf]
    %v3348 = vld [vmem:[#allocation10 + $0x10] sm:$0xf]
    %v3349 = vld [vmem:[#allocation10 + $0x14] sm:$0xf]
    %v3350 = vld [vmem:[#allocation10 + $0x18] sm:$0xf]
    %v3351 = vld [vmem:[#allocation10 + $0x1c] sm:$0xf]
    %v3352 = vld [vmem:[#allocation10 + $0x20] sm:$0xf]
    %v3353 = vld [vmem:[#allocation10 + $0x24] sm:$0xf]
    %v3354 = vld [vmem:[#allocation10 + $0x28] sm:$0xf]
    %v3355 = vld [vmem:[#allocation10 + $0x2c] sm:$0xf]
    %v3356 = vld [vmem:[#allocation10 + $0x30] sm:$0xf]
    %v3357 = vld [vmem:[#allocation10 + $0x34] sm:$0xf]
    %v3358 = vld [vmem:[#allocation10 + $0x38] sm:$0xf]
    %v3359 = vld [vmem:[#allocation10 + $0x3c] sm:$0xf]
    %v3360 = vld [vmem:[%s7] sm:$0x1]
    %v3362 = vlaneseq
    %v3363 = vshrl.u32 %v3362, 7
    %v3364 = vsub.s32 0, %v3363
    %v3365 = vrot.slane %v3360, %v3364
    %v3383 = vunpack.c.l.b16 %v3344
    %v3384 = vunpack.c.l.b16 %v3345
    %v3385 = vunpack.c.l.b16 %v3346
    %v3386 = vunpack.c.l.b16 %v3347
    %v3387 = vunpack.c.l.b16 %v3348
    %v3388 = vunpack.c.l.b16 %v3349
    %v3389 = vunpack.c.l.b16 %v3350
    %v3390 = vunpack.c.l.b16 %v3351
    %v3391 = vunpack.c.l.b16 %v3352
    %v3392 = vunpack.c.l.b16 %v3353
    %v3393 = vunpack.c.l.b16 %v3354
    %v3394 = vunpack.c.l.b16 %v3355
    %v3395 = vunpack.c.l.b16 %v3356
    %v3396 = vunpack.c.l.b16 %v3357
    %v3397 = vunpack.c.l.b16 %v3358
    %v3398 = vunpack.c.l.b16 %v3359
    %v3399 = vpack.c.b16 %v3384, %v3383
    %v3400 = vpack.c.b16 %v3386, %v3385
    %v3401 = vpack.c.b16 %v3388, %v3387
    %v3402 = vpack.c.b16 %v3390, %v3389
    %v3403 = vpack.c.b16 %v3392, %v3391
    %v3404 = vpack.c.b16 %v3394, %v3393
    %v3405 = vpack.c.b16 %v3396, %v3395
    %v3406 = vpack.c.b16 %v3398, %v3397
    %3415 = vmatprep.subr.bf16.mxu0 0
    %3416 = vmatpush1.bf16.msra.mxu0 %v3399
    %3417 = vmatprep.subr.bf16.mxu0 0
    %3418 = vmatpush1.bf16.msra.mxu0 %v3400
    %3419 = vmatprep.subr.bf16.mxu0 0
    %3420 = vmatpush1.bf16.msra.mxu0 %v3401
    %3421 = vmatprep.subr.bf16.mxu0 0
    %3422 = vmatpush1.bf16.msra.mxu0 %v3402
    %3423 = vmatprep.subr.bf16.mxu0 0
    %3424 = vmatpush1.bf16.msra.mxu0 %v3403
    %3425 = vmatprep.subr.bf16.mxu0 0
    %3426 = vmatpush1.bf16.msra.mxu0 %v3404
    %3427 = vmatprep.subr.bf16.mxu0 0
    %3428 = vmatpush1.bf16.msra.mxu0 %v3405
    %3429 = vmatprep.subr.bf16.mxu0 0
    %3430 = vmatpush1.bf16.msra.mxu0 %v3406
    %3431 = vmatprep.subr.bf16.mxu0 0
    %3432 = vmatpush1.bf16.msra.mxu0 0
    %3433 = vmatprep.subr.bf16.mxu0 0
    %3434 = vmatpush1.bf16.msra.mxu0 0
    %3435 = vmatprep.subr.bf16.mxu0 0
    %3436 = vmatpush1.bf16.msra.mxu0 0
    %3437 = vmatprep.subr.bf16.mxu0 0
    %3438 = vmatpush1.bf16.msra.mxu0 0
    %3439 = vmatprep.subr.bf16.mxu0 0
    %3440 = vmatpush1.bf16.msra.mxu0 0
    %3441 = vmatprep.subr.bf16.mxu0 0
    %3442 = vmatpush1.bf16.msra.mxu0 0
    %3443 = vmatprep.subr.bf16.mxu0 0
    %3444 = vmatpush1.bf16.msra.mxu0 0
    %3445 = vmatprep.subr.bf16.mxu0 0
    %3446 = vmatpush1.bf16.msra.mxu0 0
    %3447 = vmatprep.mubr.bf16.mxu0 0
    %3448 = vmatmul.mubr.bf16.gmra.mrb[0].mxu0 %v3340
    %v3449 = vpop.f32.mrb[0].mxu0
    %v3450 = vadd.f32 %v3365, %v3449
    %v3451 = vpop.f32.mrb[0].mxu0
    %v3452 = vpop.f32.mrb[0].mxu0
    %v3453 = vadd.f32 %v3365, %v3452
    %v3454 = vpop.f32.mrb[0].mxu0
    %3455 = vmatprep.mubr.bf16.mxu0 0
    %3456 = vmatmul.mubr.bf16.gmra.mrb[0].mxu0 %v3341
    %v3457 = vpop.f32.mrb[0].mxu0
    %v3458 = vadd.f32 %v3365, %v3457
    %v3459 = vpop.f32.mrb[0].mxu0
    %v3460 = vpop.f32.mrb[0].mxu0
    %v3461 = vadd.f32 %v3365, %v3460
    %v3462 = vpop.f32.mrb[0].mxu0
    %3463 = vmatprep.mubr.bf16.mxu0 0
    %3464 = vmatmul.mubr.bf16.gmra.mrb[0].mxu0 %v3342
    %v3465 = vpop.f32.mrb[0].mxu0
    %v3466 = vadd.f32 %v3365, %v3465
    %v3467 = vpop.f32.mrb[0].mxu0
    %v3468 = vpop.f32.mrb[0].mxu0
    %v3469 = vadd.f32 %v3365, %v3468
    %v3470 = vpop.f32.mrb[0].mxu0
    %3471 = vmatprep.mubr.bf16.mxu0 0
    %3472 = vmatmul.mubr.bf16.gmra.mrb[0].mxu0 %v3343
    %v3473 = vpop.f32.mrb[0].mxu0
    %v3474 = vadd.f32 %v3365, %v3473
    %v3475 = vpop.f32.mrb[0].mxu0
    %v3476 = vpop.f32.mrb[0].mxu0
    %v3477 = vadd.f32 %v3365, %v3476
    %v3478 = vpop.f32.mrb[0].mxu0
    %3479 = vdwg.mxu0
    %3480 = vst [vmem:[#allocation2] sm:$0xff] %v3450
    %3481 = vst [vmem:[#allocation2 + $0x8] sm:$0xff] %v3453
    %3482 = vst [vmem:[#allocation2 + $0x10] sm:$0xff] %v3458
    %3483 = vst [vmem:[#allocation2 + $0x18] sm:$0xff] %v3461
    %3484 = vst [vmem:[#allocation2 + $0x20] sm:$0xff] %v3466
    %3485 = vst [vmem:[#allocation2 + $0x28] sm:$0xff] %v3469
    %3486 = vst [vmem:[#allocation2 + $0x30] sm:$0xff] %v3474
    %3487 = vst [vmem:[#allocation2 + $0x38] sm:$0xff] %v3477
    %s3488 = scalar_lea.vmem [#allocation10], 64
    %v3489 = vld [vmem:[%s3488] sm:$0xf]
    %v3490 = vld [vmem:[%s3488 + $0x4] sm:$0xf]
    %v3491 = vld [vmem:[%s3488 + $0x8] sm:$0xf]
    %v3492 = vld [vmem:[%s3488 + $0xc] sm:$0xf]
    %v3493 = vld [vmem:[%s3488 + $0x10] sm:$0xf]
    %v3494 = vld [vmem:[%s3488 + $0x14] sm:$0xf]
    %v3495 = vld [vmem:[%s3488 + $0x18] sm:$0xf]
    %v3496 = vld [vmem:[%s3488 + $0x1c] sm:$0xf]
    %v3497 = vld [vmem:[%s3488 + $0x20] sm:$0xf]
    %v3498 = vld [vmem:[%s3488 + $0x24] sm:$0xf]
    %v3499 = vld [vmem:[%s3488 + $0x28] sm:$0xf]
    %v3500 = vld [vmem:[%s3488 + $0x2c] sm:$0xf]
    %v3501 = vld [vmem:[%s3488 + $0x30] sm:$0xf]
    %v3502 = vld [vmem:[%s3488 + $0x34] sm:$0xf]
    %v3503 = vld [vmem:[%s3488 + $0x38] sm:$0xf]
    %v3504 = vld [vmem:[%s3488 + $0x3c] sm:$0xf]
    %s3505 = scalar_lea.vmem %s7, 1
    %v3506 = vld [vmem:[%s3505] sm:$0x1]
    %v3508 = vlaneseq
    %v3509 = vshrl.u32 %v3508, 7
    %v3510 = vsub.s32 0, %v3509
    %v3511 = vrot.slane %v3506, %v3510
    %v3529 = vunpack.c.l.b16 %v3489
    %v3530 = vunpack.c.l.b16 %v3490
    %v3531 = vunpack.c.l.b16 %v3491
    %v3532 = vunpack.c.l.b16 %v3492
    %v3533 = vunpack.c.l.b16 %v3493
    %v3534 = vunpack.c.l.b16 %v3494
    %v3535 = vunpack.c.l.b16 %v3495
    %v3536 = vunpack.c.l.b16 %v3496
    %v3537 = vunpack.c.l.b16 %v3497
    %v3538 = vunpack.c.l.b16 %v3498
    %v3539 = vunpack.c.l.b16 %v3499
    %v3540 = vunpack.c.l.b16 %v3500
    %v3541 = vunpack.c.l.b16 %v3501
    %v3542 = vunpack.c.l.b16 %v3502
    %v3543 = vunpack.c.l.b16 %v3503
    %v3544 = vunpack.c.l.b16 %v3504
    %v3545 = vpack.c.b16 %v3530, %v3529
    %v3546 = vpack.c.b16 %v3532, %v3531
    %v3547 = vpack.c.b16 %v3534, %v3533
    %v3548 = vpack.c.b16 %v3536, %v3535
    %v3549 = vpack.c.b16 %v3538, %v3537
    %v3550 = vpack.c.b16 %v3540, %v3539
    %v3551 = vpack.c.b16 %v3542, %v3541
    %v3552 = vpack.c.b16 %v3544, %v3543
    %3561 = vmatprep.subr.bf16.mxu0 0
    %3562 = vmatpush1.bf16.msra.mxu0 %v3545
    %3563 = vmatprep.subr.bf16.mxu0 0
    %3564 = vmatpush1.bf16.msra.mxu0 %v3546
    %3565 = vmatprep.subr.bf16.mxu0 0
    %3566 = vmatpush1.bf16.msra.mxu0 %v3547
    %3567 = vmatprep.subr.bf16.mxu0 0
    %3568 = vmatpush1.bf16.msra.mxu0 %v3548
    %3569 = vmatprep.subr.bf16.mxu0 0
    %3570 = vmatpush1.bf16.msra.mxu0 %v3549
    %3571 = vmatprep.subr.bf16.mxu0 0
    %3572 = vmatpush1.bf16.msra.mxu0 %v3550
    %3573 = vmatprep.subr.bf16.mxu0 0
    %3574 = vmatpush1.bf16.msra.mxu0 %v3551
    %3575 = vmatprep.subr.bf16.mxu0 0
    %3576 = vmatpush1.bf16.msra.mxu0 %v3552
    %3577 = vmatprep.subr.bf16.mxu0 0
    %3578 = vmatpush1.bf16.msra.mxu0 0
    %3579 = vmatprep.subr.bf16.mxu0 0
    %3580 = vmatpush1.bf16.msra.mxu0 0
    %3581 = vmatprep.subr.bf16.mxu0 0
    %3582 = vmatpush1.bf16.msra.mxu0 0
    %3583 = vmatprep.subr.bf16.mxu0 0
    %3584 = vmatpush1.bf16.msra.mxu0 0
    %3585 = vmatprep.subr.bf16.mxu0 0
    %3586 = vmatpush1.bf16.msra.mxu0 0
    %3587 = vmatprep.subr.bf16.mxu0 0
    %3588 = vmatpush1.bf16.msra.mxu0 0
    %3589 = vmatprep.subr.bf16.mxu0 0
    %3590 = vmatpush1.bf16.msra.mxu0 0
    %3591 = vmatprep.subr.bf16.mxu0 0
    %3592 = vmatpush1.bf16.msra.mxu0 0
    %3593 = vmatprep.mubr.bf16.mxu0 0
    %3594 = vmatmul.mubr.bf16.gmra.mrb[0].mxu0 %v3340
    %v3595 = vpop.f32.mrb[0].mxu0
    %v3596 = vadd.f32 %v3511, %v3595
    %v3597 = vpop.f32.mrb[0].mxu0
    %v3598 = vpop.f32.mrb[0].mxu0
    %v3599 = vadd.f32 %v3511, %v3598
    %v3600 = vpop.f32.mrb[0].mxu0
    %3601 = vmatprep.mubr.bf16.mxu0 0
    %3602 = vmatmul.mubr.bf16.gmra.mrb[0].mxu0 %v3341
    %v3603 = vpop.f32.mrb[0].mxu0
    %v3604 = vadd.f32 %v3511, %v3603
    %v3605 = vpop.f32.mrb[0].mxu0
    %v3606 = vpop.f32.mrb[0].mxu0
    %v3607 = vadd.f32 %v3511, %v3606
    %v3608 = vpop.f32.mrb[0].mxu0
    %3609 = vmatprep.mubr.bf16.mxu0 0
    %3610 = vmatmul.mubr.bf16.gmra.mrb[0].mxu0 %v3342
    %v3611 = vpop.f32.mrb[0].mxu0
    %v3612 = vadd.f32 %v3511, %v3611
    %v3613 = vpop.f32.mrb[0].mxu0
    %v3614 = vpop.f32.mrb[0].mxu0
    %v3615 = vadd.f32 %v3511, %v3614
    %v3616 = vpop.f32.mrb[0].mxu0
    %3617 = vmatprep.mubr.bf16.mxu0 0
    %3618 = vmatmul.mubr.bf16.gmra.mrb[0].mxu0 %v3343
    %v3619 = vpop.f32.mrb[0].mxu0
    %v3620 = vadd.f32 %v3511, %v3619
    %v3621 = vpop.f32.mrb[0].mxu0
    %v3622 = vpop.f32.mrb[0].mxu0
    %v3623 = vadd.f32 %v3511, %v3622
    %v3624 = vpop.f32.mrb[0].mxu0
    %3625 = vdwg.mxu0
    %3626 = vst [vmem:[%s436] sm:$0xff] %v3596
    %3627 = vst [vmem:[%s436 + $0x8] sm:$0xff] %v3599
    %3628 = vst [vmem:[%s436 + $0x10] sm:$0xff] %v3604
    %3629 = vst [vmem:[%s436 + $0x18] sm:$0xff] %v3607
    %3630 = vst [vmem:[%s436 + $0x20] sm:$0xff] %v3612
    %3631 = vst [vmem:[%s436 + $0x28] sm:$0xff] %v3615
    %3632 = vst [vmem:[%s436 + $0x30] sm:$0xff] %v3620
    %3633 = vst [vmem:[%s436 + $0x38] sm:$0xff] %v3623
    %s3634 = scalar_lea.vmem [#allocation10], 128
    %v3635 = vld [vmem:[%s3634] sm:$0xf]
    %v3636 = vld [vmem:[%s3634 + $0x4] sm:$0xf]
    %v3637 = vld [vmem:[%s3634 + $0x8] sm:$0xf]
    %v3638 = vld [vmem:[%s3634 + $0xc] sm:$0xf]
    %v3639 = vld [vmem:[%s3634 + $0x10] sm:$0xf]
    %v3640 = vld [vmem:[%s3634 + $0x14] sm:$0xf]
    %v3641 = vld [vmem:[%s3634 + $0x18] sm:$0xf]
    %v3642 = vld [vmem:[%s3634 + $0x1c] sm:$0xf]
    %v3643 = vld [vmem:[%s3634 + $0x20] sm:$0xf]
    %v3644 = vld [vmem:[%s3634 + $0x24] sm:$0xf]
    %v3645 = vld [vmem:[%s3634 + $0x28] sm:$0xf]
    %v3646 = vld [vmem:[%s3634 + $0x2c] sm:$0xf]
    %v3647 = vld [vmem:[%s3634 + $0x30] sm:$0xf]
    %v3648 = vld [vmem:[%s3634 + $0x34] sm:$0xf]
    %v3649 = vld [vmem:[%s3634 + $0x38] sm:$0xf]
    %v3650 = vld [vmem:[%s3634 + $0x3c] sm:$0xf]
    %s3651 = scalar_lea.vmem %s7, 2
    %v3652 = vld [vmem:[%s3651] sm:$0x1]
    %v3654 = vlaneseq
    %v3655 = vshrl.u32 %v3654, 7
    %v3656 = vsub.s32 0, %v3655
    %v3657 = vrot.slane %v3652, %v3656
    %v3675 = vunpack.c.l.b16 %v3635
    %v3676 = vunpack.c.l.b16 %v3636
    %v3677 = vunpack.c.l.b16 %v3637
    %v3678 = vunpack.c.l.b16 %v3638
    %v3679 = vunpack.c.l.b16 %v3639
    %v3680 = vunpack.c.l.b16 %v3640
    %v3681 = vunpack.c.l.b16 %v3641
    %v3682 = vunpack.c.l.b16 %v3642
    %v3683 = vunpack.c.l.b16 %v3643
    %v3684 = vunpack.c.l.b16 %v3644
    %v3685 = vunpack.c.l.b16 %v3645
    %v3686 = vunpack.c.l.b16 %v3646
    %v3687 = vunpack.c.l.b16 %v3647
    %v3688 = vunpack.c.l.b16 %v3648
    %v3689 = vunpack.c.l.b16 %v3649
    %v3690 = vunpack.c.l.b16 %v3650
    %v3691 = vpack.c.b16 %v3676, %v3675
    %v3692 = vpack.c.b16 %v3678, %v3677
    %v3693 = vpack.c.b16 %v3680, %v3679
    %v3694 = vpack.c.b16 %v3682, %v3681
    %v3695 = vpack.c.b16 %v3684, %v3683
    %v3696 = vpack.c.b16 %v3686, %v3685
    %v3697 = vpack.c.b16 %v3688, %v3687
    %v3698 = vpack.c.b16 %v3690, %v3689
    %3707 = vmatprep.subr.bf16.mxu0 0
    %3708 = vmatpush1.bf16.msra.mxu0 %v3691
    %3709 = vmatprep.subr.bf16.mxu0 0
    %3710 = vmatpush1.bf16.msra.mxu0 %v3692
    %3711 = vmatprep.subr.bf16.mxu0 0
    %3712 = vmatpush1.bf16.msra.mxu0 %v3693
    %3713 = vmatprep.subr.bf16.mxu0 0
    %3714 = vmatpush1.bf16.msra.mxu0 %v3694
    %3715 = vmatprep.subr.bf16.mxu0 0
    %3716 = vmatpush1.bf16.msra.mxu0 %v3695
    %3717 = vmatprep.subr.bf16.mxu0 0
    %3718 = vmatpush1.bf16.msra.mxu0 %v3696
    %3719 = vmatprep.subr.bf16.mxu0 0
    %3720 = vmatpush1.bf16.msra.mxu0 %v3697
    %3721 = vmatprep.subr.bf16.mxu0 0
    %3722 = vmatpush1.bf16.msra.mxu0 %v3698
    %3723 = vmatprep.subr.bf16.mxu0 0
    %3724 = vmatpush1.bf16.msra.mxu0 0
    %3725 = vmatprep.subr.bf16.mxu0 0
    %3726 = vmatpush1.bf16.msra.mxu0 0
    %3727 = vmatprep.subr.bf16.mxu0 0
    %3728 = vmatpush1.bf16.msra.mxu0 0
    %3729 = vmatprep.subr.bf16.mxu0 0
    %3730 = vmatpush1.bf16.msra.mxu0 0
    %3731 = vmatprep.subr.bf16.mxu0 0
    %3732 = vmatpush1.bf16.msra.mxu0 0
    %3733 = vmatprep.subr.bf16.mxu0 0
    %3734 = vmatpush1.bf16.msra.mxu0 0
    %3735 = vmatprep.subr.bf16.mxu0 0
    %3736 = vmatpush1.bf16.msra.mxu0 0
    %3737 = vmatprep.subr.bf16.mxu0 0
    %3738 = vmatpush1.bf16.msra.mxu0 0
    %3739 = vmatprep.mubr.bf16.mxu0 0
    %3740 = vmatmul.mubr.bf16.gmra.mrb[0].mxu0 %v3340
    %v3741 = vpop.f32.mrb[0].mxu0
    %v3742 = vadd.f32 %v3657, %v3741
    %v3743 = vpop.f32.mrb[0].mxu0
    %v3744 = vpop.f32.mrb[0].mxu0
    %v3745 = vadd.f32 %v3657, %v3744
    %v3746 = vpop.f32.mrb[0].mxu0
    %3747 = vmatprep.mubr.bf16.mxu0 0
    %3748 = vmatmul.mubr.bf16.gmra.mrb[0].mxu0 %v3341
    %v3749 = vpop.f32.mrb[0].mxu0
    %v3750 = vadd.f32 %v3657, %v3749
    %v3751 = vpop.f32.mrb[0].mxu0
    %v3752 = vpop.f32.mrb[0].mxu0
    %v3753 = vadd.f32 %v3657, %v3752
    %v3754 = vpop.f32.mrb[0].mxu0
    %3755 = vmatprep.mubr.bf16.mxu0 0
    %3756 = vmatmul.mubr.bf16.gmra.mrb[0].mxu0 %v3342
    %v3757 = vpop.f32.mrb[0].mxu0
    %v3758 = vadd.f32 %v3657, %v3757
    %v3759 = vpop.f32.mrb[0].mxu0
    %v3760 = vpop.f32.mrb[0].mxu0
    %v3761 = vadd.f32 %v3657, %v3760
    %v3762 = vpop.f32.mrb[0].mxu0
    %3763 = vmatprep.mubr.bf16.mxu0 0
    %3764 = vmatmul.mubr.bf16.gmra.mrb[0].mxu0 %v3343
    %v3765 = vpop.f32.mrb[0].mxu0
    %v3766 = vadd.f32 %v3657, %v3765
    %v3767 = vpop.f32.mrb[0].mxu0
    %v3768 = vpop.f32.mrb[0].mxu0
    %v3769 = vadd.f32 %v3657, %v3768
    %v3770 = vpop.f32.mrb[0].mxu0
    %3771 = vdwg.mxu0
    %3772 = vst [vmem:[%s583] sm:$0xff] %v3742
    %3773 = vst [vmem:[%s583 + $0x8] sm:$0xff] %v3745
    %3774 = vst [vmem:[%s583 + $0x10] sm:$0xff] %v3750
    %3775 = vst [vmem:[%s583 + $0x18] sm:$0xff] %v3753
    %3776 = vst [vmem:[%s583 + $0x20] sm:$0xff] %v3758
    %3777 = vst [vmem:[%s583 + $0x28] sm:$0xff] %v3761
    %3778 = vst [vmem:[%s583 + $0x30] sm:$0xff] %v3766
    %3779 = vst [vmem:[%s583 + $0x38] sm:$0xff] %v3769
    %v3780 = vld [vmem:[%s8] sm:$0x1]
    %v3782 = vlaneseq
    %v3783 = vshrl.u32 %v3782, 7
    %v3784 = vsub.s32 0, %v3783
    %v3785 = vrot.slane %v3780, %v3784
    %v3787 = vld [vmem:[#allocation12] sm:$0xf]
    %v3788 = vld [vmem:[#allocation12 + $0x4] sm:$0xf]
    %v3789 = vld [vmem:[#allocation12 + $0x8] sm:$0xf]
    %v3790 = vld [vmem:[#allocation12 + $0xc] sm:$0xf]
    %v3791 = vld [vmem:[#allocation12 + $0x10] sm:$0xf]
    %v3792 = vld [vmem:[#allocation12 + $0x14] sm:$0xf]
    %v3793 = vld [vmem:[#allocation12 + $0x18] sm:$0xf]
    %v3794 = vld [vmem:[#allocation12 + $0x1c] sm:$0xf]
    %v3795 = vld [vmem:[#allocation12 + $0x20] sm:$0xf]
    %v3796 = vld [vmem:[#allocation12 + $0x24] sm:$0xf]
    %v3797 = vld [vmem:[#allocation12 + $0x28] sm:$0xf]
    %v3798 = vld [vmem:[#allocation12 + $0x2c] sm:$0xf]
    %v3799 = vld [vmem:[#allocation12 + $0x30] sm:$0xf]
    %v3800 = vld [vmem:[#allocation12 + $0x34] sm:$0xf]
    %v3801 = vld [vmem:[#allocation12 + $0x38] sm:$0xf]
    %v3802 = vld [vmem:[#allocation12 + $0x3c] sm:$0xf]
    %v3819 = vunpack.c.l.b16 %v3787
    %v3820 = vunpack.c.l.b16 %v3788
    %v3821 = vunpack.c.l.b16 %v3789
    %v3822 = vunpack.c.l.b16 %v3790
    %v3823 = vunpack.c.l.b16 %v3791
    %v3824 = vunpack.c.l.b16 %v3792
    %v3825 = vunpack.c.l.b16 %v3793
    %v3826 = vunpack.c.l.b16 %v3794
    %v3827 = vunpack.c.l.b16 %v3795
    %v3828 = vunpack.c.l.b16 %v3796
    %v3829 = vunpack.c.l.b16 %v3797
    %v3830 = vunpack.c.l.b16 %v3798
    %v3831 = vunpack.c.l.b16 %v3799
    %v3832 = vunpack.c.l.b16 %v3800
    %v3833 = vunpack.c.l.b16 %v3801
    %v3834 = vunpack.c.l.b16 %v3802
    %v3835 = vpack.c.b16 %v3820, %v3819
    %v3836 = vpack.c.b16 %v3822, %v3821
    %v3837 = vpack.c.b16 %v3824, %v3823
    %v3838 = vpack.c.b16 %v3826, %v3825
    %v3839 = vpack.c.b16 %v3828, %v3827
    %v3840 = vpack.c.b16 %v3830, %v3829
    %v3841 = vpack.c.b16 %v3832, %v3831
    %v3842 = vpack.c.b16 %v3834, %v3833
    %3851 = vmatprep.subr.bf16.mxu0 0
    %3852 = vmatpush1.bf16.msra.mxu0 %v3835
    %3853 = vmatprep.subr.bf16.mxu0 0
    %3854 = vmatpush1.bf16.msra.mxu0 %v3836
    %3855 = vmatprep.subr.bf16.mxu0 0
    %3856 = vmatpush1.bf16.msra.mxu0 %v3837
    %3857 = vmatprep.subr.bf16.mxu0 0
    %3858 = vmatpush1.bf16.msra.mxu0 %v3838
    %3859 = vmatprep.subr.bf16.mxu0 0
    %3860 = vmatpush1.bf16.msra.mxu0 %v3839
    %3861 = vmatprep.subr.bf16.mxu0 0
    %3862 = vmatpush1.bf16.msra.mxu0 %v3840
    %3863 = vmatprep.subr.bf16.mxu0 0
    %3864 = vmatpush1.bf16.msra.mxu0 %v3841
    %3865 = vmatprep.subr.bf16.mxu0 0
    %3866 = vmatpush1.bf16.msra.mxu0 %v3842
    %3867 = vmatprep.subr.bf16.mxu0 0
    %3868 = vmatpush1.bf16.msra.mxu0 0
    %3869 = vmatprep.subr.bf16.mxu0 0
    %3870 = vmatpush1.bf16.msra.mxu0 0
    %3871 = vmatprep.subr.bf16.mxu0 0
    %3872 = vmatpush1.bf16.msra.mxu0 0
    %3873 = vmatprep.subr.bf16.mxu0 0
    %3874 = vmatpush1.bf16.msra.mxu0 0
    %3875 = vmatprep.subr.bf16.mxu0 0
    %3876 = vmatpush1.bf16.msra.mxu0 0
    %3877 = vmatprep.subr.bf16.mxu0 0
    %3878 = vmatpush1.bf16.msra.mxu0 0
    %3879 = vmatprep.subr.bf16.mxu0 0
    %3880 = vmatpush1.bf16.msra.mxu0 0
    %3881 = vmatprep.subr.bf16.mxu0 0
    %3882 = vmatpush1.bf16.msra.mxu0 0
    %3883 = vmatprep.mubr.bf16.mxu0 0
    %3884 = vmatmul.mubr.bf16.gmra.mrb[0].mxu0 0
    %v3885 = vpop.f32.mrb[0].mxu0
    %v3886 = vadd.f32 0.0, %v3885
    %v3887 = vpop.f32.mrb[0].mxu0
    %v3888 = vpop.f32.mrb[0].mxu0
    %v3889 = vpop.f32.mrb[0].mxu0
    %3890 = vdwg.mxu0
    %s3891 = scalar_lea.vmem [#allocation12], 64
    %v3892 = vld [vmem:[%s3891] sm:$0xf]
    %v3893 = vld [vmem:[%s3891 + $0x4] sm:$0xf]
    %v3894 = vld [vmem:[%s3891 + $0x8] sm:$0xf]
    %v3895 = vld [vmem:[%s3891 + $0xc] sm:$0xf]
    %v3896 = vld [vmem:[%s3891 + $0x10] sm:$0xf]
    %v3897 = vld [vmem:[%s3891 + $0x14] sm:$0xf]
    %v3898 = vld [vmem:[%s3891 + $0x18] sm:$0xf]
    %v3899 = vld [vmem:[%s3891 + $0x1c] sm:$0xf]
    %v3900 = vld [vmem:[%s3891 + $0x20] sm:$0xf]
    %v3901 = vld [vmem:[%s3891 + $0x24] sm:$0xf]
    %v3902 = vld [vmem:[%s3891 + $0x28] sm:$0xf]
    %v3903 = vld [vmem:[%s3891 + $0x2c] sm:$0xf]
    %v3904 = vld [vmem:[%s3891 + $0x30] sm:$0xf]
    %v3905 = vld [vmem:[%s3891 + $0x34] sm:$0xf]
    %v3906 = vld [vmem:[%s3891 + $0x38] sm:$0xf]
    %v3907 = vld [vmem:[%s3891 + $0x3c] sm:$0xf]
    %v3924 = vunpack.c.l.b16 %v3892
    %v3925 = vunpack.c.l.b16 %v3893
    %v3926 = vunpack.c.l.b16 %v3894
    %v3927 = vunpack.c.l.b16 %v3895
    %v3928 = vunpack.c.l.b16 %v3896
    %v3929 = vunpack.c.l.b16 %v3897
    %v3930 = vunpack.c.l.b16 %v3898
    %v3931 = vunpack.c.l.b16 %v3899
    %v3932 = vunpack.c.l.b16 %v3900
    %v3933 = vunpack.c.l.b16 %v3901
    %v3934 = vunpack.c.l.b16 %v3902
    %v3935 = vunpack.c.l.b16 %v3903
    %v3936 = vunpack.c.l.b16 %v3904
    %v3937 = vunpack.c.l.b16 %v3905
    %v3938 = vunpack.c.l.b16 %v3906
    %v3939 = vunpack.c.l.b16 %v3907
    %v3940 = vpack.c.b16 %v3925, %v3924
    %v3941 = vpack.c.b16 %v3927, %v3926
    %v3942 = vpack.c.b16 %v3929, %v3928
    %v3943 = vpack.c.b16 %v3931, %v3930
    %v3944 = vpack.c.b16 %v3933, %v3932
    %v3945 = vpack.c.b16 %v3935, %v3934
    %v3946 = vpack.c.b16 %v3937, %v3936
    %v3947 = vpack.c.b16 %v3939, %v3938
    %3956 = vmatprep.subr.bf16.mxu0 0
    %3957 = vmatpush1.bf16.msra.mxu0 %v3940
    %3958 = vmatprep.subr.bf16.mxu0 0
    %3959 = vmatpush1.bf16.msra.mxu0 %v3941
    %3960 = vmatprep.subr.bf16.mxu0 0
    %3961 = vmatpush1.bf16.msra.mxu0 %v3942
    %3962 = vmatprep.subr.bf16.mxu0 0
    %3963 = vmatpush1.bf16.msra.mxu0 %v3943
    %3964 = vmatprep.subr.bf16.mxu0 0
    %3965 = vmatpush1.bf16.msra.mxu0 %v3944
    %3966 = vmatprep.subr.bf16.mxu0 0
    %3967 = vmatpush1.bf16.msra.mxu0 %v3945
    %3968 = vmatprep.subr.bf16.mxu0 0
    %3969 = vmatpush1.bf16.msra.mxu0 %v3946
    %3970 = vmatprep.subr.bf16.mxu0 0
    %3971 = vmatpush1.bf16.msra.mxu0 %v3947
    %3972 = vmatprep.subr.bf16.mxu0 0
    %3973 = vmatpush1.bf16.msra.mxu0 0
    %3974 = vmatprep.subr.bf16.mxu0 0
    %3975 = vmatpush1.bf16.msra.mxu0 0
    %3976 = vmatprep.subr.bf16.mxu0 0
    %3977 = vmatpush1.bf16.msra.mxu0 0
    %3978 = vmatprep.subr.bf16.mxu0 0
    %3979 = vmatpush1.bf16.msra.mxu0 0
    %3980 = vmatprep.subr.bf16.mxu0 0
    %3981 = vmatpush1.bf16.msra.mxu0 0
    %3982 = vmatprep.subr.bf16.mxu0 0
    %3983 = vmatpush1.bf16.msra.mxu0 0
    %3984 = vmatprep.subr.bf16.mxu0 0
    %3985 = vmatpush1.bf16.msra.mxu0 0
    %3986 = vmatprep.subr.bf16.mxu0 0
    %3987 = vmatpush1.bf16.msra.mxu0 0
    %3988 = vmatprep.mubr.bf16.mxu0 0
    %3989 = vmatmul.mubr.bf16.gmra.mrb[0].mxu0 0
    %v3990 = vpop.f32.mrb[0].mxu0
    %v3991 = vadd.f32 0.0, %v3990
    %v3992 = vpop.f32.mrb[0].mxu0
    %v3993 = vpop.f32.mrb[0].mxu0
    %v3994 = vpop.f32.mrb[0].mxu0
    %3995 = vdwg.mxu0
    %s3996 = scalar_lea.vmem [#allocation12], 128
    %v3997 = vld [vmem:[%s3996] sm:$0xf]
    %v3998 = vld [vmem:[%s3996 + $0x4] sm:$0xf]
    %v3999 = vld [vmem:[%s3996 + $0x8] sm:$0xf]
    %v4000 = vld [vmem:[%s3996 + $0xc] sm:$0xf]
    %v4001 = vld [vmem:[%s3996 + $0x10] sm:$0xf]
    %v4002 = vld [vmem:[%s3996 + $0x14] sm:$0xf]
    %v4003 = vld [vmem:[%s3996 + $0x18] sm:$0xf]
    %v4004 = vld [vmem:[%s3996 + $0x1c] sm:$0xf]
    %v4005 = vld [vmem:[%s3996 + $0x20] sm:$0xf]
    %v4006 = vld [vmem:[%s3996 + $0x24] sm:$0xf]
    %v4007 = vld [vmem:[%s3996 + $0x28] sm:$0xf]
    %v4008 = vld [vmem:[%s3996 + $0x2c] sm:$0xf]
    %v4009 = vld [vmem:[%s3996 + $0x30] sm:$0xf]
    %v4010 = vld [vmem:[%s3996 + $0x34] sm:$0xf]
    %v4011 = vld [vmem:[%s3996 + $0x38] sm:$0xf]
    %v4012 = vld [vmem:[%s3996 + $0x3c] sm:$0xf]
    %v4013 = vld [vmem:[#allocation2] sm:$0xff]
    %v4014 = vadd.f32 %v4013, %v3886
    %v4015 = vxor.u32 %v4014, 2147483648
    %v4016 = vmul.f32 %v4015, 1.442695
    %v4017 = vpow.pop %v4016
    %v4018 = vadd.f32 %v4017, 1.0
    %v4019 = vrcp.pop %v4018
    %v4020 = vmul.f32 1.0, %v4019
    %v4021 = vld [vmem:[%s436] sm:$0xff]
    %v4022 = vadd.f32 %v4021, %v3991
    %v4023 = vxor.u32 %v4022, 2147483648
    %v4024 = vmul.f32 %v4023, 1.442695
    %v4025 = vpow.pop %v4024
    %v4026 = vadd.f32 %v4025, 1.0
    %v4027 = vrcp.pop %v4026
    %v4028 = vmul.f32 1.0, %v4027
    %v4029 = vld [vmem:[%s583] sm:$0xff]
    %v4046 = vunpack.c.l.b16 %v3997
    %v4047 = vunpack.c.l.b16 %v3998
    %v4048 = vunpack.c.l.b16 %v3999
    %v4049 = vunpack.c.l.b16 %v4000
    %v4050 = vunpack.c.l.b16 %v4001
    %v4051 = vunpack.c.l.b16 %v4002
    %v4052 = vunpack.c.l.b16 %v4003
    %v4053 = vunpack.c.l.b16 %v4004
    %v4054 = vunpack.c.l.b16 %v4005
    %v4055 = vunpack.c.l.b16 %v4006
    %v4056 = vunpack.c.l.b16 %v4007
    %v4057 = vunpack.c.l.b16 %v4008
    %v4058 = vunpack.c.l.b16 %v4009
    %v4059 = vunpack.c.l.b16 %v4010
    %v4060 = vunpack.c.l.b16 %v4011
    %v4061 = vunpack.c.l.b16 %v4012
    %v4062 = vpack.c.b16 %v4047, %v4046
    %v4063 = vpack.c.b16 %v4049, %v4048
    %v4064 = vpack.c.b16 %v4051, %v4050
    %v4065 = vpack.c.b16 %v4053, %v4052
    %v4066 = vpack.c.b16 %v4055, %v4054
    %v4067 = vpack.c.b16 %v4057, %v4056
    %v4068 = vpack.c.b16 %v4059, %v4058
    %v4069 = vpack.c.b16 %v4061, %v4060
    %4078 = vmatprep.subr.bf16.mxu0 0
    %4079 = vmatpush1.bf16.msra.mxu0 %v4062
    %4080 = vmatprep.subr.bf16.mxu0 0
    %4081 = vmatpush1.bf16.msra.mxu0 %v4063
    %4082 = vmatprep.subr.bf16.mxu0 0
    %4083 = vmatpush1.bf16.msra.mxu0 %v4064
    %4084 = vmatprep.subr.bf16.mxu0 0
    %4085 = vmatpush1.bf16.msra.mxu0 %v4065
    %4086 = vmatprep.subr.bf16.mxu0 0
    %4087 = vmatpush1.bf16.msra.mxu0 %v4066
    %4088 = vmatprep.subr.bf16.mxu0 0
    %4089 = vmatpush1.bf16.msra.mxu0 %v4067
    %4090 = vmatprep.subr.bf16.mxu0 0
    %4091 = vmatpush1.bf16.msra.mxu0 %v4068
    %4092 = vmatprep.subr.bf16.mxu0 0
    %4093 = vmatpush1.bf16.msra.mxu0 %v4069
    %4094 = vmatprep.subr.bf16.mxu0 0
    %4095 = vmatpush1.bf16.msra.mxu0 0
    %4096 = vmatprep.subr.bf16.mxu0 0
    %4097 = vmatpush1.bf16.msra.mxu0 0
    %4098 = vmatprep.subr.bf16.mxu0 0
    %4099 = vmatpush1.bf16.msra.mxu0 0
    %4100 = vmatprep.subr.bf16.mxu0 0
    %4101 = vmatpush1.bf16.msra.mxu0 0
    %4102 = vmatprep.subr.bf16.mxu0 0
    %4103 = vmatpush1.bf16.msra.mxu0 0
    %4104 = vmatprep.subr.bf16.mxu0 0
    %4105 = vmatpush1.bf16.msra.mxu0 0
    %4106 = vmatprep.subr.bf16.mxu0 0
    %4107 = vmatpush1.bf16.msra.mxu0 0
    %4108 = vmatprep.subr.bf16.mxu0 0
    %4109 = vmatpush1.bf16.msra.mxu0 0
    %4110 = vmatprep.mubr.bf16.mxu0 0
    %4111 = vmatmul.mubr.bf16.gmra.mrb[0].mxu0 0
    %v4112 = vpop.f32.mrb[0].mxu0
    %v4113 = vadd.f32 %v3785, %v4112
    %v4114 = vpop.f32.mrb[0].mxu0
    %v4115 = vpop.f32.mrb[0].mxu0
    %v4116 = vpop.f32.mrb[0].mxu0
    %4117 = vdwg.mxu0
    %v4118 = vmul.f32 %v4020, %v4113
    %v4119 = vadd.f32 %v4029, %v4118
    %v4120 = vtanh.pop %v4119
    %v4121 = vsub.f32 1.0, %v4028
    %v4122 = vmul.f32 %v4121, %v4120
    %v4123 = vmul.f32 %v4028, 0.0
    %v4124 = vadd.f32 %v4122, %v4123
    %v4125 = vpack.c.bf16 %v4124, %v4124
    %4126 = vmatprep.subr.bf16.mxu0 0
    %4127 = vmatpush1.bf16.msra.mxu0 %v3835
    %4128 = vmatprep.subr.bf16.mxu0 0
    %4129 = vmatpush1.bf16.msra.mxu0 %v3836
    %4130 = vmatprep.subr.bf16.mxu0 0
    %4131 = vmatpush1.bf16.msra.mxu0 %v3837
    %4132 = vmatprep.subr.bf16.mxu0 0
    %4133 = vmatpush1.bf16.msra.mxu0 %v3838
    %4134 = vmatprep.subr.bf16.mxu0 0
    %4135 = vmatpush1.bf16.msra.mxu0 %v3839
    %4136 = vmatprep.subr.bf16.mxu0 0
    %4137 = vmatpush1.bf16.msra.mxu0 %v3840
    %4138 = vmatprep.subr.bf16.mxu0 0
    %4139 = vmatpush1.bf16.msra.mxu0 %v3841
    %4140 = vmatprep.subr.bf16.mxu0 0
    %4141 = vmatpush1.bf16.msra.mxu0 %v3842
    %4142 = vmatprep.subr.bf16.mxu0 0
    %4143 = vmatpush1.bf16.msra.mxu0 0
    %4144 = vmatprep.subr.bf16.mxu0 0
    %4145 = vmatpush1.bf16.msra.mxu0 0
    %4146 = vmatprep.subr.bf16.mxu0 0
    %4147 = vmatpush1.bf16.msra.mxu0 0
    %4148 = vmatprep.subr.bf16.mxu0 0
    %4149 = vmatpush1.bf16.msra.mxu0 0
    %4150 = vmatprep.subr.bf16.mxu0 0
    %4151 = vmatpush1.bf16.msra.mxu0 0
    %4152 = vmatprep.subr.bf16.mxu0 0
    %4153 = vmatpush1.bf16.msra.mxu0 0
    %4154 = vmatprep.subr.bf16.mxu0 0
    %4155 = vmatpush1.bf16.msra.mxu0 0
    %4156 = vmatprep.subr.bf16.mxu0 0
    %4157 = vmatpush1.bf16.msra.mxu0 0
    %4158 = vmatprep.mubr.bf16.mxu0 0
    %4159 = vmatmul.mubr.bf16.gmra.mrb[0].mxu0 %v4125
    %v4160 = vpop.f32.mrb[0].mxu0
    %v4161 = vadd.f32 0.0, %v4160
    %v4162 = vpop.f32.mrb[0].mxu0
    %v4163 = vpop.f32.mrb[0].mxu0
    %v4164 = vpop.f32.mrb[0].mxu0
    %4165 = vdwg.mxu0
    %4166 = vmatprep.subr.bf16.mxu0 0
    %4167 = vmatpush1.bf16.msra.mxu0 %v3940
    %4168 = vmatprep.subr.bf16.mxu0 0
    %4169 = vmatpush1.bf16.msra.mxu0 %v3941
    %4170 = vmatprep.subr.bf16.mxu0 0
    %4171 = vmatpush1.bf16.msra.mxu0 %v3942
    %4172 = vmatprep.subr.bf16.mxu0 0
    %4173 = vmatpush1.bf16.msra.mxu0 %v3943
    %4174 = vmatprep.subr.bf16.mxu0 0
    %4175 = vmatpush1.bf16.msra.mxu0 %v3944
    %4176 = vmatprep.subr.bf16.mxu0 0
    %4177 = vmatpush1.bf16.msra.mxu0 %v3945
    %4178 = vmatprep.subr.bf16.mxu0 0
    %4179 = vmatpush1.bf16.msra.mxu0 %v3946
    %4180 = vmatprep.subr.bf16.mxu0 0
    %4181 = vmatpush1.bf16.msra.mxu0 %v3947
    %4182 = vmatprep.subr.bf16.mxu0 0
    %4183 = vmatpush1.bf16.msra.mxu0 0
    %4184 = vmatprep.subr.bf16.mxu0 0
    %4185 = vmatpush1.bf16.msra.mxu0 0
    %4186 = vmatprep.subr.bf16.mxu0 0
    %4187 = vmatpush1.bf16.msra.mxu0 0
    %4188 = vmatprep.subr.bf16.mxu0 0
    %4189 = vmatpush1.bf16.msra.mxu0 0
    %4190 = vmatprep.subr.bf16.mxu0 0
    %4191 = vmatpush1.bf16.msra.mxu0 0
    %4192 = vmatprep.subr.bf16.mxu0 0
    %4193 = vmatpush1.bf16.msra.mxu0 0
    %4194 = vmatprep.subr.bf16.mxu0 0
    %4195 = vmatpush1.bf16.msra.mxu0 0
    %4196 = vmatprep.subr.bf16.mxu0 0
    %4197 = vmatpush1.bf16.msra.mxu0 0
    %4198 = vmatprep.mubr.bf16.mxu0 0
    %4199 = vmatmul.mubr.bf16.gmra.mrb[0].mxu0 %v4125
    %v4200 = vpop.f32.mrb[0].mxu0
    %v4201 = vadd.f32 0.0, %v4200
    %v4202 = vpop.f32.mrb[0].mxu0
    %v4203 = vpop.f32.mrb[0].mxu0
    %v4204 = vpop.f32.mrb[0].mxu0
    %4205 = vdwg.mxu0
    %v4206 = vld [vmem:[%s1163] sm:$0xff]
    %v4207 = vadd.f32 %v4206, %v4161
    %v4208 = vxor.u32 %v4207, 2147483648
    %v4209 = vmul.f32 %v4208, 1.442695
    %v4210 = vpow.pop %v4209
    %v4211 = vadd.f32 %v4210, 1.0
    %v4212 = vrcp.pop %v4211
    %v4213 = vmul.f32 1.0, %v4212
    %v4214 = vld [vmem:[%s1172] sm:$0xff]
    %v4215 = vadd.f32 %v4214, %v4201
    %v4216 = vxor.u32 %v4215, 2147483648
    %v4217 = vmul.f32 %v4216, 1.442695
    %v4218 = vpow.pop %v4217
    %v4219 = vadd.f32 %v4218, 1.0
    %v4220 = vrcp.pop %v4219
    %v4221 = vmul.f32 1.0, %v4220
    %v4222 = vld [vmem:[%s1181] sm:$0xff]
    %4223 = vmatprep.subr.bf16.mxu0 0
    %4224 = vmatpush1.bf16.msra.mxu0 %v4062
    %4225 = vmatprep.subr.bf16.mxu0 0
    %4226 = vmatpush1.bf16.msra.mxu0 %v4063
    %4227 = vmatprep.subr.bf16.mxu0 0
    %4228 = vmatpush1.bf16.msra.mxu0 %v4064
    %4229 = vmatprep.subr.bf16.mxu0 0
    %4230 = vmatpush1.bf16.msra.mxu0 %v4065
    %4231 = vmatprep.subr.bf16.mxu0 0
    %4232 = vmatpush1.bf16.msra.mxu0 %v4066
    %4233 = vmatprep.subr.bf16.mxu0 0
    %4234 = vmatpush1.bf16.msra.mxu0 %v4067
    %4235 = vmatprep.subr.bf16.mxu0 0
    %4236 = vmatpush1.bf16.msra.mxu0 %v4068
    %4237 = vmatprep.subr.bf16.mxu0 0
    %4238 = vmatpush1.bf16.msra.mxu0 %v4069
    %4239 = vmatprep.subr.bf16.mxu0 0
    %4240 = vmatpush1.bf16.msra.mxu0 0
    %4241 = vmatprep.subr.bf16.mxu0 0
    %4242 = vmatpush1.bf16.msra.mxu0 0
    %4243 = vmatprep.subr.bf16.mxu0 0
    %4244 = vmatpush1.bf16.msra.mxu0 0
    %4245 = vmatprep.subr.bf16.mxu0 0
    %4246 = vmatpush1.bf16.msra.mxu0 0
    %4247 = vmatprep.subr.bf16.mxu0 0
    %4248 = vmatpush1.bf16.msra.mxu0 0
    %4249 = vmatprep.subr.bf16.mxu0 0
    %4250 = vmatpush1.bf16.msra.mxu0 0
    %4251 = vmatprep.subr.bf16.mxu0 0
    %4252 = vmatpush1.bf16.msra.mxu0 0
    %4253 = vmatprep.subr.bf16.mxu0 0
    %4254 = vmatpush1.bf16.msra.mxu0 0
    %4255 = vmatprep.mubr.bf16.mxu0 0
    %4256 = vmatmul.mubr.bf16.gmra.mrb[0].mxu0 %v4125
    %v4257 = vpop.f32.mrb[0].mxu0
    %v4258 = vadd.f32 %v3785, %v4257
    %v4259 = vpop.f32.mrb[0].mxu0
    %v4260 = vpop.f32.mrb[0].mxu0
    %v4261 = vpop.f32.mrb[0].mxu0
    %4262 = vdwg.mxu0
    %v4263 = vmul.f32 %v4213, %v4258
    %v4264 = vadd.f32 %v4222, %v4263
    %v4265 = vtanh.pop %v4264
    %v4266 = vsub.f32 1.0, %v4221
    %v4267 = vmul.f32 %v4266, %v4265
    %v4268 = vmul.f32 %v4221, %v4124
    %v4269 = vadd.f32 %v4267, %v4268
    %v4270 = vpack.c.bf16 %v4269, %v4269
    %4271 = vmatprep.subr.bf16.mxu0 0
    %4272 = vmatpush1.bf16.msra.mxu0 %v3835
    %4273 = vmatprep.subr.bf16.mxu0 0
    %4274 = vmatpush1.bf16.msra.mxu0 %v3836
    %4275 = vmatprep.subr.bf16.mxu0 0
    %4276 = vmatpush1.bf16.msra.mxu0 %v3837
    %4277 = vmatprep.subr.bf16.mxu0 0
    %4278 = vmatpush1.bf16.msra.mxu0 %v3838
    %4279 = vmatprep.subr.bf16.mxu0 0
    %4280 = vmatpush1.bf16.msra.mxu0 %v3839
    %4281 = vmatprep.subr.bf16.mxu0 0
    %4282 = vmatpush1.bf16.msra.mxu0 %v3840
    %4283 = vmatprep.subr.bf16.mxu0 0
    %4284 = vmatpush1.bf16.msra.mxu0 %v3841
    %4285 = vmatprep.subr.bf16.mxu0 0
    %4286 = vmatpush1.bf16.msra.mxu0 %v3842
    %4287 = vmatprep.subr.bf16.mxu0 0
    %4288 = vmatpush1.bf16.msra.mxu0 0
    %4289 = vmatprep.subr.bf16.mxu0 0
    %4290 = vmatpush1.bf16.msra.mxu0 0
    %4291 = vmatprep.subr.bf16.mxu0 0
    %4292 = vmatpush1.bf16.msra.mxu0 0
    %4293 = vmatprep.subr.bf16.mxu0 0
    %4294 = vmatpush1.bf16.msra.mxu0 0
    %4295 = vmatprep.subr.bf16.mxu0 0
    %4296 = vmatpush1.bf16.msra.mxu0 0
    %4297 = vmatprep.subr.bf16.mxu0 0
    %4298 = vmatpush1.bf16.msra.mxu0 0
    %4299 = vmatprep.subr.bf16.mxu0 0
    %4300 = vmatpush1.bf16.msra.mxu0 0
    %4301 = vmatprep.subr.bf16.mxu0 0
    %4302 = vmatpush1.bf16.msra.mxu0 0
    %4303 = vmatprep.mubr.bf16.mxu0 0
    %4304 = vmatmul.mubr.bf16.gmra.mrb[0].mxu0 %v4270
    %v4305 = vpop.f32.mrb[0].mxu0
    %v4306 = vadd.f32 0.0, %v4305
    %v4307 = vpop.f32.mrb[0].mxu0
    %v4308 = vpop.f32.mrb[0].mxu0
    %v4309 = vpop.f32.mrb[0].mxu0
    %4310 = vdwg.mxu0
    %4311 = vmatprep.subr.bf16.mxu0 0
    %4312 = vmatpush1.bf16.msra.mxu0 %v3940
    %4313 = vmatprep.subr.bf16.mxu0 0
    %4314 = vmatpush1.bf16.msra.mxu0 %v3941
    %4315 = vmatprep.subr.bf16.mxu0 0
    %4316 = vmatpush1.bf16.msra.mxu0 %v3942
    %4317 = vmatprep.subr.bf16.mxu0 0
    %4318 = vmatpush1.bf16.msra.mxu0 %v3943
    %4319 = vmatprep.subr.bf16.mxu0 0
    %4320 = vmatpush1.bf16.msra.mxu0 %v3944
    %4321 = vmatprep.subr.bf16.mxu0 0
    %4322 = vmatpush1.bf16.msra.mxu0 %v3945
    %4323 = vmatprep.subr.bf16.mxu0 0
    %4324 = vmatpush1.bf16.msra.mxu0 %v3946
    %4325 = vmatprep.subr.bf16.mxu0 0
    %4326 = vmatpush1.bf16.msra.mxu0 %v3947
    %4327 = vmatprep.subr.bf16.mxu0 0
    %4328 = vmatpush1.bf16.msra.mxu0 0
    %4329 = vmatprep.subr.bf16.mxu0 0
    %4330 = vmatpush1.bf16.msra.mxu0 0
    %4331 = vmatprep.subr.bf16.mxu0 0
    %4332 = vmatpush1.bf16.msra.mxu0 0
    %4333 = vmatprep.subr.bf16.mxu0 0
    %4334 = vmatpush1.bf16.msra.mxu0 0
    %4335 = vmatprep.subr.bf16.mxu0 0
    %4336 = vmatpush1.bf16.msra.mxu0 0
    %4337 = vmatprep.subr.bf16.mxu0 0
    %4338 = vmatpush1.bf16.msra.mxu0 0
    %4339 = vmatprep.subr.bf16.mxu0 0
    %4340 = vmatpush1.bf16.msra.mxu0 0
    %4341 = vmatprep.subr.bf16.mxu0 0
    %4342 = vmatpush1.bf16.msra.mxu0 0
    %4343 = vmatprep.mubr.bf16.mxu0 0
    %4344 = vmatmul.mubr.bf16.gmra.mrb[0].mxu0 %v4270
    %v4345 = vpop.f32.mrb[0].mxu0
    %v4346 = vadd.f32 0.0, %v4345
    %v4347 = vpop.f32.mrb[0].mxu0
    %v4348 = vpop.f32.mrb[0].mxu0
    %v4349 = vpop.f32.mrb[0].mxu0
    %4350 = vdwg.mxu0
    %v4351 = vld [vmem:[%s1505] sm:$0xff]
    %v4352 = vadd.f32 %v4351, %v4306
    %v4353 = vxor.u32 %v4352, 2147483648
    %v4354 = vmul.f32 %v4353, 1.442695
    %v4355 = vpow.pop %v4354
    %v4356 = vadd.f32 %v4355, 1.0
    %v4357 = vrcp.pop %v4356
    %v4358 = vmul.f32 1.0, %v4357
    %v4359 = vld [vmem:[%s1514] sm:$0xff]
    %v4360 = vadd.f32 %v4359, %v4346
    %v4361 = vxor.u32 %v4360, 2147483648
    %v4362 = vmul.f32 %v4361, 1.442695
    %v4363 = vpow.pop %v4362
    %v4364 = vadd.f32 %v4363, 1.0
    %v4365 = vrcp.pop %v4364
    %v4366 = vmul.f32 1.0, %v4365
    %v4367 = vld [vmem:[%s1523] sm:$0xff]
    %4368 = vmatprep.subr.bf16.mxu0 0
    %4369 = vmatpush1.bf16.msra.mxu0 %v4062
    %4370 = vmatprep.subr.bf16.mxu0 0
    %4371 = vmatpush1.bf16.msra.mxu0 %v4063
    %4372 = vmatprep.subr.bf16.mxu0 0
    %4373 = vmatpush1.bf16.msra.mxu0 %v4064
    %4374 = vmatprep.subr.bf16.mxu0 0
    %4375 = vmatpush1.bf16.msra.mxu0 %v4065
    %4376 = vmatprep.subr.bf16.mxu0 0
    %4377 = vmatpush1.bf16.msra.mxu0 %v4066
    %4378 = vmatprep.subr.bf16.mxu0 0
    %4379 = vmatpush1.bf16.msra.mxu0 %v4067
    %4380 = vmatprep.subr.bf16.mxu0 0
    %4381 = vmatpush1.bf16.msra.mxu0 %v4068
    %4382 = vmatprep.subr.bf16.mxu0 0
    %4383 = vmatpush1.bf16.msra.mxu0 %v4069
    %4384 = vmatprep.subr.bf16.mxu0 0
    %4385 = vmatpush1.bf16.msra.mxu0 0
    %4386 = vmatprep.subr.bf16.mxu0 0
    %4387 = vmatpush1.bf16.msra.mxu0 0
    %4388 = vmatprep.subr.bf16.mxu0 0
    %4389 = vmatpush1.bf16.msra.mxu0 0
    %4390 = vmatprep.subr.bf16.mxu0 0
    %4391 = vmatpush1.bf16.msra.mxu0 0
    %4392 = vmatprep.subr.bf16.mxu0 0
    %4393 = vmatpush1.bf16.msra.mxu0 0
    %4394 = vmatprep.subr.bf16.mxu0 0
    %4395 = vmatpush1.bf16.msra.mxu0 0
    %4396 = vmatprep.subr.bf16.mxu0 0
    %4397 = vmatpush1.bf16.msra.mxu0 0
    %4398 = vmatprep.subr.bf16.mxu0 0
    %4399 = vmatpush1.bf16.msra.mxu0 0
    %4400 = vmatprep.mubr.bf16.mxu0 0
    %4401 = vmatmul.mubr.bf16.gmra.mrb[0].mxu0 %v4270
    %v4402 = vpop.f32.mrb[0].mxu0
    %v4403 = vadd.f32 %v3785, %v4402
    %v4404 = vpop.f32.mrb[0].mxu0
    %v4405 = vpop.f32.mrb[0].mxu0
    %v4406 = vpop.f32.mrb[0].mxu0
    %4407 = vdwg.mxu0
    %v4408 = vmul.f32 %v4358, %v4403
    %v4409 = vadd.f32 %v4367, %v4408
    %v4410 = vtanh.pop %v4409
    %v4411 = vsub.f32 1.0, %v4366
    %v4412 = vmul.f32 %v4411, %v4410
    %v4413 = vmul.f32 %v4366, %v4269
    %v4414 = vadd.f32 %v4412, %v4413
    %v4415 = vpack.c.bf16 %v4414, %v4414
    %4416 = vmatprep.subr.bf16.mxu0 0
    %4417 = vmatpush1.bf16.msra.mxu0 %v3835
    %4418 = vmatprep.subr.bf16.mxu0 0
    %4419 = vmatpush1.bf16.msra.mxu0 %v3836
    %4420 = vmatprep.subr.bf16.mxu0 0
    %4421 = vmatpush1.bf16.msra.mxu0 %v3837
    %4422 = vmatprep.subr.bf16.mxu0 0
    %4423 = vmatpush1.bf16.msra.mxu0 %v3838
    %4424 = vmatprep.subr.bf16.mxu0 0
    %4425 = vmatpush1.bf16.msra.mxu0 %v3839
    %4426 = vmatprep.subr.bf16.mxu0 0
    %4427 = vmatpush1.bf16.msra.mxu0 %v3840
    %4428 = vmatprep.subr.bf16.mxu0 0
    %4429 = vmatpush1.bf16.msra.mxu0 %v3841
    %4430 = vmatprep.subr.bf16.mxu0 0
    %4431 = vmatpush1.bf16.msra.mxu0 %v3842
    %4432 = vmatprep.subr.bf16.mxu0 0
    %4433 = vmatpush1.bf16.msra.mxu0 0
    %4434 = vmatprep.subr.bf16.mxu0 0
    %4435 = vmatpush1.bf16.msra.mxu0 0
    %4436 = vmatprep.subr.bf16.mxu0 0
    %4437 = vmatpush1.bf16.msra.mxu0 0
    %4438 = vmatprep.subr.bf16.mxu0 0
    %4439 = vmatpush1.bf16.msra.mxu0 0
    %4440 = vmatprep.subr.bf16.mxu0 0
    %4441 = vmatpush1.bf16.msra.mxu0 0
    %4442 = vmatprep.subr.bf16.mxu0 0
    %4443 = vmatpush1.bf16.msra.mxu0 0
    %4444 = vmatprep.subr.bf16.mxu0 0
    %4445 = vmatpush1.bf16.msra.mxu0 0
    %4446 = vmatprep.subr.bf16.mxu0 0
    %4447 = vmatpush1.bf16.msra.mxu0 0
    %4448 = vmatprep.mubr.bf16.mxu0 0
    %4449 = vmatmul.mubr.bf16.gmra.mrb[0].mxu0 %v4415
    %v4450 = vpop.f32.mrb[0].mxu0
    %v4451 = vadd.f32 0.0, %v4450
    %v4452 = vpop.f32.mrb[0].mxu0
    %v4453 = vpop.f32.mrb[0].mxu0
    %v4454 = vpop.f32.mrb[0].mxu0
    %4455 = vdwg.mxu0
    %4456 = vmatprep.subr.bf16.mxu0 0
    %4457 = vmatpush1.bf16.msra.mxu0 %v3940
    %4458 = vmatprep.subr.bf16.mxu0 0
    %4459 = vmatpush1.bf16.msra.mxu0 %v3941
    %4460 = vmatprep.subr.bf16.mxu0 0
    %4461 = vmatpush1.bf16.msra.mxu0 %v3942
    %4462 = vmatprep.subr.bf16.mxu0 0
    %4463 = vmatpush1.bf16.msra.mxu0 %v3943
    %4464 = vmatprep.subr.bf16.mxu0 0
    %4465 = vmatpush1.bf16.msra.mxu0 %v3944
    %4466 = vmatprep.subr.bf16.mxu0 0
    %4467 = vmatpush1.bf16.msra.mxu0 %v3945
    %4468 = vmatprep.subr.bf16.mxu0 0
    %4469 = vmatpush1.bf16.msra.mxu0 %v3946
    %4470 = vmatprep.subr.bf16.mxu0 0
    %4471 = vmatpush1.bf16.msra.mxu0 %v3947
    %4472 = vmatprep.subr.bf16.mxu0 0
    %4473 = vmatpush1.bf16.msra.mxu0 0
    %4474 = vmatprep.subr.bf16.mxu0 0
    %4475 = vmatpush1.bf16.msra.mxu0 0
    %4476 = vmatprep.subr.bf16.mxu0 0
    %4477 = vmatpush1.bf16.msra.mxu0 0
    %4478 = vmatprep.subr.bf16.mxu0 0
    %4479 = vmatpush1.bf16.msra.mxu0 0
    %4480 = vmatprep.subr.bf16.mxu0 0
    %4481 = vmatpush1.bf16.msra.mxu0 0
    %4482 = vmatprep.subr.bf16.mxu0 0
    %4483 = vmatpush1.bf16.msra.mxu0 0
    %4484 = vmatprep.subr.bf16.mxu0 0
    %4485 = vmatpush1.bf16.msra.mxu0 0
    %4486 = vmatprep.subr.bf16.mxu0 0
    %4487 = vmatpush1.bf16.msra.mxu0 0
    %4488 = vmatprep.mubr.bf16.mxu0 0
    %4489 = vmatmul.mubr.bf16.gmra.mrb[0].mxu0 %v4415
    %v4490 = vpop.f32.mrb[0].mxu0
    %v4491 = vadd.f32 0.0, %v4490
    %v4492 = vpop.f32.mrb[0].mxu0
    %v4493 = vpop.f32.mrb[0].mxu0
    %v4494 = vpop.f32.mrb[0].mxu0
    %4495 = vdwg.mxu0
    %v4496 = vld [vmem:[%s1847] sm:$0xff]
    %v4497 = vadd.f32 %v4496, %v4451
    %v4498 = vxor.u32 %v4497, 2147483648
    %v4499 = vmul.f32 %v4498, 1.442695
    %v4500 = vpow.pop %v4499
    %v4501 = vadd.f32 %v4500, 1.0
    %v4502 = vrcp.pop %v4501
    %v4503 = vmul.f32 1.0, %v4502
    %v4504 = vld [vmem:[%s1856] sm:$0xff]
    %v4505 = vadd.f32 %v4504, %v4491
    %v4506 = vxor.u32 %v4505, 2147483648
    %v4507 = vmul.f32 %v4506, 1.442695
    %v4508 = vpow.pop %v4507
    %v4509 = vadd.f32 %v4508, 1.0
    %v4510 = vrcp.pop %v4509
    %v4511 = vmul.f32 1.0, %v4510
    %v4512 = vld [vmem:[%s1865] sm:$0xff]
    %4513 = vmatprep.subr.bf16.mxu0 0
    %4514 = vmatpush1.bf16.msra.mxu0 %v4062
    %4515 = vmatprep.subr.bf16.mxu0 0
    %4516 = vmatpush1.bf16.msra.mxu0 %v4063
    %4517 = vmatprep.subr.bf16.mxu0 0
    %4518 = vmatpush1.bf16.msra.mxu0 %v4064
    %4519 = vmatprep.subr.bf16.mxu0 0
    %4520 = vmatpush1.bf16.msra.mxu0 %v4065
    %4521 = vmatprep.subr.bf16.mxu0 0
    %4522 = vmatpush1.bf16.msra.mxu0 %v4066
    %4523 = vmatprep.subr.bf16.mxu0 0
    %4524 = vmatpush1.bf16.msra.mxu0 %v4067
    %4525 = vmatprep.subr.bf16.mxu0 0
    %4526 = vmatpush1.bf16.msra.mxu0 %v4068
    %4527 = vmatprep.subr.bf16.mxu0 0
    %4528 = vmatpush1.bf16.msra.mxu0 %v4069
    %4529 = vmatprep.subr.bf16.mxu0 0
    %4530 = vmatpush1.bf16.msra.mxu0 0
    %4531 = vmatprep.subr.bf16.mxu0 0
    %4532 = vmatpush1.bf16.msra.mxu0 0
    %4533 = vmatprep.subr.bf16.mxu0 0
    %4534 = vmatpush1.bf16.msra.mxu0 0
    %4535 = vmatprep.subr.bf16.mxu0 0
    %4536 = vmatpush1.bf16.msra.mxu0 0
    %4537 = vmatprep.subr.bf16.mxu0 0
    %4538 = vmatpush1.bf16.msra.mxu0 0
    %4539 = vmatprep.subr.bf16.mxu0 0
    %4540 = vmatpush1.bf16.msra.mxu0 0
    %4541 = vmatprep.subr.bf16.mxu0 0
    %4542 = vmatpush1.bf16.msra.mxu0 0
    %4543 = vmatprep.subr.bf16.mxu0 0
    %4544 = vmatpush1.bf16.msra.mxu0 0
    %4545 = vmatprep.mubr.bf16.mxu0 0
    %4546 = vmatmul.mubr.bf16.gmra.mrb[0].mxu0 %v4415
    %v4547 = vpop.f32.mrb[0].mxu0
    %v4548 = vadd.f32 %v3785, %v4547
    %v4549 = vpop.f32.mrb[0].mxu0
    %v4550 = vpop.f32.mrb[0].mxu0
    %v4551 = vpop.f32.mrb[0].mxu0
    %4552 = vdwg.mxu0
    %v4553 = vmul.f32 %v4503, %v4548
    %v4554 = vadd.f32 %v4512, %v4553
    %v4555 = vtanh.pop %v4554
    %v4556 = vsub.f32 1.0, %v4511
    %v4557 = vmul.f32 %v4556, %v4555
    %v4558 = vmul.f32 %v4511, %v4414
    %v4559 = vadd.f32 %v4557, %v4558
    %v4560 = vpack.c.bf16 %v4559, %v4559
    %4561 = vmatprep.subr.bf16.mxu0 0
    %4562 = vmatpush1.bf16.msra.mxu0 %v3835
    %4563 = vmatprep.subr.bf16.mxu0 0
    %4564 = vmatpush1.bf16.msra.mxu0 %v3836
    %4565 = vmatprep.subr.bf16.mxu0 0
    %4566 = vmatpush1.bf16.msra.mxu0 %v3837
    %4567 = vmatprep.subr.bf16.mxu0 0
    %4568 = vmatpush1.bf16.msra.mxu0 %v3838
    %4569 = vmatprep.subr.bf16.mxu0 0
    %4570 = vmatpush1.bf16.msra.mxu0 %v3839
    %4571 = vmatprep.subr.bf16.mxu0 0
    %4572 = vmatpush1.bf16.msra.mxu0 %v3840
    %4573 = vmatprep.subr.bf16.mxu0 0
    %4574 = vmatpush1.bf16.msra.mxu0 %v3841
    %4575 = vmatprep.subr.bf16.mxu0 0
    %4576 = vmatpush1.bf16.msra.mxu0 %v3842
    %4577 = vmatprep.subr.bf16.mxu0 0
    %4578 = vmatpush1.bf16.msra.mxu0 0
    %4579 = vmatprep.subr.bf16.mxu0 0
    %4580 = vmatpush1.bf16.msra.mxu0 0
    %4581 = vmatprep.subr.bf16.mxu0 0
    %4582 = vmatpush1.bf16.msra.mxu0 0
    %4583 = vmatprep.subr.bf16.mxu0 0
    %4584 = vmatpush1.bf16.msra.mxu0 0
    %4585 = vmatprep.subr.bf16.mxu0 0
    %4586 = vmatpush1.bf16.msra.mxu0 0
    %4587 = vmatprep.subr.bf16.mxu0 0
    %4588 = vmatpush1.bf16.msra.mxu0 0
    %4589 = vmatprep.subr.bf16.mxu0 0
    %4590 = vmatpush1.bf16.msra.mxu0 0
    %4591 = vmatprep.subr.bf16.mxu0 0
    %4592 = vmatpush1.bf16.msra.mxu0 0
    %4593 = vmatprep.mubr.bf16.mxu0 0
    %4594 = vmatmul.mubr.bf16.gmra.mrb[0].mxu0 %v4560
    %v4595 = vpop.f32.mrb[0].mxu0
    %v4596 = vadd.f32 0.0, %v4595
    %v4597 = vpop.f32.mrb[0].mxu0
    %v4598 = vpop.f32.mrb[0].mxu0
    %v4599 = vpop.f32.mrb[0].mxu0
    %4600 = vdwg.mxu0
    %4601 = vmatprep.subr.bf16.mxu0 0
    %4602 = vmatpush1.bf16.msra.mxu0 %v3940
    %4603 = vmatprep.subr.bf16.mxu0 0
    %4604 = vmatpush1.bf16.msra.mxu0 %v3941
    %4605 = vmatprep.subr.bf16.mxu0 0
    %4606 = vmatpush1.bf16.msra.mxu0 %v3942
    %4607 = vmatprep.subr.bf16.mxu0 0
    %4608 = vmatpush1.bf16.msra.mxu0 %v3943
    %4609 = vmatprep.subr.bf16.mxu0 0
    %4610 = vmatpush1.bf16.msra.mxu0 %v3944
    %4611 = vmatprep.subr.bf16.mxu0 0
    %4612 = vmatpush1.bf16.msra.mxu0 %v3945
    %4613 = vmatprep.subr.bf16.mxu0 0
    %4614 = vmatpush1.bf16.msra.mxu0 %v3946
    %4615 = vmatprep.subr.bf16.mxu0 0
    %4616 = vmatpush1.bf16.msra.mxu0 %v3947
    %4617 = vmatprep.subr.bf16.mxu0 0
    %4618 = vmatpush1.bf16.msra.mxu0 0
    %4619 = vmatprep.subr.bf16.mxu0 0
    %4620 = vmatpush1.bf16.msra.mxu0 0
    %4621 = vmatprep.subr.bf16.mxu0 0
    %4622 = vmatpush1.bf16.msra.mxu0 0
    %4623 = vmatprep.subr.bf16.mxu0 0
    %4624 = vmatpush1.bf16.msra.mxu0 0
    %4625 = vmatprep.subr.bf16.mxu0 0
    %4626 = vmatpush1.bf16.msra.mxu0 0
    %4627 = vmatprep.subr.bf16.mxu0 0
    %4628 = vmatpush1.bf16.msra.mxu0 0
    %4629 = vmatprep.subr.bf16.mxu0 0
    %4630 = vmatpush1.bf16.msra.mxu0 0
    %4631 = vmatprep.subr.bf16.mxu0 0
    %4632 = vmatpush1.bf16.msra.mxu0 0
    %4633 = vmatprep.mubr.bf16.mxu0 0
    %4634 = vmatmul.mubr.bf16.gmra.mrb[0].mxu0 %v4560
    %v4635 = vpop.f32.mrb[0].mxu0
    %v4636 = vadd.f32 0.0, %v4635
    %v4637 = vpop.f32.mrb[0].mxu0
    %v4638 = vpop.f32.mrb[0].mxu0
    %v4639 = vpop.f32.mrb[0].mxu0
    %4640 = vdwg.mxu0
    %v4641 = vld [vmem:[%s2189] sm:$0xff]
    %v4642 = vadd.f32 %v4641, %v4596
    %v4643 = vxor.u32 %v4642, 2147483648
    %v4644 = vmul.f32 %v4643, 1.442695
    %v4645 = vpow.pop %v4644
    %v4646 = vadd.f32 %v4645, 1.0
    %v4647 = vrcp.pop %v4646
    %v4648 = vmul.f32 1.0, %v4647
    %v4649 = vld [vmem:[%s2198] sm:$0xff]
    %v4650 = vadd.f32 %v4649, %v4636
    %v4651 = vxor.u32 %v4650, 2147483648
    %v4652 = vmul.f32 %v4651, 1.442695
    %v4653 = vpow.pop %v4652
    %v4654 = vadd.f32 %v4653, 1.0
    %v4655 = vrcp.pop %v4654
    %v4656 = vmul.f32 1.0, %v4655
    %v4657 = vld [vmem:[%s2207] sm:$0xff]
    %4658 = vmatprep.subr.bf16.mxu0 0
    %4659 = vmatpush1.bf16.msra.mxu0 %v4062
    %4660 = vmatprep.subr.bf16.mxu0 0
    %4661 = vmatpush1.bf16.msra.mxu0 %v4063
    %4662 = vmatprep.subr.bf16.mxu0 0
    %4663 = vmatpush1.bf16.msra.mxu0 %v4064
    %4664 = vmatprep.subr.bf16.mxu0 0
    %4665 = vmatpush1.bf16.msra.mxu0 %v4065
    %4666 = vmatprep.subr.bf16.mxu0 0
    %4667 = vmatpush1.bf16.msra.mxu0 %v4066
    %4668 = vmatprep.subr.bf16.mxu0 0
    %4669 = vmatpush1.bf16.msra.mxu0 %v4067
    %4670 = vmatprep.subr.bf16.mxu0 0
    %4671 = vmatpush1.bf16.msra.mxu0 %v4068
    %4672 = vmatprep.subr.bf16.mxu0 0
    %4673 = vmatpush1.bf16.msra.mxu0 %v4069
    %4674 = vmatprep.subr.bf16.mxu0 0
    %4675 = vmatpush1.bf16.msra.mxu0 0
    %4676 = vmatprep.subr.bf16.mxu0 0
    %4677 = vmatpush1.bf16.msra.mxu0 0
    %4678 = vmatprep.subr.bf16.mxu0 0
    %4679 = vmatpush1.bf16.msra.mxu0 0
    %4680 = vmatprep.subr.bf16.mxu0 0
    %4681 = vmatpush1.bf16.msra.mxu0 0
    %4682 = vmatprep.subr.bf16.mxu0 0
    %4683 = vmatpush1.bf16.msra.mxu0 0
    %4684 = vmatprep.subr.bf16.mxu0 0
    %4685 = vmatpush1.bf16.msra.mxu0 0
    %4686 = vmatprep.subr.bf16.mxu0 0
    %4687 = vmatpush1.bf16.msra.mxu0 0
    %4688 = vmatprep.subr.bf16.mxu0 0
    %4689 = vmatpush1.bf16.msra.mxu0 0
    %4690 = vmatprep.mubr.bf16.mxu0 0
    %4691 = vmatmul.mubr.bf16.gmra.mrb[0].mxu0 %v4560
    %v4692 = vpop.f32.mrb[0].mxu0
    %v4693 = vadd.f32 %v3785, %v4692
    %v4694 = vpop.f32.mrb[0].mxu0
    %v4695 = vpop.f32.mrb[0].mxu0
    %v4696 = vpop.f32.mrb[0].mxu0
    %4697 = vdwg.mxu0
    %v4698 = vmul.f32 %v4648, %v4693
    %v4699 = vadd.f32 %v4657, %v4698
    %v4700 = vtanh.pop %v4699
    %v4701 = vsub.f32 1.0, %v4656
    %v4702 = vmul.f32 %v4701, %v4700
    %v4703 = vmul.f32 %v4656, %v4559
    %v4704 = vadd.f32 %v4702, %v4703
    %v4705 = vpack.c.bf16 %v4704, %v4704
    %4706 = vmatprep.subr.bf16.mxu0 0
    %4707 = vmatpush1.bf16.msra.mxu0 %v3835
    %4708 = vmatprep.subr.bf16.mxu0 0
    %4709 = vmatpush1.bf16.msra.mxu0 %v3836
    %4710 = vmatprep.subr.bf16.mxu0 0
    %4711 = vmatpush1.bf16.msra.mxu0 %v3837
    %4712 = vmatprep.subr.bf16.mxu0 0
    %4713 = vmatpush1.bf16.msra.mxu0 %v3838
    %4714 = vmatprep.subr.bf16.mxu0 0
    %4715 = vmatpush1.bf16.msra.mxu0 %v3839
    %4716 = vmatprep.subr.bf16.mxu0 0
    %4717 = vmatpush1.bf16.msra.mxu0 %v3840
    %4718 = vmatprep.subr.bf16.mxu0 0
    %4719 = vmatpush1.bf16.msra.mxu0 %v3841
    %4720 = vmatprep.subr.bf16.mxu0 0
    %4721 = vmatpush1.bf16.msra.mxu0 %v3842
    %4722 = vmatprep.subr.bf16.mxu0 0
    %4723 = vmatpush1.bf16.msra.mxu0 0
    %4724 = vmatprep.subr.bf16.mxu0 0
    %4725 = vmatpush1.bf16.msra.mxu0 0
    %4726 = vmatprep.subr.bf16.mxu0 0
    %4727 = vmatpush1.bf16.msra.mxu0 0
    %4728 = vmatprep.subr.bf16.mxu0 0
    %4729 = vmatpush1.bf16.msra.mxu0 0
    %4730 = vmatprep.subr.bf16.mxu0 0
    %4731 = vmatpush1.bf16.msra.mxu0 0
    %4732 = vmatprep.subr.bf16.mxu0 0
    %4733 = vmatpush1.bf16.msra.mxu0 0
    %4734 = vmatprep.subr.bf16.mxu0 0
    %4735 = vmatpush1.bf16.msra.mxu0 0
    %4736 = vmatprep.subr.bf16.mxu0 0
    %4737 = vmatpush1.bf16.msra.mxu0 0
    %4738 = vmatprep.mubr.bf16.mxu0 0
    %4739 = vmatmul.mubr.bf16.gmra.mrb[0].mxu0 %v4705
    %v4740 = vpop.f32.mrb[0].mxu0
    %v4741 = vadd.f32 0.0, %v4740
    %v4742 = vpop.f32.mrb[0].mxu0
    %v4743 = vpop.f32.mrb[0].mxu0
    %v4744 = vpop.f32.mrb[0].mxu0
    %4745 = vdwg.mxu0
    %4746 = vmatprep.subr.bf16.mxu0 0
    %4747 = vmatpush1.bf16.msra.mxu0 %v3940
    %4748 = vmatprep.subr.bf16.mxu0 0
    %4749 = vmatpush1.bf16.msra.mxu0 %v3941
    %4750 = vmatprep.subr.bf16.mxu0 0
    %4751 = vmatpush1.bf16.msra.mxu0 %v3942
    %4752 = vmatprep.subr.bf16.mxu0 0
    %4753 = vmatpush1.bf16.msra.mxu0 %v3943
    %4754 = vmatprep.subr.bf16.mxu0 0
    %4755 = vmatpush1.bf16.msra.mxu0 %v3944
    %4756 = vmatprep.subr.bf16.mxu0 0
    %4757 = vmatpush1.bf16.msra.mxu0 %v3945
    %4758 = vmatprep.subr.bf16.mxu0 0
    %4759 = vmatpush1.bf16.msra.mxu0 %v3946
    %4760 = vmatprep.subr.bf16.mxu0 0
    %4761 = vmatpush1.bf16.msra.mxu0 %v3947
    %4762 = vmatprep.subr.bf16.mxu0 0
    %4763 = vmatpush1.bf16.msra.mxu0 0
    %4764 = vmatprep.subr.bf16.mxu0 0
    %4765 = vmatpush1.bf16.msra.mxu0 0
    %4766 = vmatprep.subr.bf16.mxu0 0
    %4767 = vmatpush1.bf16.msra.mxu0 0
    %4768 = vmatprep.subr.bf16.mxu0 0
    %4769 = vmatpush1.bf16.msra.mxu0 0
    %4770 = vmatprep.subr.bf16.mxu0 0
    %4771 = vmatpush1.bf16.msra.mxu0 0
    %4772 = vmatprep.subr.bf16.mxu0 0
    %4773 = vmatpush1.bf16.msra.mxu0 0
    %4774 = vmatprep.subr.bf16.mxu0 0
    %4775 = vmatpush1.bf16.msra.mxu0 0
    %4776 = vmatprep.subr.bf16.mxu0 0
    %4777 = vmatpush1.bf16.msra.mxu0 0
    %4778 = vmatprep.mubr.bf16.mxu0 0
    %4779 = vmatmul.mubr.bf16.gmra.mrb[0].mxu0 %v4705
    %v4780 = vpop.f32.mrb[0].mxu0
    %v4781 = vadd.f32 0.0, %v4780
    %v4782 = vpop.f32.mrb[0].mxu0
    %v4783 = vpop.f32.mrb[0].mxu0
    %v4784 = vpop.f32.mrb[0].mxu0
    %4785 = vdwg.mxu0
    %v4786 = vld [vmem:[%s2531] sm:$0xff]
    %v4787 = vadd.f32 %v4786, %v4741
    %v4788 = vxor.u32 %v4787, 2147483648
    %v4789 = vmul.f32 %v4788, 1.442695
    %v4790 = vpow.pop %v4789
    %v4791 = vadd.f32 %v4790, 1.0
    %v4792 = vrcp.pop %v4791
    %v4793 = vmul.f32 1.0, %v4792
    %v4794 = vld [vmem:[%s2540] sm:$0xff]
    %v4795 = vadd.f32 %v4794, %v4781
    %v4796 = vxor.u32 %v4795, 2147483648
    %v4797 = vmul.f32 %v4796, 1.442695
    %v4798 = vpow.pop %v4797
    %v4799 = vadd.f32 %v4798, 1.0
    %v4800 = vrcp.pop %v4799
    %v4801 = vmul.f32 1.0, %v4800
    %v4802 = vld [vmem:[%s2549] sm:$0xff]
    %4803 = vmatprep.subr.bf16.mxu0 0
    %4804 = vmatpush1.bf16.msra.mxu0 %v4062
    %4805 = vmatprep.subr.bf16.mxu0 0
    %4806 = vmatpush1.bf16.msra.mxu0 %v4063
    %4807 = vmatprep.subr.bf16.mxu0 0
    %4808 = vmatpush1.bf16.msra.mxu0 %v4064
    %4809 = vmatprep.subr.bf16.mxu0 0
    %4810 = vmatpush1.bf16.msra.mxu0 %v4065
    %4811 = vmatprep.subr.bf16.mxu0 0
    %4812 = vmatpush1.bf16.msra.mxu0 %v4066
    %4813 = vmatprep.subr.bf16.mxu0 0
    %4814 = vmatpush1.bf16.msra.mxu0 %v4067
    %4815 = vmatprep.subr.bf16.mxu0 0
    %4816 = vmatpush1.bf16.msra.mxu0 %v4068
    %4817 = vmatprep.subr.bf16.mxu0 0
    %4818 = vmatpush1.bf16.msra.mxu0 %v4069
    %4819 = vmatprep.subr.bf16.mxu0 0
    %4820 = vmatpush1.bf16.msra.mxu0 0
    %4821 = vmatprep.subr.bf16.mxu0 0
    %4822 = vmatpush1.bf16.msra.mxu0 0
    %4823 = vmatprep.subr.bf16.mxu0 0
    %4824 = vmatpush1.bf16.msra.mxu0 0
    %4825 = vmatprep.subr.bf16.mxu0 0
    %4826 = vmatpush1.bf16.msra.mxu0 0
    %4827 = vmatprep.subr.bf16.mxu0 0
    %4828 = vmatpush1.bf16.msra.mxu0 0
    %4829 = vmatprep.subr.bf16.mxu0 0
    %4830 = vmatpush1.bf16.msra.mxu0 0
    %4831 = vmatprep.subr.bf16.mxu0 0
    %4832 = vmatpush1.bf16.msra.mxu0 0
    %4833 = vmatprep.subr.bf16.mxu0 0
    %4834 = vmatpush1.bf16.msra.mxu0 0
    %4835 = vmatprep.mubr.bf16.mxu0 0
    %4836 = vmatmul.mubr.bf16.gmra.mrb[0].mxu0 %v4705
    %v4837 = vpop.f32.mrb[0].mxu0
    %v4838 = vadd.f32 %v3785, %v4837
    %v4839 = vpop.f32.mrb[0].mxu0
    %v4840 = vpop.f32.mrb[0].mxu0
    %v4841 = vpop.f32.mrb[0].mxu0
    %4842 = vdwg.mxu0
    %v4843 = vmul.f32 %v4793, %v4838
    %v4844 = vadd.f32 %v4802, %v4843
    %v4845 = vtanh.pop %v4844
    %v4846 = vsub.f32 1.0, %v4801
    %v4847 = vmul.f32 %v4846, %v4845
    %v4848 = vmul.f32 %v4801, %v4704
    %v4849 = vadd.f32 %v4847, %v4848
    %v4850 = vpack.c.bf16 %v4849, %v4849
    %4851 = vmatprep.subr.bf16.mxu0 0
    %4852 = vmatpush1.bf16.msra.mxu0 %v3835
    %4853 = vmatprep.subr.bf16.mxu0 0
    %4854 = vmatpush1.bf16.msra.mxu0 %v3836
    %4855 = vmatprep.subr.bf16.mxu0 0
    %4856 = vmatpush1.bf16.msra.mxu0 %v3837
    %4857 = vmatprep.subr.bf16.mxu0 0
    %4858 = vmatpush1.bf16.msra.mxu0 %v3838
    %4859 = vmatprep.subr.bf16.mxu0 0
    %4860 = vmatpush1.bf16.msra.mxu0 %v3839
    %4861 = vmatprep.subr.bf16.mxu0 0
    %4862 = vmatpush1.bf16.msra.mxu0 %v3840
    %4863 = vmatprep.subr.bf16.mxu0 0
    %4864 = vmatpush1.bf16.msra.mxu0 %v3841
    %4865 = vmatprep.subr.bf16.mxu0 0
    %4866 = vmatpush1.bf16.msra.mxu0 %v3842
    %4867 = vmatprep.subr.bf16.mxu0 0
    %4868 = vmatpush1.bf16.msra.mxu0 0
    %4869 = vmatprep.subr.bf16.mxu0 0
    %4870 = vmatpush1.bf16.msra.mxu0 0
    %4871 = vmatprep.subr.bf16.mxu0 0
    %4872 = vmatpush1.bf16.msra.mxu0 0
    %4873 = vmatprep.subr.bf16.mxu0 0
    %4874 = vmatpush1.bf16.msra.mxu0 0
    %4875 = vmatprep.subr.bf16.mxu0 0
    %4876 = vmatpush1.bf16.msra.mxu0 0
    %4877 = vmatprep.subr.bf16.mxu0 0
    %4878 = vmatpush1.bf16.msra.mxu0 0
    %4879 = vmatprep.subr.bf16.mxu0 0
    %4880 = vmatpush1.bf16.msra.mxu0 0
    %4881 = vmatprep.subr.bf16.mxu0 0
    %4882 = vmatpush1.bf16.msra.mxu0 0
    %4883 = vmatprep.mubr.bf16.mxu0 0
    %4884 = vmatmul.mubr.bf16.gmra.mrb[0].mxu0 %v4850
    %v4885 = vpop.f32.mrb[0].mxu0
    %v4886 = vadd.f32 0.0, %v4885
    %v4887 = vpop.f32.mrb[0].mxu0
    %v4888 = vpop.f32.mrb[0].mxu0
    %v4889 = vpop.f32.mrb[0].mxu0
    %4890 = vdwg.mxu0
    %4891 = vmatprep.subr.bf16.mxu0 0
    %4892 = vmatpush1.bf16.msra.mxu0 %v3940
    %4893 = vmatprep.subr.bf16.mxu0 0
    %4894 = vmatpush1.bf16.msra.mxu0 %v3941
    %4895 = vmatprep.subr.bf16.mxu0 0
    %4896 = vmatpush1.bf16.msra.mxu0 %v3942
    %4897 = vmatprep.subr.bf16.mxu0 0
    %4898 = vmatpush1.bf16.msra.mxu0 %v3943
    %4899 = vmatprep.subr.bf16.mxu0 0
    %4900 = vmatpush1.bf16.msra.mxu0 %v3944
    %4901 = vmatprep.subr.bf16.mxu0 0
    %4902 = vmatpush1.bf16.msra.mxu0 %v3945
    %4903 = vmatprep.subr.bf16.mxu0 0
    %4904 = vmatpush1.bf16.msra.mxu0 %v3946
    %4905 = vmatprep.subr.bf16.mxu0 0
    %4906 = vmatpush1.bf16.msra.mxu0 %v3947
    %4907 = vmatprep.subr.bf16.mxu0 0
    %4908 = vmatpush1.bf16.msra.mxu0 0
    %4909 = vmatprep.subr.bf16.mxu0 0
    %4910 = vmatpush1.bf16.msra.mxu0 0
    %4911 = vmatprep.subr.bf16.mxu0 0
    %4912 = vmatpush1.bf16.msra.mxu0 0
    %4913 = vmatprep.subr.bf16.mxu0 0
    %4914 = vmatpush1.bf16.msra.mxu0 0
    %4915 = vmatprep.subr.bf16.mxu0 0
    %4916 = vmatpush1.bf16.msra.mxu0 0
    %4917 = vmatprep.subr.bf16.mxu0 0
    %4918 = vmatpush1.bf16.msra.mxu0 0
    %4919 = vmatprep.subr.bf16.mxu0 0
    %4920 = vmatpush1.bf16.msra.mxu0 0
    %4921 = vmatprep.subr.bf16.mxu0 0
    %4922 = vmatpush1.bf16.msra.mxu0 0
    %4923 = vmatprep.mubr.bf16.mxu0 0
    %4924 = vmatmul.mubr.bf16.gmra.mrb[0].mxu0 %v4850
    %v4925 = vpop.f32.mrb[0].mxu0
    %v4926 = vadd.f32 0.0, %v4925
    %v4927 = vpop.f32.mrb[0].mxu0
    %v4928 = vpop.f32.mrb[0].mxu0
    %v4929 = vpop.f32.mrb[0].mxu0
    %4930 = vdwg.mxu0
    %v4931 = vld [vmem:[%s2873] sm:$0xff]
    %v4932 = vadd.f32 %v4931, %v4886
    %v4933 = vxor.u32 %v4932, 2147483648
    %v4934 = vmul.f32 %v4933, 1.442695
    %v4935 = vpow.pop %v4934
    %v4936 = vadd.f32 %v4935, 1.0
    %v4937 = vrcp.pop %v4936
    %v4938 = vmul.f32 1.0, %v4937
    %v4939 = vld [vmem:[%s2882] sm:$0xff]
    %v4940 = vadd.f32 %v4939, %v4926
    %v4941 = vxor.u32 %v4940, 2147483648
    %v4942 = vmul.f32 %v4941, 1.442695
    %v4943 = vpow.pop %v4942
    %v4944 = vadd.f32 %v4943, 1.0
    %v4945 = vrcp.pop %v4944
    %v4946 = vmul.f32 1.0, %v4945
    %v4947 = vld [vmem:[%s2891] sm:$0xff]
    %4948 = vmatprep.subr.bf16.mxu0 0
    %4949 = vmatpush1.bf16.msra.mxu0 %v4062
    %4950 = vmatprep.subr.bf16.mxu0 0
    %4951 = vmatpush1.bf16.msra.mxu0 %v4063
    %4952 = vmatprep.subr.bf16.mxu0 0
    %4953 = vmatpush1.bf16.msra.mxu0 %v4064
    %4954 = vmatprep.subr.bf16.mxu0 0
    %4955 = vmatpush1.bf16.msra.mxu0 %v4065
    %4956 = vmatprep.subr.bf16.mxu0 0
    %4957 = vmatpush1.bf16.msra.mxu0 %v4066
    %4958 = vmatprep.subr.bf16.mxu0 0
    %4959 = vmatpush1.bf16.msra.mxu0 %v4067
    %4960 = vmatprep.subr.bf16.mxu0 0
    %4961 = vmatpush1.bf16.msra.mxu0 %v4068
    %4962 = vmatprep.subr.bf16.mxu0 0
    %4963 = vmatpush1.bf16.msra.mxu0 %v4069
    %4964 = vmatprep.subr.bf16.mxu0 0
    %4965 = vmatpush1.bf16.msra.mxu0 0
    %4966 = vmatprep.subr.bf16.mxu0 0
    %4967 = vmatpush1.bf16.msra.mxu0 0
    %4968 = vmatprep.subr.bf16.mxu0 0
    %4969 = vmatpush1.bf16.msra.mxu0 0
    %4970 = vmatprep.subr.bf16.mxu0 0
    %4971 = vmatpush1.bf16.msra.mxu0 0
    %4972 = vmatprep.subr.bf16.mxu0 0
    %4973 = vmatpush1.bf16.msra.mxu0 0
    %4974 = vmatprep.subr.bf16.mxu0 0
    %4975 = vmatpush1.bf16.msra.mxu0 0
    %4976 = vmatprep.subr.bf16.mxu0 0
    %4977 = vmatpush1.bf16.msra.mxu0 0
    %4978 = vmatprep.subr.bf16.mxu0 0
    %4979 = vmatpush1.bf16.msra.mxu0 0
    %4980 = vmatprep.mubr.bf16.mxu0 0
    %4981 = vmatmul.mubr.bf16.gmra.mrb[0].mxu0 %v4850
    %v4982 = vpop.f32.mrb[0].mxu0
    %v4983 = vadd.f32 %v3785, %v4982
    %v4984 = vpop.f32.mrb[0].mxu0
    %v4985 = vpop.f32.mrb[0].mxu0
    %v4986 = vpop.f32.mrb[0].mxu0
    %4987 = vdwg.mxu0
    %v4988 = vmul.f32 %v4938, %v4983
    %v4989 = vadd.f32 %v4947, %v4988
    %v4990 = vtanh.pop %v4989
    %v4991 = vsub.f32 1.0, %v4946
    %v4992 = vmul.f32 %v4991, %v4990
    %v4993 = vmul.f32 %v4946, %v4849
    %v4994 = vadd.f32 %v4992, %v4993
    %v4995 = vpack.c.bf16 %v4994, %v4994
    %4996 = vmatprep.subr.bf16.mxu0 0
    %4997 = vmatpush1.bf16.msra.mxu0 %v3835
    %4998 = vmatprep.subr.bf16.mxu0 0
    %4999 = vmatpush1.bf16.msra.mxu0 %v3836
    %5000 = vmatprep.subr.bf16.mxu0 0
    %5001 = vmatpush1.bf16.msra.mxu0 %v3837
    %5002 = vmatprep.subr.bf16.mxu0 0
    %5003 = vmatpush1.bf16.msra.mxu0 %v3838
    %5004 = vmatprep.subr.bf16.mxu0 0
    %5005 = vmatpush1.bf16.msra.mxu0 %v3839
    %5006 = vmatprep.subr.bf16.mxu0 0
    %5007 = vmatpush1.bf16.msra.mxu0 %v3840
    %5008 = vmatprep.subr.bf16.mxu0 0
    %5009 = vmatpush1.bf16.msra.mxu0 %v3841
    %5010 = vmatprep.subr.bf16.mxu0 0
    %5011 = vmatpush1.bf16.msra.mxu0 %v3842
    %5012 = vmatprep.subr.bf16.mxu0 0
    %5013 = vmatpush1.bf16.msra.mxu0 0
    %5014 = vmatprep.subr.bf16.mxu0 0
    %5015 = vmatpush1.bf16.msra.mxu0 0
    %5016 = vmatprep.subr.bf16.mxu0 0
    %5017 = vmatpush1.bf16.msra.mxu0 0
    %5018 = vmatprep.subr.bf16.mxu0 0
    %5019 = vmatpush1.bf16.msra.mxu0 0
    %5020 = vmatprep.subr.bf16.mxu0 0
    %5021 = vmatpush1.bf16.msra.mxu0 0
    %5022 = vmatprep.subr.bf16.mxu0 0
    %5023 = vmatpush1.bf16.msra.mxu0 0
    %5024 = vmatprep.subr.bf16.mxu0 0
    %5025 = vmatpush1.bf16.msra.mxu0 0
    %5026 = vmatprep.subr.bf16.mxu0 0
    %5027 = vmatpush1.bf16.msra.mxu0 0
    %5028 = vmatprep.mubr.bf16.mxu0 0
    %5029 = vmatmul.mubr.bf16.gmra.mrb[0].mxu0 %v4995
    %v5030 = vpop.f32.mrb[0].mxu0
    %v5031 = vadd.f32 0.0, %v5030
    %v5032 = vpop.f32.mrb[0].mxu0
    %v5033 = vpop.f32.mrb[0].mxu0
    %v5034 = vpop.f32.mrb[0].mxu0
    %5035 = vdwg.mxu0
    %5036 = vmatprep.subr.bf16.mxu0 0
    %5037 = vmatpush1.bf16.msra.mxu0 %v3940
    %5038 = vmatprep.subr.bf16.mxu0 0
    %5039 = vmatpush1.bf16.msra.mxu0 %v3941
    %5040 = vmatprep.subr.bf16.mxu0 0
    %5041 = vmatpush1.bf16.msra.mxu0 %v3942
    %5042 = vmatprep.subr.bf16.mxu0 0
    %5043 = vmatpush1.bf16.msra.mxu0 %v3943
    %5044 = vmatprep.subr.bf16.mxu0 0
    %5045 = vmatpush1.bf16.msra.mxu0 %v3944
    %5046 = vmatprep.subr.bf16.mxu0 0
    %5047 = vmatpush1.bf16.msra.mxu0 %v3945
    %5048 = vmatprep.subr.bf16.mxu0 0
    %5049 = vmatpush1.bf16.msra.mxu0 %v3946
    %5050 = vmatprep.subr.bf16.mxu0 0
    %5051 = vmatpush1.bf16.msra.mxu0 %v3947
    %5052 = vmatprep.subr.bf16.mxu0 0
    %5053 = vmatpush1.bf16.msra.mxu0 0
    %5054 = vmatprep.subr.bf16.mxu0 0
    %5055 = vmatpush1.bf16.msra.mxu0 0
    %5056 = vmatprep.subr.bf16.mxu0 0
    %5057 = vmatpush1.bf16.msra.mxu0 0
    %5058 = vmatprep.subr.bf16.mxu0 0
    %5059 = vmatpush1.bf16.msra.mxu0 0
    %5060 = vmatprep.subr.bf16.mxu0 0
    %5061 = vmatpush1.bf16.msra.mxu0 0
    %5062 = vmatprep.subr.bf16.mxu0 0
    %5063 = vmatpush1.bf16.msra.mxu0 0
    %5064 = vmatprep.subr.bf16.mxu0 0
    %5065 = vmatpush1.bf16.msra.mxu0 0
    %5066 = vmatprep.subr.bf16.mxu0 0
    %5067 = vmatpush1.bf16.msra.mxu0 0
    %5068 = vmatprep.mubr.bf16.mxu0 0
    %5069 = vmatmul.mubr.bf16.gmra.mrb[0].mxu0 %v4995
    %v5070 = vpop.f32.mrb[0].mxu0
    %v5071 = vadd.f32 0.0, %v5070
    %v5072 = vpop.f32.mrb[0].mxu0
    %v5073 = vpop.f32.mrb[0].mxu0
    %v5074 = vpop.f32.mrb[0].mxu0
    %5075 = vdwg.mxu0
    %v5076 = vld [vmem:[%s3215] sm:$0xff]
    %v5077 = vadd.f32 %v5076, %v5031
    %v5078 = vxor.u32 %v5077, 2147483648
    %v5079 = vmul.f32 %v5078, 1.442695
    %v5080 = vpow.pop %v5079
    %v5081 = vadd.f32 %v5080, 1.0
    %v5082 = vrcp.pop %v5081
    %v5083 = vmul.f32 1.0, %v5082
    %v5084 = vld [vmem:[%s3224] sm:$0xff]
    %v5085 = vadd.f32 %v5084, %v5071
    %v5086 = vxor.u32 %v5085, 2147483648
    %v5087 = vmul.f32 %v5086, 1.442695
    %v5088 = vpow.pop %v5087
    %v5089 = vadd.f32 %v5088, 1.0
    %v5090 = vrcp.pop %v5089
    %v5091 = vmul.f32 1.0, %v5090
    %v5092 = vld [vmem:[%s3233] sm:$0xff]
    %5093 = vmatprep.subr.bf16.mxu0 0
    %5094 = vmatpush1.bf16.msra.mxu0 %v4062
    %5095 = vmatprep.subr.bf16.mxu0 0
    %5096 = vmatpush1.bf16.msra.mxu0 %v4063
    %5097 = vmatprep.subr.bf16.mxu0 0
    %5098 = vmatpush1.bf16.msra.mxu0 %v4064
    %5099 = vmatprep.subr.bf16.mxu0 0
    %5100 = vmatpush1.bf16.msra.mxu0 %v4065
    %5101 = vmatprep.subr.bf16.mxu0 0
    %5102 = vmatpush1.bf16.msra.mxu0 %v4066
    %5103 = vmatprep.subr.bf16.mxu0 0
    %5104 = vmatpush1.bf16.msra.mxu0 %v4067
    %5105 = vmatprep.subr.bf16.mxu0 0
    %5106 = vmatpush1.bf16.msra.mxu0 %v4068
    %5107 = vmatprep.subr.bf16.mxu0 0
    %5108 = vmatpush1.bf16.msra.mxu0 %v4069
    %5109 = vmatprep.subr.bf16.mxu0 0
    %5110 = vmatpush1.bf16.msra.mxu0 0
    %5111 = vmatprep.subr.bf16.mxu0 0
    %5112 = vmatpush1.bf16.msra.mxu0 0
    %5113 = vmatprep.subr.bf16.mxu0 0
    %5114 = vmatpush1.bf16.msra.mxu0 0
    %5115 = vmatprep.subr.bf16.mxu0 0
    %5116 = vmatpush1.bf16.msra.mxu0 0
    %5117 = vmatprep.subr.bf16.mxu0 0
    %5118 = vmatpush1.bf16.msra.mxu0 0
    %5119 = vmatprep.subr.bf16.mxu0 0
    %5120 = vmatpush1.bf16.msra.mxu0 0
    %5121 = vmatprep.subr.bf16.mxu0 0
    %5122 = vmatpush1.bf16.msra.mxu0 0
    %5123 = vmatprep.subr.bf16.mxu0 0
    %5124 = vmatpush1.bf16.msra.mxu0 0
    %5125 = vmatprep.mubr.bf16.mxu0 0
    %5126 = vmatmul.mubr.bf16.gmra.mrb[0].mxu0 %v4995
    %v5127 = vpop.f32.mrb[0].mxu0
    %v5128 = vadd.f32 %v3785, %v5127
    %v5129 = vpop.f32.mrb[0].mxu0
    %v5130 = vpop.f32.mrb[0].mxu0
    %v5131 = vpop.f32.mrb[0].mxu0
    %5132 = vdwg.mxu0
    %v5133 = vmul.f32 %v5083, %v5128
    %v5134 = vadd.f32 %v5092, %v5133
    %v5135 = vtanh.pop %v5134
    %v5136 = vsub.f32 1.0, %v5091
    %v5137 = vmul.f32 %v5136, %v5135
    %v5138 = vmul.f32 %v5091, %v4994
    %v5139 = vadd.f32 %v5137, %v5138
    %v5140 = vpack.c.bf16 %v5139, %v5139
    %v5141 = vld [vmem:[#allocation13] sm:$0xf]
    %v5142 = vld [vmem:[#allocation13 + $0x4] sm:$0xf]
    %v5143 = vld [vmem:[#allocation13 + $0x8] sm:$0xf]
    %v5144 = vld [vmem:[#allocation13 + $0xc] sm:$0xf]
    %v5145 = vld [vmem:[#allocation13 + $0x10] sm:$0xf]
    %v5146 = vld [vmem:[#allocation13 + $0x14] sm:$0xf]
    %v5147 = vld [vmem:[#allocation13 + $0x18] sm:$0xf]
    %v5148 = vld [vmem:[#allocation13 + $0x1c] sm:$0xf]
    %v5149 = vld [vmem:[#allocation13 + $0x20] sm:$0xf]
    %v5150 = vld [vmem:[#allocation13 + $0x24] sm:$0xf]
    %v5151 = vld [vmem:[#allocation13 + $0x28] sm:$0xf]
    %v5152 = vld [vmem:[#allocation13 + $0x2c] sm:$0xf]
    %v5153 = vld [vmem:[#allocation13 + $0x30] sm:$0xf]
    %v5154 = vld [vmem:[#allocation13 + $0x34] sm:$0xf]
    %v5155 = vld [vmem:[#allocation13 + $0x38] sm:$0xf]
    %v5156 = vld [vmem:[#allocation13 + $0x3c] sm:$0xf]
    %v5157 = vld [vmem:[%s10] sm:$0x1]
    %v5159 = vlaneseq
    %v5160 = vshrl.u32 %v5159, 7
    %v5161 = vsub.s32 0, %v5160
    %v5162 = vrot.slane %v5157, %v5161
    %v5180 = vunpack.c.l.b16 %v5141
    %v5181 = vunpack.c.l.b16 %v5142
    %v5182 = vunpack.c.l.b16 %v5143
    %v5183 = vunpack.c.l.b16 %v5144
    %v5184 = vunpack.c.l.b16 %v5145
    %v5185 = vunpack.c.l.b16 %v5146
    %v5186 = vunpack.c.l.b16 %v5147
    %v5187 = vunpack.c.l.b16 %v5148
    %v5188 = vunpack.c.l.b16 %v5149
    %v5189 = vunpack.c.l.b16 %v5150
    %v5190 = vunpack.c.l.b16 %v5151
    %v5191 = vunpack.c.l.b16 %v5152
    %v5192 = vunpack.c.l.b16 %v5153
    %v5193 = vunpack.c.l.b16 %v5154
    %v5194 = vunpack.c.l.b16 %v5155
    %v5195 = vunpack.c.l.b16 %v5156
    %v5196 = vpack.c.b16 %v5181, %v5180
    %v5197 = vpack.c.b16 %v5183, %v5182
    %v5198 = vpack.c.b16 %v5185, %v5184
    %v5199 = vpack.c.b16 %v5187, %v5186
    %v5200 = vpack.c.b16 %v5189, %v5188
    %v5201 = vpack.c.b16 %v5191, %v5190
    %v5202 = vpack.c.b16 %v5193, %v5192
    %v5203 = vpack.c.b16 %v5195, %v5194
    %5212 = vmatprep.subr.bf16.mxu0 0
    %5213 = vmatpush1.bf16.msra.mxu0 %v5196
    %5214 = vmatprep.subr.bf16.mxu0 0
    %5215 = vmatpush1.bf16.msra.mxu0 %v5197
    %5216 = vmatprep.subr.bf16.mxu0 0
    %5217 = vmatpush1.bf16.msra.mxu0 %v5198
    %5218 = vmatprep.subr.bf16.mxu0 0
    %5219 = vmatpush1.bf16.msra.mxu0 %v5199
    %5220 = vmatprep.subr.bf16.mxu0 0
    %5221 = vmatpush1.bf16.msra.mxu0 %v5200
    %5222 = vmatprep.subr.bf16.mxu0 0
    %5223 = vmatpush1.bf16.msra.mxu0 %v5201
    %5224 = vmatprep.subr.bf16.mxu0 0
    %5225 = vmatpush1.bf16.msra.mxu0 %v5202
    %5226 = vmatprep.subr.bf16.mxu0 0
    %5227 = vmatpush1.bf16.msra.mxu0 %v5203
    %5228 = vmatprep.subr.bf16.mxu0 0
    %5229 = vmatpush1.bf16.msra.mxu0 0
    %5230 = vmatprep.subr.bf16.mxu0 0
    %5231 = vmatpush1.bf16.msra.mxu0 0
    %5232 = vmatprep.subr.bf16.mxu0 0
    %5233 = vmatpush1.bf16.msra.mxu0 0
    %5234 = vmatprep.subr.bf16.mxu0 0
    %5235 = vmatpush1.bf16.msra.mxu0 0
    %5236 = vmatprep.subr.bf16.mxu0 0
    %5237 = vmatpush1.bf16.msra.mxu0 0
    %5238 = vmatprep.subr.bf16.mxu0 0
    %5239 = vmatpush1.bf16.msra.mxu0 0
    %5240 = vmatprep.subr.bf16.mxu0 0
    %5241 = vmatpush1.bf16.msra.mxu0 0
    %5242 = vmatprep.subr.bf16.mxu0 0
    %5243 = vmatpush1.bf16.msra.mxu0 0
    %5244 = vmatprep.mubr.bf16.mxu0 0
    %5245 = vmatmul.mubr.bf16.gmra.mrb[0].mxu0 %v5140
    %v5246 = vpop.f32.mrb[0].mxu0
    %v5247 = vadd.f32 %v5162, %v5246
    %v5248 = vpop.f32.mrb[0].mxu0
    %v5249 = vpop.f32.mrb[0].mxu0
    %v5250 = vpop.f32.mrb[0].mxu0
    %5251 = vdwg.mxu0
    %5252 = vst [vmem:[#allocation15] sm:$0xff] %v5247
    // Predicated region
    $region70: #{tpu_custom_call.1} parent=1 // pred_check
      _
    $region71: #{tpu_custom_call.1} parent=1 // pred_check_branch
      %5254 = sbr.rel (0) target = $region73
    $region72: #{tpu_custom_call.1} parent=1 // pred_region
      %s5256 = ssub.s32 128, 128
      %5257 = vsyncadd [#allocation6], %s5256
      %s5259 = sshll.u32 [#allocation15], 4
      %s5260 = int_to_ptr.vmem [resolvable:$true] %s5259
      %5262 = dma.vmem_to_hbm [thread:$0]  %s5260, 128, %s11, [#allocation6]
    $region73: #{tpu_custom_call.1} parent=1 // pred_fallthru
      _
    // Predicated region
    $region74: #{tpu_custom_call.1} parent=1 // pred_check
      _
    $region75: #{tpu_custom_call.1} parent=1 // pred_check_branch
      %5264 = sbr.rel (0) target = $region77
    $region76: #{tpu_custom_call.1} parent=1 // pred_region
      %5265 = dma.done [#allocation6], 128
    $region77: #{tpu_custom_call.1} parent=1 // pred_fallthru
      _
    %5266 = vsyncpa [#allocation5], 1
    %5267 = vsyncpa [#allocation8], 1
    %5268 = vsyncpa [#allocation11], 1
    %5269 = vsyncpa [#allocation14], 1
    %5270 = vsyncpa [#allocation6], 1

</llo_original>
